<compile_context>
chip_gen: v5e
topology: v5e:2x2
jax: 0.10.0
libtpu: 0.0.40
codegen_flags: <defaults>
</compile_context>

<pallas_src>
import functools
import math

import jax
import jax.numpy as jnp
import numpy as np
from jax.experimental import pallas as pl
from jax.experimental.pallas import tpu as pltpu

_EPS = 1e-5      # torch.nn.BatchNorm2d default eps
_K0_PAD = 32     # conv0 im2col K (=3*3*2=18) zero-padded to a sublane-friendly 32


# ----------------------------------------------------------------------------
# Host-side constant builders: 0/1 gather matrices for conv shifts / maxpool.
# ----------------------------------------------------------------------------
def _conv_gather(batch, h, w, k, pad):
    """G[s, out_row, in_row] = 1  implements the (di,dj) shift of a kxk conv."""
    ho, wo = h + 2 * pad - k + 1, w + 2 * pad - k + 1
    g = np.zeros((k * k, batch * ho * wo, batch * h * w), np.float32)
    for di in range(k):
        for dj in range(k):
            s = di * k + dj
            for b in range(batch):
                for oi in range(ho):
                    for oj in range(wo):
                        ii, ij = oi + di - pad, oj + dj - pad
                        if 0 <= ii < h and 0 <= ij < w:
                            g[s, b * ho * wo + oi * wo + oj,
                              b * h * w + ii * w + ij] = 1.0
    return g


def _pool_gather(batch, h, w):
    """Four selection matrices picking the 2x2 window elements (stride 2)."""
    ho, wo = h // 2, w // 2
    p = np.zeros((4, batch * ho * wo, batch * h * w), np.float32)
    for di in range(2):
        for dj in range(2):
            s = di * 2 + dj
            for b in range(batch):
                for oi in range(ho):
                    for oj in range(wo):
                        p[s, b * ho * wo + oi * wo + oj,
                          b * h * w + (2 * oi + di) * w + (2 * oj + dj)] = 1.0
    return p


# ----------------------------------------------------------------------------
# In-kernel helpers (traced into the single fused kernel).
# ----------------------------------------------------------------------------
def _bn(x, gamma, beta):
    """Train-mode BatchNorm over rows (= N*H*W) per channel, biased variance."""
    mean = jnp.mean(x, axis=0, keepdims=True)
    var = jnp.mean(jnp.square(x - mean), axis=0, keepdims=True)
    return (x - mean) * jax.lax.rsqrt(var + _EPS) * gamma + beta


def _conv(x_bf16, g_ref, w_ref, b_ref):
    """sum_s (G_s @ x) @ W_s + b  — all MXU work, bf16 inputs, f32 accumulation."""
    n_shift, rows_out, _ = g_ref.shape
    cout = w_ref.shape[-1]
    acc = jnp.zeros((rows_out, cout), jnp.float32)
    for s in range(n_shift):
        # G_s is a 0/1 selection -> the bf16 cast below is exact.
        shifted = jnp.dot(g_ref[s], x_bf16,
                          preferred_element_type=jnp.float32).astype(jnp.bfloat16)
        acc = acc + jnp.dot(shifted, w_ref[s], preferred_element_type=jnp.float32)
    return acc + b_ref[...]


def _basic_block(x, ga_ref, gb_ref, wcat_ref, bcat_ref, gcat_ref, becat_ref,
                 w2_ref, b2_ref, g2_ref, be2_ref, planes, sk):
    # conv1 and downsample conv fused into one lane-dense matmul (Cout concat);
    # their BatchNorms fuse into one per-channel pass.
    y = _conv(x.astype(jnp.bfloat16), ga_ref, wcat_ref, bcat_ref)
    y = _bn(y, gcat_ref[...], becat_ref[...])
    h = jnp.maximum(y[:, :planes], 0.0)                       # conv1 -> bn1 -> relu
    out = _conv(h.astype(jnp.bfloat16), gb_ref, w2_ref, b2_ref)   # conv2 (pad=1)
    out = _bn(out, g2_ref[...], be2_ref[...])
    if sk:
        out = out + y[:, planes:]                             # + downsample(x)
    return jnp.maximum(out, 0.0)


def _resnet_kernel(*refs, sk):
    (cols0_ref, w0_ref, b0_ref, g0_ref, be0_ref, pool_ref,
     g1a_ref, g1b_ref, l1_wc_ref, l1_bc_ref, l1_gc_ref, l1_bec_ref,
     l1_w2_ref, l1_b2_ref, l1_g2_ref, l1_be2_ref,
     g2a_ref, g2b_ref, l2_wc_ref, l2_bc_ref, l2_gc_ref, l2_bec_ref,
     l2_w2_ref, l2_b2_ref, l2_g2_ref, l2_be2_ref,
     g3_ref, w3_ref, b3_ref, bn3_g_ref, bn3_b_ref,
     fw1_ref, fb1_ref, fw2_ref, fb2_ref, fw3_ref, fb3_ref,
     out_ref) = refs

    # conv0 on the host-im2col'd input: (B*12*12, 32) @ (32, 64) + b
    x = jnp.dot(cols0_ref[...], w0_ref[...],
                preferred_element_type=jnp.float32) + b0_ref[...]

    # maxpool 2x2 via 4 selection matmuls + elementwise max  -> (B*6*6, 64)
    xb = x.astype(jnp.bfloat16)
    pooled = jnp.dot(pool_ref[0], xb, preferred_element_type=jnp.float32)
    for k in range(1, 4):
        pooled = jnp.maximum(
            pooled, jnp.dot(pool_ref[k], xb, preferred_element_type=jnp.float32))

    # bn0 + relu
    x = jnp.maximum(_bn(pooled, g0_ref[...], be0_ref[...]), 0.0)

    # layer1: 64 -> 64, spatial 6 -> 4 ;  layer2: 64 -> 128, spatial 4 -> 2
    x = _basic_block(x, g1a_ref, g1b_ref, l1_wc_ref, l1_bc_ref, l1_gc_ref,
                     l1_bec_ref, l1_w2_ref, l1_b2_ref, l1_g2_ref, l1_be2_ref,
                     planes=64, sk=sk)
    x = _basic_block(x, g2a_ref, g2b_ref, l2_wc_ref, l2_bc_ref, l2_gc_ref,
                     l2_bec_ref, l2_w2_ref, l2_b2_ref, l2_g2_ref, l2_be2_ref,
                     planes=128, sk=sk)

    # layer3: conv k=2 -> bn -> relu, spatial 2 -> 1, 128 -> 256  => (B, 256)
    y = _conv(x.astype(jnp.bfloat16), g3_ref, w3_ref, b3_ref)
    x = jnp.maximum(_bn(y, bn3_g_ref[...], bn3_b_ref[...]), 0.0)

    # fc head: 256 -> 128 -> 64 -> 1, sigmoid
    h = jnp.maximum(
        jnp.dot(x.astype(jnp.bfloat16), fw1_ref[...],
                preferred_element_type=jnp.float32) + fb1_ref[...], 0.0)
    h = jnp.maximum(
        jnp.dot(h.astype(jnp.bfloat16), fw2_ref[...],
                preferred_element_type=jnp.float32) + fb2_ref[...], 0.0)
    z = (jnp.dot(h.astype(jnp.bfloat16), fw3_ref[...],
                 preferred_element_type=jnp.float32) + fb3_ref[...])
    out_ref[...] = 0.5 * (jnp.tanh(0.5 * z) + 1.0)   # numerically stable sigmoid


# ----------------------------------------------------------------------------
# Parameters (same init style as before) and one-time packing for the kernel.
# ----------------------------------------------------------------------------
def init_params(key):
    keys = iter(jax.random.split(key, 32))

    def conv_p(kh, kw, cin, cout):
        scale = 1.0 / math.sqrt(kh * kw * cin)
        w = jax.random.normal(next(keys), (kh, kw, cin, cout), jnp.float32) * scale
        b = jax.random.normal(next(keys), (cout,), jnp.float32) * 0.01
        return w, b

    def bn_p(c):
        return jnp.ones((c,), jnp.float32), jnp.zeros((c,), jnp.float32)

    def linear_p(din, dout):
        scale = 1.0 / math.sqrt(din)
        w = jax.random.normal(next(keys), (din, dout), jnp.float32) * scale
        b = jax.random.normal(next(keys), (dout,), jnp.float32) * 0.01
        return w, b

    def block_p(cin, cout):
        return dict(conv1=conv_p(3, 3, cin, cout), bn1=bn_p(cout),
                    conv2=conv_p(3, 3, cout, cout), bn2=bn_p(cout),
                    down_conv=conv_p(3, 3, cin, cout), down_bn=bn_p(cout))

    return dict(conv0=conv_p(3, 3, 2, 64), bn0=bn_p(64),
                layer1=block_p(64, 64), layer2=block_p(64, 128),
                layer3_conv=conv_p(2, 2, 128, 256), layer3_bn=bn_p(256),
                fc1=linear_p(256, 128), fc2=linear_p(128, 64),
                fc3=linear_p(64, 1))


def pack_params(params, batch, in_hw=14):
    """Flatten/concat/cast everything into the kernel's positional arg order."""
    bf16, f32 = jnp.bfloat16, jnp.float32
    row = lambda v: jnp.asarray(v, f32).reshape(1, -1)

    h_conv0 = in_hw - 2          # 12
    h_pool = h_conv0 // 2        # 6
    h_l1 = h_pool - 2            # 4
    h_l2 = h_l1 - 2              # 2

    # conv0 weight as an im2col matrix, K padded 18 -> _K0_PAD (zero rows).
    w0, b0 = params["conv0"]
    k0 = w0.shape[0] * w0.shape[1] * w0.shape[2]
    w0p = jnp.pad(w0.reshape(k0, -1), ((0, _K0_PAD - k0), (0, 0))).astype(bf16)
    g0, be0 = params["bn0"]

    pool = jnp.asarray(_pool_gather(batch, h_conv0, h_conv0), bf16)

    def block_pack(p, h_in, planes):
        ga = jnp.asarray(_conv_gather(batch, h_in, h_in, 3, 0), bf16)
        gb = jnp.asarray(_conv_gather(batch, h_in - 2, h_in - 2, 3, 1), bf16)
        w1, b1 = p["conv1"]
        wd, bd = p["down_conv"]
        cin = w1.shape[2]
        wcat = jnp.concatenate([w1, wd], axis=-1).reshape(
            9, cin, 2 * planes).astype(bf16)
        bcat = row(jnp.concatenate([b1, bd]))
        g1, be1 = p["bn1"]
        gd, bed = p["down_bn"]
        gcat = row(jnp.concatenate([g1, gd]))
        becat = row(jnp.concatenate([be1, bed]))
        w2, b2 = p["conv2"]
        w2s = w2.reshape(9, planes, planes).astype(bf16)
        g2, be2 = p["bn2"]
        return (ga, gb, wcat, bcat, gcat, becat, w2s, row(b2), row(g2), row(be2))

    l1 = block_pack(params["layer1"], h_pool, 64)
    l2 = block_pack(params["layer2"], h_l1, 128)

    w3, b3 = params["layer3_conv"]
    g3 = jnp.asarray(_conv_gather(batch, h_l2, h_l2, 2, 0), bf16)
    w3s = w3.reshape(4, w3.shape[2], w3.shape[3]).astype(bf16)
    bn3_g, bn3_b = params["layer3_bn"]

    fw1, fb1 = params["fc1"]
    fw2, fb2 = params["fc2"]
    fw3, fb3 = params["fc3"]

    return ((w0p, row(b0), row(g0), row(be0), pool)
            + l1 + l2
            + (g3, w3s, row(b3), row(bn3_g), row(bn3_b),
               fw1.astype(bf16), row(fb1), fw2.astype(bf16), row(fb2),
               fw3.astype(bf16), row(fb3)))


# ----------------------------------------------------------------------------
# Forward: one-time input prep (host) + single fused pallas_call.
# ----------------------------------------------------------------------------
def _im2col_conv0(x_nchw):
    """NCHW -> NHWC -> 3x3/no-pad patch matrix (B*Ho*Wo, 18), K-padded, bf16.
    (Input prep only — all other convs are done fully inside the kernel.)"""
    x = jnp.transpose(x_nchw, (0, 2, 3, 1)).astype(jnp.float32)
    b, h, w, c = x.shape
    ho, wo = h - 2, w - 2
    cols = jnp.concatenate(
        [x[:, i:i + ho, j:j + wo, :] for i in range(3) for j in range(3)],
        axis=-1).reshape(b * ho * wo, 9 * c)
    cols = jnp.pad(cols, ((0, 0), (0, _K0_PAD - 9 * c)))
    return cols.astype(jnp.bfloat16)


def resnet_forward(x_nchw, packed, sk=True):
    batch = x_nchw.shape[0]
    cols0 = _im2col_conv0(x_nchw)
    flat = (cols0,) + tuple(packed)
    return pl.pallas_call(
        functools.partial(_resnet_kernel, sk=sk),
        out_shape=jax.ShapeDtypeStruct((batch, 1), jnp.float32),
        in_specs=[pl.BlockSpec(memory_space=pltpu.MemorySpace.VMEM)] * len(flat),
        out_specs=pl.BlockSpec(memory_space=pltpu.MemorySpace.VMEM),
        compiler_params=pltpu.CompilerParams(
            vmem_limit_bytes=32 * 1024 * 1024),
    )(*flat)


# ----------------------------------------------------------------------------
# Pure-JAX reference mirroring the kernel's bf16-matmul / f32-elementwise policy.
# ----------------------------------------------------------------------------
def _conv_ref(x, w_hwio, b, pad):
    kh, kw = w_hwio.shape[0], w_hwio.shape[1]
    if pad:
        x = jnp.pad(x, ((0, 0), (pad, pad), (pad, pad), (0, 0)))
    bsz, h, w, _ = x.shape
    ho, wo = h - kh + 1, w - kw + 1
    acc = jnp.zeros((bsz, ho, wo, w_hwio.shape[-1]), jnp.float32)
    for di in range(kh):
        for dj in range(kw):
            acc = acc + jnp.einsum(
                "bhwc,cd->bhwd",
                x[:, di:di + ho, dj:dj + wo, :].astype(jnp.bfloat16),
                w_hwio[di, dj].astype(jnp.bfloat16),
                preferred_element_type=jnp.float32)
    return acc + b


def _bn_ref(x, gamma, beta):
    mean = jnp.mean(x, axis=(0, 1, 2), keepdims=True)
    var = jnp.mean(jnp.square(x - mean), axis=(0, 1, 2), keepdims=True)
    return (x - mean) * jax.lax.rsqrt(var + _EPS) * gamma + beta


def resnet_reference(x_nchw, params, sk=True):
    bf = lambda t: t.astype(jnp.bfloat16)
    x = jnp.transpose(x_nchw, (0, 2, 3, 1)).astype(jnp.float32)
    x = _conv_ref(x, *params["conv0"], pad=0)
    x = x.astype(jnp.bfloat16).astype(jnp.float32)   # mirror kernel's bf16 hand-off
    b, h, w, c = x.shape
    x = jnp.max(x.reshape(b, h // 2, 2, w // 2, 2, c), axis=(2, 4))
    x = jnp.maximum(_bn_ref(x, *params["bn0"]), 0.0)
    for name in ("layer1", "layer2"):
        p = params[name]
        out = _conv_ref(x, *p["conv1"], pad=0)
        out = jnp.maximum(_bn_ref(out, *p["bn1"]), 0.0)
        out = _conv_ref(out, *p["conv2"], pad=1)
        out = _bn_ref(out, *p["bn2"])
        if sk:
            out = out + _bn_ref(_conv_ref(x, *p["down_conv"], pad=0), *p["down_bn"])
        x = jnp.maximum(out, 0.0)
    x = _conv_ref(x, *params["layer3_conv"], pad=0)
    x = jnp.maximum(_bn_ref(x, *params["layer3_bn"]), 0.0)
    x = x.reshape(x.shape[0], -1)
    w1, b1 = params["fc1"]
    w2, b2 = params["fc2"]
    w3, b3 = params["fc3"]
    hh = jnp.maximum(jnp.dot(bf(x), bf(w1), preferred_element_type=jnp.float32) + b1, 0.0)
    hh = jnp.maximum(jnp.dot(bf(hh), bf(w2), preferred_element_type=jnp.float32) + b2, 0.0)
    z = jnp.dot(bf(hh), bf(w3), preferred_element_type=jnp.float32) + b3
    return jax.nn.sigmoid(z)


if __name__ == "__main__":
    key = jax.random.PRNGKey(0)
    k_params, k_x = jax.random.split(key)
    params = init_params(k_params)
    # Input spatial size 14 is what the architecture implies so that the
    # flattened feature is exactly 256 before the fc head (14->12->6->4->2->1).
    x = jax.random.normal(k_x, (2, 2, 14, 14), jnp.float32)

    packed = pack_params(params, batch=x.shape[0], in_hw=x.shape[2])
    out = jax.block_until_ready(resnet_forward(x, packed, sk=True))

    assert out.shape == (2, 1)
    assert bool(jnp.all(jnp.isfinite(out)))
    assert bool(jnp.all((out >= 0.0) & (out <= 1.0)))

    # Validate against a pure-JAX reference with the same bf16-matmul policy.
    ref = jax.block_until_ready(resnet_reference(x, params, sk=True))
    assert float(jnp.max(jnp.abs(out - ref))) < 5e-2

    print("KERNEL_OK")
</pallas_src>

<mosaic_0001>
module attributes {stable_mosaic.version = 11 : i64} {
  func.func @_resnet_kernel(%arg0: memref<288x32xbf16, #tpu.memory_space<vmem>>, %arg1: memref<32x64xbf16, #tpu.memory_space<vmem>>, %arg2: memref<1x64xf32, #tpu.memory_space<vmem>>, %arg3: memref<1x64xf32, #tpu.memory_space<vmem>>, %arg4: memref<1x64xf32, #tpu.memory_space<vmem>>, %arg5: memref<4x72x288xbf16, #tpu.memory_space<vmem>>, %arg6: memref<9x32x72xbf16, #tpu.memory_space<vmem>>, %arg7: memref<9x32x32xbf16, #tpu.memory_space<vmem>>, %arg8: memref<9x64x128xbf16, #tpu.memory_space<vmem>>, %arg9: memref<1x128xf32, #tpu.memory_space<vmem>>, %arg10: memref<1x128xf32, #tpu.memory_space<vmem>>, %arg11: memref<1x128xf32, #tpu.memory_space<vmem>>, %arg12: memref<9x64x64xbf16, #tpu.memory_space<vmem>>, %arg13: memref<1x64xf32, #tpu.memory_space<vmem>>, %arg14: memref<1x64xf32, #tpu.memory_space<vmem>>, %arg15: memref<1x64xf32, #tpu.memory_space<vmem>>, %arg16: memref<9x8x32xbf16, #tpu.memory_space<vmem>>, %arg17: memref<9x8x8xbf16, #tpu.memory_space<vmem>>, %arg18: memref<9x64x256xbf16, #tpu.memory_space<vmem>>, %arg19: memref<1x256xf32, #tpu.memory_space<vmem>>, %arg20: memref<1x256xf32, #tpu.memory_space<vmem>>, %arg21: memref<1x256xf32, #tpu.memory_space<vmem>>, %arg22: memref<9x128x128xbf16, #tpu.memory_space<vmem>>, %arg23: memref<1x128xf32, #tpu.memory_space<vmem>>, %arg24: memref<1x128xf32, #tpu.memory_space<vmem>>, %arg25: memref<1x128xf32, #tpu.memory_space<vmem>>, %arg26: memref<4x2x8xbf16, #tpu.memory_space<vmem>>, %arg27: memref<4x128x256xbf16, #tpu.memory_space<vmem>>, %arg28: memref<1x256xf32, #tpu.memory_space<vmem>>, %arg29: memref<1x256xf32, #tpu.memory_space<vmem>>, %arg30: memref<1x256xf32, #tpu.memory_space<vmem>>, %arg31: memref<256x128xbf16, #tpu.memory_space<vmem>>, %arg32: memref<1x128xf32, #tpu.memory_space<vmem>>, %arg33: memref<128x64xbf16, #tpu.memory_space<vmem>>, %arg34: memref<1x64xf32, #tpu.memory_space<vmem>>, %arg35: memref<64x1xbf16, #tpu.memory_space<vmem>>, %arg36: memref<1x1xf32, #tpu.memory_space<vmem>>, %arg37: memref<2x1xf32, #tpu.memory_space<vmem>>) attributes {dimension_semantics = [], scalar_prefetch = 0 : i64, scratch_operands = 0 : i64, tpu.core_type = #tpu.core_type<tc>} {
    %c0 = arith.constant 0 : index
    %c0_0 = arith.constant 0 : index
    %0 = vector.load %arg0[%c0, %c0_0] : memref<288x32xbf16, #tpu.memory_space<vmem>>, vector<288x32xbf16>
    %c0_1 = arith.constant 0 : index
    %c0_2 = arith.constant 0 : index
    %1 = vector.load %arg1[%c0_1, %c0_2] : memref<32x64xbf16, #tpu.memory_space<vmem>>, vector<32x64xbf16>
    %cst = arith.constant dense<0.000000e+00> : vector<288x64xf32>
    %2 = tpu.matmul %0, %1, %cst {dimension_numbers = #tpu.dot_dimension_numbers<[1], [0], [0], [1], [0, 0, 1, 1], [], []>} : vector<288x32xbf16>, vector<32x64xbf16>, vector<288x64xf32> -> vector<288x64xf32>
    %c0_3 = arith.constant 0 : index
    %c0_4 = arith.constant 0 : index
    %3 = vector.load %arg2[%c0_3, %c0_4] : memref<1x64xf32, #tpu.memory_space<vmem>>, vector<1x64xf32>
    %4 = vector.broadcast %3 : vector<1x64xf32> to vector<288x64xf32>
    %5 = arith.addf %2, %4 : vector<288x64xf32>
    %6 = arith.truncf %5 : vector<288x64xf32> to vector<288x64xbf16>
    %c0_5 = arith.constant 0 : index
    %c0_6 = arith.constant 0 : index
    %c0_7 = arith.constant 0 : index
    %7 = vector.load %arg5[%c0_5, %c0_6, %c0_7] : memref<4x72x288xbf16, #tpu.memory_space<vmem>>, vector<1x72x288xbf16>
    %8 = vector.shape_cast %7 : vector<1x72x288xbf16> to vector<72x288xbf16>
    %cst_8 = arith.constant dense<0.000000e+00> : vector<72x64xf32>
    %9 = tpu.matmul %8, %6, %cst_8 {dimension_numbers = #tpu.dot_dimension_numbers<[1], [0], [0], [1], [0, 0, 1, 1], [], []>} : vector<72x288xbf16>, vector<288x64xbf16>, vector<72x64xf32> -> vector<72x64xf32>
    %c1 = arith.constant 1 : index
    %c0_9 = arith.constant 0 : index
    %c0_10 = arith.constant 0 : index
    %10 = vector.load %arg5[%c1, %c0_9, %c0_10] : memref<4x72x288xbf16, #tpu.memory_space<vmem>>, vector<1x72x288xbf16>
    %11 = vector.shape_cast %10 : vector<1x72x288xbf16> to vector<72x288xbf16>
    %cst_11 = arith.constant dense<0.000000e+00> : vector<72x64xf32>
    %12 = tpu.matmul %11, %6, %cst_11 {dimension_numbers = #tpu.dot_dimension_numbers<[1], [0], [0], [1], [0, 0, 1, 1], [], []>} : vector<72x288xbf16>, vector<288x64xbf16>, vector<72x64xf32> -> vector<72x64xf32>
    %13 = arith.maximumf %9, %12 : vector<72x64xf32>
    %c2 = arith.constant 2 : index
    %c0_12 = arith.constant 0 : index
    %c0_13 = arith.constant 0 : index
    %14 = vector.load %arg5[%c2, %c0_12, %c0_13] : memref<4x72x288xbf16, #tpu.memory_space<vmem>>, vector<1x72x288xbf16>
    %15 = vector.shape_cast %14 : vector<1x72x288xbf16> to vector<72x288xbf16>
    %cst_14 = arith.constant dense<0.000000e+00> : vector<72x64xf32>
    %16 = tpu.matmul %15, %6, %cst_14 {dimension_numbers = #tpu.dot_dimension_numbers<[1], [0], [0], [1], [0, 0, 1, 1], [], []>} : vector<72x288xbf16>, vector<288x64xbf16>, vector<72x64xf32> -> vector<72x64xf32>
    %17 = arith.maximumf %13, %16 : vector<72x64xf32>
    %c3 = arith.constant 3 : index
    %c0_15 = arith.constant 0 : index
    %c0_16 = arith.constant 0 : index
    %18 = vector.load %arg5[%c3, %c0_15, %c0_16] : memref<4x72x288xbf16, #tpu.memory_space<vmem>>, vector<1x72x288xbf16>
    %19 = vector.shape_cast %18 : vector<1x72x288xbf16> to vector<72x288xbf16>
    %cst_17 = arith.constant dense<0.000000e+00> : vector<72x64xf32>
    %20 = tpu.matmul %19, %6, %cst_17 {dimension_numbers = #tpu.dot_dimension_numbers<[1], [0], [0], [1], [0, 0, 1, 1], [], []>} : vector<72x288xbf16>, vector<288x64xbf16>, vector<72x64xf32> -> vector<72x64xf32>
    %21 = arith.maximumf %17, %20 : vector<72x64xf32>
    %c0_18 = arith.constant 0 : index
    %c0_19 = arith.constant 0 : index
    %22 = vector.load %arg3[%c0_18, %c0_19] : memref<1x64xf32, #tpu.memory_space<vmem>>, vector<1x64xf32>
    %c0_20 = arith.constant 0 : index
    %c0_21 = arith.constant 0 : index
    %23 = vector.load %arg4[%c0_20, %c0_21] : memref<1x64xf32, #tpu.memory_space<vmem>>, vector<1x64xf32>
    %cst_22 = arith.constant dense<0.000000e+00> : vector<64xf32>
    %24 = vector.multi_reduction <add>, %21, %cst_22 [0] : vector<72x64xf32> to vector<64xf32>
    %25 = vector.shape_cast %24 : vector<64xf32> to vector<1x64xf32>
    %cst_23 = arith.constant 7.200000e+01 : f32
    %26 = vector.broadcast %cst_23 : f32 to vector<1x64xf32>
    %27 = arith.divf %25, %26 : vector<1x64xf32>
    %28 = vector.broadcast %27 : vector<1x64xf32> to vector<72x64xf32>
    %29 = arith.subf %21, %28 : vector<72x64xf32>
    %30 = arith.mulf %29, %29 : vector<72x64xf32>
    %cst_24 = arith.constant dense<0.000000e+00> : vector<64xf32>
    %31 = vector.multi_reduction <add>, %30, %cst_24 [0] : vector<72x64xf32> to vector<64xf32>
    %32 = vector.shape_cast %31 : vector<64xf32> to vector<1x64xf32>
    %cst_25 = arith.constant 7.200000e+01 : f32
    %33 = vector.broadcast %cst_25 : f32 to vector<1x64xf32>
    %34 = arith.divf %32, %33 : vector<1x64xf32>
    %35 = vector.broadcast %27 : vector<1x64xf32> to vector<72x64xf32>
    %36 = arith.subf %21, %35 : vector<72x64xf32>
    %cst_26 = arith.constant 9.99999974E-6 : f32
    %37 = vector.broadcast %cst_26 : f32 to vector<1x64xf32>
    %38 = arith.addf %34, %37 : vector<1x64xf32>
    %39 = math.rsqrt %38 : vector<1x64xf32>
    %40 = vector.broadcast %39 : vector<1x64xf32> to vector<72x64xf32>
    %41 = arith.mulf %36, %40 : vector<72x64xf32>
    %42 = vector.broadcast %22 : vector<1x64xf32> to vector<72x64xf32>
    %43 = arith.mulf %41, %42 : vector<72x64xf32>
    %44 = vector.broadcast %23 : vector<1x64xf32> to vector<72x64xf32>
    %45 = arith.addf %43, %44 : vector<72x64xf32>
    %cst_27 = arith.constant 0.000000e+00 : f32
    %46 = vector.broadcast %cst_27 : f32 to vector<72x64xf32>
    %47 = arith.maximumf %45, %46 : vector<72x64xf32>
    %48 = arith.truncf %47 : vector<72x64xf32> to vector<72x64xbf16>
    %cst_28 = arith.constant 0.000000e+00 : f32
    %49 = vector.broadcast %cst_28 : f32 to vector<32x128xf32>
    %c0_29 = arith.constant 0 : index
    %c0_30 = arith.constant 0 : index
    %c0_31 = arith.constant 0 : index
    %50 = vector.load %arg6[%c0_29, %c0_30, %c0_31] : memref<9x32x72xbf16, #tpu.memory_space<vmem>>, vector<1x32x72xbf16>
    %51 = vector.shape_cast %50 : vector<1x32x72xbf16> to vector<32x72xbf16>
    %cst_32 = arith.constant dense<0.000000e+00> : vector<32x64xf32>
    %52 = tpu.matmul %51, %48, %cst_32 {dimension_numbers = #tpu.dot_dimension_numbers<[1], [0], [0], [1], [0, 0, 1, 1], [], []>} : vector<32x72xbf16>, vector<72x64xbf16>, vector<32x64xf32> -> vector<32x64xf32>
    %53 = arith.truncf %52 : vector<32x64xf32> to vector<32x64xbf16>
    %c0_33 = arith.constant 0 : index
    %c0_34 = arith.constant 0 : index
    %c0_35 = arith.constant 0 : index
    %54 = vector.load %arg8[%c0_33, %c0_34, %c0_35] : memref<9x64x128xbf16, #tpu.memory_space<vmem>>, vector<1x64x128xbf16>
    %55 = vector.shape_cast %54 : vector<1x64x128xbf16> to vector<64x128xbf16>
    %cst_36 = arith.constant dense<0.000000e+00> : vector<32x128xf32>
    %56 = tpu.matmul %53, %55, %cst_36 {dimension_numbers = #tpu.dot_dimension_numbers<[1], [0], [0], [1], [0, 0, 1, 1], [], []>} : vector<32x64xbf16>, vector<64x128xbf16>, vector<32x128xf32> -> vector<32x128xf32>
    %57 = arith.addf %49, %56 : vector<32x128xf32>
    %c1_37 = arith.constant 1 : index
    %c0_38 = arith.constant 0 : index
    %c0_39 = arith.constant 0 : index
    %58 = vector.load %arg6[%c1_37, %c0_38, %c0_39] : memref<9x32x72xbf16, #tpu.memory_space<vmem>>, vector<1x32x72xbf16>
    %59 = vector.shape_cast %58 : vector<1x32x72xbf16> to vector<32x72xbf16>
    %cst_40 = arith.constant dense<0.000000e+00> : vector<32x64xf32>
    %60 = tpu.matmul %59, %48, %cst_40 {dimension_numbers = #tpu.dot_dimension_numbers<[1], [0], [0], [1], [0, 0, 1, 1], [], []>} : vector<32x72xbf16>, vector<72x64xbf16>, vector<32x64xf32> -> vector<32x64xf32>
    %61 = arith.truncf %60 : vector<32x64xf32> to vector<32x64xbf16>
    %c1_41 = arith.constant 1 : index
    %c0_42 = arith.constant 0 : index
    %c0_43 = arith.constant 0 : index
    %62 = vector.load %arg8[%c1_41, %c0_42, %c0_43] : memref<9x64x128xbf16, #tpu.memory_space<vmem>>, vector<1x64x128xbf16>
    %63 = vector.shape_cast %62 : vector<1x64x128xbf16> to vector<64x128xbf16>
    %cst_44 = arith.constant dense<0.000000e+00> : vector<32x128xf32>
    %64 = tpu.matmul %61, %63, %cst_44 {dimension_numbers = #tpu.dot_dimension_numbers<[1], [0], [0], [1], [0, 0, 1, 1], [], []>} : vector<32x64xbf16>, vector<64x128xbf16>, vector<32x128xf32> -> vector<32x128xf32>
    %65 = arith.addf %57, %64 : vector<32x128xf32>
    %c2_45 = arith.constant 2 : index
    %c0_46 = arith.constant 0 : index
    %c0_47 = arith.constant 0 : index
    %66 = vector.load %arg6[%c2_45, %c0_46, %c0_47] : memref<9x32x72xbf16, #tpu.memory_space<vmem>>, vector<1x32x72xbf16>
    %67 = vector.shape_cast %66 : vector<1x32x72xbf16> to vector<32x72xbf16>
    %cst_48 = arith.constant dense<0.000000e+00> : vector<32x64xf32>
    %68 = tpu.matmul %67, %48, %cst_48 {dimension_numbers = #tpu.dot_dimension_numbers<[1], [0], [0], [1], [0, 0, 1, 1], [], []>} : vector<32x72xbf16>, vector<72x64xbf16>, vector<32x64xf32> -> vector<32x64xf32>
    %69 = arith.truncf %68 : vector<32x64xf32> to vector<32x64xbf16>
    %c2_49 = arith.constant 2 : index
    %c0_50 = arith.constant 0 : index
    %c0_51 = arith.constant 0 : index
    %70 = vector.load %arg8[%c2_49, %c0_50, %c0_51] : memref<9x64x128xbf16, #tpu.memory_space<vmem>>, vector<1x64x128xbf16>
    %71 = vector.shape_cast %70 : vector<1x64x128xbf16> to vector<64x128xbf16>
    %cst_52 = arith.constant dense<0.000000e+00> : vector<32x128xf32>
    %72 = tpu.matmul %69, %71, %cst_52 {dimension_numbers = #tpu.dot_dimension_numbers<[1], [0], [0], [1], [0, 0, 1, 1], [], []>} : vector<32x64xbf16>, vector<64x128xbf16>, vector<32x128xf32> -> vector<32x128xf32>
    %73 = arith.addf %65, %72 : vector<32x128xf32>
    %c3_53 = arith.constant 3 : index
    %c0_54 = arith.constant 0 : index
    %c0_55 = arith.constant 0 : index
    %74 = vector.load %arg6[%c3_53, %c0_54, %c0_55] : memref<9x32x72xbf16, #tpu.memory_space<vmem>>, vector<1x32x72xbf16>
    %75 = vector.shape_cast %74 : vector<1x32x72xbf16> to vector<32x72xbf16>
    %cst_56 = arith.constant dense<0.000000e+00> : vector<32x64xf32>
    %76 = tpu.matmul %75, %48, %cst_56 {dimension_numbers = #tpu.dot_dimension_numbers<[1], [0], [0], [1], [0, 0, 1, 1], [], []>} : vector<32x72xbf16>, vector<72x64xbf16>, vector<32x64xf32> -> vector<32x64xf32>
    %77 = arith.truncf %76 : vector<32x64xf32> to vector<32x64xbf16>
    %c3_57 = arith.constant 3 : index
    %c0_58 = arith.constant 0 : index
    %c0_59 = arith.constant 0 : index
    %78 = vector.load %arg8[%c3_57, %c0_58, %c0_59] : memref<9x64x128xbf16, #tpu.memory_space<vmem>>, vector<1x64x128xbf16>
    %79 = vector.shape_cast %78 : vector<1x64x128xbf16> to vector<64x128xbf16>
    %cst_60 = arith.constant dense<0.000000e+00> : vector<32x128xf32>
    %80 = tpu.matmul %77, %79, %cst_60 {dimension_numbers = #tpu.dot_dimension_numbers<[1], [0], [0], [1], [0, 0, 1, 1], [], []>} : vector<32x64xbf16>, vector<64x128xbf16>, vector<32x128xf32> -> vector<32x128xf32>
    %81 = arith.addf %73, %80 : vector<32x128xf32>
    %c4 = arith.constant 4 : index
    %c0_61 = arith.constant 0 : index
    %c0_62 = arith.constant 0 : index
    %82 = vector.load %arg6[%c4, %c0_61, %c0_62] : memref<9x32x72xbf16, #tpu.memory_space<vmem>>, vector<1x32x72xbf16>
    %83 = vector.shape_cast %82 : vector<1x32x72xbf16> to vector<32x72xbf16>
    %cst_63 = arith.constant dense<0.000000e+00> : vector<32x64xf32>
    %84 = tpu.matmul %83, %48, %cst_63 {dimension_numbers = #tpu.dot_dimension_numbers<[1], [0], [0], [1], [0, 0, 1, 1], [], []>} : vector<32x72xbf16>, vector<72x64xbf16>, vector<32x64xf32> -> vector<32x64xf32>
    %85 = arith.truncf %84 : vector<32x64xf32> to vector<32x64xbf16>
    %c4_64 = arith.constant 4 : index
    %c0_65 = arith.constant 0 : index
    %c0_66 = arith.constant 0 : index
    %86 = vector.load %arg8[%c4_64, %c0_65, %c0_66] : memref<9x64x128xbf16, #tpu.memory_space<vmem>>, vector<1x64x128xbf16>
    %87 = vector.shape_cast %86 : vector<1x64x128xbf16> to vector<64x128xbf16>
    %cst_67 = arith.constant dense<0.000000e+00> : vector<32x128xf32>
    %88 = tpu.matmul %85, %87, %cst_67 {dimension_numbers = #tpu.dot_dimension_numbers<[1], [0], [0], [1], [0, 0, 1, 1], [], []>} : vector<32x64xbf16>, vector<64x128xbf16>, vector<32x128xf32> -> vector<32x128xf32>
    %89 = arith.addf %81, %88 : vector<32x128xf32>
    %c5 = arith.constant 5 : index
    %c0_68 = arith.constant 0 : index
    %c0_69 = arith.constant 0 : index
    %90 = vector.load %arg6[%c5, %c0_68, %c0_69] : memref<9x32x72xbf16, #tpu.memory_space<vmem>>, vector<1x32x72xbf16>
    %91 = vector.shape_cast %90 : vector<1x32x72xbf16> to vector<32x72xbf16>
    %cst_70 = arith.constant dense<0.000000e+00> : vector<32x64xf32>
    %92 = tpu.matmul %91, %48, %cst_70 {dimension_numbers = #tpu.dot_dimension_numbers<[1], [0], [0], [1], [0, 0, 1, 1], [], []>} : vector<32x72xbf16>, vector<72x64xbf16>, vector<32x64xf32> -> vector<32x64xf32>
    %93 = arith.truncf %92 : vector<32x64xf32> to vector<32x64xbf16>
    %c5_71 = arith.constant 5 : index
    %c0_72 = arith.constant 0 : index
    %c0_73 = arith.constant 0 : index
    %94 = vector.load %arg8[%c5_71, %c0_72, %c0_73] : memref<9x64x128xbf16, #tpu.memory_space<vmem>>, vector<1x64x128xbf16>
    %95 = vector.shape_cast %94 : vector<1x64x128xbf16> to vector<64x128xbf16>
    %cst_74 = arith.constant dense<0.000000e+00> : vector<32x128xf32>
    %96 = tpu.matmul %93, %95, %cst_74 {dimension_numbers = #tpu.dot_dimension_numbers<[1], [0], [0], [1], [0, 0, 1, 1], [], []>} : vector<32x64xbf16>, vector<64x128xbf16>, vector<32x128xf32> -> vector<32x128xf32>
    %97 = arith.addf %89, %96 : vector<32x128xf32>
    %c6 = arith.constant 6 : index
    %c0_75 = arith.constant 0 : index
    %c0_76 = arith.constant 0 : index
    %98 = vector.load %arg6[%c6, %c0_75, %c0_76] : memref<9x32x72xbf16, #tpu.memory_space<vmem>>, vector<1x32x72xbf16>
    %99 = vector.shape_cast %98 : vector<1x32x72xbf16> to vector<32x72xbf16>
    %cst_77 = arith.constant dense<0.000000e+00> : vector<32x64xf32>
    %100 = tpu.matmul %99, %48, %cst_77 {dimension_numbers = #tpu.dot_dimension_numbers<[1], [0], [0], [1], [0, 0, 1, 1], [], []>} : vector<32x72xbf16>, vector<72x64xbf16>, vector<32x64xf32> -> vector<32x64xf32>
    %101 = arith.truncf %100 : vector<32x64xf32> to vector<32x64xbf16>
    %c6_78 = arith.constant 6 : index
    %c0_79 = arith.constant 0 : index
    %c0_80 = arith.constant 0 : index
    %102 = vector.load %arg8[%c6_78, %c0_79, %c0_80] : memref<9x64x128xbf16, #tpu.memory_space<vmem>>, vector<1x64x128xbf16>
    %103 = vector.shape_cast %102 : vector<1x64x128xbf16> to vector<64x128xbf16>
    %cst_81 = arith.constant dense<0.000000e+00> : vector<32x128xf32>
    %104 = tpu.matmul %101, %103, %cst_81 {dimension_numbers = #tpu.dot_dimension_numbers<[1], [0], [0], [1], [0, 0, 1, 1], [], []>} : vector<32x64xbf16>, vector<64x128xbf16>, vector<32x128xf32> -> vector<32x128xf32>
    %105 = arith.addf %97, %104 : vector<32x128xf32>
    %c7 = arith.constant 7 : index
    %c0_82 = arith.constant 0 : index
    %c0_83 = arith.constant 0 : index
    %106 = vector.load %arg6[%c7, %c0_82, %c0_83] : memref<9x32x72xbf16, #tpu.memory_space<vmem>>, vector<1x32x72xbf16>
    %107 = vector.shape_cast %106 : vector<1x32x72xbf16> to vector<32x72xbf16>
    %cst_84 = arith.constant dense<0.000000e+00> : vector<32x64xf32>
    %108 = tpu.matmul %107, %48, %cst_84 {dimension_numbers = #tpu.dot_dimension_numbers<[1], [0], [0], [1], [0, 0, 1, 1], [], []>} : vector<32x72xbf16>, vector<72x64xbf16>, vector<32x64xf32> -> vector<32x64xf32>
    %109 = arith.truncf %108 : vector<32x64xf32> to vector<32x64xbf16>
    %c7_85 = arith.constant 7 : index
    %c0_86 = arith.constant 0 : index
    %c0_87 = arith.constant 0 : index
    %110 = vector.load %arg8[%c7_85, %c0_86, %c0_87] : memref<9x64x128xbf16, #tpu.memory_space<vmem>>, vector<1x64x128xbf16>
    %111 = vector.shape_cast %110 : vector<1x64x128xbf16> to vector<64x128xbf16>
    %cst_88 = arith.constant dense<0.000000e+00> : vector<32x128xf32>
    %112 = tpu.matmul %109, %111, %cst_88 {dimension_numbers = #tpu.dot_dimension_numbers<[1], [0], [0], [1], [0, 0, 1, 1], [], []>} : vector<32x64xbf16>, vector<64x128xbf16>, vector<32x128xf32> -> vector<32x128xf32>
    %113 = arith.addf %105, %112 : vector<32x128xf32>
    %c8 = arith.constant 8 : index
    %c0_89 = arith.constant 0 : index
    %c0_90 = arith.constant 0 : index
    %114 = vector.load %arg6[%c8, %c0_89, %c0_90] : memref<9x32x72xbf16, #tpu.memory_space<vmem>>, vector<1x32x72xbf16>
    %115 = vector.shape_cast %114 : vector<1x32x72xbf16> to vector<32x72xbf16>
    %cst_91 = arith.constant dense<0.000000e+00> : vector<32x64xf32>
    %116 = tpu.matmul %115, %48, %cst_91 {dimension_numbers = #tpu.dot_dimension_numbers<[1], [0], [0], [1], [0, 0, 1, 1], [], []>} : vector<32x72xbf16>, vector<72x64xbf16>, vector<32x64xf32> -> vector<32x64xf32>
    %117 = arith.truncf %116 : vector<32x64xf32> to vector<32x64xbf16>
    %c8_92 = arith.constant 8 : index
    %c0_93 = arith.constant 0 : index
    %c0_94 = arith.constant 0 : index
    %118 = vector.load %arg8[%c8_92, %c0_93, %c0_94] : memref<9x64x128xbf16, #tpu.memory_space<vmem>>, vector<1x64x128xbf16>
    %119 = vector.shape_cast %118 : vector<1x64x128xbf16> to vector<64x128xbf16>
    %cst_95 = arith.constant dense<0.000000e+00> : vector<32x128xf32>
    %120 = tpu.matmul %117, %119, %cst_95 {dimension_numbers = #tpu.dot_dimension_numbers<[1], [0], [0], [1], [0, 0, 1, 1], [], []>} : vector<32x64xbf16>, vector<64x128xbf16>, vector<32x128xf32> -> vector<32x128xf32>
    %121 = arith.addf %113, %120 : vector<32x128xf32>
    %c0_96 = arith.constant 0 : index
    %c0_97 = arith.constant 0 : index
    %122 = vector.load %arg9[%c0_96, %c0_97] : memref<1x128xf32, #tpu.memory_space<vmem>>, vector<1x128xf32>
    %123 = vector.broadcast %122 : vector<1x128xf32> to vector<32x128xf32>
    %124 = arith.addf %121, %123 : vector<32x128xf32>
    %c0_98 = arith.constant 0 : index
    %c0_99 = arith.constant 0 : index
    %125 = vector.load %arg10[%c0_98, %c0_99] : memref<1x128xf32, #tpu.memory_space<vmem>>, vector<1x128xf32>
    %c0_100 = arith.constant 0 : index
    %c0_101 = arith.constant 0 : index
    %126 = vector.load %arg11[%c0_100, %c0_101] : memref<1x128xf32, #tpu.memory_space<vmem>>, vector<1x128xf32>
    %cst_102 = arith.constant dense<0.000000e+00> : vector<128xf32>
    %127 = vector.multi_reduction <add>, %124, %cst_102 [0] : vector<32x128xf32> to vector<128xf32>
    %128 = vector.shape_cast %127 : vector<128xf32> to vector<1x128xf32>
    %cst_103 = arith.constant 3.200000e+01 : f32
    %129 = vector.broadcast %cst_103 : f32 to vector<1x128xf32>
    %130 = arith.divf %128, %129 : vector<1x128xf32>
    %131 = vector.broadcast %130 : vector<1x128xf32> to vector<32x128xf32>
    %132 = arith.subf %124, %131 : vector<32x128xf32>
    %133 = arith.mulf %132, %132 : vector<32x128xf32>
    %cst_104 = arith.constant dense<0.000000e+00> : vector<128xf32>
    %134 = vector.multi_reduction <add>, %133, %cst_104 [0] : vector<32x128xf32> to vector<128xf32>
    %135 = vector.shape_cast %134 : vector<128xf32> to vector<1x128xf32>
    %cst_105 = arith.constant 3.200000e+01 : f32
    %136 = vector.broadcast %cst_105 : f32 to vector<1x128xf32>
    %137 = arith.divf %135, %136 : vector<1x128xf32>
    %138 = vector.broadcast %130 : vector<1x128xf32> to vector<32x128xf32>
    %139 = arith.subf %124, %138 : vector<32x128xf32>
    %cst_106 = arith.constant 9.99999974E-6 : f32
    %140 = vector.broadcast %cst_106 : f32 to vector<1x128xf32>
    %141 = arith.addf %137, %140 : vector<1x128xf32>
    %142 = math.rsqrt %141 : vector<1x128xf32>
    %143 = vector.broadcast %142 : vector<1x128xf32> to vector<32x128xf32>
    %144 = arith.mulf %139, %143 : vector<32x128xf32>
    %145 = vector.broadcast %125 : vector<1x128xf32> to vector<32x128xf32>
    %146 = arith.mulf %144, %145 : vector<32x128xf32>
    %147 = vector.broadcast %126 : vector<1x128xf32> to vector<32x128xf32>
    %148 = arith.addf %146, %147 : vector<32x128xf32>
    %149 = vector.extract_strided_slice %148 {offsets = [0, 0], sizes = [32, 64], strides = [1, 1]} : vector<32x128xf32> to vector<32x64xf32>
    %cst_107 = arith.constant 0.000000e+00 : f32
    %150 = vector.broadcast %cst_107 : f32 to vector<32x64xf32>
    %151 = arith.maximumf %149, %150 : vector<32x64xf32>
    %152 = arith.truncf %151 : vector<32x64xf32> to vector<32x64xbf16>
    %cst_108 = arith.constant 0.000000e+00 : f32
    %153 = vector.broadcast %cst_108 : f32 to vector<32x64xf32>
    %c0_109 = arith.constant 0 : index
    %c0_110 = arith.constant 0 : index
    %c0_111 = arith.constant 0 : index
    %154 = vector.load %arg7[%c0_109, %c0_110, %c0_111] : memref<9x32x32xbf16, #tpu.memory_space<vmem>>, vector<1x32x32xbf16>
    %155 = vector.shape_cast %154 : vector<1x32x32xbf16> to vector<32x32xbf16>
    %cst_112 = arith.constant dense<0.000000e+00> : vector<32x64xf32>
    %156 = tpu.matmul %155, %152, %cst_112 {dimension_numbers = #tpu.dot_dimension_numbers<[1], [0], [0], [1], [0, 0, 1, 1], [], []>} : vector<32x32xbf16>, vector<32x64xbf16>, vector<32x64xf32> -> vector<32x64xf32>
    %157 = arith.truncf %156 : vector<32x64xf32> to vector<32x64xbf16>
    %c0_113 = arith.constant 0 : index
    %c0_114 = arith.constant 0 : index
    %c0_115 = arith.constant 0 : index
    %158 = vector.load %arg12[%c0_113, %c0_114, %c0_115] : memref<9x64x64xbf16, #tpu.memory_space<vmem>>, vector<1x64x64xbf16>
    %159 = vector.shape_cast %158 : vector<1x64x64xbf16> to vector<64x64xbf16>
    %cst_116 = arith.constant dense<0.000000e+00> : vector<32x64xf32>
    %160 = tpu.matmul %157, %159, %cst_116 {dimension_numbers = #tpu.dot_dimension_numbers<[1], [0], [0], [1], [0, 0, 1, 1], [], []>} : vector<32x64xbf16>, vector<64x64xbf16>, vector<32x64xf32> -> vector<32x64xf32>
    %161 = arith.addf %153, %160 : vector<32x64xf32>
    %c1_117 = arith.constant 1 : index
    %c0_118 = arith.constant 0 : index
    %c0_119 = arith.constant 0 : index
    %162 = vector.load %arg7[%c1_117, %c0_118, %c0_119] : memref<9x32x32xbf16, #tpu.memory_space<vmem>>, vector<1x32x32xbf16>
    %163 = vector.shape_cast %162 : vector<1x32x32xbf16> to vector<32x32xbf16>
    %cst_120 = arith.constant dense<0.000000e+00> : vector<32x64xf32>
    %164 = tpu.matmul %163, %152, %cst_120 {dimension_numbers = #tpu.dot_dimension_numbers<[1], [0], [0], [1], [0, 0, 1, 1], [], []>} : vector<32x32xbf16>, vector<32x64xbf16>, vector<32x64xf32> -> vector<32x64xf32>
    %165 = arith.truncf %164 : vector<32x64xf32> to vector<32x64xbf16>
    %c1_121 = arith.constant 1 : index
    %c0_122 = arith.constant 0 : index
    %c0_123 = arith.constant 0 : index
    %166 = vector.load %arg12[%c1_121, %c0_122, %c0_123] : memref<9x64x64xbf16, #tpu.memory_space<vmem>>, vector<1x64x64xbf16>
    %167 = vector.shape_cast %166 : vector<1x64x64xbf16> to vector<64x64xbf16>
    %cst_124 = arith.constant dense<0.000000e+00> : vector<32x64xf32>
    %168 = tpu.matmul %165, %167, %cst_124 {dimension_numbers = #tpu.dot_dimension_numbers<[1], [0], [0], [1], [0, 0, 1, 1], [], []>} : vector<32x64xbf16>, vector<64x64xbf16>, vector<32x64xf32> -> vector<32x64xf32>
    %169 = arith.addf %161, %168 : vector<32x64xf32>
    %c2_125 = arith.constant 2 : index
    %c0_126 = arith.constant 0 : index
    %c0_127 = arith.constant 0 : index
    %170 = vector.load %arg7[%c2_125, %c0_126, %c0_127] : memref<9x32x32xbf16, #tpu.memory_space<vmem>>, vector<1x32x32xbf16>
    %171 = vector.shape_cast %170 : vector<1x32x32xbf16> to vector<32x32xbf16>
    %cst_128 = arith.constant dense<0.000000e+00> : vector<32x64xf32>
    %172 = tpu.matmul %171, %152, %cst_128 {dimension_numbers = #tpu.dot_dimension_numbers<[1], [0], [0], [1], [0, 0, 1, 1], [], []>} : vector<32x32xbf16>, vector<32x64xbf16>, vector<32x64xf32> -> vector<32x64xf32>
    %173 = arith.truncf %172 : vector<32x64xf32> to vector<32x64xbf16>
    %c2_129 = arith.constant 2 : index
    %c0_130 = arith.constant 0 : index
    %c0_131 = arith.constant 0 : index
    %174 = vector.load %arg12[%c2_129, %c0_130, %c0_131] : memref<9x64x64xbf16, #tpu.memory_space<vmem>>, vector<1x64x64xbf16>
    %175 = vector.shape_cast %174 : vector<1x64x64xbf16> to vector<64x64xbf16>
    %cst_132 = arith.constant dense<0.000000e+00> : vector<32x64xf32>
    %176 = tpu.matmul %173, %175, %cst_132 {dimension_numbers = #tpu.dot_dimension_numbers<[1], [0], [0], [1], [0, 0, 1, 1], [], []>} : vector<32x64xbf16>, vector<64x64xbf16>, vector<32x64xf32> -> vector<32x64xf32>
    %177 = arith.addf %169, %176 : vector<32x64xf32>
    %c3_133 = arith.constant 3 : index
    %c0_134 = arith.constant 0 : index
    %c0_135 = arith.constant 0 : index
    %178 = vector.load %arg7[%c3_133, %c0_134, %c0_135] : memref<9x32x32xbf16, #tpu.memory_space<vmem>>, vector<1x32x32xbf16>
    %179 = vector.shape_cast %178 : vector<1x32x32xbf16> to vector<32x32xbf16>
    %cst_136 = arith.constant dense<0.000000e+00> : vector<32x64xf32>
    %180 = tpu.matmul %179, %152, %cst_136 {dimension_numbers = #tpu.dot_dimension_numbers<[1], [0], [0], [1], [0, 0, 1, 1], [], []>} : vector<32x32xbf16>, vector<32x64xbf16>, vector<32x64xf32> -> vector<32x64xf32>
    %181 = arith.truncf %180 : vector<32x64xf32> to vector<32x64xbf16>
    %c3_137 = arith.constant 3 : index
    %c0_138 = arith.constant 0 : index
    %c0_139 = arith.constant 0 : index
    %182 = vector.load %arg12[%c3_137, %c0_138, %c0_139] : memref<9x64x64xbf16, #tpu.memory_space<vmem>>, vector<1x64x64xbf16>
    %183 = vector.shape_cast %182 : vector<1x64x64xbf16> to vector<64x64xbf16>
    %cst_140 = arith.constant dense<0.000000e+00> : vector<32x64xf32>
    %184 = tpu.matmul %181, %183, %cst_140 {dimension_numbers = #tpu.dot_dimension_numbers<[1], [0], [0], [1], [0, 0, 1, 1], [], []>} : vector<32x64xbf16>, vector<64x64xbf16>, vector<32x64xf32> -> vector<32x64xf32>
    %185 = arith.addf %177, %184 : vector<32x64xf32>
    %c4_141 = arith.constant 4 : index
    %c0_142 = arith.constant 0 : index
    %c0_143 = arith.constant 0 : index
    %186 = vector.load %arg7[%c4_141, %c0_142, %c0_143] : memref<9x32x32xbf16, #tpu.memory_space<vmem>>, vector<1x32x32xbf16>
    %187 = vector.shape_cast %186 : vector<1x32x32xbf16> to vector<32x32xbf16>
    %cst_144 = arith.constant dense<0.000000e+00> : vector<32x64xf32>
    %188 = tpu.matmul %187, %152, %cst_144 {dimension_numbers = #tpu.dot_dimension_numbers<[1], [0], [0], [1], [0, 0, 1, 1], [], []>} : vector<32x32xbf16>, vector<32x64xbf16>, vector<32x64xf32> -> vector<32x64xf32>
    %189 = arith.truncf %188 : vector<32x64xf32> to vector<32x64xbf16>
    %c4_145 = arith.constant 4 : index
    %c0_146 = arith.constant 0 : index
    %c0_147 = arith.constant 0 : index
    %190 = vector.load %arg12[%c4_145, %c0_146, %c0_147] : memref<9x64x64xbf16, #tpu.memory_space<vmem>>, vector<1x64x64xbf16>
    %191 = vector.shape_cast %190 : vector<1x64x64xbf16> to vector<64x64xbf16>
    %cst_148 = arith.constant dense<0.000000e+00> : vector<32x64xf32>
    %192 = tpu.matmul %189, %191, %cst_148 {dimension_numbers = #tpu.dot_dimension_numbers<[1], [0], [0], [1], [0, 0, 1, 1], [], []>} : vector<32x64xbf16>, vector<64x64xbf16>, vector<32x64xf32> -> vector<32x64xf32>
    %193 = arith.addf %185, %192 : vector<32x64xf32>
    %c5_149 = arith.constant 5 : index
    %c0_150 = arith.constant 0 : index
    %c0_151 = arith.constant 0 : index
    %194 = vector.load %arg7[%c5_149, %c0_150, %c0_151] : memref<9x32x32xbf16, #tpu.memory_space<vmem>>, vector<1x32x32xbf16>
    %195 = vector.shape_cast %194 : vector<1x32x32xbf16> to vector<32x32xbf16>
    %cst_152 = arith.constant dense<0.000000e+00> : vector<32x64xf32>
    %196 = tpu.matmul %195, %152, %cst_152 {dimension_numbers = #tpu.dot_dimension_numbers<[1], [0], [0], [1], [0, 0, 1, 1], [], []>} : vector<32x32xbf16>, vector<32x64xbf16>, vector<32x64xf32> -> vector<32x64xf32>
    %197 = arith.truncf %196 : vector<32x64xf32> to vector<32x64xbf16>
    %c5_153 = arith.constant 5 : index
    %c0_154 = arith.constant 0 : index
    %c0_155 = arith.constant 0 : index
    %198 = vector.load %arg12[%c5_153, %c0_154, %c0_155] : memref<9x64x64xbf16, #tpu.memory_space<vmem>>, vector<1x64x64xbf16>
    %199 = vector.shape_cast %198 : vector<1x64x64xbf16> to vector<64x64xbf16>
    %cst_156 = arith.constant dense<0.000000e+00> : vector<32x64xf32>
    %200 = tpu.matmul %197, %199, %cst_156 {dimension_numbers = #tpu.dot_dimension_numbers<[1], [0], [0], [1], [0, 0, 1, 1], [], []>} : vector<32x64xbf16>, vector<64x64xbf16>, vector<32x64xf32> -> vector<32x64xf32>
    %201 = arith.addf %193, %200 : vector<32x64xf32>
    %c6_157 = arith.constant 6 : index
    %c0_158 = arith.constant 0 : index
    %c0_159 = arith.constant 0 : index
    %202 = vector.load %arg7[%c6_157, %c0_158, %c0_159] : memref<9x32x32xbf16, #tpu.memory_space<vmem>>, vector<1x32x32xbf16>
    %203 = vector.shape_cast %202 : vector<1x32x32xbf16> to vector<32x32xbf16>
    %cst_160 = arith.constant dense<0.000000e+00> : vector<32x64xf32>
    %204 = tpu.matmul %203, %152, %cst_160 {dimension_numbers = #tpu.dot_dimension_numbers<[1], [0], [0], [1], [0, 0, 1, 1], [], []>} : vector<32x32xbf16>, vector<32x64xbf16>, vector<32x64xf32> -> vector<32x64xf32>
    %205 = arith.truncf %204 : vector<32x64xf32> to vector<32x64xbf16>
    %c6_161 = arith.constant 6 : index
    %c0_162 = arith.constant 0 : index
    %c0_163 = arith.constant 0 : index
    %206 = vector.load %arg12[%c6_161, %c0_162, %c0_163] : memref<9x64x64xbf16, #tpu.memory_space<vmem>>, vector<1x64x64xbf16>
    %207 = vector.shape_cast %206 : vector<1x64x64xbf16> to vector<64x64xbf16>
    %cst_164 = arith.constant dense<0.000000e+00> : vector<32x64xf32>
    %208 = tpu.matmul %205, %207, %cst_164 {dimension_numbers = #tpu.dot_dimension_numbers<[1], [0], [0], [1], [0, 0, 1, 1], [], []>} : vector<32x64xbf16>, vector<64x64xbf16>, vector<32x64xf32> -> vector<32x64xf32>
    %209 = arith.addf %201, %208 : vector<32x64xf32>
    %c7_165 = arith.constant 7 : index
    %c0_166 = arith.constant 0 : index
    %c0_167 = arith.constant 0 : index
    %210 = vector.load %arg7[%c7_165, %c0_166, %c0_167] : memref<9x32x32xbf16, #tpu.memory_space<vmem>>, vector<1x32x32xbf16>
    %211 = vector.shape_cast %210 : vector<1x32x32xbf16> to vector<32x32xbf16>
    %cst_168 = arith.constant dense<0.000000e+00> : vector<32x64xf32>
    %212 = tpu.matmul %211, %152, %cst_168 {dimension_numbers = #tpu.dot_dimension_numbers<[1], [0], [0], [1], [0, 0, 1, 1], [], []>} : vector<32x32xbf16>, vector<32x64xbf16>, vector<32x64xf32> -> vector<32x64xf32>
    %213 = arith.truncf %212 : vector<32x64xf32> to vector<32x64xbf16>
    %c7_169 = arith.constant 7 : index
    %c0_170 = arith.constant 0 : index
    %c0_171 = arith.constant 0 : index
    %214 = vector.load %arg12[%c7_169, %c0_170, %c0_171] : memref<9x64x64xbf16, #tpu.memory_space<vmem>>, vector<1x64x64xbf16>
    %215 = vector.shape_cast %214 : vector<1x64x64xbf16> to vector<64x64xbf16>
    %cst_172 = arith.constant dense<0.000000e+00> : vector<32x64xf32>
    %216 = tpu.matmul %213, %215, %cst_172 {dimension_numbers = #tpu.dot_dimension_numbers<[1], [0], [0], [1], [0, 0, 1, 1], [], []>} : vector<32x64xbf16>, vector<64x64xbf16>, vector<32x64xf32> -> vector<32x64xf32>
    %217 = arith.addf %209, %216 : vector<32x64xf32>
    %c8_173 = arith.constant 8 : index
    %c0_174 = arith.constant 0 : index
    %c0_175 = arith.constant 0 : index
    %218 = vector.load %arg7[%c8_173, %c0_174, %c0_175] : memref<9x32x32xbf16, #tpu.memory_space<vmem>>, vector<1x32x32xbf16>
    %219 = vector.shape_cast %218 : vector<1x32x32xbf16> to vector<32x32xbf16>
    %cst_176 = arith.constant dense<0.000000e+00> : vector<32x64xf32>
    %220 = tpu.matmul %219, %152, %cst_176 {dimension_numbers = #tpu.dot_dimension_numbers<[1], [0], [0], [1], [0, 0, 1, 1], [], []>} : vector<32x32xbf16>, vector<32x64xbf16>, vector<32x64xf32> -> vector<32x64xf32>
    %221 = arith.truncf %220 : vector<32x64xf32> to vector<32x64xbf16>
    %c8_177 = arith.constant 8 : index
    %c0_178 = arith.constant 0 : index
    %c0_179 = arith.constant 0 : index
    %222 = vector.load %arg12[%c8_177, %c0_178, %c0_179] : memref<9x64x64xbf16, #tpu.memory_space<vmem>>, vector<1x64x64xbf16>
    %223 = vector.shape_cast %222 : vector<1x64x64xbf16> to vector<64x64xbf16>
    %cst_180 = arith.constant dense<0.000000e+00> : vector<32x64xf32>
    %224 = tpu.matmul %221, %223, %cst_180 {dimension_numbers = #tpu.dot_dimension_numbers<[1], [0], [0], [1], [0, 0, 1, 1], [], []>} : vector<32x64xbf16>, vector<64x64xbf16>, vector<32x64xf32> -> vector<32x64xf32>
    %225 = arith.addf %217, %224 : vector<32x64xf32>
    %c0_181 = arith.constant 0 : index
    %c0_182 = arith.constant 0 : index
    %226 = vector.load %arg13[%c0_181, %c0_182] : memref<1x64xf32, #tpu.memory_space<vmem>>, vector<1x64xf32>
    %227 = vector.broadcast %226 : vector<1x64xf32> to vector<32x64xf32>
    %228 = arith.addf %225, %227 : vector<32x64xf32>
    %c0_183 = arith.constant 0 : index
    %c0_184 = arith.constant 0 : index
    %229 = vector.load %arg14[%c0_183, %c0_184] : memref<1x64xf32, #tpu.memory_space<vmem>>, vector<1x64xf32>
    %c0_185 = arith.constant 0 : index
    %c0_186 = arith.constant 0 : index
    %230 = vector.load %arg15[%c0_185, %c0_186] : memref<1x64xf32, #tpu.memory_space<vmem>>, vector<1x64xf32>
    %cst_187 = arith.constant dense<0.000000e+00> : vector<64xf32>
    %231 = vector.multi_reduction <add>, %228, %cst_187 [0] : vector<32x64xf32> to vector<64xf32>
    %232 = vector.shape_cast %231 : vector<64xf32> to vector<1x64xf32>
    %cst_188 = arith.constant 3.200000e+01 : f32
    %233 = vector.broadcast %cst_188 : f32 to vector<1x64xf32>
    %234 = arith.divf %232, %233 : vector<1x64xf32>
    %235 = vector.broadcast %234 : vector<1x64xf32> to vector<32x64xf32>
    %236 = arith.subf %228, %235 : vector<32x64xf32>
    %237 = arith.mulf %236, %236 : vector<32x64xf32>
    %cst_189 = arith.constant dense<0.000000e+00> : vector<64xf32>
    %238 = vector.multi_reduction <add>, %237, %cst_189 [0] : vector<32x64xf32> to vector<64xf32>
    %239 = vector.shape_cast %238 : vector<64xf32> to vector<1x64xf32>
    %cst_190 = arith.constant 3.200000e+01 : f32
    %240 = vector.broadcast %cst_190 : f32 to vector<1x64xf32>
    %241 = arith.divf %239, %240 : vector<1x64xf32>
    %242 = vector.broadcast %234 : vector<1x64xf32> to vector<32x64xf32>
    %243 = arith.subf %228, %242 : vector<32x64xf32>
    %cst_191 = arith.constant 9.99999974E-6 : f32
    %244 = vector.broadcast %cst_191 : f32 to vector<1x64xf32>
    %245 = arith.addf %241, %244 : vector<1x64xf32>
    %246 = math.rsqrt %245 : vector<1x64xf32>
    %247 = vector.broadcast %246 : vector<1x64xf32> to vector<32x64xf32>
    %248 = arith.mulf %243, %247 : vector<32x64xf32>
    %249 = vector.broadcast %229 : vector<1x64xf32> to vector<32x64xf32>
    %250 = arith.mulf %248, %249 : vector<32x64xf32>
    %251 = vector.broadcast %230 : vector<1x64xf32> to vector<32x64xf32>
    %252 = arith.addf %250, %251 : vector<32x64xf32>
    %253 = vector.extract_strided_slice %148 {offsets = [0, 64], sizes = [32, 64], strides = [1, 1]} : vector<32x128xf32> to vector<32x64xf32>
    %254 = arith.addf %252, %253 : vector<32x64xf32>
    %cst_192 = arith.constant 0.000000e+00 : f32
    %255 = vector.broadcast %cst_192 : f32 to vector<32x64xf32>
    %256 = arith.maximumf %254, %255 : vector<32x64xf32>
    %257 = arith.truncf %256 : vector<32x64xf32> to vector<32x64xbf16>
    %cst_193 = arith.constant 0.000000e+00 : f32
    %258 = vector.broadcast %cst_193 : f32 to vector<8x256xf32>
    %c0_194 = arith.constant 0 : index
    %c0_195 = arith.constant 0 : index
    %c0_196 = arith.constant 0 : index
    %259 = vector.load %arg16[%c0_194, %c0_195, %c0_196] : memref<9x8x32xbf16, #tpu.memory_space<vmem>>, vector<1x8x32xbf16>
    %260 = vector.shape_cast %259 : vector<1x8x32xbf16> to vector<8x32xbf16>
    %cst_197 = arith.constant dense<0.000000e+00> : vector<8x64xf32>
    %261 = tpu.matmul %260, %257, %cst_197 {dimension_numbers = #tpu.dot_dimension_numbers<[1], [0], [0], [1], [0, 0, 1, 1], [], []>} : vector<8x32xbf16>, vector<32x64xbf16>, vector<8x64xf32> -> vector<8x64xf32>
    %262 = arith.truncf %261 : vector<8x64xf32> to vector<8x64xbf16>
    %c0_198 = arith.constant 0 : index
    %c0_199 = arith.constant 0 : index
    %c0_200 = arith.constant 0 : index
    %263 = vector.load %arg18[%c0_198, %c0_199, %c0_200] : memref<9x64x256xbf16, #tpu.memory_space<vmem>>, vector<1x64x256xbf16>
    %264 = vector.shape_cast %263 : vector<1x64x256xbf16> to vector<64x256xbf16>
    %cst_201 = arith.constant dense<0.000000e+00> : vector<8x256xf32>
    %265 = tpu.matmul %262, %264, %cst_201 {dimension_numbers = #tpu.dot_dimension_numbers<[1], [0], [0], [1], [0, 0, 1, 1], [], []>} : vector<8x64xbf16>, vector<64x256xbf16>, vector<8x256xf32> -> vector<8x256xf32>
    %266 = arith.addf %258, %265 : vector<8x256xf32>
    %c1_202 = arith.constant 1 : index
    %c0_203 = arith.constant 0 : index
    %c0_204 = arith.constant 0 : index
    %267 = vector.load %arg16[%c1_202, %c0_203, %c0_204] : memref<9x8x32xbf16, #tpu.memory_space<vmem>>, vector<1x8x32xbf16>
    %268 = vector.shape_cast %267 : vector<1x8x32xbf16> to vector<8x32xbf16>
    %cst_205 = arith.constant dense<0.000000e+00> : vector<8x64xf32>
    %269 = tpu.matmul %268, %257, %cst_205 {dimension_numbers = #tpu.dot_dimension_numbers<[1], [0], [0], [1], [0, 0, 1, 1], [], []>} : vector<8x32xbf16>, vector<32x64xbf16>, vector<8x64xf32> -> vector<8x64xf32>
    %270 = arith.truncf %269 : vector<8x64xf32> to vector<8x64xbf16>
    %c1_206 = arith.constant 1 : index
    %c0_207 = arith.constant 0 : index
    %c0_208 = arith.constant 0 : index
    %271 = vector.load %arg18[%c1_206, %c0_207, %c0_208] : memref<9x64x256xbf16, #tpu.memory_space<vmem>>, vector<1x64x256xbf16>
    %272 = vector.shape_cast %271 : vector<1x64x256xbf16> to vector<64x256xbf16>
    %cst_209 = arith.constant dense<0.000000e+00> : vector<8x256xf32>
    %273 = tpu.matmul %270, %272, %cst_209 {dimension_numbers = #tpu.dot_dimension_numbers<[1], [0], [0], [1], [0, 0, 1, 1], [], []>} : vector<8x64xbf16>, vector<64x256xbf16>, vector<8x256xf32> -> vector<8x256xf32>
    %274 = arith.addf %266, %273 : vector<8x256xf32>
    %c2_210 = arith.constant 2 : index
    %c0_211 = arith.constant 0 : index
    %c0_212 = arith.constant 0 : index
    %275 = vector.load %arg16[%c2_210, %c0_211, %c0_212] : memref<9x8x32xbf16, #tpu.memory_space<vmem>>, vector<1x8x32xbf16>
    %276 = vector.shape_cast %275 : vector<1x8x32xbf16> to vector<8x32xbf16>
    %cst_213 = arith.constant dense<0.000000e+00> : vector<8x64xf32>
    %277 = tpu.matmul %276, %257, %cst_213 {dimension_numbers = #tpu.dot_dimension_numbers<[1], [0], [0], [1], [0, 0, 1, 1], [], []>} : vector<8x32xbf16>, vector<32x64xbf16>, vector<8x64xf32> -> vector<8x64xf32>
    %278 = arith.truncf %277 : vector<8x64xf32> to vector<8x64xbf16>
    %c2_214 = arith.constant 2 : index
    %c0_215 = arith.constant 0 : index
    %c0_216 = arith.constant 0 : index
    %279 = vector.load %arg18[%c2_214, %c0_215, %c0_216] : memref<9x64x256xbf16, #tpu.memory_space<vmem>>, vector<1x64x256xbf16>
    %280 = vector.shape_cast %279 : vector<1x64x256xbf16> to vector<64x256xbf16>
    %cst_217 = arith.constant dense<0.000000e+00> : vector<8x256xf32>
    %281 = tpu.matmul %278, %280, %cst_217 {dimension_numbers = #tpu.dot_dimension_numbers<[1], [0], [0], [1], [0, 0, 1, 1], [], []>} : vector<8x64xbf16>, vector<64x256xbf16>, vector<8x256xf32> -> vector<8x256xf32>
    %282 = arith.addf %274, %281 : vector<8x256xf32>
    %c3_218 = arith.constant 3 : index
    %c0_219 = arith.constant 0 : index
    %c0_220 = arith.constant 0 : index
    %283 = vector.load %arg16[%c3_218, %c0_219, %c0_220] : memref<9x8x32xbf16, #tpu.memory_space<vmem>>, vector<1x8x32xbf16>
    %284 = vector.shape_cast %283 : vector<1x8x32xbf16> to vector<8x32xbf16>
    %cst_221 = arith.constant dense<0.000000e+00> : vector<8x64xf32>
    %285 = tpu.matmul %284, %257, %cst_221 {dimension_numbers = #tpu.dot_dimension_numbers<[1], [0], [0], [1], [0, 0, 1, 1], [], []>} : vector<8x32xbf16>, vector<32x64xbf16>, vector<8x64xf32> -> vector<8x64xf32>
    %286 = arith.truncf %285 : vector<8x64xf32> to vector<8x64xbf16>
    %c3_222 = arith.constant 3 : index
    %c0_223 = arith.constant 0 : index
    %c0_224 = arith.constant 0 : index
    %287 = vector.load %arg18[%c3_222, %c0_223, %c0_224] : memref<9x64x256xbf16, #tpu.memory_space<vmem>>, vector<1x64x256xbf16>
    %288 = vector.shape_cast %287 : vector<1x64x256xbf16> to vector<64x256xbf16>
    %cst_225 = arith.constant dense<0.000000e+00> : vector<8x256xf32>
    %289 = tpu.matmul %286, %288, %cst_225 {dimension_numbers = #tpu.dot_dimension_numbers<[1], [0], [0], [1], [0, 0, 1, 1], [], []>} : vector<8x64xbf16>, vector<64x256xbf16>, vector<8x256xf32> -> vector<8x256xf32>
    %290 = arith.addf %282, %289 : vector<8x256xf32>
    %c4_226 = arith.constant 4 : index
    %c0_227 = arith.constant 0 : index
    %c0_228 = arith.constant 0 : index
    %291 = vector.load %arg16[%c4_226, %c0_227, %c0_228] : memref<9x8x32xbf16, #tpu.memory_space<vmem>>, vector<1x8x32xbf16>
    %292 = vector.shape_cast %291 : vector<1x8x32xbf16> to vector<8x32xbf16>
    %cst_229 = arith.constant dense<0.000000e+00> : vector<8x64xf32>
    %293 = tpu.matmul %292, %257, %cst_229 {dimension_numbers = #tpu.dot_dimension_numbers<[1], [0], [0], [1], [0, 0, 1, 1], [], []>} : vector<8x32xbf16>, vector<32x64xbf16>, vector<8x64xf32> -> vector<8x64xf32>
    %294 = arith.truncf %293 : vector<8x64xf32> to vector<8x64xbf16>
    %c4_230 = arith.constant 4 : index
    %c0_231 = arith.constant 0 : index
    %c0_232 = arith.constant 0 : index
    %295 = vector.load %arg18[%c4_230, %c0_231, %c0_232] : memref<9x64x256xbf16, #tpu.memory_space<vmem>>, vector<1x64x256xbf16>
    %296 = vector.shape_cast %295 : vector<1x64x256xbf16> to vector<64x256xbf16>
    %cst_233 = arith.constant dense<0.000000e+00> : vector<8x256xf32>
    %297 = tpu.matmul %294, %296, %cst_233 {dimension_numbers = #tpu.dot_dimension_numbers<[1], [0], [0], [1], [0, 0, 1, 1], [], []>} : vector<8x64xbf16>, vector<64x256xbf16>, vector<8x256xf32> -> vector<8x256xf32>
    %298 = arith.addf %290, %297 : vector<8x256xf32>
    %c5_234 = arith.constant 5 : index
    %c0_235 = arith.constant 0 : index
    %c0_236 = arith.constant 0 : index
    %299 = vector.load %arg16[%c5_234, %c0_235, %c0_236] : memref<9x8x32xbf16, #tpu.memory_space<vmem>>, vector<1x8x32xbf16>
    %300 = vector.shape_cast %299 : vector<1x8x32xbf16> to vector<8x32xbf16>
    %cst_237 = arith.constant dense<0.000000e+00> : vector<8x64xf32>
    %301 = tpu.matmul %300, %257, %cst_237 {dimension_numbers = #tpu.dot_dimension_numbers<[1], [0], [0], [1], [0, 0, 1, 1], [], []>} : vector<8x32xbf16>, vector<32x64xbf16>, vector<8x64xf32> -> vector<8x64xf32>
    %302 = arith.truncf %301 : vector<8x64xf32> to vector<8x64xbf16>
    %c5_238 = arith.constant 5 : index
    %c0_239 = arith.constant 0 : index
    %c0_240 = arith.constant 0 : index
    %303 = vector.load %arg18[%c5_238, %c0_239, %c0_240] : memref<9x64x256xbf16, #tpu.memory_space<vmem>>, vector<1x64x256xbf16>
    %304 = vector.shape_cast %303 : vector<1x64x256xbf16> to vector<64x256xbf16>
    %cst_241 = arith.constant dense<0.000000e+00> : vector<8x256xf32>
    %305 = tpu.matmul %302, %304, %cst_241 {dimension_numbers = #tpu.dot_dimension_numbers<[1], [0], [0], [1], [0, 0, 1, 1], [], []>} : vector<8x64xbf16>, vector<64x256xbf16>, vector<8x256xf32> -> vector<8x256xf32>
    %306 = arith.addf %298, %305 : vector<8x256xf32>
    %c6_242 = arith.constant 6 : index
    %c0_243 = arith.constant 0 : index
    %c0_244 = arith.constant 0 : index
    %307 = vector.load %arg16[%c6_242, %c0_243, %c0_244] : memref<9x8x32xbf16, #tpu.memory_space<vmem>>, vector<1x8x32xbf16>
    %308 = vector.shape_cast %307 : vector<1x8x32xbf16> to vector<8x32xbf16>
    %cst_245 = arith.constant dense<0.000000e+00> : vector<8x64xf32>
    %309 = tpu.matmul %308, %257, %cst_245 {dimension_numbers = #tpu.dot_dimension_numbers<[1], [0], [0], [1], [0, 0, 1, 1], [], []>} : vector<8x32xbf16>, vector<32x64xbf16>, vector<8x64xf32> -> vector<8x64xf32>
    %310 = arith.truncf %309 : vector<8x64xf32> to vector<8x64xbf16>
    %c6_246 = arith.constant 6 : index
    %c0_247 = arith.constant 0 : index
    %c0_248 = arith.constant 0 : index
    %311 = vector.load %arg18[%c6_246, %c0_247, %c0_248] : memref<9x64x256xbf16, #tpu.memory_space<vmem>>, vector<1x64x256xbf16>
    %312 = vector.shape_cast %311 : vector<1x64x256xbf16> to vector<64x256xbf16>
    %cst_249 = arith.constant dense<0.000000e+00> : vector<8x256xf32>
    %313 = tpu.matmul %310, %312, %cst_249 {dimension_numbers = #tpu.dot_dimension_numbers<[1], [0], [0], [1], [0, 0, 1, 1], [], []>} : vector<8x64xbf16>, vector<64x256xbf16>, vector<8x256xf32> -> vector<8x256xf32>
    %314 = arith.addf %306, %313 : vector<8x256xf32>
    %c7_250 = arith.constant 7 : index
    %c0_251 = arith.constant 0 : index
    %c0_252 = arith.constant 0 : index
    %315 = vector.load %arg16[%c7_250, %c0_251, %c0_252] : memref<9x8x32xbf16, #tpu.memory_space<vmem>>, vector<1x8x32xbf16>
    %316 = vector.shape_cast %315 : vector<1x8x32xbf16> to vector<8x32xbf16>
    %cst_253 = arith.constant dense<0.000000e+00> : vector<8x64xf32>
    %317 = tpu.matmul %316, %257, %cst_253 {dimension_numbers = #tpu.dot_dimension_numbers<[1], [0], [0], [1], [0, 0, 1, 1], [], []>} : vector<8x32xbf16>, vector<32x64xbf16>, vector<8x64xf32> -> vector<8x64xf32>
    %318 = arith.truncf %317 : vector<8x64xf32> to vector<8x64xbf16>
    %c7_254 = arith.constant 7 : index
    %c0_255 = arith.constant 0 : index
    %c0_256 = arith.constant 0 : index
    %319 = vector.load %arg18[%c7_254, %c0_255, %c0_256] : memref<9x64x256xbf16, #tpu.memory_space<vmem>>, vector<1x64x256xbf16>
    %320 = vector.shape_cast %319 : vector<1x64x256xbf16> to vector<64x256xbf16>
    %cst_257 = arith.constant dense<0.000000e+00> : vector<8x256xf32>
    %321 = tpu.matmul %318, %320, %cst_257 {dimension_numbers = #tpu.dot_dimension_numbers<[1], [0], [0], [1], [0, 0, 1, 1], [], []>} : vector<8x64xbf16>, vector<64x256xbf16>, vector<8x256xf32> -> vector<8x256xf32>
    %322 = arith.addf %314, %321 : vector<8x256xf32>
    %c8_258 = arith.constant 8 : index
    %c0_259 = arith.constant 0 : index
    %c0_260 = arith.constant 0 : index
    %323 = vector.load %arg16[%c8_258, %c0_259, %c0_260] : memref<9x8x32xbf16, #tpu.memory_space<vmem>>, vector<1x8x32xbf16>
    %324 = vector.shape_cast %323 : vector<1x8x32xbf16> to vector<8x32xbf16>
    %cst_261 = arith.constant dense<0.000000e+00> : vector<8x64xf32>
    %325 = tpu.matmul %324, %257, %cst_261 {dimension_numbers = #tpu.dot_dimension_numbers<[1], [0], [0], [1], [0, 0, 1, 1], [], []>} : vector<8x32xbf16>, vector<32x64xbf16>, vector<8x64xf32> -> vector<8x64xf32>
    %326 = arith.truncf %325 : vector<8x64xf32> to vector<8x64xbf16>
    %c8_262 = arith.constant 8 : index
    %c0_263 = arith.constant 0 : index
    %c0_264 = arith.constant 0 : index
    %327 = vector.load %arg18[%c8_262, %c0_263, %c0_264] : memref<9x64x256xbf16, #tpu.memory_space<vmem>>, vector<1x64x256xbf16>
    %328 = vector.shape_cast %327 : vector<1x64x256xbf16> to vector<64x256xbf16>
    %cst_265 = arith.constant dense<0.000000e+00> : vector<8x256xf32>
    %329 = tpu.matmul %326, %328, %cst_265 {dimension_numbers = #tpu.dot_dimension_numbers<[1], [0], [0], [1], [0, 0, 1, 1], [], []>} : vector<8x64xbf16>, vector<64x256xbf16>, vector<8x256xf32> -> vector<8x256xf32>
    %330 = arith.addf %322, %329 : vector<8x256xf32>
    %c0_266 = arith.constant 0 : index
    %c0_267 = arith.constant 0 : index
    %331 = vector.load %arg19[%c0_266, %c0_267] : memref<1x256xf32, #tpu.memory_space<vmem>>, vector<1x256xf32>
    %332 = vector.broadcast %331 : vector<1x256xf32> to vector<8x256xf32>
    %333 = arith.addf %330, %332 : vector<8x256xf32>
    %c0_268 = arith.constant 0 : index
    %c0_269 = arith.constant 0 : index
    %334 = vector.load %arg20[%c0_268, %c0_269] : memref<1x256xf32, #tpu.memory_space<vmem>>, vector<1x256xf32>
    %c0_270 = arith.constant 0 : index
    %c0_271 = arith.constant 0 : index
    %335 = vector.load %arg21[%c0_270, %c0_271] : memref<1x256xf32, #tpu.memory_space<vmem>>, vector<1x256xf32>
    %cst_272 = arith.constant dense<0.000000e+00> : vector<256xf32>
    %336 = vector.multi_reduction <add>, %333, %cst_272 [0] : vector<8x256xf32> to vector<256xf32>
    %337 = vector.shape_cast %336 : vector<256xf32> to vector<1x256xf32>
    %cst_273 = arith.constant 8.000000e+00 : f32
    %338 = vector.broadcast %cst_273 : f32 to vector<1x256xf32>
    %339 = arith.divf %337, %338 : vector<1x256xf32>
    %340 = vector.broadcast %339 : vector<1x256xf32> to vector<8x256xf32>
    %341 = arith.subf %333, %340 : vector<8x256xf32>
    %342 = arith.mulf %341, %341 : vector<8x256xf32>
    %cst_274 = arith.constant dense<0.000000e+00> : vector<256xf32>
    %343 = vector.multi_reduction <add>, %342, %cst_274 [0] : vector<8x256xf32> to vector<256xf32>
    %344 = vector.shape_cast %343 : vector<256xf32> to vector<1x256xf32>
    %cst_275 = arith.constant 8.000000e+00 : f32
    %345 = vector.broadcast %cst_275 : f32 to vector<1x256xf32>
    %346 = arith.divf %344, %345 : vector<1x256xf32>
    %347 = vector.broadcast %339 : vector<1x256xf32> to vector<8x256xf32>
    %348 = arith.subf %333, %347 : vector<8x256xf32>
    %cst_276 = arith.constant 9.99999974E-6 : f32
    %349 = vector.broadcast %cst_276 : f32 to vector<1x256xf32>
    %350 = arith.addf %346, %349 : vector<1x256xf32>
    %351 = math.rsqrt %350 : vector<1x256xf32>
    %352 = vector.broadcast %351 : vector<1x256xf32> to vector<8x256xf32>
    %353 = arith.mulf %348, %352 : vector<8x256xf32>
    %354 = vector.broadcast %334 : vector<1x256xf32> to vector<8x256xf32>
    %355 = arith.mulf %353, %354 : vector<8x256xf32>
    %356 = vector.broadcast %335 : vector<1x256xf32> to vector<8x256xf32>
    %357 = arith.addf %355, %356 : vector<8x256xf32>
    %358 = vector.extract_strided_slice %357 {offsets = [0, 0], sizes = [8, 128], strides = [1, 1]} : vector<8x256xf32> to vector<8x128xf32>
    %cst_277 = arith.constant 0.000000e+00 : f32
    %359 = vector.broadcast %cst_277 : f32 to vector<8x128xf32>
    %360 = arith.maximumf %358, %359 : vector<8x128xf32>
    %361 = arith.truncf %360 : vector<8x128xf32> to vector<8x128xbf16>
    %cst_278 = arith.constant 0.000000e+00 : f32
    %362 = vector.broadcast %cst_278 : f32 to vector<8x128xf32>
    %c0_279 = arith.constant 0 : index
    %c0_280 = arith.constant 0 : index
    %c0_281 = arith.constant 0 : index
    %363 = vector.load %arg17[%c0_279, %c0_280, %c0_281] : memref<9x8x8xbf16, #tpu.memory_space<vmem>>, vector<1x8x8xbf16>
    %364 = vector.shape_cast %363 : vector<1x8x8xbf16> to vector<8x8xbf16>
    %cst_282 = arith.constant dense<0.000000e+00> : vector<8x128xf32>
    %365 = tpu.matmul %364, %361, %cst_282 {dimension_numbers = #tpu.dot_dimension_numbers<[1], [0], [0], [1], [0, 0, 1, 1], [], []>} : vector<8x8xbf16>, vector<8x128xbf16>, vector<8x128xf32> -> vector<8x128xf32>
    %366 = arith.truncf %365 : vector<8x128xf32> to vector<8x128xbf16>
    %c0_283 = arith.constant 0 : index
    %c0_284 = arith.constant 0 : index
    %c0_285 = arith.constant 0 : index
    %367 = vector.load %arg22[%c0_283, %c0_284, %c0_285] : memref<9x128x128xbf16, #tpu.memory_space<vmem>>, vector<1x128x128xbf16>
    %368 = vector.shape_cast %367 : vector<1x128x128xbf16> to vector<128x128xbf16>
    %cst_286 = arith.constant dense<0.000000e+00> : vector<8x128xf32>
    %369 = tpu.matmul %366, %368, %cst_286 {dimension_numbers = #tpu.dot_dimension_numbers<[1], [0], [0], [1], [0, 0, 1, 1], [], []>} : vector<8x128xbf16>, vector<128x128xbf16>, vector<8x128xf32> -> vector<8x128xf32>
    %370 = arith.addf %362, %369 : vector<8x128xf32>
    %c1_287 = arith.constant 1 : index
    %c0_288 = arith.constant 0 : index
    %c0_289 = arith.constant 0 : index
    %371 = vector.load %arg17[%c1_287, %c0_288, %c0_289] : memref<9x8x8xbf16, #tpu.memory_space<vmem>>, vector<1x8x8xbf16>
    %372 = vector.shape_cast %371 : vector<1x8x8xbf16> to vector<8x8xbf16>
    %cst_290 = arith.constant dense<0.000000e+00> : vector<8x128xf32>
    %373 = tpu.matmul %372, %361, %cst_290 {dimension_numbers = #tpu.dot_dimension_numbers<[1], [0], [0], [1], [0, 0, 1, 1], [], []>} : vector<8x8xbf16>, vector<8x128xbf16>, vector<8x128xf32> -> vector<8x128xf32>
    %374 = arith.truncf %373 : vector<8x128xf32> to vector<8x128xbf16>
    %c1_291 = arith.constant 1 : index
    %c0_292 = arith.constant 0 : index
    %c0_293 = arith.constant 0 : index
    %375 = vector.load %arg22[%c1_291, %c0_292, %c0_293] : memref<9x128x128xbf16, #tpu.memory_space<vmem>>, vector<1x128x128xbf16>
    %376 = vector.shape_cast %375 : vector<1x128x128xbf16> to vector<128x128xbf16>
    %cst_294 = arith.constant dense<0.000000e+00> : vector<8x128xf32>
    %377 = tpu.matmul %374, %376, %cst_294 {dimension_numbers = #tpu.dot_dimension_numbers<[1], [0], [0], [1], [0, 0, 1, 1], [], []>} : vector<8x128xbf16>, vector<128x128xbf16>, vector<8x128xf32> -> vector<8x128xf32>
    %378 = arith.addf %370, %377 : vector<8x128xf32>
    %c2_295 = arith.constant 2 : index
    %c0_296 = arith.constant 0 : index
    %c0_297 = arith.constant 0 : index
    %379 = vector.load %arg17[%c2_295, %c0_296, %c0_297] : memref<9x8x8xbf16, #tpu.memory_space<vmem>>, vector<1x8x8xbf16>
    %380 = vector.shape_cast %379 : vector<1x8x8xbf16> to vector<8x8xbf16>
    %cst_298 = arith.constant dense<0.000000e+00> : vector<8x128xf32>
    %381 = tpu.matmul %380, %361, %cst_298 {dimension_numbers = #tpu.dot_dimension_numbers<[1], [0], [0], [1], [0, 0, 1, 1], [], []>} : vector<8x8xbf16>, vector<8x128xbf16>, vector<8x128xf32> -> vector<8x128xf32>
    %382 = arith.truncf %381 : vector<8x128xf32> to vector<8x128xbf16>
    %c2_299 = arith.constant 2 : index
    %c0_300 = arith.constant 0 : index
    %c0_301 = arith.constant 0 : index
    %383 = vector.load %arg22[%c2_299, %c0_300, %c0_301] : memref<9x128x128xbf16, #tpu.memory_space<vmem>>, vector<1x128x128xbf16>
    %384 = vector.shape_cast %383 : vector<1x128x128xbf16> to vector<128x128xbf16>
    %cst_302 = arith.constant dense<0.000000e+00> : vector<8x128xf32>
    %385 = tpu.matmul %382, %384, %cst_302 {dimension_numbers = #tpu.dot_dimension_numbers<[1], [0], [0], [1], [0, 0, 1, 1], [], []>} : vector<8x128xbf16>, vector<128x128xbf16>, vector<8x128xf32> -> vector<8x128xf32>
    %386 = arith.addf %378, %385 : vector<8x128xf32>
    %c3_303 = arith.constant 3 : index
    %c0_304 = arith.constant 0 : index
    %c0_305 = arith.constant 0 : index
    %387 = vector.load %arg17[%c3_303, %c0_304, %c0_305] : memref<9x8x8xbf16, #tpu.memory_space<vmem>>, vector<1x8x8xbf16>
    %388 = vector.shape_cast %387 : vector<1x8x8xbf16> to vector<8x8xbf16>
    %cst_306 = arith.constant dense<0.000000e+00> : vector<8x128xf32>
    %389 = tpu.matmul %388, %361, %cst_306 {dimension_numbers = #tpu.dot_dimension_numbers<[1], [0], [0], [1], [0, 0, 1, 1], [], []>} : vector<8x8xbf16>, vector<8x128xbf16>, vector<8x128xf32> -> vector<8x128xf32>
    %390 = arith.truncf %389 : vector<8x128xf32> to vector<8x128xbf16>
    %c3_307 = arith.constant 3 : index
    %c0_308 = arith.constant 0 : index
    %c0_309 = arith.constant 0 : index
    %391 = vector.load %arg22[%c3_307, %c0_308, %c0_309] : memref<9x128x128xbf16, #tpu.memory_space<vmem>>, vector<1x128x128xbf16>
    %392 = vector.shape_cast %391 : vector<1x128x128xbf16> to vector<128x128xbf16>
    %cst_310 = arith.constant dense<0.000000e+00> : vector<8x128xf32>
    %393 = tpu.matmul %390, %392, %cst_310 {dimension_numbers = #tpu.dot_dimension_numbers<[1], [0], [0], [1], [0, 0, 1, 1], [], []>} : vector<8x128xbf16>, vector<128x128xbf16>, vector<8x128xf32> -> vector<8x128xf32>
    %394 = arith.addf %386, %393 : vector<8x128xf32>
    %c4_311 = arith.constant 4 : index
    %c0_312 = arith.constant 0 : index
    %c0_313 = arith.constant 0 : index
    %395 = vector.load %arg17[%c4_311, %c0_312, %c0_313] : memref<9x8x8xbf16, #tpu.memory_space<vmem>>, vector<1x8x8xbf16>
    %396 = vector.shape_cast %395 : vector<1x8x8xbf16> to vector<8x8xbf16>
    %cst_314 = arith.constant dense<0.000000e+00> : vector<8x128xf32>
    %397 = tpu.matmul %396, %361, %cst_314 {dimension_numbers = #tpu.dot_dimension_numbers<[1], [0], [0], [1], [0, 0, 1, 1], [], []>} : vector<8x8xbf16>, vector<8x128xbf16>, vector<8x128xf32> -> vector<8x128xf32>
    %398 = arith.truncf %397 : vector<8x128xf32> to vector<8x128xbf16>
    %c4_315 = arith.constant 4 : index
    %c0_316 = arith.constant 0 : index
    %c0_317 = arith.constant 0 : index
    %399 = vector.load %arg22[%c4_315, %c0_316, %c0_317] : memref<9x128x128xbf16, #tpu.memory_space<vmem>>, vector<1x128x128xbf16>
    %400 = vector.shape_cast %399 : vector<1x128x128xbf16> to vector<128x128xbf16>
    %cst_318 = arith.constant dense<0.000000e+00> : vector<8x128xf32>
    %401 = tpu.matmul %398, %400, %cst_318 {dimension_numbers = #tpu.dot_dimension_numbers<[1], [0], [0], [1], [0, 0, 1, 1], [], []>} : vector<8x128xbf16>, vector<128x128xbf16>, vector<8x128xf32> -> vector<8x128xf32>
    %402 = arith.addf %394, %401 : vector<8x128xf32>
    %c5_319 = arith.constant 5 : index
    %c0_320 = arith.constant 0 : index
    %c0_321 = arith.constant 0 : index
    %403 = vector.load %arg17[%c5_319, %c0_320, %c0_321] : memref<9x8x8xbf16, #tpu.memory_space<vmem>>, vector<1x8x8xbf16>
    %404 = vector.shape_cast %403 : vector<1x8x8xbf16> to vector<8x8xbf16>
    %cst_322 = arith.constant dense<0.000000e+00> : vector<8x128xf32>
    %405 = tpu.matmul %404, %361, %cst_322 {dimension_numbers = #tpu.dot_dimension_numbers<[1], [0], [0], [1], [0, 0, 1, 1], [], []>} : vector<8x8xbf16>, vector<8x128xbf16>, vector<8x128xf32> -> vector<8x128xf32>
    %406 = arith.truncf %405 : vector<8x128xf32> to vector<8x128xbf16>
    %c5_323 = arith.constant 5 : index
    %c0_324 = arith.constant 0 : index
    %c0_325 = arith.constant 0 : index
    %407 = vector.load %arg22[%c5_323, %c0_324, %c0_325] : memref<9x128x128xbf16, #tpu.memory_space<vmem>>, vector<1x128x128xbf16>
    %408 = vector.shape_cast %407 : vector<1x128x128xbf16> to vector<128x128xbf16>
    %cst_326 = arith.constant dense<0.000000e+00> : vector<8x128xf32>
    %409 = tpu.matmul %406, %408, %cst_326 {dimension_numbers = #tpu.dot_dimension_numbers<[1], [0], [0], [1], [0, 0, 1, 1], [], []>} : vector<8x128xbf16>, vector<128x128xbf16>, vector<8x128xf32> -> vector<8x128xf32>
    %410 = arith.addf %402, %409 : vector<8x128xf32>
    %c6_327 = arith.constant 6 : index
    %c0_328 = arith.constant 0 : index
    %c0_329 = arith.constant 0 : index
    %411 = vector.load %arg17[%c6_327, %c0_328, %c0_329] : memref<9x8x8xbf16, #tpu.memory_space<vmem>>, vector<1x8x8xbf16>
    %412 = vector.shape_cast %411 : vector<1x8x8xbf16> to vector<8x8xbf16>
    %cst_330 = arith.constant dense<0.000000e+00> : vector<8x128xf32>
    %413 = tpu.matmul %412, %361, %cst_330 {dimension_numbers = #tpu.dot_dimension_numbers<[1], [0], [0], [1], [0, 0, 1, 1], [], []>} : vector<8x8xbf16>, vector<8x128xbf16>, vector<8x128xf32> -> vector<8x128xf32>
    %414 = arith.truncf %413 : vector<8x128xf32> to vector<8x128xbf16>
    %c6_331 = arith.constant 6 : index
    %c0_332 = arith.constant 0 : index
    %c0_333 = arith.constant 0 : index
    %415 = vector.load %arg22[%c6_331, %c0_332, %c0_333] : memref<9x128x128xbf16, #tpu.memory_space<vmem>>, vector<1x128x128xbf16>
    %416 = vector.shape_cast %415 : vector<1x128x128xbf16> to vector<128x128xbf16>
    %cst_334 = arith.constant dense<0.000000e+00> : vector<8x128xf32>
    %417 = tpu.matmul %414, %416, %cst_334 {dimension_numbers = #tpu.dot_dimension_numbers<[1], [0], [0], [1], [0, 0, 1, 1], [], []>} : vector<8x128xbf16>, vector<128x128xbf16>, vector<8x128xf32> -> vector<8x128xf32>
    %418 = arith.addf %410, %417 : vector<8x128xf32>
    %c7_335 = arith.constant 7 : index
    %c0_336 = arith.constant 0 : index
    %c0_337 = arith.constant 0 : index
    %419 = vector.load %arg17[%c7_335, %c0_336, %c0_337] : memref<9x8x8xbf16, #tpu.memory_space<vmem>>, vector<1x8x8xbf16>
    %420 = vector.shape_cast %419 : vector<1x8x8xbf16> to vector<8x8xbf16>
    %cst_338 = arith.constant dense<0.000000e+00> : vector<8x128xf32>
    %421 = tpu.matmul %420, %361, %cst_338 {dimension_numbers = #tpu.dot_dimension_numbers<[1], [0], [0], [1], [0, 0, 1, 1], [], []>} : vector<8x8xbf16>, vector<8x128xbf16>, vector<8x128xf32> -> vector<8x128xf32>
    %422 = arith.truncf %421 : vector<8x128xf32> to vector<8x128xbf16>
    %c7_339 = arith.constant 7 : index
    %c0_340 = arith.constant 0 : index
    %c0_341 = arith.constant 0 : index
    %423 = vector.load %arg22[%c7_339, %c0_340, %c0_341] : memref<9x128x128xbf16, #tpu.memory_space<vmem>>, vector<1x128x128xbf16>
    %424 = vector.shape_cast %423 : vector<1x128x128xbf16> to vector<128x128xbf16>
    %cst_342 = arith.constant dense<0.000000e+00> : vector<8x128xf32>
    %425 = tpu.matmul %422, %424, %cst_342 {dimension_numbers = #tpu.dot_dimension_numbers<[1], [0], [0], [1], [0, 0, 1, 1], [], []>} : vector<8x128xbf16>, vector<128x128xbf16>, vector<8x128xf32> -> vector<8x128xf32>
    %426 = arith.addf %418, %425 : vector<8x128xf32>
    %c8_343 = arith.constant 8 : index
    %c0_344 = arith.constant 0 : index
    %c0_345 = arith.constant 0 : index
    %427 = vector.load %arg17[%c8_343, %c0_344, %c0_345] : memref<9x8x8xbf16, #tpu.memory_space<vmem>>, vector<1x8x8xbf16>
    %428 = vector.shape_cast %427 : vector<1x8x8xbf16> to vector<8x8xbf16>
    %cst_346 = arith.constant dense<0.000000e+00> : vector<8x128xf32>
    %429 = tpu.matmul %428, %361, %cst_346 {dimension_numbers = #tpu.dot_dimension_numbers<[1], [0], [0], [1], [0, 0, 1, 1], [], []>} : vector<8x8xbf16>, vector<8x128xbf16>, vector<8x128xf32> -> vector<8x128xf32>
    %430 = arith.truncf %429 : vector<8x128xf32> to vector<8x128xbf16>
    %c8_347 = arith.constant 8 : index
    %c0_348 = arith.constant 0 : index
    %c0_349 = arith.constant 0 : index
    %431 = vector.load %arg22[%c8_347, %c0_348, %c0_349] : memref<9x128x128xbf16, #tpu.memory_space<vmem>>, vector<1x128x128xbf16>
    %432 = vector.shape_cast %431 : vector<1x128x128xbf16> to vector<128x128xbf16>
    %cst_350 = arith.constant dense<0.000000e+00> : vector<8x128xf32>
    %433 = tpu.matmul %430, %432, %cst_350 {dimension_numbers = #tpu.dot_dimension_numbers<[1], [0], [0], [1], [0, 0, 1, 1], [], []>} : vector<8x128xbf16>, vector<128x128xbf16>, vector<8x128xf32> -> vector<8x128xf32>
    %434 = arith.addf %426, %433 : vector<8x128xf32>
    %c0_351 = arith.constant 0 : index
    %c0_352 = arith.constant 0 : index
    %435 = vector.load %arg23[%c0_351, %c0_352] : memref<1x128xf32, #tpu.memory_space<vmem>>, vector<1x128xf32>
    %436 = vector.broadcast %435 : vector<1x128xf32> to vector<8x128xf32>
    %437 = arith.addf %434, %436 : vector<8x128xf32>
    %c0_353 = arith.constant 0 : index
    %c0_354 = arith.constant 0 : index
    %438 = vector.load %arg24[%c0_353, %c0_354] : memref<1x128xf32, #tpu.memory_space<vmem>>, vector<1x128xf32>
    %c0_355 = arith.constant 0 : index
    %c0_356 = arith.constant 0 : index
    %439 = vector.load %arg25[%c0_355, %c0_356] : memref<1x128xf32, #tpu.memory_space<vmem>>, vector<1x128xf32>
    %cst_357 = arith.constant dense<0.000000e+00> : vector<128xf32>
    %440 = vector.multi_reduction <add>, %437, %cst_357 [0] : vector<8x128xf32> to vector<128xf32>
    %441 = vector.shape_cast %440 : vector<128xf32> to vector<1x128xf32>
    %cst_358 = arith.constant 8.000000e+00 : f32
    %442 = vector.broadcast %cst_358 : f32 to vector<1x128xf32>
    %443 = arith.divf %441, %442 : vector<1x128xf32>
    %444 = vector.broadcast %443 : vector<1x128xf32> to vector<8x128xf32>
    %445 = arith.subf %437, %444 : vector<8x128xf32>
    %446 = arith.mulf %445, %445 : vector<8x128xf32>
    %cst_359 = arith.constant dense<0.000000e+00> : vector<128xf32>
    %447 = vector.multi_reduction <add>, %446, %cst_359 [0] : vector<8x128xf32> to vector<128xf32>
    %448 = vector.shape_cast %447 : vector<128xf32> to vector<1x128xf32>
    %cst_360 = arith.constant 8.000000e+00 : f32
    %449 = vector.broadcast %cst_360 : f32 to vector<1x128xf32>
    %450 = arith.divf %448, %449 : vector<1x128xf32>
    %451 = vector.broadcast %443 : vector<1x128xf32> to vector<8x128xf32>
    %452 = arith.subf %437, %451 : vector<8x128xf32>
    %cst_361 = arith.constant 9.99999974E-6 : f32
    %453 = vector.broadcast %cst_361 : f32 to vector<1x128xf32>
    %454 = arith.addf %450, %453 : vector<1x128xf32>
    %455 = math.rsqrt %454 : vector<1x128xf32>
    %456 = vector.broadcast %455 : vector<1x128xf32> to vector<8x128xf32>
    %457 = arith.mulf %452, %456 : vector<8x128xf32>
    %458 = vector.broadcast %438 : vector<1x128xf32> to vector<8x128xf32>
    %459 = arith.mulf %457, %458 : vector<8x128xf32>
    %460 = vector.broadcast %439 : vector<1x128xf32> to vector<8x128xf32>
    %461 = arith.addf %459, %460 : vector<8x128xf32>
    %462 = vector.extract_strided_slice %357 {offsets = [0, 128], sizes = [8, 128], strides = [1, 1]} : vector<8x256xf32> to vector<8x128xf32>
    %463 = arith.addf %461, %462 : vector<8x128xf32>
    %cst_362 = arith.constant 0.000000e+00 : f32
    %464 = vector.broadcast %cst_362 : f32 to vector<8x128xf32>
    %465 = arith.maximumf %463, %464 : vector<8x128xf32>
    %466 = arith.truncf %465 : vector<8x128xf32> to vector<8x128xbf16>
    %cst_363 = arith.constant 0.000000e+00 : f32
    %467 = vector.broadcast %cst_363 : f32 to vector<2x256xf32>
    %c0_364 = arith.constant 0 : index
    %c0_365 = arith.constant 0 : index
    %c0_366 = arith.constant 0 : index
    %468 = vector.load %arg26[%c0_364, %c0_365, %c0_366] : memref<4x2x8xbf16, #tpu.memory_space<vmem>>, vector<1x2x8xbf16>
    %469 = vector.shape_cast %468 : vector<1x2x8xbf16> to vector<2x8xbf16>
    %cst_367 = arith.constant dense<0.000000e+00> : vector<2x128xf32>
    %470 = tpu.matmul %469, %466, %cst_367 {dimension_numbers = #tpu.dot_dimension_numbers<[1], [0], [0], [1], [0, 0, 1, 1], [], []>} : vector<2x8xbf16>, vector<8x128xbf16>, vector<2x128xf32> -> vector<2x128xf32>
    %471 = arith.truncf %470 : vector<2x128xf32> to vector<2x128xbf16>
    %c0_368 = arith.constant 0 : index
    %c0_369 = arith.constant 0 : index
    %c0_370 = arith.constant 0 : index
    %472 = vector.load %arg27[%c0_368, %c0_369, %c0_370] : memref<4x128x256xbf16, #tpu.memory_space<vmem>>, vector<1x128x256xbf16>
    %473 = vector.shape_cast %472 : vector<1x128x256xbf16> to vector<128x256xbf16>
    %cst_371 = arith.constant dense<0.000000e+00> : vector<2x256xf32>
    %474 = tpu.matmul %471, %473, %cst_371 {dimension_numbers = #tpu.dot_dimension_numbers<[1], [0], [0], [1], [0, 0, 1, 1], [], []>} : vector<2x128xbf16>, vector<128x256xbf16>, vector<2x256xf32> -> vector<2x256xf32>
    %475 = arith.addf %467, %474 : vector<2x256xf32>
    %c1_372 = arith.constant 1 : index
    %c0_373 = arith.constant 0 : index
    %c0_374 = arith.constant 0 : index
    %476 = vector.load %arg26[%c1_372, %c0_373, %c0_374] : memref<4x2x8xbf16, #tpu.memory_space<vmem>>, vector<1x2x8xbf16>
    %477 = vector.shape_cast %476 : vector<1x2x8xbf16> to vector<2x8xbf16>
    %cst_375 = arith.constant dense<0.000000e+00> : vector<2x128xf32>
    %478 = tpu.matmul %477, %466, %cst_375 {dimension_numbers = #tpu.dot_dimension_numbers<[1], [0], [0], [1], [0, 0, 1, 1], [], []>} : vector<2x8xbf16>, vector<8x128xbf16>, vector<2x128xf32> -> vector<2x128xf32>
    %479 = arith.truncf %478 : vector<2x128xf32> to vector<2x128xbf16>
    %c1_376 = arith.constant 1 : index
    %c0_377 = arith.constant 0 : index
    %c0_378 = arith.constant 0 : index
    %480 = vector.load %arg27[%c1_376, %c0_377, %c0_378] : memref<4x128x256xbf16, #tpu.memory_space<vmem>>, vector<1x128x256xbf16>
    %481 = vector.shape_cast %480 : vector<1x128x256xbf16> to vector<128x256xbf16>
    %cst_379 = arith.constant dense<0.000000e+00> : vector<2x256xf32>
    %482 = tpu.matmul %479, %481, %cst_379 {dimension_numbers = #tpu.dot_dimension_numbers<[1], [0], [0], [1], [0, 0, 1, 1], [], []>} : vector<2x128xbf16>, vector<128x256xbf16>, vector<2x256xf32> -> vector<2x256xf32>
    %483 = arith.addf %475, %482 : vector<2x256xf32>
    %c2_380 = arith.constant 2 : index
    %c0_381 = arith.constant 0 : index
    %c0_382 = arith.constant 0 : index
    %484 = vector.load %arg26[%c2_380, %c0_381, %c0_382] : memref<4x2x8xbf16, #tpu.memory_space<vmem>>, vector<1x2x8xbf16>
    %485 = vector.shape_cast %484 : vector<1x2x8xbf16> to vector<2x8xbf16>
    %cst_383 = arith.constant dense<0.000000e+00> : vector<2x128xf32>
    %486 = tpu.matmul %485, %466, %cst_383 {dimension_numbers = #tpu.dot_dimension_numbers<[1], [0], [0], [1], [0, 0, 1, 1], [], []>} : vector<2x8xbf16>, vector<8x128xbf16>, vector<2x128xf32> -> vector<2x128xf32>
    %487 = arith.truncf %486 : vector<2x128xf32> to vector<2x128xbf16>
    %c2_384 = arith.constant 2 : index
    %c0_385 = arith.constant 0 : index
    %c0_386 = arith.constant 0 : index
    %488 = vector.load %arg27[%c2_384, %c0_385, %c0_386] : memref<4x128x256xbf16, #tpu.memory_space<vmem>>, vector<1x128x256xbf16>
    %489 = vector.shape_cast %488 : vector<1x128x256xbf16> to vector<128x256xbf16>
    %cst_387 = arith.constant dense<0.000000e+00> : vector<2x256xf32>
    %490 = tpu.matmul %487, %489, %cst_387 {dimension_numbers = #tpu.dot_dimension_numbers<[1], [0], [0], [1], [0, 0, 1, 1], [], []>} : vector<2x128xbf16>, vector<128x256xbf16>, vector<2x256xf32> -> vector<2x256xf32>
    %491 = arith.addf %483, %490 : vector<2x256xf32>
    %c3_388 = arith.constant 3 : index
    %c0_389 = arith.constant 0 : index
    %c0_390 = arith.constant 0 : index
    %492 = vector.load %arg26[%c3_388, %c0_389, %c0_390] : memref<4x2x8xbf16, #tpu.memory_space<vmem>>, vector<1x2x8xbf16>
    %493 = vector.shape_cast %492 : vector<1x2x8xbf16> to vector<2x8xbf16>
    %cst_391 = arith.constant dense<0.000000e+00> : vector<2x128xf32>
    %494 = tpu.matmul %493, %466, %cst_391 {dimension_numbers = #tpu.dot_dimension_numbers<[1], [0], [0], [1], [0, 0, 1, 1], [], []>} : vector<2x8xbf16>, vector<8x128xbf16>, vector<2x128xf32> -> vector<2x128xf32>
    %495 = arith.truncf %494 : vector<2x128xf32> to vector<2x128xbf16>
    %c3_392 = arith.constant 3 : index
    %c0_393 = arith.constant 0 : index
    %c0_394 = arith.constant 0 : index
    %496 = vector.load %arg27[%c3_392, %c0_393, %c0_394] : memref<4x128x256xbf16, #tpu.memory_space<vmem>>, vector<1x128x256xbf16>
    %497 = vector.shape_cast %496 : vector<1x128x256xbf16> to vector<128x256xbf16>
    %cst_395 = arith.constant dense<0.000000e+00> : vector<2x256xf32>
    %498 = tpu.matmul %495, %497, %cst_395 {dimension_numbers = #tpu.dot_dimension_numbers<[1], [0], [0], [1], [0, 0, 1, 1], [], []>} : vector<2x128xbf16>, vector<128x256xbf16>, vector<2x256xf32> -> vector<2x256xf32>
    %499 = arith.addf %491, %498 : vector<2x256xf32>
    %c0_396 = arith.constant 0 : index
    %c0_397 = arith.constant 0 : index
    %500 = vector.load %arg28[%c0_396, %c0_397] : memref<1x256xf32, #tpu.memory_space<vmem>>, vector<1x256xf32>
    %501 = vector.broadcast %500 : vector<1x256xf32> to vector<2x256xf32>
    %502 = arith.addf %499, %501 : vector<2x256xf32>
    %c0_398 = arith.constant 0 : index
    %c0_399 = arith.constant 0 : index
    %503 = vector.load %arg29[%c0_398, %c0_399] : memref<1x256xf32, #tpu.memory_space<vmem>>, vector<1x256xf32>
    %c0_400 = arith.constant 0 : index
    %c0_401 = arith.constant 0 : index
    %504 = vector.load %arg30[%c0_400, %c0_401] : memref<1x256xf32, #tpu.memory_space<vmem>>, vector<1x256xf32>
    %cst_402 = arith.constant dense<0.000000e+00> : vector<256xf32>
    %505 = vector.multi_reduction <add>, %502, %cst_402 [0] : vector<2x256xf32> to vector<256xf32>
    %506 = vector.shape_cast %505 : vector<256xf32> to vector<1x256xf32>
    %cst_403 = arith.constant 2.000000e+00 : f32
    %507 = vector.broadcast %cst_403 : f32 to vector<1x256xf32>
    %508 = arith.divf %506, %507 : vector<1x256xf32>
    %509 = vector.broadcast %508 : vector<1x256xf32> to vector<2x256xf32>
    %510 = arith.subf %502, %509 : vector<2x256xf32>
    %511 = arith.mulf %510, %510 : vector<2x256xf32>
    %cst_404 = arith.constant dense<0.000000e+00> : vector<256xf32>
    %512 = vector.multi_reduction <add>, %511, %cst_404 [0] : vector<2x256xf32> to vector<256xf32>
    %513 = vector.shape_cast %512 : vector<256xf32> to vector<1x256xf32>
    %cst_405 = arith.constant 2.000000e+00 : f32
    %514 = vector.broadcast %cst_405 : f32 to vector<1x256xf32>
    %515 = arith.divf %513, %514 : vector<1x256xf32>
    %516 = vector.broadcast %508 : vector<1x256xf32> to vector<2x256xf32>
    %517 = arith.subf %502, %516 : vector<2x256xf32>
    %cst_406 = arith.constant 9.99999974E-6 : f32
    %518 = vector.broadcast %cst_406 : f32 to vector<1x256xf32>
    %519 = arith.addf %515, %518 : vector<1x256xf32>
    %520 = math.rsqrt %519 : vector<1x256xf32>
    %521 = vector.broadcast %520 : vector<1x256xf32> to vector<2x256xf32>
    %522 = arith.mulf %517, %521 : vector<2x256xf32>
    %523 = vector.broadcast %503 : vector<1x256xf32> to vector<2x256xf32>
    %524 = arith.mulf %522, %523 : vector<2x256xf32>
    %525 = vector.broadcast %504 : vector<1x256xf32> to vector<2x256xf32>
    %526 = arith.addf %524, %525 : vector<2x256xf32>
    %cst_407 = arith.constant 0.000000e+00 : f32
    %527 = vector.broadcast %cst_407 : f32 to vector<2x256xf32>
    %528 = arith.maximumf %526, %527 : vector<2x256xf32>
    %529 = arith.truncf %528 : vector<2x256xf32> to vector<2x256xbf16>
    %c0_408 = arith.constant 0 : index
    %c0_409 = arith.constant 0 : index
    %530 = vector.load %arg31[%c0_408, %c0_409] : memref<256x128xbf16, #tpu.memory_space<vmem>>, vector<256x128xbf16>
    %cst_410 = arith.constant dense<0.000000e+00> : vector<2x128xf32>
    %531 = tpu.matmul %529, %530, %cst_410 {dimension_numbers = #tpu.dot_dimension_numbers<[1], [0], [0], [1], [0, 0, 1, 1], [], []>} : vector<2x256xbf16>, vector<256x128xbf16>, vector<2x128xf32> -> vector<2x128xf32>
    %c0_411 = arith.constant 0 : index
    %c0_412 = arith.constant 0 : index
    %532 = vector.load %arg32[%c0_411, %c0_412] : memref<1x128xf32, #tpu.memory_space<vmem>>, vector<1x128xf32>
    %533 = vector.broadcast %532 : vector<1x128xf32> to vector<2x128xf32>
    %534 = arith.addf %531, %533 : vector<2x128xf32>
    %cst_413 = arith.constant 0.000000e+00 : f32
    %535 = vector.broadcast %cst_413 : f32 to vector<2x128xf32>
    %536 = arith.maximumf %534, %535 : vector<2x128xf32>
    %537 = arith.truncf %536 : vector<2x128xf32> to vector<2x128xbf16>
    %c0_414 = arith.constant 0 : index
    %c0_415 = arith.constant 0 : index
    %538 = vector.load %arg33[%c0_414, %c0_415] : memref<128x64xbf16, #tpu.memory_space<vmem>>, vector<128x64xbf16>
    %cst_416 = arith.constant dense<0.000000e+00> : vector<2x64xf32>
    %539 = tpu.matmul %537, %538, %cst_416 {dimension_numbers = #tpu.dot_dimension_numbers<[1], [0], [0], [1], [0, 0, 1, 1], [], []>} : vector<2x128xbf16>, vector<128x64xbf16>, vector<2x64xf32> -> vector<2x64xf32>
    %c0_417 = arith.constant 0 : index
    %c0_418 = arith.constant 0 : index
    %540 = vector.load %arg34[%c0_417, %c0_418] : memref<1x64xf32, #tpu.memory_space<vmem>>, vector<1x64xf32>
    %541 = vector.broadcast %540 : vector<1x64xf32> to vector<2x64xf32>
    %542 = arith.addf %539, %541 : vector<2x64xf32>
    %cst_419 = arith.constant 0.000000e+00 : f32
    %543 = vector.broadcast %cst_419 : f32 to vector<2x64xf32>
    %544 = arith.maximumf %542, %543 : vector<2x64xf32>
    %545 = arith.truncf %544 : vector<2x64xf32> to vector<2x64xbf16>
    %c0_420 = arith.constant 0 : index
    %c0_421 = arith.constant 0 : index
    %546 = vector.load %arg35[%c0_420, %c0_421] : memref<64x1xbf16, #tpu.memory_space<vmem>>, vector<64x1xbf16>
    %cst_422 = arith.constant dense<0.000000e+00> : vector<2x1xf32>
    %547 = tpu.matmul %545, %546, %cst_422 {dimension_numbers = #tpu.dot_dimension_numbers<[1], [0], [0], [1], [0, 0, 1, 1], [], []>} : vector<2x64xbf16>, vector<64x1xbf16>, vector<2x1xf32> -> vector<2x1xf32>
    %c0_423 = arith.constant 0 : index
    %c0_424 = arith.constant 0 : index
    %548 = vector.load %arg36[%c0_423, %c0_424] : memref<1x1xf32, #tpu.memory_space<vmem>>, vector<1x1xf32>
    %549 = vector.broadcast %548 : vector<1x1xf32> to vector<2x1xf32>
    %550 = arith.addf %547, %549 : vector<2x1xf32>
    %cst_425 = arith.constant 5.000000e-01 : f32
    %551 = vector.broadcast %cst_425 : f32 to vector<2x1xf32>
    %552 = arith.mulf %551, %550 : vector<2x1xf32>
    %553 = math.tanh %552 : vector<2x1xf32>
    %cst_426 = arith.constant 1.000000e+00 : f32
    %554 = vector.broadcast %cst_426 : f32 to vector<2x1xf32>
    %555 = arith.addf %553, %554 : vector<2x1xf32>
    %cst_427 = arith.constant 5.000000e-01 : f32
    %556 = vector.broadcast %cst_427 : f32 to vector<2x1xf32>
    %557 = arith.mulf %556, %555 : vector<2x1xf32>
    %c0_428 = arith.constant 0 : index
    %c0_429 = arith.constant 0 : index
    %558 = vector.load %arg37[%c0_428, %c0_429] : memref<2x1xf32, #tpu.memory_space<vmem>>, vector<2x1xf32>
    tpu.vector_store %arg37[%c0_428, %c0_429], %557 {strides = array<i32>} : memref<2x1xf32, #tpu.memory_space<vmem>>, vector<2x1xf32>,
    return
  }
}

</mosaic_0001>

<llo_original>
// kernel: tpu_custom_call.1
$region0: #{tpu_custom_call.1}
  #allocation0 [shape = 'u32[]', space=smem, size = 0x4, offset = 0x4, fixed_abs, tag = 'smem constant byte address 0x4 - core index']
  #allocation1 [shape = 'u32[72,128]{1,0:T(1,128)}', space=vmem, size = 0x9000, scoped, tag = 'internal scratch']
  #allocation2 [shape = 'f32[1,1]{1,0:T(1,128)S(1)}', space=vmem, size = 0x200, scoped, tag = 'scoped memory for tpu_custom_call.1']
  %s0 = inlined_call_operand.smem [shape: u32[38], index: -1, kind: input, shape index: {}]
  %s1 = sld [smem:[%s0]]
  %s2 = scalar_lea.smem %s0, 1
  %s3 = sld [smem:[%s2]]
  %s4 = scalar_lea.smem %s0, 2
  %s5 = sld [smem:[%s4]]
  %s6 = scalar_lea.smem %s0, 3
  %s7 = sld [smem:[%s6]]
  %s8 = scalar_lea.smem %s0, 4
  %s9 = sld [smem:[%s8]]
  %s10 = scalar_lea.smem %s0, 5
  %s11 = sld [smem:[%s10]]
  %s12 = scalar_lea.smem %s0, 6
  %s13 = sld [smem:[%s12]]
  %s14 = scalar_lea.smem %s0, 7
  %s15 = sld [smem:[%s14]]
  %s16 = scalar_lea.smem %s0, 8
  %s17 = sld [smem:[%s16]]
  %s18 = scalar_lea.smem %s0, 9
  %s19 = sld [smem:[%s18]]
  %s20 = scalar_lea.smem %s0, 10
  %s21 = sld [smem:[%s20]]
  %s22 = scalar_lea.smem %s0, 11
  %s23 = sld [smem:[%s22]]
  %s24 = scalar_lea.smem %s0, 12
  %s25 = sld [smem:[%s24]]
  %s26 = scalar_lea.smem %s0, 13
  %s27 = sld [smem:[%s26]]
  %s28 = scalar_lea.smem %s0, 14
  %s29 = sld [smem:[%s28]]
  %s30 = scalar_lea.smem %s0, 15
  %s31 = sld [smem:[%s30]]
  %s32 = scalar_lea.smem %s0, 16
  %s33 = sld [smem:[%s32]]
  %s34 = scalar_lea.smem %s0, 17
  %s35 = sld [smem:[%s34]]
  %s36 = scalar_lea.smem %s0, 18
  %s37 = sld [smem:[%s36]]
  %s38 = scalar_lea.smem %s0, 19
  %s39 = sld [smem:[%s38]]
  %s40 = scalar_lea.smem %s0, 20
  %s41 = sld [smem:[%s40]]
  %s42 = scalar_lea.smem %s0, 21
  %s43 = sld [smem:[%s42]]
  %s44 = scalar_lea.smem %s0, 22
  %s45 = sld [smem:[%s44]]
  %s46 = scalar_lea.smem %s0, 23
  %s47 = sld [smem:[%s46]]
  %s48 = scalar_lea.smem %s0, 24
  %s49 = sld [smem:[%s48]]
  %s50 = scalar_lea.smem %s0, 25
  %s51 = sld [smem:[%s50]]
  %s52 = scalar_lea.smem %s0, 26
  %s53 = sld [smem:[%s52]]
  %s54 = scalar_lea.smem %s0, 27
  %s55 = sld [smem:[%s54]]
  %s56 = scalar_lea.smem %s0, 28
  %s57 = sld [smem:[%s56]]
  %s58 = scalar_lea.smem %s0, 29
  %s59 = sld [smem:[%s58]]
  %s60 = scalar_lea.smem %s0, 30
  %s61 = sld [smem:[%s60]]
  %s62 = scalar_lea.smem %s0, 31
  %s63 = sld [smem:[%s62]]
  %s64 = scalar_lea.smem %s0, 32
  %s65 = sld [smem:[%s64]]
  %s66 = scalar_lea.smem %s0, 33
  %s67 = sld [smem:[%s66]]
  %s68 = scalar_lea.smem %s0, 34
  %s69 = sld [smem:[%s68]]
  %s70 = scalar_lea.smem %s0, 35
  %s71 = sld [smem:[%s70]]
  %s72 = scalar_lea.smem %s0, 36
  %s73 = sld [smem:[%s72]]
  %s74 = scalar_lea.smem %s0, 37
  %s75 = sld [smem:[%s74]]
  %s76 = sld [smem:[#allocation0]]
  $region190: #{tpu_custom_call.1} parent=0
    _
  %s78 = ssub.s32 1, %s76
  %s79 = scalar_select 0, %s78, %s76
  %v80 = vstv %s73
  %81 = vst [vmem:[#allocation2] sm:$0x1] %v80
  $region1: #{tpu_custom_call.1} parent=0
    #allocation3 [shape = 'u8[221184]{0}', space=vmem, size = 0x36000, scoped, tag = 'input window, operand 5, single buffered']
    #allocation4 [shape = 's32[1]{0}', space=sflag, size = 0x4, scoped, tag = 'scoped memory for tpu_custom_call.1']
    #allocation5 [shape = 'u8[73728]{0}', space=vmem, size = 0x12000, scoped, tag = 'input window, operand 7, single buffered']
    #allocation6 [shape = 's32[1]{0}', space=sflag, size = 0x4, scoped, tag = 'scoped memory for tpu_custom_call.1']
    #allocation7 [shape = 'u8[147456]{0}', space=vmem, size = 0x24000, scoped, tag = 'input window, operand 8, single buffered']
    #allocation8 [shape = 'u8[147456]{0}', space=vmem, size = 0x24000, scoped, tag = 'input window, operand 12, single buffered']
    #allocation9 [shape = 's32[1]{0}', space=sflag, size = 0x4, scoped, tag = 'scoped memory for tpu_custom_call.1']
    #allocation10 [shape = 'u8[294912]{0}', space=vmem, size = 0x48000, scoped, tag = 'input window, operand 18, single buffered']
    #allocation11 [shape = 'u8[294912]{0}', space=vmem, size = 0x48000, scoped, tag = 'input window, operand 22, single buffered']
    #allocation12 [shape = 's32[1]{0}', space=sflag, size = 0x4, scoped, tag = 'scoped memory for tpu_custom_call.1']
    #allocation13 [shape = 'u8[262144]{0}', space=vmem, size = 0x40000, scoped, tag = 'input window, operand 27, single buffered']
    #allocation14 [shape = 'u8[65536]{0}', space=vmem, size = 0x10000, scoped, tag = 'input window, operand 31, single buffered']
    #allocation15 [shape = 's32[1]{0}', space=sflag, size = 0x4, scoped, tag = 'scoped memory for tpu_custom_call.1']
    %82 = vsyncpa [#allocation4], 0
    %83 = vsyncpa [#allocation6], 0
    %84 = vsyncpa [#allocation9], 0
    %85 = vsyncpa [#allocation12], 0
    %86 = vsyncpa [#allocation15], 0
    // Predicated region
    $region2: #{tpu_custom_call.1} parent=1 // pred_check
      _
    $region3: #{tpu_custom_call.1} parent=1 // pred_check_branch
      %88 = sbr.rel (0) target = $region5
    $region4: #{tpu_custom_call.1} parent=1 // pred_region
      _
    $region5: #{tpu_custom_call.1} parent=1 // pred_fallthru
      _
    // Predicated region
    $region6: #{tpu_custom_call.1} parent=1 // pred_check
      _
    $region7: #{tpu_custom_call.1} parent=1 // pred_check_branch
      %90 = sbr.rel (0) target = $region9
    $region8: #{tpu_custom_call.1} parent=1 // pred_region
      _
    $region9: #{tpu_custom_call.1} parent=1 // pred_fallthru
      _
    // Predicated region
    $region10: #{tpu_custom_call.1} parent=1 // pred_check
      _
    $region11: #{tpu_custom_call.1} parent=1 // pred_check_branch
      %92 = sbr.rel (0) target = $region13
    $region12: #{tpu_custom_call.1} parent=1 // pred_region
      _
    $region13: #{tpu_custom_call.1} parent=1 // pred_fallthru
      _
    // Predicated region
    $region14: #{tpu_custom_call.1} parent=1 // pred_check
      _
    $region15: #{tpu_custom_call.1} parent=1 // pred_check_branch
      %94 = sbr.rel (0) target = $region17
    $region16: #{tpu_custom_call.1} parent=1 // pred_region
      _
    $region17: #{tpu_custom_call.1} parent=1 // pred_fallthru
      _
    // Predicated region
    $region18: #{tpu_custom_call.1} parent=1 // pred_check
      _
    $region19: #{tpu_custom_call.1} parent=1 // pred_check_branch
      %96 = sbr.rel (0) target = $region21
    $region20: #{tpu_custom_call.1} parent=1 // pred_region
      _
    $region21: #{tpu_custom_call.1} parent=1 // pred_fallthru
      _
    // Predicated region
    $region22: #{tpu_custom_call.1} parent=1 // pred_check
      _
    $region23: #{tpu_custom_call.1} parent=1 // pred_check_branch
      %98 = sbr.rel (0) target = $region25
    $region24: #{tpu_custom_call.1} parent=1 // pred_region
      %100 = vsyncadd [#allocation4], 0
      %s101 = sshll.u32 %s11, 4
      %s102 = int_to_ptr.hbm [resolvable:$true] %s101
      %s103 = sshll.u32 [#allocation3], 4
      %s104 = int_to_ptr.vmem [resolvable:$true] %s103
      %109 = dma.hbm_to_vmem [thread:$0]  %s102, 6912, %s104, [#allocation4], 192, 192, 12
    $region25: #{tpu_custom_call.1} parent=1 // pred_fallthru
      _
    // Predicated region
    $region26: #{tpu_custom_call.1} parent=1 // pred_check
      _
    $region27: #{tpu_custom_call.1} parent=1 // pred_check_branch
      %111 = sbr.rel (0) target = $region29
    $region28: #{tpu_custom_call.1} parent=1 // pred_region
      _
    $region29: #{tpu_custom_call.1} parent=1 // pred_fallthru
      _
    // Predicated region
    $region30: #{tpu_custom_call.1} parent=1 // pred_check
      _
    $region31: #{tpu_custom_call.1} parent=1 // pred_check_branch
      %113 = sbr.rel (0) target = $region33
    $region32: #{tpu_custom_call.1} parent=1 // pred_region
      %115 = vsyncadd [#allocation6], 0
      %s116 = sshll.u32 %s15, 4
      %s117 = int_to_ptr.hbm [resolvable:$true] %s116
      %s118 = sshll.u32 [#allocation5], 4
      %s119 = int_to_ptr.vmem [resolvable:$true] %s118
      %124 = dma.hbm_to_vmem [thread:$0]  %s117, 2304, %s119, [#allocation6], 64, 64, 4
    $region33: #{tpu_custom_call.1} parent=1 // pred_fallthru
      _
    // Predicated region
    $region34: #{tpu_custom_call.1} parent=1 // pred_check
      _
    $region35: #{tpu_custom_call.1} parent=1 // pred_check_branch
      %126 = sbr.rel (0) target = $region37
    $region36: #{tpu_custom_call.1} parent=1 // pred_region
      %128 = vsyncadd [#allocation6], 0
      %s129 = sshll.u32 %s17, 4
      %s130 = int_to_ptr.hbm [resolvable:$true] %s129
      %s131 = sshll.u32 [#allocation7], 4
      %s132 = int_to_ptr.vmem [resolvable:$true] %s131
      %137 = dma.hbm_to_vmem [thread:$0]  %s130, 4608, %s132, [#allocation6], 64, 64, 4
    $region37: #{tpu_custom_call.1} parent=1 // pred_fallthru
      _
    // Predicated region
    $region38: #{tpu_custom_call.1} parent=1 // pred_check
      _
    $region39: #{tpu_custom_call.1} parent=1 // pred_check_branch
      %139 = sbr.rel (0) target = $region41
    $region40: #{tpu_custom_call.1} parent=1 // pred_region
      _
    $region41: #{tpu_custom_call.1} parent=1 // pred_fallthru
      _
    // Predicated region
    $region42: #{tpu_custom_call.1} parent=1 // pred_check
      _
    $region43: #{tpu_custom_call.1} parent=1 // pred_check_branch
      %141 = sbr.rel (0) target = $region45
    $region44: #{tpu_custom_call.1} parent=1 // pred_region
      _
    $region45: #{tpu_custom_call.1} parent=1 // pred_fallthru
      _
    // Predicated region
    $region46: #{tpu_custom_call.1} parent=1 // pred_check
      _
    $region47: #{tpu_custom_call.1} parent=1 // pred_check_branch
      %143 = sbr.rel (0) target = $region49
    $region48: #{tpu_custom_call.1} parent=1 // pred_region
      _
    $region49: #{tpu_custom_call.1} parent=1 // pred_fallthru
      _
    // Predicated region
    $region50: #{tpu_custom_call.1} parent=1 // pred_check
      _
    $region51: #{tpu_custom_call.1} parent=1 // pred_check_branch
      %145 = sbr.rel (0) target = $region53
    $region52: #{tpu_custom_call.1} parent=1 // pred_region
      %147 = vsyncadd [#allocation9], 0
      %s148 = sshll.u32 %s25, 4
      %s149 = int_to_ptr.hbm [resolvable:$true] %s148
      %s150 = sshll.u32 [#allocation8], 4
      %s151 = int_to_ptr.vmem [resolvable:$true] %s150
      %156 = dma.hbm_to_vmem [thread:$0]  %s149, 4608, %s151, [#allocation9], 64, 64, 4
    $region53: #{tpu_custom_call.1} parent=1 // pred_fallthru
      _
    // Predicated region
    $region54: #{tpu_custom_call.1} parent=1 // pred_check
      _
    $region55: #{tpu_custom_call.1} parent=1 // pred_check_branch
      %158 = sbr.rel (0) target = $region57
    $region56: #{tpu_custom_call.1} parent=1 // pred_region
      _
    $region57: #{tpu_custom_call.1} parent=1 // pred_fallthru
      _
    // Predicated region
    $region58: #{tpu_custom_call.1} parent=1 // pred_check
      _
    $region59: #{tpu_custom_call.1} parent=1 // pred_check_branch
      %160 = sbr.rel (0) target = $region61
    $region60: #{tpu_custom_call.1} parent=1 // pred_region
      _
    $region61: #{tpu_custom_call.1} parent=1 // pred_fallthru
      _
    // Predicated region
    $region62: #{tpu_custom_call.1} parent=1 // pred_check
      _
    $region63: #{tpu_custom_call.1} parent=1 // pred_check_branch
      %162 = sbr.rel (0) target = $region65
    $region64: #{tpu_custom_call.1} parent=1 // pred_region
      _
    $region65: #{tpu_custom_call.1} parent=1 // pred_fallthru
      _
    // Predicated region
    $region66: #{tpu_custom_call.1} parent=1 // pred_check
      _
    $region67: #{tpu_custom_call.1} parent=1 // pred_check_branch
      %164 = sbr.rel (0) target = $region69
    $region68: #{tpu_custom_call.1} parent=1 // pred_region
      _
    $region69: #{tpu_custom_call.1} parent=1 // pred_fallthru
      _
    // Predicated region
    $region70: #{tpu_custom_call.1} parent=1 // pred_check
      _
    $region71: #{tpu_custom_call.1} parent=1 // pred_check_branch
      %166 = sbr.rel (0) target = $region73
    $region72: #{tpu_custom_call.1} parent=1 // pred_region
      _
    $region73: #{tpu_custom_call.1} parent=1 // pred_fallthru
      _
    // Predicated region
    $region74: #{tpu_custom_call.1} parent=1 // pred_check
      _
    $region75: #{tpu_custom_call.1} parent=1 // pred_check_branch
      %168 = sbr.rel (0) target = $region77
    $region76: #{tpu_custom_call.1} parent=1 // pred_region
      %170 = vsyncadd [#allocation9], 0
      %s171 = sshll.u32 %s37, 4
      %s172 = int_to_ptr.hbm [resolvable:$true] %s171
      %s173 = sshll.u32 [#allocation10], 4
      %s174 = int_to_ptr.vmem [resolvable:$true] %s173
      %179 = dma.hbm_to_vmem [thread:$0]  %s172, 9216, %s174, [#allocation9], 128, 128, 8
    $region77: #{tpu_custom_call.1} parent=1 // pred_fallthru
      _
    // Predicated region
    $region78: #{tpu_custom_call.1} parent=1 // pred_check
      _
    $region79: #{tpu_custom_call.1} parent=1 // pred_check_branch
      %181 = sbr.rel (0) target = $region81
    $region80: #{tpu_custom_call.1} parent=1 // pred_region
      _
    $region81: #{tpu_custom_call.1} parent=1 // pred_fallthru
      _
    // Predicated region
    $region82: #{tpu_custom_call.1} parent=1 // pred_check
      _
    $region83: #{tpu_custom_call.1} parent=1 // pred_check_branch
      %183 = sbr.rel (0) target = $region85
    $region84: #{tpu_custom_call.1} parent=1 // pred_region
      _
    $region85: #{tpu_custom_call.1} parent=1 // pred_fallthru
      _
    // Predicated region
    $region86: #{tpu_custom_call.1} parent=1 // pred_check
      _
    $region87: #{tpu_custom_call.1} parent=1 // pred_check_branch
      %185 = sbr.rel (0) target = $region89
    $region88: #{tpu_custom_call.1} parent=1 // pred_region
      _
    $region89: #{tpu_custom_call.1} parent=1 // pred_fallthru
      _
    // Predicated region
    $region90: #{tpu_custom_call.1} parent=1 // pred_check
      _
    $region91: #{tpu_custom_call.1} parent=1 // pred_check_branch
      %187 = sbr.rel (0) target = $region93
    $region92: #{tpu_custom_call.1} parent=1 // pred_region
      %189 = vsyncadd [#allocation12], 0
      %s190 = sshll.u32 %s45, 4
      %s191 = int_to_ptr.hbm [resolvable:$true] %s190
      %s192 = sshll.u32 [#allocation11], 4
      %s193 = int_to_ptr.vmem [resolvable:$true] %s192
      %198 = dma.hbm_to_vmem [thread:$0]  %s191, 9216, %s193, [#allocation12], 64, 64, 4
    $region93: #{tpu_custom_call.1} parent=1 // pred_fallthru
      _
    // Predicated region
    $region94: #{tpu_custom_call.1} parent=1 // pred_check
      _
    $region95: #{tpu_custom_call.1} parent=1 // pred_check_branch
      %200 = sbr.rel (0) target = $region97
    $region96: #{tpu_custom_call.1} parent=1 // pred_region
      _
    $region97: #{tpu_custom_call.1} parent=1 // pred_fallthru
      _
    // Predicated region
    $region98: #{tpu_custom_call.1} parent=1 // pred_check
      _
    $region99: #{tpu_custom_call.1} parent=1 // pred_check_branch
      %202 = sbr.rel (0) target = $region101
    $region100: #{tpu_custom_call.1} parent=1 // pred_region
      _
    $region101: #{tpu_custom_call.1} parent=1 // pred_fallthru
      _
    // Predicated region
    $region102: #{tpu_custom_call.1} parent=1 // pred_check
      _
    $region103: #{tpu_custom_call.1} parent=1 // pred_check_branch
      %204 = sbr.rel (0) target = $region105
    $region104: #{tpu_custom_call.1} parent=1 // pred_region
      _
    $region105: #{tpu_custom_call.1} parent=1 // pred_fallthru
      _
    // Predicated region
    $region106: #{tpu_custom_call.1} parent=1 // pred_check
      _
    $region107: #{tpu_custom_call.1} parent=1 // pred_check_branch
      %206 = sbr.rel (0) target = $region109
    $region108: #{tpu_custom_call.1} parent=1 // pred_region
      _
    $region109: #{tpu_custom_call.1} parent=1 // pred_fallthru
      _
    // Predicated region
    $region110: #{tpu_custom_call.1} parent=1 // pred_check
      _
    $region111: #{tpu_custom_call.1} parent=1 // pred_check_branch
      %208 = sbr.rel (0) target = $region113
    $region112: #{tpu_custom_call.1} parent=1 // pred_region
      %210 = vsyncadd [#allocation12], 0
      %s211 = sshll.u32 %s55, 4
      %s212 = int_to_ptr.hbm [resolvable:$true] %s211
      %s213 = sshll.u32 [#allocation13], 4
      %s214 = int_to_ptr.vmem [resolvable:$true] %s213
      %219 = dma.hbm_to_vmem [thread:$0]  %s212, 8192, %s214, [#allocation12], 128, 128, 8
    $region113: #{tpu_custom_call.1} parent=1 // pred_fallthru
      _
    // Predicated region
    $region114: #{tpu_custom_call.1} parent=1 // pred_check
      _
    $region115: #{tpu_custom_call.1} parent=1 // pred_check_branch
      %221 = sbr.rel (0) target = $region117
    $region116: #{tpu_custom_call.1} parent=1 // pred_region
      _
    $region117: #{tpu_custom_call.1} parent=1 // pred_fallthru
      _
    // Predicated region
    $region118: #{tpu_custom_call.1} parent=1 // pred_check
      _
    $region119: #{tpu_custom_call.1} parent=1 // pred_check_branch
      %223 = sbr.rel (0) target = $region121
    $region120: #{tpu_custom_call.1} parent=1 // pred_region
      _
    $region121: #{tpu_custom_call.1} parent=1 // pred_fallthru
      _
    // Predicated region
    $region122: #{tpu_custom_call.1} parent=1 // pred_check
      _
    $region123: #{tpu_custom_call.1} parent=1 // pred_check_branch
      %225 = sbr.rel (0) target = $region125
    $region124: #{tpu_custom_call.1} parent=1 // pred_region
      _
    $region125: #{tpu_custom_call.1} parent=1 // pred_fallthru
      _
    // Predicated region
    $region126: #{tpu_custom_call.1} parent=1 // pred_check
      _
    $region127: #{tpu_custom_call.1} parent=1 // pred_check_branch
      %227 = sbr.rel (0) target = $region129
    $region128: #{tpu_custom_call.1} parent=1 // pred_region
      %229 = vsyncadd [#allocation15], 0
      %s230 = sshll.u32 %s63, 4
      %s231 = int_to_ptr.hbm [resolvable:$true] %s230
      %s232 = sshll.u32 [#allocation14], 4
      %s233 = int_to_ptr.vmem [resolvable:$true] %s232
      %238 = dma.hbm_to_vmem [thread:$0]  %s231, 2048, %s233, [#allocation15], 64, 64, 4
    $region129: #{tpu_custom_call.1} parent=1 // pred_fallthru
      _
    // Predicated region
    $region130: #{tpu_custom_call.1} parent=1 // pred_check
      _
    $region131: #{tpu_custom_call.1} parent=1 // pred_check_branch
      %240 = sbr.rel (0) target = $region133
    $region132: #{tpu_custom_call.1} parent=1 // pred_region
      _
    $region133: #{tpu_custom_call.1} parent=1 // pred_fallthru
      _
    // Predicated region
    $region134: #{tpu_custom_call.1} parent=1 // pred_check
      _
    $region135: #{tpu_custom_call.1} parent=1 // pred_check_branch
      %242 = sbr.rel (0) target = $region137
    $region136: #{tpu_custom_call.1} parent=1 // pred_region
      _
    $region137: #{tpu_custom_call.1} parent=1 // pred_fallthru
      _
    // Predicated region
    $region138: #{tpu_custom_call.1} parent=1 // pred_check
      _
    $region139: #{tpu_custom_call.1} parent=1 // pred_check_branch
      %244 = sbr.rel (0) target = $region141
    $region140: #{tpu_custom_call.1} parent=1 // pred_region
      _
    $region141: #{tpu_custom_call.1} parent=1 // pred_fallthru
      _
    // Predicated region
    $region142: #{tpu_custom_call.1} parent=1 // pred_check
      _
    $region143: #{tpu_custom_call.1} parent=1 // pred_check_branch
      %246 = sbr.rel (0) target = $region145
    $region144: #{tpu_custom_call.1} parent=1 // pred_region
      _
    $region145: #{tpu_custom_call.1} parent=1 // pred_fallthru
      _
    // Predicated region
    $region146: #{tpu_custom_call.1} parent=1 // pred_check
      _
    $region147: #{tpu_custom_call.1} parent=1 // pred_check_branch
      %248 = sbr.rel (0) target = $region149
    $region148: #{tpu_custom_call.1} parent=1 // pred_region
      _
    $region149: #{tpu_custom_call.1} parent=1 // pred_fallthru
      _
    // Predicated region
    $region150: #{tpu_custom_call.1} parent=1 // pred_check
      _
    $region151: #{tpu_custom_call.1} parent=1 // pred_check_branch
      %250 = sbr.rel (0) target = $region153
    $region152: #{tpu_custom_call.1} parent=1 // pred_region
      %252 = dma.done [#allocation4], 6912
    $region153: #{tpu_custom_call.1} parent=1 // pred_fallthru
      _
    // Predicated region
    $region154: #{tpu_custom_call.1} parent=1 // pred_check
      _
    $region155: #{tpu_custom_call.1} parent=1 // pred_check_branch
      %254 = sbr.rel (0) target = $region157
    $region156: #{tpu_custom_call.1} parent=1 // pred_region
      %256 = dma.done [#allocation6], 2304
    $region157: #{tpu_custom_call.1} parent=1 // pred_fallthru
      _
    // Predicated region
    $region158: #{tpu_custom_call.1} parent=1 // pred_check
      _
    $region159: #{tpu_custom_call.1} parent=1 // pred_check_branch
      %258 = sbr.rel (0) target = $region161
    $region160: #{tpu_custom_call.1} parent=1 // pred_region
      %260 = dma.done [#allocation6], 4608
    $region161: #{tpu_custom_call.1} parent=1 // pred_fallthru
      _
    // Predicated region
    $region162: #{tpu_custom_call.1} parent=1 // pred_check
      _
    $region163: #{tpu_custom_call.1} parent=1 // pred_check_branch
      %262 = sbr.rel (0) target = $region165
    $region164: #{tpu_custom_call.1} parent=1 // pred_region
      %264 = dma.done [#allocation9], 4608
    $region165: #{tpu_custom_call.1} parent=1 // pred_fallthru
      _
    // Predicated region
    $region166: #{tpu_custom_call.1} parent=1 // pred_check
      _
    $region167: #{tpu_custom_call.1} parent=1 // pred_check_branch
      %266 = sbr.rel (0) target = $region169
    $region168: #{tpu_custom_call.1} parent=1 // pred_region
      %268 = dma.done [#allocation9], 9216
    $region169: #{tpu_custom_call.1} parent=1 // pred_fallthru
      _
    // Predicated region
    $region170: #{tpu_custom_call.1} parent=1 // pred_check
      _
    $region171: #{tpu_custom_call.1} parent=1 // pred_check_branch
      %270 = sbr.rel (0) target = $region173
    $region172: #{tpu_custom_call.1} parent=1 // pred_region
      %272 = dma.done [#allocation12], 9216
    $region173: #{tpu_custom_call.1} parent=1 // pred_fallthru
      _
    // Predicated region
    $region174: #{tpu_custom_call.1} parent=1 // pred_check
      _
    $region175: #{tpu_custom_call.1} parent=1 // pred_check_branch
      %274 = sbr.rel (0) target = $region177
    $region176: #{tpu_custom_call.1} parent=1 // pred_region
      %276 = dma.done [#allocation12], 8192
    $region177: #{tpu_custom_call.1} parent=1 // pred_fallthru
      _
    // Predicated region
    $region178: #{tpu_custom_call.1} parent=1 // pred_check
      _
    $region179: #{tpu_custom_call.1} parent=1 // pred_check_branch
      %278 = sbr.rel (0) target = $region181
    $region180: #{tpu_custom_call.1} parent=1 // pred_region
      %280 = dma.done [#allocation15], 2048
    $region181: #{tpu_custom_call.1} parent=1 // pred_fallthru
      _
    %v282 = vld [vmem:[%s1] sm:$0xf]
    %v283 = vld [vmem:[%s1 + $0x4] sm:$0xf]
    %v284 = vld [vmem:[%s1 + $0x8] sm:$0xf]
    %v285 = vld [vmem:[%s1 + $0xc] sm:$0xf]
    %v286 = vld [vmem:[%s1 + $0x10] sm:$0xf]
    %v287 = vld [vmem:[%s1 + $0x14] sm:$0xf]
    %v288 = vld [vmem:[%s1 + $0x18] sm:$0xf]
    %v289 = vld [vmem:[%s1 + $0x1c] sm:$0xf]
    %v290 = vld [vmem:[%s1 + $0x20] sm:$0xf]
    %v291 = vld [vmem:[%s1 + $0x24] sm:$0xf]
    %v292 = vld [vmem:[%s1 + $0x28] sm:$0xf]
    %v293 = vld [vmem:[%s1 + $0x2c] sm:$0xf]
    %v294 = vld [vmem:[%s1 + $0x30] sm:$0xf]
    %v295 = vld [vmem:[%s1 + $0x34] sm:$0xf]
    %v296 = vld [vmem:[%s1 + $0x38] sm:$0xf]
    %v297 = vld [vmem:[%s1 + $0x3c] sm:$0xf]
    %v298 = vld [vmem:[%s1 + $0x40] sm:$0xf]
    %v299 = vld [vmem:[%s1 + $0x44] sm:$0xf]
    %v300 = vld [vmem:[%s1 + $0x48] sm:$0xf]
    %v301 = vld [vmem:[%s1 + $0x4c] sm:$0xf]
    %v302 = vld [vmem:[%s1 + $0x50] sm:$0xf]
    %v303 = vld [vmem:[%s1 + $0x54] sm:$0xf]
    %v304 = vld [vmem:[%s1 + $0x58] sm:$0xf]
    %v305 = vld [vmem:[%s1 + $0x5c] sm:$0xf]
    %v306 = vld [vmem:[%s1 + $0x60] sm:$0xf]
    %v307 = vld [vmem:[%s1 + $0x64] sm:$0xf]
    %v308 = vld [vmem:[%s1 + $0x68] sm:$0xf]
    %v309 = vld [vmem:[%s1 + $0x6c] sm:$0xf]
    %v310 = vld [vmem:[%s1 + $0x70] sm:$0xf]
    %v311 = vld [vmem:[%s1 + $0x74] sm:$0xf]
    %v312 = vld [vmem:[%s1 + $0x78] sm:$0xf]
    %v313 = vld [vmem:[%s1 + $0x7c] sm:$0xf]
    %v314 = vld [vmem:[%s1 + $0x80] sm:$0xf]
    %v315 = vld [vmem:[%s1 + $0x84] sm:$0xf]
    %v316 = vld [vmem:[%s1 + $0x88] sm:$0xf]
    %v317 = vld [vmem:[%s1 + $0x8c] sm:$0xf]
    %v318 = vld [vmem:[%s3] sm:$0xf]
    %v319 = vld [vmem:[%s3 + $0x4] sm:$0xf]
    %v320 = vld [vmem:[%s3 + $0x8] sm:$0xf]
    %v321 = vld [vmem:[%s3 + $0xc] sm:$0xf]
    %v322 = vld [vmem:[%s5] sm:$0x1]
    %v324 = vperm.slane %v322, 0
    %v362 = vunpack.c.l.b16 %v282
    %v363 = vunpack.c.l.b16 %v283
    %v364 = vunpack.c.l.b16 %v284
    %v365 = vunpack.c.l.b16 %v285
    %v366 = vunpack.c.l.b16 %v286
    %v367 = vunpack.c.l.b16 %v287
    %v368 = vunpack.c.l.b16 %v288
    %v369 = vunpack.c.l.b16 %v289
    %v370 = vunpack.c.l.b16 %v290
    %v371 = vunpack.c.l.b16 %v291
    %v372 = vunpack.c.l.b16 %v292
    %v373 = vunpack.c.l.b16 %v293
    %v374 = vunpack.c.l.b16 %v294
    %v375 = vunpack.c.l.b16 %v295
    %v376 = vunpack.c.l.b16 %v296
    %v377 = vunpack.c.l.b16 %v297
    %v378 = vunpack.c.l.b16 %v298
    %v379 = vunpack.c.l.b16 %v299
    %v380 = vunpack.c.l.b16 %v300
    %v381 = vunpack.c.l.b16 %v301
    %v382 = vunpack.c.l.b16 %v302
    %v383 = vunpack.c.l.b16 %v303
    %v384 = vunpack.c.l.b16 %v304
    %v385 = vunpack.c.l.b16 %v305
    %v386 = vunpack.c.l.b16 %v306
    %v387 = vunpack.c.l.b16 %v307
    %v388 = vunpack.c.l.b16 %v308
    %v389 = vunpack.c.l.b16 %v309
    %v390 = vunpack.c.l.b16 %v310
    %v391 = vunpack.c.l.b16 %v311
    %v392 = vunpack.c.l.b16 %v312
    %v393 = vunpack.c.l.b16 %v313
    %v394 = vunpack.c.l.b16 %v314
    %v395 = vunpack.c.l.b16 %v315
    %v396 = vunpack.c.l.b16 %v316
    %v397 = vunpack.c.l.b16 %v317
    %v398 = vpack.c.b16 %v363, %v362
    %v399 = vpack.c.b16 %v365, %v364
    %v400 = vpack.c.b16 %v367, %v366
    %v401 = vpack.c.b16 %v369, %v368
    %v402 = vpack.c.b16 %v371, %v370
    %v403 = vpack.c.b16 %v373, %v372
    %v404 = vpack.c.b16 %v375, %v374
    %v405 = vpack.c.b16 %v377, %v376
    %v406 = vpack.c.b16 %v379, %v378
    %v407 = vpack.c.b16 %v381, %v380
    %v408 = vpack.c.b16 %v383, %v382
    %v409 = vpack.c.b16 %v385, %v384
    %v410 = vpack.c.b16 %v387, %v386
    %v411 = vpack.c.b16 %v389, %v388
    %v412 = vpack.c.b16 %v391, %v390
    %v413 = vpack.c.b16 %v393, %v392
    %v414 = vpack.c.b16 %v395, %v394
    %v415 = vpack.c.b16 %v397, %v396
    %v420 = vunpack.c.l.b16 %v318
    %v421 = vunpack.c.l.b16 %v319
    %v422 = vunpack.c.l.b16 %v320
    %v423 = vunpack.c.l.b16 %v321
    %v424 = vpack.c.b16 %v421, %v420
    %v425 = vpack.c.b16 %v423, %v422
    %vm428 = vcmask 261120
    %v430 = vsel %vm428, %v398, 0
    %v433 = vsel %vm428, %v399, 0
    %v436 = vsel %vm428, %v400, 0
    %v439 = vsel %vm428, %v401, 0
    %v442 = vsel %vm428, %v402, 0
    %v445 = vsel %vm428, %v403, 0
    %v448 = vsel %vm428, %v404, 0
    %v451 = vsel %vm428, %v405, 0
    %v454 = vsel %vm428, %v406, 0
    %v457 = vsel %vm428, %v407, 0
    %v460 = vsel %vm428, %v408, 0
    %v463 = vsel %vm428, %v409, 0
    %v466 = vsel %vm428, %v410, 0
    %v469 = vsel %vm428, %v411, 0
    %v472 = vsel %vm428, %v412, 0
    %v475 = vsel %vm428, %v413, 0
    %v478 = vsel %vm428, %v414, 0
    %v481 = vsel %vm428, %v415, 0
    %483 = vmatpush.bf16.msra.mxu0 0
    %484 = vmatpush.bf16.msra.mxu0 0
    %485 = vmatpush.bf16.msra.mxu0 0
    %486 = vmatpush.bf16.msra.mxu0 0
    %487 = vmatpush.bf16.msra.mxu0 0
    %488 = vmatpush.bf16.msra.mxu0 0
    %489 = vmatpush.bf16.msra.mxu0 %v425
    %490 = vmatpush.bf16.msra.mxu0 %v424
    %491 = vmatmul.bf16.gmra.mxu0 %v430
    %v492 = vpop.f32.mrf.mxu0
    %v493 = vadd.f32 %v324, %v492
    %v494 = vpop.f32.mrf.mxu0
    %v495 = vadd.f32 %v324, %v494
    %496 = vmatmul.bf16.gmra.mxu0 %v433
    %v497 = vpop.f32.mrf.mxu0
    %v498 = vadd.f32 %v324, %v497
    %v499 = vpop.f32.mrf.mxu0
    %v500 = vadd.f32 %v324, %v499
    %501 = vmatmul.bf16.gmra.mxu0 %v436
    %v502 = vpop.f32.mrf.mxu0
    %v503 = vadd.f32 %v324, %v502
    %v504 = vpop.f32.mrf.mxu0
    %v505 = vadd.f32 %v324, %v504
    %506 = vmatmul.bf16.gmra.mxu0 %v439
    %v507 = vpop.f32.mrf.mxu0
    %v508 = vadd.f32 %v324, %v507
    %v509 = vpop.f32.mrf.mxu0
    %v510 = vadd.f32 %v324, %v509
    %511 = vmatmul.bf16.gmra.mxu0 %v442
    %v512 = vpop.f32.mrf.mxu0
    %v513 = vadd.f32 %v324, %v512
    %v514 = vpop.f32.mrf.mxu0
    %v515 = vadd.f32 %v324, %v514
    %516 = vmatmul.bf16.gmra.mxu0 %v445
    %v517 = vpop.f32.mrf.mxu0
    %v518 = vadd.f32 %v324, %v517
    %v519 = vpop.f32.mrf.mxu0
    %v520 = vadd.f32 %v324, %v519
    %521 = vmatmul.bf16.gmra.mxu0 %v448
    %v522 = vpop.f32.mrf.mxu0
    %v523 = vadd.f32 %v324, %v522
    %v524 = vpop.f32.mrf.mxu0
    %v525 = vadd.f32 %v324, %v524
    %526 = vmatmul.bf16.gmra.mxu0 %v451
    %v527 = vpop.f32.mrf.mxu0
    %v528 = vadd.f32 %v324, %v527
    %v529 = vpop.f32.mrf.mxu0
    %v530 = vadd.f32 %v324, %v529
    %531 = vmatmul.bf16.gmra.mxu0 %v454
    %v532 = vpop.f32.mrf.mxu0
    %v533 = vadd.f32 %v324, %v532
    %v534 = vpop.f32.mrf.mxu0
    %v535 = vadd.f32 %v324, %v534
    %536 = vmatmul.bf16.gmra.mxu0 %v457
    %v537 = vpop.f32.mrf.mxu0
    %v538 = vadd.f32 %v324, %v537
    %v539 = vpop.f32.mrf.mxu0
    %v540 = vadd.f32 %v324, %v539
    %541 = vmatmul.bf16.gmra.mxu0 %v460
    %v542 = vpop.f32.mrf.mxu0
    %v543 = vadd.f32 %v324, %v542
    %v544 = vpop.f32.mrf.mxu0
    %v545 = vadd.f32 %v324, %v544
    %546 = vmatmul.bf16.gmra.mxu0 %v463
    %v547 = vpop.f32.mrf.mxu0
    %v548 = vadd.f32 %v324, %v547
    %v549 = vpop.f32.mrf.mxu0
    %v550 = vadd.f32 %v324, %v549
    %551 = vmatmul.bf16.gmra.mxu0 %v466
    %v552 = vpop.f32.mrf.mxu0
    %v553 = vadd.f32 %v324, %v552
    %v554 = vpop.f32.mrf.mxu0
    %v555 = vadd.f32 %v324, %v554
    %556 = vmatmul.bf16.gmra.mxu0 %v469
    %v557 = vpop.f32.mrf.mxu0
    %v558 = vadd.f32 %v324, %v557
    %v559 = vpop.f32.mrf.mxu0
    %v560 = vadd.f32 %v324, %v559
    %561 = vmatmul.bf16.gmra.mxu0 %v472
    %v562 = vpop.f32.mrf.mxu0
    %v563 = vadd.f32 %v324, %v562
    %v564 = vpop.f32.mrf.mxu0
    %v565 = vadd.f32 %v324, %v564
    %566 = vmatmul.bf16.gmra.mxu0 %v475
    %v567 = vpop.f32.mrf.mxu0
    %v568 = vadd.f32 %v324, %v567
    %v569 = vpop.f32.mrf.mxu0
    %v570 = vadd.f32 %v324, %v569
    %571 = vmatmul.bf16.gmra.mxu0 %v478
    %v572 = vpop.f32.mrf.mxu0
    %v573 = vadd.f32 %v324, %v572
    %v574 = vpop.f32.mrf.mxu0
    %v575 = vadd.f32 %v324, %v574
    %576 = vmatmul.bf16.gmra.mxu0 %v481
    %v577 = vpop.f32.mrf.mxu0
    %v578 = vadd.f32 %v324, %v577
    %v579 = vpop.f32.mrf.mxu0
    %v580 = vadd.f32 %v324, %v579
    %581 = vdwg.mxu0
    %v582 = vpack.c.bf16 %v495, %v493
    %v583 = vpack.c.bf16 %v500, %v498
    %v584 = vpack.c.bf16 %v505, %v503
    %v585 = vpack.c.bf16 %v510, %v508
    %v586 = vpack.c.bf16 %v515, %v513
    %v587 = vpack.c.bf16 %v520, %v518
    %v588 = vpack.c.bf16 %v525, %v523
    %v589 = vpack.c.bf16 %v530, %v528
    %v590 = vpack.c.bf16 %v535, %v533
    %v591 = vpack.c.bf16 %v540, %v538
    %v592 = vpack.c.bf16 %v545, %v543
    %v593 = vpack.c.bf16 %v550, %v548
    %v594 = vpack.c.bf16 %v555, %v553
    %v595 = vpack.c.bf16 %v560, %v558
    %v596 = vpack.c.bf16 %v565, %v563
    %v597 = vpack.c.bf16 %v570, %v568
    %v598 = vpack.c.bf16 %v575, %v573
    %v599 = vpack.c.bf16 %v580, %v578
    %v600 = vld [vmem:[#allocation3] sm:$0xff]
    %v601 = vld [vmem:[#allocation3 + $0x8] sm:$0xf]
    %v602 = vld [vmem:[#allocation3 + $0xc] sm:$0xff]
    %v603 = vld [vmem:[#allocation3 + $0x14] sm:$0xf]
    %v604 = vld [vmem:[#allocation3 + $0x18] sm:$0xff]
    %v605 = vld [vmem:[#allocation3 + $0x20] sm:$0xf]
    %v606 = vld [vmem:[#allocation3 + $0x24] sm:$0xff]
    %v607 = vld [vmem:[#allocation3 + $0x2c] sm:$0xf]
    %v608 = vld [vmem:[#allocation3 + $0x30] sm:$0xff]
    %v609 = vld [vmem:[#allocation3 + $0x38] sm:$0xf]
    %v610 = vld [vmem:[#allocation3 + $0x3c] sm:$0xff]
    %v611 = vld [vmem:[#allocation3 + $0x44] sm:$0xf]
    %v612 = vld [vmem:[#allocation3 + $0x48] sm:$0xff]
    %v613 = vld [vmem:[#allocation3 + $0x50] sm:$0xf]
    %v614 = vld [vmem:[#allocation3 + $0x54] sm:$0xff]
    %v615 = vld [vmem:[#allocation3 + $0x5c] sm:$0xf]
    %v616 = vld [vmem:[#allocation3 + $0x60] sm:$0xff]
    %v617 = vld [vmem:[#allocation3 + $0x68] sm:$0xf]
    %v636 = vunpack.c.l.b16 %v600
    %v637 = vunpack.c.h.b16 %v600
    %v638 = vunpack.c.l.b16 %v601
    %v639 = vunpack.c.l.b16 %v602
    %v640 = vunpack.c.h.b16 %v602
    %v641 = vunpack.c.l.b16 %v603
    %v642 = vunpack.c.l.b16 %v604
    %v643 = vunpack.c.h.b16 %v604
    %v644 = vunpack.c.l.b16 %v605
    %v645 = vunpack.c.l.b16 %v606
    %v646 = vunpack.c.h.b16 %v606
    %v647 = vunpack.c.l.b16 %v607
    %v648 = vunpack.c.l.b16 %v608
    %v649 = vunpack.c.h.b16 %v608
    %v650 = vunpack.c.l.b16 %v609
    %v651 = vunpack.c.l.b16 %v610
    %v652 = vunpack.c.h.b16 %v610
    %v653 = vunpack.c.l.b16 %v611
    %v654 = vunpack.c.l.b16 %v612
    %v655 = vunpack.c.h.b16 %v612
    %v656 = vunpack.c.l.b16 %v613
    %v657 = vunpack.c.l.b16 %v614
    %v658 = vunpack.c.h.b16 %v614
    %v659 = vunpack.c.l.b16 %v615
    %v660 = vunpack.c.l.b16 %v616
    %v661 = vunpack.c.h.b16 %v616
    %v662 = vunpack.c.l.b16 %v617
    %v663 = vpack.c.b16 %v639, %v636
    %v664 = vpack.c.b16 %v640, %v637
    %v665 = vpack.c.b16 %v641, %v638
    %v666 = vpack.c.b16 %v645, %v642
    %v667 = vpack.c.b16 %v646, %v643
    %v668 = vpack.c.b16 %v647, %v644
    %v669 = vpack.c.b16 %v651, %v648
    %v670 = vpack.c.b16 %v652, %v649
    %v671 = vpack.c.b16 %v653, %v650
    %v672 = vpack.c.b16 %v657, %v654
    %v673 = vpack.c.b16 %v658, %v655
    %v674 = vpack.c.b16 %v659, %v656
    %v675 = vpack.c.b16 %v660, %v660
    %v676 = vpack.c.b16 %v661, %v661
    %v677 = vpack.c.b16 %v662, %v662
    %v689 = vsel %vm428, %v665, 0
    %v692 = vsel %vm428, %v668, 0
    %v695 = vsel %vm428, %v671, 0
    %v698 = vsel %vm428, %v674, 0
    %v701 = vsel %vm428, %v677, 0
    %703 = vmatpush.bf16.msra.mxu0 %v589
    %704 = vmatpush.bf16.msra.mxu0 %v588
    %705 = vmatpush.bf16.msra.mxu0 %v587
    %706 = vmatpush.bf16.msra.mxu0 %v586
    %707 = vmatpush.bf16.msra.mxu0 %v585
    %708 = vmatpush.bf16.msra.mxu0 %v584
    %709 = vmatpush.bf16.msra.mxu0 %v583
    %710 = vmatpush.bf16.msra.mxu0 %v582
    %711 = vmatmul.bf16.gmra.mxu0 %v663
    %v712 = vpop.f32.mrf.mxu0
    %v713 = vadd.f32 0.0, %v712
    %v714 = vpop.f32.mrf.mxu0
    %v715 = vadd.f32 0.0, %v714
    %716 = vmatmul.bf16.gmra.mxu0 %v666
    %v717 = vpop.f32.mrf.mxu0
    %v718 = vadd.f32 0.0, %v717
    %v719 = vpop.f32.mrf.mxu0
    %v720 = vadd.f32 0.0, %v719
    %721 = vmatmul.bf16.gmra.mxu0 %v669
    %v722 = vpop.f32.mrf.mxu0
    %v723 = vadd.f32 0.0, %v722
    %v724 = vpop.f32.mrf.mxu0
    %v725 = vadd.f32 0.0, %v724
    %726 = vmatmul.bf16.gmra.mxu0 %v672
    %v727 = vpop.f32.mrf.mxu0
    %v728 = vadd.f32 0.0, %v727
    %v729 = vpop.f32.mrf.mxu0
    %v730 = vadd.f32 0.0, %v729
    %731 = vmatmul.bf16.gmra.mxu0 %v675
    %v732 = vpop.f32.mrf.mxu0
    %v733 = vadd.f32 0.0, %v732
    %v734 = vpop.f32.mrf.mxu0
    %735 = vdwg.mxu0
    %736 = vmatpush.bf16.msra.mxu0 %v597
    %737 = vmatpush.bf16.msra.mxu0 %v596
    %738 = vmatpush.bf16.msra.mxu0 %v595
    %739 = vmatpush.bf16.msra.mxu0 %v594
    %740 = vmatpush.bf16.msra.mxu0 %v593
    %741 = vmatpush.bf16.msra.mxu0 %v592
    %742 = vmatpush.bf16.msra.mxu0 %v591
    %743 = vmatpush.bf16.msra.mxu0 %v590
    %744 = vmatmul.bf16.gmra.mxu0 %v664
    %v745 = vpop.f32.mrf.mxu0
    %v746 = vadd.f32 %v713, %v745
    %v747 = vpop.f32.mrf.mxu0
    %v748 = vadd.f32 %v715, %v747
    %749 = vmatmul.bf16.gmra.mxu0 %v667
    %v750 = vpop.f32.mrf.mxu0
    %v751 = vadd.f32 %v718, %v750
    %v752 = vpop.f32.mrf.mxu0
    %v753 = vadd.f32 %v720, %v752
    %754 = vmatmul.bf16.gmra.mxu0 %v670
    %v755 = vpop.f32.mrf.mxu0
    %v756 = vadd.f32 %v723, %v755
    %v757 = vpop.f32.mrf.mxu0
    %v758 = vadd.f32 %v725, %v757
    %759 = vmatmul.bf16.gmra.mxu0 %v673
    %v760 = vpop.f32.mrf.mxu0
    %v761 = vadd.f32 %v728, %v760
    %v762 = vpop.f32.mrf.mxu0
    %v763 = vadd.f32 %v730, %v762
    %764 = vmatmul.bf16.gmra.mxu0 %v676
    %v765 = vpop.f32.mrf.mxu0
    %v766 = vadd.f32 %v733, %v765
    %v767 = vpop.f32.mrf.mxu0
    %768 = vdwg.mxu0
    %769 = vmatpush.bf16.msra.mxu0 0
    %770 = vmatpush.bf16.msra.mxu0 0
    %771 = vmatpush.bf16.msra.mxu0 0
    %772 = vmatpush.bf16.msra.mxu0 0
    %773 = vmatpush.bf16.msra.mxu0 0
    %774 = vmatpush.bf16.msra.mxu0 0
    %775 = vmatpush.bf16.msra.mxu0 %v599
    %776 = vmatpush.bf16.msra.mxu0 %v598
    %777 = vmatmul.bf16.gmra.mxu0 %v689
    %v778 = vpop.f32.mrf.mxu0
    %v779 = vadd.f32 %v746, %v778
    %v780 = vpop.f32.mrf.mxu0
    %v781 = vadd.f32 %v748, %v780
    %782 = vmatmul.bf16.gmra.mxu0 %v692
    %v783 = vpop.f32.mrf.mxu0
    %v784 = vadd.f32 %v751, %v783
    %v785 = vpop.f32.mrf.mxu0
    %v786 = vadd.f32 %v753, %v785
    %787 = vmatmul.bf16.gmra.mxu0 %v695
    %v788 = vpop.f32.mrf.mxu0
    %v789 = vadd.f32 %v756, %v788
    %v790 = vpop.f32.mrf.mxu0
    %v791 = vadd.f32 %v758, %v790
    %792 = vmatmul.bf16.gmra.mxu0 %v698
    %v793 = vpop.f32.mrf.mxu0
    %v794 = vadd.f32 %v761, %v793
    %v795 = vpop.f32.mrf.mxu0
    %v796 = vadd.f32 %v763, %v795
    %797 = vmatmul.bf16.gmra.mxu0 %v701
    %v798 = vpop.f32.mrf.mxu0
    %v799 = vadd.f32 %v766, %v798
    %v800 = vpop.f32.mrf.mxu0
    %801 = vdwg.mxu0
    %s802 = scalar_lea.vmem [#allocation3], 108
    %v803 = vld [vmem:[%s802] sm:$0xff]
    %v804 = vld [vmem:[%s802 + $0x8] sm:$0xf]
    %v805 = vld [vmem:[%s802 + $0xc] sm:$0xff]
    %v806 = vld [vmem:[%s802 + $0x14] sm:$0xf]
    %v807 = vld [vmem:[%s802 + $0x18] sm:$0xff]
    %v808 = vld [vmem:[%s802 + $0x20] sm:$0xf]
    %v809 = vld [vmem:[%s802 + $0x24] sm:$0xff]
    %v810 = vld [vmem:[%s802 + $0x2c] sm:$0xf]
    %v811 = vld [vmem:[%s802 + $0x30] sm:$0xff]
    %v812 = vld [vmem:[%s802 + $0x38] sm:$0xf]
    %v813 = vld [vmem:[%s802 + $0x3c] sm:$0xff]
    %v814 = vld [vmem:[%s802 + $0x44] sm:$0xf]
    %v815 = vld [vmem:[%s802 + $0x48] sm:$0xff]
    %v816 = vld [vmem:[%s802 + $0x50] sm:$0xf]
    %v817 = vld [vmem:[%s802 + $0x54] sm:$0xff]
    %v818 = vld [vmem:[%s802 + $0x5c] sm:$0xf]
    %v819 = vld [vmem:[%s802 + $0x60] sm:$0xff]
    %v820 = vld [vmem:[%s802 + $0x68] sm:$0xf]
    %v839 = vunpack.c.l.b16 %v803
    %v840 = vunpack.c.h.b16 %v803
    %v841 = vunpack.c.l.b16 %v804
    %v842 = vunpack.c.l.b16 %v805
    %v843 = vunpack.c.h.b16 %v805
    %v844 = vunpack.c.l.b16 %v806
    %v845 = vunpack.c.l.b16 %v807
    %v846 = vunpack.c.h.b16 %v807
    %v847 = vunpack.c.l.b16 %v808
    %v848 = vunpack.c.l.b16 %v809
    %v849 = vunpack.c.h.b16 %v809
    %v850 = vunpack.c.l.b16 %v810
    %v851 = vunpack.c.l.b16 %v811
    %v852 = vunpack.c.h.b16 %v811
    %v853 = vunpack.c.l.b16 %v812
    %v854 = vunpack.c.l.b16 %v813
    %v855 = vunpack.c.h.b16 %v813
    %v856 = vunpack.c.l.b16 %v814
    %v857 = vunpack.c.l.b16 %v815
    %v858 = vunpack.c.h.b16 %v815
    %v859 = vunpack.c.l.b16 %v816
    %v860 = vunpack.c.l.b16 %v817
    %v861 = vunpack.c.h.b16 %v817
    %v862 = vunpack.c.l.b16 %v818
    %v863 = vunpack.c.l.b16 %v819
    %v864 = vunpack.c.h.b16 %v819
    %v865 = vunpack.c.l.b16 %v820
    %v866 = vpack.c.b16 %v842, %v839
    %v867 = vpack.c.b16 %v843, %v840
    %v868 = vpack.c.b16 %v844, %v841
    %v869 = vpack.c.b16 %v848, %v845
    %v870 = vpack.c.b16 %v849, %v846
    %v871 = vpack.c.b16 %v850, %v847
    %v872 = vpack.c.b16 %v854, %v851
    %v873 = vpack.c.b16 %v855, %v852
    %v874 = vpack.c.b16 %v856, %v853
    %v875 = vpack.c.b16 %v860, %v857
    %v876 = vpack.c.b16 %v861, %v858
    %v877 = vpack.c.b16 %v862, %v859
    %v878 = vpack.c.b16 %v863, %v863
    %v879 = vpack.c.b16 %v864, %v864
    %v880 = vpack.c.b16 %v865, %v865
    %v892 = vsel %vm428, %v868, 0
    %v895 = vsel %vm428, %v871, 0
    %v898 = vsel %vm428, %v874, 0
    %v901 = vsel %vm428, %v877, 0
    %v904 = vsel %vm428, %v880, 0
    %906 = vmatpush.bf16.msra.mxu0 %v589
    %907 = vmatpush.bf16.msra.mxu0 %v588
    %908 = vmatpush.bf16.msra.mxu0 %v587
    %909 = vmatpush.bf16.msra.mxu0 %v586
    %910 = vmatpush.bf16.msra.mxu0 %v585
    %911 = vmatpush.bf16.msra.mxu0 %v584
    %912 = vmatpush.bf16.msra.mxu0 %v583
    %913 = vmatpush.bf16.msra.mxu0 %v582
    %914 = vmatmul.bf16.gmra.mxu0 %v866
    %v915 = vpop.f32.mrf.mxu0
    %v916 = vadd.f32 0.0, %v915
    %v917 = vpop.f32.mrf.mxu0
    %v918 = vadd.f32 0.0, %v917
    %919 = vmatmul.bf16.gmra.mxu0 %v869
    %v920 = vpop.f32.mrf.mxu0
    %v921 = vadd.f32 0.0, %v920
    %v922 = vpop.f32.mrf.mxu0
    %v923 = vadd.f32 0.0, %v922
    %924 = vmatmul.bf16.gmra.mxu0 %v872
    %v925 = vpop.f32.mrf.mxu0
    %v926 = vadd.f32 0.0, %v925
    %v927 = vpop.f32.mrf.mxu0
    %v928 = vadd.f32 0.0, %v927
    %929 = vmatmul.bf16.gmra.mxu0 %v875
    %v930 = vpop.f32.mrf.mxu0
    %v931 = vadd.f32 0.0, %v930
    %v932 = vpop.f32.mrf.mxu0
    %v933 = vadd.f32 0.0, %v932
    %934 = vmatmul.bf16.gmra.mxu0 %v878
    %v935 = vpop.f32.mrf.mxu0
    %v936 = vadd.f32 0.0, %v935
    %v937 = vpop.f32.mrf.mxu0
    %938 = vdwg.mxu0
    %939 = vmatpush.bf16.msra.mxu0 %v597
    %940 = vmatpush.bf16.msra.mxu0 %v596
    %941 = vmatpush.bf16.msra.mxu0 %v595
    %942 = vmatpush.bf16.msra.mxu0 %v594
    %943 = vmatpush.bf16.msra.mxu0 %v593
    %944 = vmatpush.bf16.msra.mxu0 %v592
    %945 = vmatpush.bf16.msra.mxu0 %v591
    %946 = vmatpush.bf16.msra.mxu0 %v590
    %947 = vmatmul.bf16.gmra.mxu0 %v867
    %v948 = vpop.f32.mrf.mxu0
    %v949 = vadd.f32 %v916, %v948
    %v950 = vpop.f32.mrf.mxu0
    %v951 = vadd.f32 %v918, %v950
    %952 = vmatmul.bf16.gmra.mxu0 %v870
    %v953 = vpop.f32.mrf.mxu0
    %v954 = vadd.f32 %v921, %v953
    %v955 = vpop.f32.mrf.mxu0
    %v956 = vadd.f32 %v923, %v955
    %957 = vmatmul.bf16.gmra.mxu0 %v873
    %v958 = vpop.f32.mrf.mxu0
    %v959 = vadd.f32 %v926, %v958
    %v960 = vpop.f32.mrf.mxu0
    %v961 = vadd.f32 %v928, %v960
    %962 = vmatmul.bf16.gmra.mxu0 %v876
    %v963 = vpop.f32.mrf.mxu0
    %v964 = vadd.f32 %v931, %v963
    %v965 = vpop.f32.mrf.mxu0
    %v966 = vadd.f32 %v933, %v965
    %967 = vmatmul.bf16.gmra.mxu0 %v879
    %v968 = vpop.f32.mrf.mxu0
    %v969 = vadd.f32 %v936, %v968
    %v970 = vpop.f32.mrf.mxu0
    %971 = vdwg.mxu0
    %972 = vmatpush.bf16.msra.mxu0 0
    %973 = vmatpush.bf16.msra.mxu0 0
    %974 = vmatpush.bf16.msra.mxu0 0
    %975 = vmatpush.bf16.msra.mxu0 0
    %976 = vmatpush.bf16.msra.mxu0 0
    %977 = vmatpush.bf16.msra.mxu0 0
    %978 = vmatpush.bf16.msra.mxu0 %v599
    %979 = vmatpush.bf16.msra.mxu0 %v598
    %980 = vmatmul.bf16.gmra.mxu0 %v892
    %v981 = vpop.f32.mrf.mxu0
    %v982 = vadd.f32 %v949, %v981
    %v983 = vpop.f32.mrf.mxu0
    %v984 = vadd.f32 %v951, %v983
    %985 = vmatmul.bf16.gmra.mxu0 %v895
    %v986 = vpop.f32.mrf.mxu0
    %v987 = vadd.f32 %v954, %v986
    %v988 = vpop.f32.mrf.mxu0
    %v989 = vadd.f32 %v956, %v988
    %990 = vmatmul.bf16.gmra.mxu0 %v898
    %v991 = vpop.f32.mrf.mxu0
    %v992 = vadd.f32 %v959, %v991
    %v993 = vpop.f32.mrf.mxu0
    %v994 = vadd.f32 %v961, %v993
    %995 = vmatmul.bf16.gmra.mxu0 %v901
    %v996 = vpop.f32.mrf.mxu0
    %v997 = vadd.f32 %v964, %v996
    %v998 = vpop.f32.mrf.mxu0
    %v999 = vadd.f32 %v966, %v998
    %1000 = vmatmul.bf16.gmra.mxu0 %v904
    %v1001 = vpop.f32.mrf.mxu0
    %v1002 = vadd.f32 %v969, %v1001
    %v1003 = vpop.f32.mrf.mxu0
    %1004 = vdwg.mxu0
    %v1005 = vmax.f32 %v779, %v982
    %v1006 = vmax.f32 %v781, %v984
    %v1007 = vmax.f32 %v784, %v987
    %v1008 = vmax.f32 %v786, %v989
    %v1009 = vmax.f32 %v789, %v992
    %v1010 = vmax.f32 %v791, %v994
    %v1011 = vmax.f32 %v794, %v997
    %v1012 = vmax.f32 %v796, %v999
    %v1013 = vmax.f32 %v799, %v1002
    %s1014 = scalar_lea.vmem [#allocation3], 216
    %v1015 = vld [vmem:[%s1014] sm:$0xff]
    %v1016 = vld [vmem:[%s1014 + $0x8] sm:$0xf]
    %v1017 = vld [vmem:[%s1014 + $0xc] sm:$0xff]
    %v1018 = vld [vmem:[%s1014 + $0x14] sm:$0xf]
    %v1019 = vld [vmem:[%s1014 + $0x18] sm:$0xff]
    %v1020 = vld [vmem:[%s1014 + $0x20] sm:$0xf]
    %v1021 = vld [vmem:[%s1014 + $0x24] sm:$0xff]
    %v1022 = vld [vmem:[%s1014 + $0x2c] sm:$0xf]
    %v1023 = vld [vmem:[%s1014 + $0x30] sm:$0xff]
    %v1024 = vld [vmem:[%s1014 + $0x38] sm:$0xf]
    %v1025 = vld [vmem:[%s1014 + $0x3c] sm:$0xff]
    %v1026 = vld [vmem:[%s1014 + $0x44] sm:$0xf]
    %v1027 = vld [vmem:[%s1014 + $0x48] sm:$0xff]
    %v1028 = vld [vmem:[%s1014 + $0x50] sm:$0xf]
    %v1029 = vld [vmem:[%s1014 + $0x54] sm:$0xff]
    %v1030 = vld [vmem:[%s1014 + $0x5c] sm:$0xf]
    %v1031 = vld [vmem:[%s1014 + $0x60] sm:$0xff]
    %v1032 = vld [vmem:[%s1014 + $0x68] sm:$0xf]
    %v1051 = vunpack.c.l.b16 %v1015
    %v1052 = vunpack.c.h.b16 %v1015
    %v1053 = vunpack.c.l.b16 %v1016
    %v1054 = vunpack.c.l.b16 %v1017
    %v1055 = vunpack.c.h.b16 %v1017
    %v1056 = vunpack.c.l.b16 %v1018
    %v1057 = vunpack.c.l.b16 %v1019
    %v1058 = vunpack.c.h.b16 %v1019
    %v1059 = vunpack.c.l.b16 %v1020
    %v1060 = vunpack.c.l.b16 %v1021
    %v1061 = vunpack.c.h.b16 %v1021
    %v1062 = vunpack.c.l.b16 %v1022
    %v1063 = vunpack.c.l.b16 %v1023
    %v1064 = vunpack.c.h.b16 %v1023
    %v1065 = vunpack.c.l.b16 %v1024
    %v1066 = vunpack.c.l.b16 %v1025
    %v1067 = vunpack.c.h.b16 %v1025
    %v1068 = vunpack.c.l.b16 %v1026
    %v1069 = vunpack.c.l.b16 %v1027
    %v1070 = vunpack.c.h.b16 %v1027
    %v1071 = vunpack.c.l.b16 %v1028
    %v1072 = vunpack.c.l.b16 %v1029
    %v1073 = vunpack.c.h.b16 %v1029
    %v1074 = vunpack.c.l.b16 %v1030
    %v1075 = vunpack.c.l.b16 %v1031
    %v1076 = vunpack.c.h.b16 %v1031
    %v1077 = vunpack.c.l.b16 %v1032
    %v1078 = vpack.c.b16 %v1054, %v1051
    %v1079 = vpack.c.b16 %v1055, %v1052
    %v1080 = vpack.c.b16 %v1056, %v1053
    %v1081 = vpack.c.b16 %v1060, %v1057
    %v1082 = vpack.c.b16 %v1061, %v1058
    %v1083 = vpack.c.b16 %v1062, %v1059
    %v1084 = vpack.c.b16 %v1066, %v1063
    %v1085 = vpack.c.b16 %v1067, %v1064
    %v1086 = vpack.c.b16 %v1068, %v1065
    %v1087 = vpack.c.b16 %v1072, %v1069
    %v1088 = vpack.c.b16 %v1073, %v1070
    %v1089 = vpack.c.b16 %v1074, %v1071
    %v1090 = vpack.c.b16 %v1075, %v1075
    %v1091 = vpack.c.b16 %v1076, %v1076
    %v1092 = vpack.c.b16 %v1077, %v1077
    %v1104 = vsel %vm428, %v1080, 0
    %v1107 = vsel %vm428, %v1083, 0
    %v1110 = vsel %vm428, %v1086, 0
    %v1113 = vsel %vm428, %v1089, 0
    %v1116 = vsel %vm428, %v1092, 0
    %1118 = vmatpush.bf16.msra.mxu0 %v589
    %1119 = vmatpush.bf16.msra.mxu0 %v588
    %1120 = vmatpush.bf16.msra.mxu0 %v587
    %1121 = vmatpush.bf16.msra.mxu0 %v586
    %1122 = vmatpush.bf16.msra.mxu0 %v585
    %1123 = vmatpush.bf16.msra.mxu0 %v584
    %1124 = vmatpush.bf16.msra.mxu0 %v583
    %1125 = vmatpush.bf16.msra.mxu0 %v582
    %1126 = vmatmul.bf16.gmra.mxu0 %v1078
    %v1127 = vpop.f32.mrf.mxu0
    %v1128 = vadd.f32 0.0, %v1127
    %v1129 = vpop.f32.mrf.mxu0
    %v1130 = vadd.f32 0.0, %v1129
    %1131 = vmatmul.bf16.gmra.mxu0 %v1081
    %v1132 = vpop.f32.mrf.mxu0
    %v1133 = vadd.f32 0.0, %v1132
    %v1134 = vpop.f32.mrf.mxu0
    %v1135 = vadd.f32 0.0, %v1134
    %1136 = vmatmul.bf16.gmra.mxu0 %v1084
    %v1137 = vpop.f32.mrf.mxu0
    %v1138 = vadd.f32 0.0, %v1137
    %v1139 = vpop.f32.mrf.mxu0
    %v1140 = vadd.f32 0.0, %v1139
    %1141 = vmatmul.bf16.gmra.mxu0 %v1087
    %v1142 = vpop.f32.mrf.mxu0
    %v1143 = vadd.f32 0.0, %v1142
    %v1144 = vpop.f32.mrf.mxu0
    %v1145 = vadd.f32 0.0, %v1144
    %1146 = vmatmul.bf16.gmra.mxu0 %v1090
    %v1147 = vpop.f32.mrf.mxu0
    %v1148 = vadd.f32 0.0, %v1147
    %v1149 = vpop.f32.mrf.mxu0
    %1150 = vdwg.mxu0
    %1151 = vmatpush.bf16.msra.mxu0 %v597
    %1152 = vmatpush.bf16.msra.mxu0 %v596
    %1153 = vmatpush.bf16.msra.mxu0 %v595
    %1154 = vmatpush.bf16.msra.mxu0 %v594
    %1155 = vmatpush.bf16.msra.mxu0 %v593
    %1156 = vmatpush.bf16.msra.mxu0 %v592
    %1157 = vmatpush.bf16.msra.mxu0 %v591
    %1158 = vmatpush.bf16.msra.mxu0 %v590
    %1159 = vmatmul.bf16.gmra.mxu0 %v1079
    %v1160 = vpop.f32.mrf.mxu0
    %v1161 = vadd.f32 %v1128, %v1160
    %v1162 = vpop.f32.mrf.mxu0
    %v1163 = vadd.f32 %v1130, %v1162
    %1164 = vmatmul.bf16.gmra.mxu0 %v1082
    %v1165 = vpop.f32.mrf.mxu0
    %v1166 = vadd.f32 %v1133, %v1165
    %v1167 = vpop.f32.mrf.mxu0
    %v1168 = vadd.f32 %v1135, %v1167
    %1169 = vmatmul.bf16.gmra.mxu0 %v1085
    %v1170 = vpop.f32.mrf.mxu0
    %v1171 = vadd.f32 %v1138, %v1170
    %v1172 = vpop.f32.mrf.mxu0
    %v1173 = vadd.f32 %v1140, %v1172
    %1174 = vmatmul.bf16.gmra.mxu0 %v1088
    %v1175 = vpop.f32.mrf.mxu0
    %v1176 = vadd.f32 %v1143, %v1175
    %v1177 = vpop.f32.mrf.mxu0
    %v1178 = vadd.f32 %v1145, %v1177
    %1179 = vmatmul.bf16.gmra.mxu0 %v1091
    %v1180 = vpop.f32.mrf.mxu0
    %v1181 = vadd.f32 %v1148, %v1180
    %v1182 = vpop.f32.mrf.mxu0
    %1183 = vdwg.mxu0
    %1184 = vmatpush.bf16.msra.mxu0 0
    %1185 = vmatpush.bf16.msra.mxu0 0
    %1186 = vmatpush.bf16.msra.mxu0 0
    %1187 = vmatpush.bf16.msra.mxu0 0
    %1188 = vmatpush.bf16.msra.mxu0 0
    %1189 = vmatpush.bf16.msra.mxu0 0
    %1190 = vmatpush.bf16.msra.mxu0 %v599
    %1191 = vmatpush.bf16.msra.mxu0 %v598
    %1192 = vmatmul.bf16.gmra.mxu0 %v1104
    %v1193 = vpop.f32.mrf.mxu0
    %v1194 = vadd.f32 %v1161, %v1193
    %v1195 = vpop.f32.mrf.mxu0
    %v1196 = vadd.f32 %v1163, %v1195
    %1197 = vmatmul.bf16.gmra.mxu0 %v1107
    %v1198 = vpop.f32.mrf.mxu0
    %v1199 = vadd.f32 %v1166, %v1198
    %v1200 = vpop.f32.mrf.mxu0
    %v1201 = vadd.f32 %v1168, %v1200
    %1202 = vmatmul.bf16.gmra.mxu0 %v1110
    %v1203 = vpop.f32.mrf.mxu0
    %v1204 = vadd.f32 %v1171, %v1203
    %v1205 = vpop.f32.mrf.mxu0
    %v1206 = vadd.f32 %v1173, %v1205
    %1207 = vmatmul.bf16.gmra.mxu0 %v1113
    %v1208 = vpop.f32.mrf.mxu0
    %v1209 = vadd.f32 %v1176, %v1208
    %v1210 = vpop.f32.mrf.mxu0
    %v1211 = vadd.f32 %v1178, %v1210
    %1212 = vmatmul.bf16.gmra.mxu0 %v1116
    %v1213 = vpop.f32.mrf.mxu0
    %v1214 = vadd.f32 %v1181, %v1213
    %v1215 = vpop.f32.mrf.mxu0
    %1216 = vdwg.mxu0
    %v1217 = vmax.f32 %v1005, %v1194
    %v1218 = vmax.f32 %v1006, %v1196
    %v1219 = vmax.f32 %v1007, %v1199
    %v1220 = vmax.f32 %v1008, %v1201
    %v1221 = vmax.f32 %v1009, %v1204
    %v1222 = vmax.f32 %v1010, %v1206
    %v1223 = vmax.f32 %v1011, %v1209
    %v1224 = vmax.f32 %v1012, %v1211
    %v1225 = vmax.f32 %v1013, %v1214
    %s1226 = scalar_lea.vmem [#allocation3], 324
    %v1227 = vld [vmem:[%s1226] sm:$0xff]
    %v1228 = vld [vmem:[%s1226 + $0x8] sm:$0xf]
    %v1229 = vld [vmem:[%s1226 + $0xc] sm:$0xff]
    %v1230 = vld [vmem:[%s1226 + $0x14] sm:$0xf]
    %v1231 = vld [vmem:[%s1226 + $0x18] sm:$0xff]
    %v1232 = vld [vmem:[%s1226 + $0x20] sm:$0xf]
    %v1233 = vld [vmem:[%s1226 + $0x24] sm:$0xff]
    %v1234 = vld [vmem:[%s1226 + $0x2c] sm:$0xf]
    %v1235 = vld [vmem:[%s1226 + $0x30] sm:$0xff]
    %v1236 = vld [vmem:[%s1226 + $0x38] sm:$0xf]
    %v1237 = vld [vmem:[%s1226 + $0x3c] sm:$0xff]
    %v1238 = vld [vmem:[%s1226 + $0x44] sm:$0xf]
    %v1239 = vld [vmem:[%s1226 + $0x48] sm:$0xff]
    %v1240 = vld [vmem:[%s1226 + $0x50] sm:$0xf]
    %v1241 = vld [vmem:[%s1226 + $0x54] sm:$0xff]
    %v1242 = vld [vmem:[%s1226 + $0x5c] sm:$0xf]
    %v1243 = vld [vmem:[%s1226 + $0x60] sm:$0xff]
    %v1244 = vld [vmem:[%s1226 + $0x68] sm:$0xf]
    %v1263 = vunpack.c.l.b16 %v1227
    %v1264 = vunpack.c.h.b16 %v1227
    %v1265 = vunpack.c.l.b16 %v1228
    %v1266 = vunpack.c.l.b16 %v1229
    %v1267 = vunpack.c.h.b16 %v1229
    %v1268 = vunpack.c.l.b16 %v1230
    %v1269 = vunpack.c.l.b16 %v1231
    %v1270 = vunpack.c.h.b16 %v1231
    %v1271 = vunpack.c.l.b16 %v1232
    %v1272 = vunpack.c.l.b16 %v1233
    %v1273 = vunpack.c.h.b16 %v1233
    %v1274 = vunpack.c.l.b16 %v1234
    %v1275 = vunpack.c.l.b16 %v1235
    %v1276 = vunpack.c.h.b16 %v1235
    %v1277 = vunpack.c.l.b16 %v1236
    %v1278 = vunpack.c.l.b16 %v1237
    %v1279 = vunpack.c.h.b16 %v1237
    %v1280 = vunpack.c.l.b16 %v1238
    %v1281 = vunpack.c.l.b16 %v1239
    %v1282 = vunpack.c.h.b16 %v1239
    %v1283 = vunpack.c.l.b16 %v1240
    %v1284 = vunpack.c.l.b16 %v1241
    %v1285 = vunpack.c.h.b16 %v1241
    %v1286 = vunpack.c.l.b16 %v1242
    %v1287 = vunpack.c.l.b16 %v1243
    %v1288 = vunpack.c.h.b16 %v1243
    %v1289 = vunpack.c.l.b16 %v1244
    %v1290 = vpack.c.b16 %v1266, %v1263
    %v1291 = vpack.c.b16 %v1267, %v1264
    %v1292 = vpack.c.b16 %v1268, %v1265
    %v1293 = vpack.c.b16 %v1272, %v1269
    %v1294 = vpack.c.b16 %v1273, %v1270
    %v1295 = vpack.c.b16 %v1274, %v1271
    %v1296 = vpack.c.b16 %v1278, %v1275
    %v1297 = vpack.c.b16 %v1279, %v1276
    %v1298 = vpack.c.b16 %v1280, %v1277
    %v1299 = vpack.c.b16 %v1284, %v1281
    %v1300 = vpack.c.b16 %v1285, %v1282
    %v1301 = vpack.c.b16 %v1286, %v1283
    %v1302 = vpack.c.b16 %v1287, %v1287
    %v1303 = vpack.c.b16 %v1288, %v1288
    %v1304 = vpack.c.b16 %v1289, %v1289
    %v1316 = vsel %vm428, %v1292, 0
    %v1319 = vsel %vm428, %v1295, 0
    %v1322 = vsel %vm428, %v1298, 0
    %v1325 = vsel %vm428, %v1301, 0
    %v1328 = vsel %vm428, %v1304, 0
    %1330 = vmatpush.bf16.msra.mxu0 %v589
    %1331 = vmatpush.bf16.msra.mxu0 %v588
    %1332 = vmatpush.bf16.msra.mxu0 %v587
    %1333 = vmatpush.bf16.msra.mxu0 %v586
    %1334 = vmatpush.bf16.msra.mxu0 %v585
    %1335 = vmatpush.bf16.msra.mxu0 %v584
    %1336 = vmatpush.bf16.msra.mxu0 %v583
    %1337 = vmatpush.bf16.msra.mxu0 %v582
    %1338 = vmatmul.bf16.gmra.mxu0 %v1290
    %v1339 = vpop.f32.mrf.mxu0
    %v1340 = vadd.f32 0.0, %v1339
    %v1341 = vpop.f32.mrf.mxu0
    %v1342 = vadd.f32 0.0, %v1341
    %1343 = vmatmul.bf16.gmra.mxu0 %v1293
    %v1344 = vpop.f32.mrf.mxu0
    %v1345 = vadd.f32 0.0, %v1344
    %v1346 = vpop.f32.mrf.mxu0
    %v1347 = vadd.f32 0.0, %v1346
    %1348 = vmatmul.bf16.gmra.mxu0 %v1296
    %v1349 = vpop.f32.mrf.mxu0
    %v1350 = vadd.f32 0.0, %v1349
    %v1351 = vpop.f32.mrf.mxu0
    %v1352 = vadd.f32 0.0, %v1351
    %1353 = vmatmul.bf16.gmra.mxu0 %v1299
    %v1354 = vpop.f32.mrf.mxu0
    %v1355 = vadd.f32 0.0, %v1354
    %v1356 = vpop.f32.mrf.mxu0
    %v1357 = vadd.f32 0.0, %v1356
    %1358 = vmatmul.bf16.gmra.mxu0 %v1302
    %v1359 = vpop.f32.mrf.mxu0
    %v1360 = vadd.f32 0.0, %v1359
    %v1361 = vpop.f32.mrf.mxu0
    %1362 = vdwg.mxu0
    %1363 = vmatpush.bf16.msra.mxu0 %v597
    %1364 = vmatpush.bf16.msra.mxu0 %v596
    %1365 = vmatpush.bf16.msra.mxu0 %v595
    %1366 = vmatpush.bf16.msra.mxu0 %v594
    %1367 = vmatpush.bf16.msra.mxu0 %v593
    %1368 = vmatpush.bf16.msra.mxu0 %v592
    %1369 = vmatpush.bf16.msra.mxu0 %v591
    %1370 = vmatpush.bf16.msra.mxu0 %v590
    %1371 = vmatmul.bf16.gmra.mxu0 %v1291
    %v1372 = vpop.f32.mrf.mxu0
    %v1373 = vadd.f32 %v1340, %v1372
    %v1374 = vpop.f32.mrf.mxu0
    %v1375 = vadd.f32 %v1342, %v1374
    %1376 = vmatmul.bf16.gmra.mxu0 %v1294
    %v1377 = vpop.f32.mrf.mxu0
    %v1378 = vadd.f32 %v1345, %v1377
    %v1379 = vpop.f32.mrf.mxu0
    %v1380 = vadd.f32 %v1347, %v1379
    %1381 = vmatmul.bf16.gmra.mxu0 %v1297
    %v1382 = vpop.f32.mrf.mxu0
    %v1383 = vadd.f32 %v1350, %v1382
    %v1384 = vpop.f32.mrf.mxu0
    %v1385 = vadd.f32 %v1352, %v1384
    %1386 = vmatmul.bf16.gmra.mxu0 %v1300
    %v1387 = vpop.f32.mrf.mxu0
    %v1388 = vadd.f32 %v1355, %v1387
    %v1389 = vpop.f32.mrf.mxu0
    %v1390 = vadd.f32 %v1357, %v1389
    %1391 = vmatmul.bf16.gmra.mxu0 %v1303
    %v1392 = vpop.f32.mrf.mxu0
    %v1393 = vadd.f32 %v1360, %v1392
    %v1394 = vpop.f32.mrf.mxu0
    %1395 = vdwg.mxu0
    %1396 = vmatpush.bf16.msra.mxu0 0
    %1397 = vmatpush.bf16.msra.mxu0 0
    %1398 = vmatpush.bf16.msra.mxu0 0
    %1399 = vmatpush.bf16.msra.mxu0 0
    %1400 = vmatpush.bf16.msra.mxu0 0
    %1401 = vmatpush.bf16.msra.mxu0 0
    %1402 = vmatpush.bf16.msra.mxu0 %v599
    %1403 = vmatpush.bf16.msra.mxu0 %v598
    %1404 = vmatmul.bf16.gmra.mxu0 %v1316
    %v1405 = vpop.f32.mrf.mxu0
    %v1406 = vadd.f32 %v1373, %v1405
    %v1407 = vpop.f32.mrf.mxu0
    %v1408 = vadd.f32 %v1375, %v1407
    %1409 = vmatmul.bf16.gmra.mxu0 %v1319
    %v1410 = vpop.f32.mrf.mxu0
    %v1411 = vadd.f32 %v1378, %v1410
    %v1412 = vpop.f32.mrf.mxu0
    %v1413 = vadd.f32 %v1380, %v1412
    %1414 = vmatmul.bf16.gmra.mxu0 %v1322
    %v1415 = vpop.f32.mrf.mxu0
    %v1416 = vadd.f32 %v1383, %v1415
    %v1417 = vpop.f32.mrf.mxu0
    %v1418 = vadd.f32 %v1385, %v1417
    %1419 = vmatmul.bf16.gmra.mxu0 %v1325
    %v1420 = vpop.f32.mrf.mxu0
    %v1421 = vadd.f32 %v1388, %v1420
    %v1422 = vpop.f32.mrf.mxu0
    %v1423 = vadd.f32 %v1390, %v1422
    %1424 = vmatmul.bf16.gmra.mxu0 %v1328
    %v1425 = vpop.f32.mrf.mxu0
    %v1426 = vadd.f32 %v1393, %v1425
    %v1427 = vpop.f32.mrf.mxu0
    %1428 = vdwg.mxu0
    %v1429 = vmax.f32 %v1217, %v1406
    %v1430 = vmax.f32 %v1218, %v1408
    %v1431 = vmax.f32 %v1219, %v1411
    %v1432 = vmax.f32 %v1220, %v1413
    %v1433 = vmax.f32 %v1221, %v1416
    %v1434 = vmax.f32 %v1222, %v1418
    %v1435 = vmax.f32 %v1223, %v1421
    %v1436 = vmax.f32 %v1224, %v1423
    %v1437 = vmax.f32 %v1225, %v1426
    %v1438 = vld [vmem:[%s7] sm:$0x1]
    %v1439 = vld [vmem:[%s9] sm:$0x1]
    %vm1440 = vcmask 523264
    %v1441 = vsel %vm1440, %v1429, 0.0
    %v1442 = vsel %vm1440, %v1430, 0.0
    %v1443 = vadd.f32 %v1441, %v1442
    %v1444 = vsel %vm1440, %v1431, 0.0
    %v1445 = vadd.f32 %v1443, %v1444
    %v1446 = vsel %vm1440, %v1432, 0.0
    %v1447 = vadd.f32 %v1445, %v1446
    %v1448 = vsel %vm1440, %v1433, 0.0
    %v1449 = vadd.f32 %v1447, %v1448
    %v1450 = vsel %vm1440, %v1434, 0.0
    %v1451 = vadd.f32 %v1449, %v1450
    %v1452 = vsel %vm1440, %v1435, 0.0
    %v1453 = vadd.f32 %v1451, %v1452
    %v1454 = vsel %vm1440, %v1436, 0.0
    %v1455 = vadd.f32 %v1453, %v1454
    %v1456 = vsel %vm1440, %v1437, 0.0
    %v1457 = vadd.f32 %v1455, %v1456
    %v1458 = vrot.slane %v1457, 4
    %v1459 = vadd.f32 %v1457, %v1458
    %v1460 = vrot.slane %v1459, 2
    %v1461 = vadd.f32 %v1459, %v1460
    %v1462 = vrot.slane %v1461, 1
    %v1463 = vadd.f32 %v1461, %v1462
    %v1464 = vrcp.pop 72.0
    %v1465 = vmul.f32 72.0, %v1464
    %v1466 = vsub.f32 1.0, %v1465
    %v1467 = vmul.f32 %v1464, %v1466
    %v1468 = vadd.f32 %v1464, %v1467
    %vm1469 = vweird.f32 %v1464
    %v1470 = vsel %vm1469, %v1464, %v1468
    %v1471 = vmul.f32 %v1463, %v1470
    %v1472 = vsub.f32 %v1429, %v1471
    %v1473 = vsub.f32 %v1430, %v1471
    %v1474 = vsub.f32 %v1431, %v1471
    %v1475 = vsub.f32 %v1432, %v1471
    %v1476 = vsub.f32 %v1433, %v1471
    %v1477 = vsub.f32 %v1434, %v1471
    %v1478 = vsub.f32 %v1435, %v1471
    %v1479 = vsub.f32 %v1436, %v1471
    %v1480 = vsub.f32 %v1437, %v1471
    %v1481 = vmul.f32 %v1472, %v1472
    %v1482 = vmul.f32 %v1473, %v1473
    %v1483 = vmul.f32 %v1474, %v1474
    %v1484 = vmul.f32 %v1475, %v1475
    %v1485 = vmul.f32 %v1476, %v1476
    %v1486 = vmul.f32 %v1477, %v1477
    %v1487 = vmul.f32 %v1478, %v1478
    %v1488 = vmul.f32 %v1479, %v1479
    %v1489 = vmul.f32 %v1480, %v1480
    %v1490 = vsel %vm1440, %v1481, 0.0
    %v1491 = vsel %vm1440, %v1482, 0.0
    %v1492 = vadd.f32 %v1490, %v1491
    %v1493 = vsel %vm1440, %v1483, 0.0
    %v1494 = vadd.f32 %v1492, %v1493
    %v1495 = vsel %vm1440, %v1484, 0.0
    %v1496 = vadd.f32 %v1494, %v1495
    %v1497 = vsel %vm1440, %v1485, 0.0
    %v1498 = vadd.f32 %v1496, %v1497
    %v1499 = vsel %vm1440, %v1486, 0.0
    %v1500 = vadd.f32 %v1498, %v1499
    %v1501 = vsel %vm1440, %v1487, 0.0
    %v1502 = vadd.f32 %v1500, %v1501
    %v1503 = vsel %vm1440, %v1488, 0.0
    %v1504 = vadd.f32 %v1502, %v1503
    %v1505 = vsel %vm1440, %v1489, 0.0
    %v1506 = vadd.f32 %v1504, %v1505
    %v1507 = vrot.slane %v1506, 4
    %v1508 = vadd.f32 %v1506, %v1507
    %v1509 = vrot.slane %v1508, 2
    %v1510 = vadd.f32 %v1508, %v1509
    %v1511 = vrot.slane %v1510, 1
    %v1512 = vadd.f32 %v1510, %v1511
    %v1513 = vmul.f32 %v1512, %v1470
    %v1514 = vadd.f32 %v1513, 1e-05
    %v1515 = vrsqrt.pop %v1514
    %v1516 = vmul.f32 %v1515, %v1514
    %v1517 = vmul.f32 %v1516, %v1515
    %v1518 = vmul.f32 0.5, %v1517
    %v1519 = vsub.f32 1.5, %v1518
    %v1520 = vmul.f32 %v1515, %v1519
    %vm1521 = vweird.f32 %v1514
    %vm1522 = vweird.f32 %v1515
    %vm1523 = vmor %vm1521, %vm1522
    %v1524 = vsel %vm1523, %v1515, %v1520
    %v1525 = vmul.f32 %v1472, %v1524
    %v1526 = vmul.f32 %v1473, %v1524
    %v1527 = vmul.f32 %v1474, %v1524
    %v1528 = vmul.f32 %v1475, %v1524
    %v1529 = vmul.f32 %v1476, %v1524
    %v1530 = vmul.f32 %v1477, %v1524
    %v1531 = vmul.f32 %v1478, %v1524
    %v1532 = vmul.f32 %v1479, %v1524
    %v1533 = vmul.f32 %v1480, %v1524
    %v1535 = vperm.slane %v1438, 0
    %v1537 = vmul.f32 %v1525, %v1535
    %v1538 = vmul.f32 %v1526, %v1535
    %v1539 = vmul.f32 %v1527, %v1535
    %v1540 = vmul.f32 %v1528, %v1535
    %v1541 = vmul.f32 %v1529, %v1535
    %v1542 = vmul.f32 %v1530, %v1535
    %v1543 = vmul.f32 %v1531, %v1535
    %v1544 = vmul.f32 %v1532, %v1535
    %v1545 = vmul.f32 %v1533, %v1535
    %v1547 = vperm.slane %v1439, 0
    %v1549 = vadd.f32 %v1537, %v1547
    %v1550 = vadd.f32 %v1538, %v1547
    %v1551 = vadd.f32 %v1539, %v1547
    %v1552 = vadd.f32 %v1540, %v1547
    %v1553 = vadd.f32 %v1541, %v1547
    %v1554 = vadd.f32 %v1542, %v1547
    %v1555 = vadd.f32 %v1543, %v1547
    %v1556 = vadd.f32 %v1544, %v1547
    %v1557 = vadd.f32 %v1545, %v1547
    %v1558 = vmax.f32 %v1549, 0.0
    %v1559 = vmax.f32 %v1550, 0.0
    %v1560 = vmax.f32 %v1551, 0.0
    %v1561 = vmax.f32 %v1552, 0.0
    %v1562 = vmax.f32 %v1553, 0.0
    %v1563 = vmax.f32 %v1554, 0.0
    %v1564 = vmax.f32 %v1555, 0.0
    %v1565 = vmax.f32 %v1556, 0.0
    %v1566 = vmax.f32 %v1557, 0.0
    %v1567 = vpack.c.bf16 %v1559, %v1558
    %v1568 = vpack.c.bf16 %v1561, %v1560
    %v1569 = vpack.c.bf16 %v1563, %v1562
    %v1570 = vpack.c.bf16 %v1565, %v1564
    %v1571 = vpack.c.bf16 %v1566, %v1566
    %v1572 = vld [vmem:[%s13] sm:$0xf]
    %v1573 = vld [vmem:[%s13 + $0x4] sm:$0xf]
    %v1574 = vld [vmem:[%s13 + $0x8] sm:$0xf]
    %v1575 = vld [vmem:[%s13 + $0xc] sm:$0xf]
    %v1580 = vunpack.c.l.b16 %v1572
    %v1581 = vunpack.c.l.b16 %v1573
    %v1582 = vunpack.c.l.b16 %v1574
    %v1583 = vunpack.c.l.b16 %v1575
    %v1584 = vpack.c.b16 %v1581, %v1580
    %v1585 = vpack.c.b16 %v1583, %v1582
    %vm1586 = vcmask 588800
    %v1588 = vsel %vm1586, %v1584, 0
    %v1591 = vsel %vm1586, %v1585, 0
    %vm1593 = vcmask 1043456
    %v1595 = vsel %vm1593, %v1571, 0
    %1597 = vmatpush.bf16.msra.mxu0 0
    %1598 = vmatpush.bf16.msra.mxu0 0
    %1599 = vmatpush.bf16.msra.mxu0 0
    %1600 = vmatpush.bf16.msra.mxu0 %v1595
    %1601 = vmatpush.bf16.msra.mxu0 %v1570
    %1602 = vmatpush.bf16.msra.mxu0 %v1569
    %1603 = vmatpush.bf16.msra.mxu0 %v1568
    %1604 = vmatpush.bf16.msra.mxu0 %v1567
    %1605 = vmatmul.bf16.gmra.mxu0 %v1588
    %v1606 = vpop.f32.mrf.mxu0
    %v1607 = vadd.f32 0.0, %v1606
    %v1608 = vpop.f32.mrf.mxu0
    %v1609 = vadd.f32 0.0, %v1608
    %1610 = vmatmul.bf16.gmra.mxu0 %v1591
    %v1611 = vpop.f32.mrf.mxu0
    %v1612 = vadd.f32 0.0, %v1611
    %v1613 = vpop.f32.mrf.mxu0
    %v1614 = vadd.f32 0.0, %v1613
    %1615 = vdwg.mxu0
    %v1616 = vpack.c.bf16 %v1609, %v1607
    %v1617 = vpack.c.bf16 %v1614, %v1612
    %v1618 = vld [vmem:[#allocation7] sm:$0xf]
    %v1619 = vld [vmem:[#allocation7 + $0x4] sm:$0xf]
    %v1620 = vld [vmem:[#allocation7 + $0x8] sm:$0xf]
    %v1621 = vld [vmem:[#allocation7 + $0xc] sm:$0xf]
    %v1622 = vld [vmem:[#allocation7 + $0x10] sm:$0xf]
    %v1623 = vld [vmem:[#allocation7 + $0x14] sm:$0xf]
    %v1624 = vld [vmem:[#allocation7 + $0x18] sm:$0xf]
    %v1625 = vld [vmem:[#allocation7 + $0x1c] sm:$0xf]
    %s1626 = scalar_lea.vmem %s13, 16
    %v1627 = vld [vmem:[%s1626] sm:$0xf]
    %v1628 = vld [vmem:[%s1626 + $0x4] sm:$0xf]
    %v1629 = vld [vmem:[%s1626 + $0x8] sm:$0xf]
    %v1630 = vld [vmem:[%s1626 + $0xc] sm:$0xf]
    %v1635 = vunpack.c.l.b16 %v1627
    %v1636 = vunpack.c.l.b16 %v1628
    %v1637 = vunpack.c.l.b16 %v1629
    %v1638 = vunpack.c.l.b16 %v1630
    %v1639 = vpack.c.b16 %v1636, %v1635
    %v1640 = vpack.c.b16 %v1638, %v1637
    %v1642 = vsel %vm1586, %v1639, 0
    %v1645 = vsel %vm1586, %v1640, 0
    %1647 = vmatpush.bf16.msra.mxu0 0
    %1648 = vmatpush.bf16.msra.mxu0 0
    %1649 = vmatpush.bf16.msra.mxu0 0
    %1650 = vmatpush.bf16.msra.mxu0 %v1595
    %1651 = vmatpush.bf16.msra.mxu0 %v1570
    %1652 = vmatpush.bf16.msra.mxu0 %v1569
    %1653 = vmatpush.bf16.msra.mxu0 %v1568
    %1654 = vmatpush.bf16.msra.mxu0 %v1567
    %1655 = vmatmul.bf16.gmra.mxu0 %v1642
    %v1656 = vpop.f32.mrf.mxu0
    %v1657 = vadd.f32 0.0, %v1656
    %v1658 = vpop.f32.mrf.mxu0
    %v1659 = vadd.f32 0.0, %v1658
    %1660 = vmatmul.bf16.gmra.mxu0 %v1645
    %v1661 = vpop.f32.mrf.mxu0
    %v1662 = vadd.f32 0.0, %v1661
    %v1663 = vpop.f32.mrf.mxu0
    %v1664 = vadd.f32 0.0, %v1663
    %1665 = vdwg.mxu0
    %v1666 = vpack.c.bf16 %v1659, %v1657
    %v1667 = vpack.c.bf16 %v1664, %v1662
    %s1668 = scalar_lea.vmem [#allocation7], 32
    %v1669 = vld [vmem:[%s1668] sm:$0xf]
    %v1670 = vld [vmem:[%s1668 + $0x4] sm:$0xf]
    %v1671 = vld [vmem:[%s1668 + $0x8] sm:$0xf]
    %v1672 = vld [vmem:[%s1668 + $0xc] sm:$0xf]
    %v1673 = vld [vmem:[%s1668 + $0x10] sm:$0xf]
    %v1674 = vld [vmem:[%s1668 + $0x14] sm:$0xf]
    %v1675 = vld [vmem:[%s1668 + $0x18] sm:$0xf]
    %v1676 = vld [vmem:[%s1668 + $0x1c] sm:$0xf]
    %v1685 = vunpack.c.l.b16 %v1669
    %v1686 = vunpack.c.l.b16 %v1670
    %v1687 = vunpack.c.l.b16 %v1671
    %v1688 = vunpack.c.l.b16 %v1672
    %v1689 = vunpack.c.l.b16 %v1673
    %v1690 = vunpack.c.l.b16 %v1674
    %v1691 = vunpack.c.l.b16 %v1675
    %v1692 = vunpack.c.l.b16 %v1676
    %v1693 = vpack.c.b16 %v1686, %v1685
    %v1694 = vpack.c.b16 %v1688, %v1687
    %v1695 = vpack.c.b16 %v1690, %v1689
    %v1696 = vpack.c.b16 %v1692, %v1691
    %v1702 = vsel %vm1440, %v1666, 0
    %v1705 = vsel %vm1440, %v1667, 0
    %1707 = vmatpush.bf16.msra.mxu0 0
    %1708 = vmatpush.bf16.msra.mxu0 0
    %1709 = vmatpush.bf16.msra.mxu0 0
    %1710 = vmatpush.bf16.msra.mxu0 0
    %1711 = vmatpush.bf16.msra.mxu0 %v1696
    %1712 = vmatpush.bf16.msra.mxu0 %v1695
    %1713 = vmatpush.bf16.msra.mxu0 %v1694
    %1714 = vmatpush.bf16.msra.mxu0 %v1693
    %1715 = vmatmul.bf16.gmra.mxu0 %v1702
    %v1716 = vpop.f32.mrf.mxu0
    %v1717 = vadd.f32 0.0, %v1716
    %v1718 = vpop.f32.mrf.mxu0
    %v1719 = vadd.f32 0.0, %v1718
    %1720 = vmatmul.bf16.gmra.mxu0 %v1705
    %v1721 = vpop.f32.mrf.mxu0
    %v1722 = vadd.f32 0.0, %v1721
    %v1723 = vpop.f32.mrf.mxu0
    %v1724 = vadd.f32 0.0, %v1723
    %1725 = vdwg.mxu0
    %v1734 = vunpack.c.l.b16 %v1618
    %v1735 = vunpack.c.l.b16 %v1619
    %v1736 = vunpack.c.l.b16 %v1620
    %v1737 = vunpack.c.l.b16 %v1621
    %v1738 = vunpack.c.l.b16 %v1622
    %v1739 = vunpack.c.l.b16 %v1623
    %v1740 = vunpack.c.l.b16 %v1624
    %v1741 = vunpack.c.l.b16 %v1625
    %v1742 = vpack.c.b16 %v1735, %v1734
    %v1743 = vpack.c.b16 %v1737, %v1736
    %v1744 = vpack.c.b16 %v1739, %v1738
    %v1745 = vpack.c.b16 %v1741, %v1740
    %v1751 = vsel %vm1440, %v1616, 0
    %v1754 = vsel %vm1440, %v1617, 0
    %1756 = vmatpush.bf16.msra.mxu0 0
    %1757 = vmatpush.bf16.msra.mxu0 0
    %1758 = vmatpush.bf16.msra.mxu0 0
    %1759 = vmatpush.bf16.msra.mxu0 0
    %1760 = vmatpush.bf16.msra.mxu0 %v1745
    %1761 = vmatpush.bf16.msra.mxu0 %v1744
    %1762 = vmatpush.bf16.msra.mxu0 %v1743
    %1763 = vmatpush.bf16.msra.mxu0 %v1742
    %1764 = vmatmul.bf16.gmra.mxu0 %v1751
    %v1765 = vpop.f32.mrf.mxu0
    %v1766 = vadd.f32 %v1717, %v1765
    %v1767 = vpop.f32.mrf.mxu0
    %v1768 = vadd.f32 %v1719, %v1767
    %1769 = vmatmul.bf16.gmra.mxu0 %v1754
    %v1770 = vpop.f32.mrf.mxu0
    %v1771 = vadd.f32 %v1722, %v1770
    %v1772 = vpop.f32.mrf.mxu0
    %v1773 = vadd.f32 %v1724, %v1772
    %1774 = vdwg.mxu0
    %s1775 = scalar_lea.vmem %s13, 32
    %v1776 = vld [vmem:[%s1775] sm:$0xf]
    %v1777 = vld [vmem:[%s1775 + $0x4] sm:$0xf]
    %v1778 = vld [vmem:[%s1775 + $0x8] sm:$0xf]
    %v1779 = vld [vmem:[%s1775 + $0xc] sm:$0xf]
    %v1784 = vunpack.c.l.b16 %v1776
    %v1785 = vunpack.c.l.b16 %v1777
    %v1786 = vunpack.c.l.b16 %v1778
    %v1787 = vunpack.c.l.b16 %v1779
    %v1788 = vpack.c.b16 %v1785, %v1784
    %v1789 = vpack.c.b16 %v1787, %v1786
    %v1791 = vsel %vm1586, %v1788, 0
    %v1794 = vsel %vm1586, %v1789, 0
    %1796 = vmatpush.bf16.msra.mxu0 0
    %1797 = vmatpush.bf16.msra.mxu0 0
    %1798 = vmatpush.bf16.msra.mxu0 0
    %1799 = vmatpush.bf16.msra.mxu0 %v1595
    %1800 = vmatpush.bf16.msra.mxu0 %v1570
    %1801 = vmatpush.bf16.msra.mxu0 %v1569
    %1802 = vmatpush.bf16.msra.mxu0 %v1568
    %1803 = vmatpush.bf16.msra.mxu0 %v1567
    %1804 = vmatmul.bf16.gmra.mxu0 %v1791
    %v1805 = vpop.f32.mrf.mxu0
    %v1806 = vadd.f32 0.0, %v1805
    %v1807 = vpop.f32.mrf.mxu0
    %v1808 = vadd.f32 0.0, %v1807
    %1809 = vmatmul.bf16.gmra.mxu0 %v1794
    %v1810 = vpop.f32.mrf.mxu0
    %v1811 = vadd.f32 0.0, %v1810
    %v1812 = vpop.f32.mrf.mxu0
    %v1813 = vadd.f32 0.0, %v1812
    %1814 = vdwg.mxu0
    %v1815 = vpack.c.bf16 %v1808, %v1806
    %v1816 = vpack.c.bf16 %v1813, %v1811
    %s1817 = scalar_lea.vmem [#allocation7], 64
    %v1818 = vld [vmem:[%s1817] sm:$0xf]
    %v1819 = vld [vmem:[%s1817 + $0x4] sm:$0xf]
    %v1820 = vld [vmem:[%s1817 + $0x8] sm:$0xf]
    %v1821 = vld [vmem:[%s1817 + $0xc] sm:$0xf]
    %v1822 = vld [vmem:[%s1817 + $0x10] sm:$0xf]
    %v1823 = vld [vmem:[%s1817 + $0x14] sm:$0xf]
    %v1824 = vld [vmem:[%s1817 + $0x18] sm:$0xf]
    %v1825 = vld [vmem:[%s1817 + $0x1c] sm:$0xf]
    %v1834 = vunpack.c.l.b16 %v1818
    %v1835 = vunpack.c.l.b16 %v1819
    %v1836 = vunpack.c.l.b16 %v1820
    %v1837 = vunpack.c.l.b16 %v1821
    %v1838 = vunpack.c.l.b16 %v1822
    %v1839 = vunpack.c.l.b16 %v1823
    %v1840 = vunpack.c.l.b16 %v1824
    %v1841 = vunpack.c.l.b16 %v1825
    %v1842 = vpack.c.b16 %v1835, %v1834
    %v1843 = vpack.c.b16 %v1837, %v1836
    %v1844 = vpack.c.b16 %v1839, %v1838
    %v1845 = vpack.c.b16 %v1841, %v1840
    %v1851 = vsel %vm1440, %v1815, 0
    %v1854 = vsel %vm1440, %v1816, 0
    %1856 = vmatpush.bf16.msra.mxu0 0
    %1857 = vmatpush.bf16.msra.mxu0 0
    %1858 = vmatpush.bf16.msra.mxu0 0
    %1859 = vmatpush.bf16.msra.mxu0 0
    %1860 = vmatpush.bf16.msra.mxu0 %v1845
    %1861 = vmatpush.bf16.msra.mxu0 %v1844
    %1862 = vmatpush.bf16.msra.mxu0 %v1843
    %1863 = vmatpush.bf16.msra.mxu0 %v1842
    %1864 = vmatmul.bf16.gmra.mxu0 %v1851
    %v1865 = vpop.f32.mrf.mxu0
    %v1866 = vadd.f32 0.0, %v1865
    %v1867 = vpop.f32.mrf.mxu0
    %v1868 = vadd.f32 0.0, %v1867
    %1869 = vmatmul.bf16.gmra.mxu0 %v1854
    %v1870 = vpop.f32.mrf.mxu0
    %v1871 = vadd.f32 0.0, %v1870
    %v1872 = vpop.f32.mrf.mxu0
    %v1873 = vadd.f32 0.0, %v1872
    %1874 = vdwg.mxu0
    %v1875 = vadd.f32 %v1766, %v1866
    %v1876 = vadd.f32 %v1768, %v1868
    %v1877 = vadd.f32 %v1771, %v1871
    %v1878 = vadd.f32 %v1773, %v1873
    %s1879 = scalar_lea.vmem %s13, 48
    %v1880 = vld [vmem:[%s1879] sm:$0xf]
    %v1881 = vld [vmem:[%s1879 + $0x4] sm:$0xf]
    %v1882 = vld [vmem:[%s1879 + $0x8] sm:$0xf]
    %v1883 = vld [vmem:[%s1879 + $0xc] sm:$0xf]
    %v1888 = vunpack.c.l.b16 %v1880
    %v1889 = vunpack.c.l.b16 %v1881
    %v1890 = vunpack.c.l.b16 %v1882
    %v1891 = vunpack.c.l.b16 %v1883
    %v1892 = vpack.c.b16 %v1889, %v1888
    %v1893 = vpack.c.b16 %v1891, %v1890
    %v1895 = vsel %vm1586, %v1892, 0
    %v1898 = vsel %vm1586, %v1893, 0
    %1900 = vmatpush.bf16.msra.mxu0 0
    %1901 = vmatpush.bf16.msra.mxu0 0
    %1902 = vmatpush.bf16.msra.mxu0 0
    %1903 = vmatpush.bf16.msra.mxu0 %v1595
    %1904 = vmatpush.bf16.msra.mxu0 %v1570
    %1905 = vmatpush.bf16.msra.mxu0 %v1569
    %1906 = vmatpush.bf16.msra.mxu0 %v1568
    %1907 = vmatpush.bf16.msra.mxu0 %v1567
    %1908 = vmatmul.bf16.gmra.mxu0 %v1895
    %v1909 = vpop.f32.mrf.mxu0
    %v1910 = vadd.f32 0.0, %v1909
    %v1911 = vpop.f32.mrf.mxu0
    %v1912 = vadd.f32 0.0, %v1911
    %1913 = vmatmul.bf16.gmra.mxu0 %v1898
    %v1914 = vpop.f32.mrf.mxu0
    %v1915 = vadd.f32 0.0, %v1914
    %v1916 = vpop.f32.mrf.mxu0
    %v1917 = vadd.f32 0.0, %v1916
    %1918 = vdwg.mxu0
    %v1919 = vpack.c.bf16 %v1912, %v1910
    %v1920 = vpack.c.bf16 %v1917, %v1915
    %s1921 = scalar_lea.vmem [#allocation7], 96
    %v1922 = vld [vmem:[%s1921] sm:$0xf]
    %v1923 = vld [vmem:[%s1921 + $0x4] sm:$0xf]
    %v1924 = vld [vmem:[%s1921 + $0x8] sm:$0xf]
    %v1925 = vld [vmem:[%s1921 + $0xc] sm:$0xf]
    %v1926 = vld [vmem:[%s1921 + $0x10] sm:$0xf]
    %v1927 = vld [vmem:[%s1921 + $0x14] sm:$0xf]
    %v1928 = vld [vmem:[%s1921 + $0x18] sm:$0xf]
    %v1929 = vld [vmem:[%s1921 + $0x1c] sm:$0xf]
    %v1938 = vunpack.c.l.b16 %v1922
    %v1939 = vunpack.c.l.b16 %v1923
    %v1940 = vunpack.c.l.b16 %v1924
    %v1941 = vunpack.c.l.b16 %v1925
    %v1942 = vunpack.c.l.b16 %v1926
    %v1943 = vunpack.c.l.b16 %v1927
    %v1944 = vunpack.c.l.b16 %v1928
    %v1945 = vunpack.c.l.b16 %v1929
    %v1946 = vpack.c.b16 %v1939, %v1938
    %v1947 = vpack.c.b16 %v1941, %v1940
    %v1948 = vpack.c.b16 %v1943, %v1942
    %v1949 = vpack.c.b16 %v1945, %v1944
    %v1955 = vsel %vm1440, %v1919, 0
    %v1958 = vsel %vm1440, %v1920, 0
    %1960 = vmatpush.bf16.msra.mxu0 0
    %1961 = vmatpush.bf16.msra.mxu0 0
    %1962 = vmatpush.bf16.msra.mxu0 0
    %1963 = vmatpush.bf16.msra.mxu0 0
    %1964 = vmatpush.bf16.msra.mxu0 %v1949
    %1965 = vmatpush.bf16.msra.mxu0 %v1948
    %1966 = vmatpush.bf16.msra.mxu0 %v1947
    %1967 = vmatpush.bf16.msra.mxu0 %v1946
    %1968 = vmatmul.bf16.gmra.mxu0 %v1955
    %v1969 = vpop.f32.mrf.mxu0
    %v1970 = vadd.f32 0.0, %v1969
    %v1971 = vpop.f32.mrf.mxu0
    %v1972 = vadd.f32 0.0, %v1971
    %1973 = vmatmul.bf16.gmra.mxu0 %v1958
    %v1974 = vpop.f32.mrf.mxu0
    %v1975 = vadd.f32 0.0, %v1974
    %v1976 = vpop.f32.mrf.mxu0
    %v1977 = vadd.f32 0.0, %v1976
    %1978 = vdwg.mxu0
    %v1979 = vadd.f32 %v1875, %v1970
    %v1980 = vadd.f32 %v1876, %v1972
    %v1981 = vadd.f32 %v1877, %v1975
    %v1982 = vadd.f32 %v1878, %v1977
    %s1983 = scalar_lea.vmem %s13, 64
    %v1984 = vld [vmem:[%s1983] sm:$0xf]
    %v1985 = vld [vmem:[%s1983 + $0x4] sm:$0xf]
    %v1986 = vld [vmem:[%s1983 + $0x8] sm:$0xf]
    %v1987 = vld [vmem:[%s1983 + $0xc] sm:$0xf]
    %v1992 = vunpack.c.l.b16 %v1984
    %v1993 = vunpack.c.l.b16 %v1985
    %v1994 = vunpack.c.l.b16 %v1986
    %v1995 = vunpack.c.l.b16 %v1987
    %v1996 = vpack.c.b16 %v1993, %v1992
    %v1997 = vpack.c.b16 %v1995, %v1994
    %v1999 = vsel %vm1586, %v1996, 0
    %v2002 = vsel %vm1586, %v1997, 0
    %2004 = vmatpush.bf16.msra.mxu0 0
    %2005 = vmatpush.bf16.msra.mxu0 0
    %2006 = vmatpush.bf16.msra.mxu0 0
    %2007 = vmatpush.bf16.msra.mxu0 %v1595
    %2008 = vmatpush.bf16.msra.mxu0 %v1570
    %2009 = vmatpush.bf16.msra.mxu0 %v1569
    %2010 = vmatpush.bf16.msra.mxu0 %v1568
    %2011 = vmatpush.bf16.msra.mxu0 %v1567
    %2012 = vmatmul.bf16.gmra.mxu0 %v1999
    %v2013 = vpop.f32.mrf.mxu0
    %v2014 = vadd.f32 0.0, %v2013
    %v2015 = vpop.f32.mrf.mxu0
    %v2016 = vadd.f32 0.0, %v2015
    %2017 = vmatmul.bf16.gmra.mxu0 %v2002
    %v2018 = vpop.f32.mrf.mxu0
    %v2019 = vadd.f32 0.0, %v2018
    %v2020 = vpop.f32.mrf.mxu0
    %v2021 = vadd.f32 0.0, %v2020
    %2022 = vdwg.mxu0
    %v2023 = vpack.c.bf16 %v2016, %v2014
    %v2024 = vpack.c.bf16 %v2021, %v2019
    %s2025 = scalar_lea.vmem [#allocation7], 128
    %v2026 = vld [vmem:[%s2025] sm:$0xf]
    %v2027 = vld [vmem:[%s2025 + $0x4] sm:$0xf]
    %v2028 = vld [vmem:[%s2025 + $0x8] sm:$0xf]
    %v2029 = vld [vmem:[%s2025 + $0xc] sm:$0xf]
    %v2030 = vld [vmem:[%s2025 + $0x10] sm:$0xf]
    %v2031 = vld [vmem:[%s2025 + $0x14] sm:$0xf]
    %v2032 = vld [vmem:[%s2025 + $0x18] sm:$0xf]
    %v2033 = vld [vmem:[%s2025 + $0x1c] sm:$0xf]
    %v2042 = vunpack.c.l.b16 %v2026
    %v2043 = vunpack.c.l.b16 %v2027
    %v2044 = vunpack.c.l.b16 %v2028
    %v2045 = vunpack.c.l.b16 %v2029
    %v2046 = vunpack.c.l.b16 %v2030
    %v2047 = vunpack.c.l.b16 %v2031
    %v2048 = vunpack.c.l.b16 %v2032
    %v2049 = vunpack.c.l.b16 %v2033
    %v2050 = vpack.c.b16 %v2043, %v2042
    %v2051 = vpack.c.b16 %v2045, %v2044
    %v2052 = vpack.c.b16 %v2047, %v2046
    %v2053 = vpack.c.b16 %v2049, %v2048
    %v2059 = vsel %vm1440, %v2023, 0
    %v2062 = vsel %vm1440, %v2024, 0
    %2064 = vmatpush.bf16.msra.mxu0 0
    %2065 = vmatpush.bf16.msra.mxu0 0
    %2066 = vmatpush.bf16.msra.mxu0 0
    %2067 = vmatpush.bf16.msra.mxu0 0
    %2068 = vmatpush.bf16.msra.mxu0 %v2053
    %2069 = vmatpush.bf16.msra.mxu0 %v2052
    %2070 = vmatpush.bf16.msra.mxu0 %v2051
    %2071 = vmatpush.bf16.msra.mxu0 %v2050
    %2072 = vmatmul.bf16.gmra.mxu0 %v2059
    %v2073 = vpop.f32.mrf.mxu0
    %v2074 = vadd.f32 0.0, %v2073
    %v2075 = vpop.f32.mrf.mxu0
    %v2076 = vadd.f32 0.0, %v2075
    %2077 = vmatmul.bf16.gmra.mxu0 %v2062
    %v2078 = vpop.f32.mrf.mxu0
    %v2079 = vadd.f32 0.0, %v2078
    %v2080 = vpop.f32.mrf.mxu0
    %v2081 = vadd.f32 0.0, %v2080
    %2082 = vdwg.mxu0
    %v2083 = vadd.f32 %v1979, %v2074
    %v2084 = vadd.f32 %v1980, %v2076
    %v2085 = vadd.f32 %v1981, %v2079
    %v2086 = vadd.f32 %v1982, %v2081
    %s2087 = scalar_lea.vmem %s13, 80
    %v2088 = vld [vmem:[%s2087] sm:$0xf]
    %v2089 = vld [vmem:[%s2087 + $0x4] sm:$0xf]
    %v2090 = vld [vmem:[%s2087 + $0x8] sm:$0xf]
    %v2091 = vld [vmem:[%s2087 + $0xc] sm:$0xf]
    %v2096 = vunpack.c.l.b16 %v2088
    %v2097 = vunpack.c.l.b16 %v2089
    %v2098 = vunpack.c.l.b16 %v2090
    %v2099 = vunpack.c.l.b16 %v2091
    %v2100 = vpack.c.b16 %v2097, %v2096
    %v2101 = vpack.c.b16 %v2099, %v2098
    %v2103 = vsel %vm1586, %v2100, 0
    %v2106 = vsel %vm1586, %v2101, 0
    %2108 = vmatpush.bf16.msra.mxu0 0
    %2109 = vmatpush.bf16.msra.mxu0 0
    %2110 = vmatpush.bf16.msra.mxu0 0
    %2111 = vmatpush.bf16.msra.mxu0 %v1595
    %2112 = vmatpush.bf16.msra.mxu0 %v1570
    %2113 = vmatpush.bf16.msra.mxu0 %v1569
    %2114 = vmatpush.bf16.msra.mxu0 %v1568
    %2115 = vmatpush.bf16.msra.mxu0 %v1567
    %2116 = vmatmul.bf16.gmra.mxu0 %v2103
    %v2117 = vpop.f32.mrf.mxu0
    %v2118 = vadd.f32 0.0, %v2117
    %v2119 = vpop.f32.mrf.mxu0
    %v2120 = vadd.f32 0.0, %v2119
    %2121 = vmatmul.bf16.gmra.mxu0 %v2106
    %v2122 = vpop.f32.mrf.mxu0
    %v2123 = vadd.f32 0.0, %v2122
    %v2124 = vpop.f32.mrf.mxu0
    %v2125 = vadd.f32 0.0, %v2124
    %2126 = vdwg.mxu0
    %v2127 = vpack.c.bf16 %v2120, %v2118
    %v2128 = vpack.c.bf16 %v2125, %v2123
    %s2129 = scalar_lea.vmem [#allocation7], 160
    %v2130 = vld [vmem:[%s2129] sm:$0xf]
    %v2131 = vld [vmem:[%s2129 + $0x4] sm:$0xf]
    %v2132 = vld [vmem:[%s2129 + $0x8] sm:$0xf]
    %v2133 = vld [vmem:[%s2129 + $0xc] sm:$0xf]
    %v2134 = vld [vmem:[%s2129 + $0x10] sm:$0xf]
    %v2135 = vld [vmem:[%s2129 + $0x14] sm:$0xf]
    %v2136 = vld [vmem:[%s2129 + $0x18] sm:$0xf]
    %v2137 = vld [vmem:[%s2129 + $0x1c] sm:$0xf]
    %v2146 = vunpack.c.l.b16 %v2130
    %v2147 = vunpack.c.l.b16 %v2131
    %v2148 = vunpack.c.l.b16 %v2132
    %v2149 = vunpack.c.l.b16 %v2133
    %v2150 = vunpack.c.l.b16 %v2134
    %v2151 = vunpack.c.l.b16 %v2135
    %v2152 = vunpack.c.l.b16 %v2136
    %v2153 = vunpack.c.l.b16 %v2137
    %v2154 = vpack.c.b16 %v2147, %v2146
    %v2155 = vpack.c.b16 %v2149, %v2148
    %v2156 = vpack.c.b16 %v2151, %v2150
    %v2157 = vpack.c.b16 %v2153, %v2152
    %v2163 = vsel %vm1440, %v2127, 0
    %v2166 = vsel %vm1440, %v2128, 0
    %2168 = vmatpush.bf16.msra.mxu0 0
    %2169 = vmatpush.bf16.msra.mxu0 0
    %2170 = vmatpush.bf16.msra.mxu0 0
    %2171 = vmatpush.bf16.msra.mxu0 0
    %2172 = vmatpush.bf16.msra.mxu0 %v2157
    %2173 = vmatpush.bf16.msra.mxu0 %v2156
    %2174 = vmatpush.bf16.msra.mxu0 %v2155
    %2175 = vmatpush.bf16.msra.mxu0 %v2154
    %2176 = vmatmul.bf16.gmra.mxu0 %v2163
    %v2177 = vpop.f32.mrf.mxu0
    %v2178 = vadd.f32 0.0, %v2177
    %v2179 = vpop.f32.mrf.mxu0
    %v2180 = vadd.f32 0.0, %v2179
    %2181 = vmatmul.bf16.gmra.mxu0 %v2166
    %v2182 = vpop.f32.mrf.mxu0
    %v2183 = vadd.f32 0.0, %v2182
    %v2184 = vpop.f32.mrf.mxu0
    %v2185 = vadd.f32 0.0, %v2184
    %2186 = vdwg.mxu0
    %v2187 = vadd.f32 %v2083, %v2178
    %v2188 = vadd.f32 %v2084, %v2180
    %v2189 = vadd.f32 %v2085, %v2183
    %v2190 = vadd.f32 %v2086, %v2185
    %s2191 = scalar_lea.vmem %s13, 96
    %v2192 = vld [vmem:[%s2191] sm:$0xf]
    %v2193 = vld [vmem:[%s2191 + $0x4] sm:$0xf]
    %v2194 = vld [vmem:[%s2191 + $0x8] sm:$0xf]
    %v2195 = vld [vmem:[%s2191 + $0xc] sm:$0xf]
    %v2200 = vunpack.c.l.b16 %v2192
    %v2201 = vunpack.c.l.b16 %v2193
    %v2202 = vunpack.c.l.b16 %v2194
    %v2203 = vunpack.c.l.b16 %v2195
    %v2204 = vpack.c.b16 %v2201, %v2200
    %v2205 = vpack.c.b16 %v2203, %v2202
    %v2207 = vsel %vm1586, %v2204, 0
    %v2210 = vsel %vm1586, %v2205, 0
    %2212 = vmatpush.bf16.msra.mxu0 0
    %2213 = vmatpush.bf16.msra.mxu0 0
    %2214 = vmatpush.bf16.msra.mxu0 0
    %2215 = vmatpush.bf16.msra.mxu0 %v1595
    %2216 = vmatpush.bf16.msra.mxu0 %v1570
    %2217 = vmatpush.bf16.msra.mxu0 %v1569
    %2218 = vmatpush.bf16.msra.mxu0 %v1568
    %2219 = vmatpush.bf16.msra.mxu0 %v1567
    %2220 = vmatmul.bf16.gmra.mxu0 %v2207
    %v2221 = vpop.f32.mrf.mxu0
    %v2222 = vadd.f32 0.0, %v2221
    %v2223 = vpop.f32.mrf.mxu0
    %v2224 = vadd.f32 0.0, %v2223
    %2225 = vmatmul.bf16.gmra.mxu0 %v2210
    %v2226 = vpop.f32.mrf.mxu0
    %v2227 = vadd.f32 0.0, %v2226
    %v2228 = vpop.f32.mrf.mxu0
    %v2229 = vadd.f32 0.0, %v2228
    %2230 = vdwg.mxu0
    %v2231 = vpack.c.bf16 %v2224, %v2222
    %v2232 = vpack.c.bf16 %v2229, %v2227
    %s2233 = scalar_lea.vmem [#allocation7], 192
    %v2234 = vld [vmem:[%s2233] sm:$0xf]
    %v2235 = vld [vmem:[%s2233 + $0x4] sm:$0xf]
    %v2236 = vld [vmem:[%s2233 + $0x8] sm:$0xf]
    %v2237 = vld [vmem:[%s2233 + $0xc] sm:$0xf]
    %v2238 = vld [vmem:[%s2233 + $0x10] sm:$0xf]
    %v2239 = vld [vmem:[%s2233 + $0x14] sm:$0xf]
    %v2240 = vld [vmem:[%s2233 + $0x18] sm:$0xf]
    %v2241 = vld [vmem:[%s2233 + $0x1c] sm:$0xf]
    %v2250 = vunpack.c.l.b16 %v2234
    %v2251 = vunpack.c.l.b16 %v2235
    %v2252 = vunpack.c.l.b16 %v2236
    %v2253 = vunpack.c.l.b16 %v2237
    %v2254 = vunpack.c.l.b16 %v2238
    %v2255 = vunpack.c.l.b16 %v2239
    %v2256 = vunpack.c.l.b16 %v2240
    %v2257 = vunpack.c.l.b16 %v2241
    %v2258 = vpack.c.b16 %v2251, %v2250
    %v2259 = vpack.c.b16 %v2253, %v2252
    %v2260 = vpack.c.b16 %v2255, %v2254
    %v2261 = vpack.c.b16 %v2257, %v2256
    %v2267 = vsel %vm1440, %v2231, 0
    %v2270 = vsel %vm1440, %v2232, 0
    %2272 = vmatpush.bf16.msra.mxu0 0
    %2273 = vmatpush.bf16.msra.mxu0 0
    %2274 = vmatpush.bf16.msra.mxu0 0
    %2275 = vmatpush.bf16.msra.mxu0 0
    %2276 = vmatpush.bf16.msra.mxu0 %v2261
    %2277 = vmatpush.bf16.msra.mxu0 %v2260
    %2278 = vmatpush.bf16.msra.mxu0 %v2259
    %2279 = vmatpush.bf16.msra.mxu0 %v2258
    %2280 = vmatmul.bf16.gmra.mxu0 %v2267
    %v2281 = vpop.f32.mrf.mxu0
    %v2282 = vadd.f32 0.0, %v2281
    %v2283 = vpop.f32.mrf.mxu0
    %v2284 = vadd.f32 0.0, %v2283
    %2285 = vmatmul.bf16.gmra.mxu0 %v2270
    %v2286 = vpop.f32.mrf.mxu0
    %v2287 = vadd.f32 0.0, %v2286
    %v2288 = vpop.f32.mrf.mxu0
    %v2289 = vadd.f32 0.0, %v2288
    %2290 = vdwg.mxu0
    %v2291 = vadd.f32 %v2187, %v2282
    %v2292 = vadd.f32 %v2188, %v2284
    %v2293 = vadd.f32 %v2189, %v2287
    %v2294 = vadd.f32 %v2190, %v2289
    %s2295 = scalar_lea.vmem %s13, 112
    %v2296 = vld [vmem:[%s2295] sm:$0xf]
    %v2297 = vld [vmem:[%s2295 + $0x4] sm:$0xf]
    %v2298 = vld [vmem:[%s2295 + $0x8] sm:$0xf]
    %v2299 = vld [vmem:[%s2295 + $0xc] sm:$0xf]
    %v2304 = vunpack.c.l.b16 %v2296
    %v2305 = vunpack.c.l.b16 %v2297
    %v2306 = vunpack.c.l.b16 %v2298
    %v2307 = vunpack.c.l.b16 %v2299
    %v2308 = vpack.c.b16 %v2305, %v2304
    %v2309 = vpack.c.b16 %v2307, %v2306
    %v2311 = vsel %vm1586, %v2308, 0
    %v2314 = vsel %vm1586, %v2309, 0
    %2316 = vmatpush.bf16.msra.mxu0 0
    %2317 = vmatpush.bf16.msra.mxu0 0
    %2318 = vmatpush.bf16.msra.mxu0 0
    %2319 = vmatpush.bf16.msra.mxu0 %v1595
    %2320 = vmatpush.bf16.msra.mxu0 %v1570
    %2321 = vmatpush.bf16.msra.mxu0 %v1569
    %2322 = vmatpush.bf16.msra.mxu0 %v1568
    %2323 = vmatpush.bf16.msra.mxu0 %v1567
    %2324 = vmatmul.bf16.gmra.mxu0 %v2311
    %v2325 = vpop.f32.mrf.mxu0
    %v2326 = vadd.f32 0.0, %v2325
    %v2327 = vpop.f32.mrf.mxu0
    %v2328 = vadd.f32 0.0, %v2327
    %2329 = vmatmul.bf16.gmra.mxu0 %v2314
    %v2330 = vpop.f32.mrf.mxu0
    %v2331 = vadd.f32 0.0, %v2330
    %v2332 = vpop.f32.mrf.mxu0
    %v2333 = vadd.f32 0.0, %v2332
    %2334 = vdwg.mxu0
    %v2335 = vpack.c.bf16 %v2328, %v2326
    %v2336 = vpack.c.bf16 %v2333, %v2331
    %s2337 = scalar_lea.vmem [#allocation7], 224
    %v2338 = vld [vmem:[%s2337] sm:$0xf]
    %v2339 = vld [vmem:[%s2337 + $0x4] sm:$0xf]
    %v2340 = vld [vmem:[%s2337 + $0x8] sm:$0xf]
    %v2341 = vld [vmem:[%s2337 + $0xc] sm:$0xf]
    %v2342 = vld [vmem:[%s2337 + $0x10] sm:$0xf]
    %v2343 = vld [vmem:[%s2337 + $0x14] sm:$0xf]
    %v2344 = vld [vmem:[%s2337 + $0x18] sm:$0xf]
    %v2345 = vld [vmem:[%s2337 + $0x1c] sm:$0xf]
    %v2354 = vunpack.c.l.b16 %v2338
    %v2355 = vunpack.c.l.b16 %v2339
    %v2356 = vunpack.c.l.b16 %v2340
    %v2357 = vunpack.c.l.b16 %v2341
    %v2358 = vunpack.c.l.b16 %v2342
    %v2359 = vunpack.c.l.b16 %v2343
    %v2360 = vunpack.c.l.b16 %v2344
    %v2361 = vunpack.c.l.b16 %v2345
    %v2362 = vpack.c.b16 %v2355, %v2354
    %v2363 = vpack.c.b16 %v2357, %v2356
    %v2364 = vpack.c.b16 %v2359, %v2358
    %v2365 = vpack.c.b16 %v2361, %v2360
    %v2371 = vsel %vm1440, %v2335, 0
    %v2374 = vsel %vm1440, %v2336, 0
    %2376 = vmatpush.bf16.msra.mxu0 0
    %2377 = vmatpush.bf16.msra.mxu0 0
    %2378 = vmatpush.bf16.msra.mxu0 0
    %2379 = vmatpush.bf16.msra.mxu0 0
    %2380 = vmatpush.bf16.msra.mxu0 %v2365
    %2381 = vmatpush.bf16.msra.mxu0 %v2364
    %2382 = vmatpush.bf16.msra.mxu0 %v2363
    %2383 = vmatpush.bf16.msra.mxu0 %v2362
    %2384 = vmatmul.bf16.gmra.mxu0 %v2371
    %v2385 = vpop.f32.mrf.mxu0
    %v2386 = vadd.f32 0.0, %v2385
    %v2387 = vpop.f32.mrf.mxu0
    %v2388 = vadd.f32 0.0, %v2387
    %2389 = vmatmul.bf16.gmra.mxu0 %v2374
    %v2390 = vpop.f32.mrf.mxu0
    %v2391 = vadd.f32 0.0, %v2390
    %v2392 = vpop.f32.mrf.mxu0
    %v2393 = vadd.f32 0.0, %v2392
    %2394 = vdwg.mxu0
    %v2395 = vadd.f32 %v2291, %v2386
    %v2396 = vadd.f32 %v2292, %v2388
    %v2397 = vadd.f32 %v2293, %v2391
    %v2398 = vadd.f32 %v2294, %v2393
    %s2399 = scalar_lea.vmem %s13, 128
    %v2400 = vld [vmem:[%s2399] sm:$0xf]
    %v2401 = vld [vmem:[%s2399 + $0x4] sm:$0xf]
    %v2402 = vld [vmem:[%s2399 + $0x8] sm:$0xf]
    %v2403 = vld [vmem:[%s2399 + $0xc] sm:$0xf]
    %v2408 = vunpack.c.l.b16 %v2400
    %v2409 = vunpack.c.l.b16 %v2401
    %v2410 = vunpack.c.l.b16 %v2402
    %v2411 = vunpack.c.l.b16 %v2403
    %v2412 = vpack.c.b16 %v2409, %v2408
    %v2413 = vpack.c.b16 %v2411, %v2410
    %v2415 = vsel %vm1586, %v2412, 0
    %v2418 = vsel %vm1586, %v2413, 0
    %2420 = vmatpush.bf16.msra.mxu0 0
    %2421 = vmatpush.bf16.msra.mxu0 0
    %2422 = vmatpush.bf16.msra.mxu0 0
    %2423 = vmatpush.bf16.msra.mxu0 %v1595
    %2424 = vmatpush.bf16.msra.mxu0 %v1570
    %2425 = vmatpush.bf16.msra.mxu0 %v1569
    %2426 = vmatpush.bf16.msra.mxu0 %v1568
    %2427 = vmatpush.bf16.msra.mxu0 %v1567
    %2428 = vmatmul.bf16.gmra.mxu0 %v2415
    %v2429 = vpop.f32.mrf.mxu0
    %v2430 = vadd.f32 0.0, %v2429
    %v2431 = vpop.f32.mrf.mxu0
    %v2432 = vadd.f32 0.0, %v2431
    %2433 = vmatmul.bf16.gmra.mxu0 %v2418
    %v2434 = vpop.f32.mrf.mxu0
    %v2435 = vadd.f32 0.0, %v2434
    %v2436 = vpop.f32.mrf.mxu0
    %v2437 = vadd.f32 0.0, %v2436
    %2438 = vdwg.mxu0
    %v2439 = vpack.c.bf16 %v2432, %v2430
    %v2440 = vpack.c.bf16 %v2437, %v2435
    %s2441 = scalar_lea.vmem [#allocation7], 256
    %v2442 = vld [vmem:[%s2441] sm:$0xf]
    %v2443 = vld [vmem:[%s2441 + $0x4] sm:$0xf]
    %v2444 = vld [vmem:[%s2441 + $0x8] sm:$0xf]
    %v2445 = vld [vmem:[%s2441 + $0xc] sm:$0xf]
    %v2446 = vld [vmem:[%s2441 + $0x10] sm:$0xf]
    %v2447 = vld [vmem:[%s2441 + $0x14] sm:$0xf]
    %v2448 = vld [vmem:[%s2441 + $0x18] sm:$0xf]
    %v2449 = vld [vmem:[%s2441 + $0x1c] sm:$0xf]
    %v2458 = vunpack.c.l.b16 %v2442
    %v2459 = vunpack.c.l.b16 %v2443
    %v2460 = vunpack.c.l.b16 %v2444
    %v2461 = vunpack.c.l.b16 %v2445
    %v2462 = vunpack.c.l.b16 %v2446
    %v2463 = vunpack.c.l.b16 %v2447
    %v2464 = vunpack.c.l.b16 %v2448
    %v2465 = vunpack.c.l.b16 %v2449
    %v2466 = vpack.c.b16 %v2459, %v2458
    %v2467 = vpack.c.b16 %v2461, %v2460
    %v2468 = vpack.c.b16 %v2463, %v2462
    %v2469 = vpack.c.b16 %v2465, %v2464
    %v2475 = vsel %vm1440, %v2439, 0
    %v2478 = vsel %vm1440, %v2440, 0
    %2480 = vmatpush.bf16.msra.mxu0 0
    %2481 = vmatpush.bf16.msra.mxu0 0
    %2482 = vmatpush.bf16.msra.mxu0 0
    %2483 = vmatpush.bf16.msra.mxu0 0
    %2484 = vmatpush.bf16.msra.mxu0 %v2469
    %2485 = vmatpush.bf16.msra.mxu0 %v2468
    %2486 = vmatpush.bf16.msra.mxu0 %v2467
    %2487 = vmatpush.bf16.msra.mxu0 %v2466
    %2488 = vmatmul.bf16.gmra.mxu0 %v2475
    %v2489 = vpop.f32.mrf.mxu0
    %v2490 = vadd.f32 0.0, %v2489
    %v2491 = vpop.f32.mrf.mxu0
    %v2492 = vadd.f32 0.0, %v2491
    %2493 = vmatmul.bf16.gmra.mxu0 %v2478
    %v2494 = vpop.f32.mrf.mxu0
    %v2495 = vadd.f32 0.0, %v2494
    %v2496 = vpop.f32.mrf.mxu0
    %v2497 = vadd.f32 0.0, %v2496
    %2498 = vdwg.mxu0
    %v2499 = vadd.f32 %v2395, %v2490
    %v2500 = vadd.f32 %v2396, %v2492
    %v2501 = vadd.f32 %v2397, %v2495
    %v2502 = vadd.f32 %v2398, %v2497
    %v2503 = vld [vmem:[%s19] sm:$0x1]
    %v2505 = vperm.slane %v2503, 0
    %v2507 = vadd.f32 %v2499, %v2505
    %v2508 = vadd.f32 %v2500, %v2505
    %v2509 = vadd.f32 %v2501, %v2505
    %v2510 = vadd.f32 %v2502, %v2505
    %v2511 = vld [vmem:[%s21] sm:$0x1]
    %v2512 = vld [vmem:[%s23] sm:$0x1]
    %v2513 = vadd.f32 %v2507, %v2508
    %v2514 = vadd.f32 %v2513, %v2509
    %v2515 = vadd.f32 %v2514, %v2510
    %v2516 = vrot.slane %v2515, 4
    %v2517 = vadd.f32 %v2515, %v2516
    %v2518 = vrot.slane %v2517, 2
    %v2519 = vadd.f32 %v2517, %v2518
    %v2520 = vrot.slane %v2519, 1
    %v2521 = vadd.f32 %v2519, %v2520
    %v2522 = vrcp.pop 32.0
    %v2523 = vmul.f32 32.0, %v2522
    %v2524 = vsub.f32 1.0, %v2523
    %v2525 = vmul.f32 %v2522, %v2524
    %v2526 = vadd.f32 %v2522, %v2525
    %vm2527 = vweird.f32 %v2522
    %v2528 = vsel %vm2527, %v2522, %v2526
    %v2529 = vmul.f32 %v2521, %v2528
    %v2530 = vsub.f32 %v2507, %v2529
    %v2531 = vsub.f32 %v2508, %v2529
    %v2532 = vsub.f32 %v2509, %v2529
    %v2533 = vsub.f32 %v2510, %v2529
    %v2534 = vmul.f32 %v2530, %v2530
    %v2535 = vmul.f32 %v2531, %v2531
    %v2536 = vmul.f32 %v2532, %v2532
    %v2537 = vmul.f32 %v2533, %v2533
    %v2538 = vadd.f32 %v2534, %v2535
    %v2539 = vadd.f32 %v2538, %v2536
    %v2540 = vadd.f32 %v2539, %v2537
    %v2541 = vrot.slane %v2540, 4
    %v2542 = vadd.f32 %v2540, %v2541
    %v2543 = vrot.slane %v2542, 2
    %v2544 = vadd.f32 %v2542, %v2543
    %v2545 = vrot.slane %v2544, 1
    %v2546 = vadd.f32 %v2544, %v2545
    %v2547 = vmul.f32 %v2546, %v2528
    %v2548 = vadd.f32 %v2547, 1e-05
    %v2549 = vrsqrt.pop %v2548
    %v2550 = vmul.f32 %v2549, %v2548
    %v2551 = vmul.f32 %v2550, %v2549
    %v2552 = vmul.f32 0.5, %v2551
    %v2553 = vsub.f32 1.5, %v2552
    %v2554 = vmul.f32 %v2549, %v2553
    %vm2555 = vweird.f32 %v2548
    %vm2556 = vweird.f32 %v2549
    %vm2557 = vmor %vm2555, %vm2556
    %v2558 = vsel %vm2557, %v2549, %v2554
    %v2559 = vmul.f32 %v2530, %v2558
    %v2560 = vmul.f32 %v2531, %v2558
    %v2561 = vmul.f32 %v2532, %v2558
    %v2562 = vmul.f32 %v2533, %v2558
    %v2564 = vperm.slane %v2511, 0
    %v2566 = vmul.f32 %v2559, %v2564
    %v2567 = vmul.f32 %v2560, %v2564
    %v2568 = vmul.f32 %v2561, %v2564
    %v2569 = vmul.f32 %v2562, %v2564
    %v2571 = vperm.slane %v2512, 0
    %v2573 = vadd.f32 %v2566, %v2571
    %v2574 = vadd.f32 %v2567, %v2571
    %v2575 = vadd.f32 %v2568, %v2571
    %v2576 = vadd.f32 %v2569, %v2571
    %v2577 = vmax.f32 %v2573, 0.0
    %v2578 = vmax.f32 %v2574, 0.0
    %v2579 = vmax.f32 %v2575, 0.0
    %v2580 = vmax.f32 %v2576, 0.0
    %v2581 = vpack.c.bf16 %v2578, %v2577
    %v2582 = vpack.c.bf16 %v2580, %v2579
    %v2583 = vld [vmem:[#allocation5] sm:$0xf]
    %v2584 = vld [vmem:[#allocation5 + $0x4] sm:$0xf]
    %v2585 = vld [vmem:[#allocation5 + $0x8] sm:$0xf]
    %v2586 = vld [vmem:[#allocation5 + $0xc] sm:$0xf]
    %v2591 = vunpack.c.l.b16 %v2583
    %v2592 = vunpack.c.l.b16 %v2584
    %v2593 = vunpack.c.l.b16 %v2585
    %v2594 = vunpack.c.l.b16 %v2586
    %v2595 = vpack.c.b16 %v2592, %v2591
    %v2596 = vpack.c.b16 %v2594, %v2593
    %v2598 = vsel %vm428, %v2595, 0
    %v2601 = vsel %vm428, %v2596, 0
    %2603 = vmatpush.bf16.msra.mxu0 0
    %2604 = vmatpush.bf16.msra.mxu0 0
    %2605 = vmatpush.bf16.msra.mxu0 0
    %2606 = vmatpush.bf16.msra.mxu0 0
    %2607 = vmatpush.bf16.msra.mxu0 0
    %2608 = vmatpush.bf16.msra.mxu0 0
    %2609 = vmatpush.bf16.msra.mxu0 %v2582
    %2610 = vmatpush.bf16.msra.mxu0 %v2581
    %2611 = vmatmul.bf16.gmra.mxu0 %v2598
    %v2612 = vpop.f32.mrf.mxu0
    %v2613 = vadd.f32 0.0, %v2612
    %v2614 = vpop.f32.mrf.mxu0
    %v2615 = vadd.f32 0.0, %v2614
    %2616 = vmatmul.bf16.gmra.mxu0 %v2601
    %v2617 = vpop.f32.mrf.mxu0
    %v2618 = vadd.f32 0.0, %v2617
    %v2619 = vpop.f32.mrf.mxu0
    %v2620 = vadd.f32 0.0, %v2619
    %2621 = vdwg.mxu0
    %v2622 = vpack.c.bf16 %v2615, %v2613
    %v2623 = vpack.c.bf16 %v2620, %v2618
    %v2624 = vld [vmem:[#allocation8] sm:$0xf]
    %v2625 = vld [vmem:[#allocation8 + $0x4] sm:$0xf]
    %v2626 = vld [vmem:[#allocation8 + $0x8] sm:$0xf]
    %v2627 = vld [vmem:[#allocation8 + $0xc] sm:$0xf]
    %v2628 = vld [vmem:[#allocation8 + $0x10] sm:$0xf]
    %v2629 = vld [vmem:[#allocation8 + $0x14] sm:$0xf]
    %v2630 = vld [vmem:[#allocation8 + $0x18] sm:$0xf]
    %v2631 = vld [vmem:[#allocation8 + $0x1c] sm:$0xf]
    %s2632 = scalar_lea.vmem [#allocation5], 16
    %v2633 = vld [vmem:[%s2632] sm:$0xf]
    %v2634 = vld [vmem:[%s2632 + $0x4] sm:$0xf]
    %v2635 = vld [vmem:[%s2632 + $0x8] sm:$0xf]
    %v2636 = vld [vmem:[%s2632 + $0xc] sm:$0xf]
    %v2641 = vunpack.c.l.b16 %v2633
    %v2642 = vunpack.c.l.b16 %v2634
    %v2643 = vunpack.c.l.b16 %v2635
    %v2644 = vunpack.c.l.b16 %v2636
    %v2645 = vpack.c.b16 %v2642, %v2641
    %v2646 = vpack.c.b16 %v2644, %v2643
    %v2648 = vsel %vm428, %v2645, 0
    %v2651 = vsel %vm428, %v2646, 0
    %2653 = vmatpush.bf16.msra.mxu0 0
    %2654 = vmatpush.bf16.msra.mxu0 0
    %2655 = vmatpush.bf16.msra.mxu0 0
    %2656 = vmatpush.bf16.msra.mxu0 0
    %2657 = vmatpush.bf16.msra.mxu0 0
    %2658 = vmatpush.bf16.msra.mxu0 0
    %2659 = vmatpush.bf16.msra.mxu0 %v2582
    %2660 = vmatpush.bf16.msra.mxu0 %v2581
    %2661 = vmatmul.bf16.gmra.mxu0 %v2648
    %v2662 = vpop.f32.mrf.mxu0
    %v2663 = vadd.f32 0.0, %v2662
    %v2664 = vpop.f32.mrf.mxu0
    %v2665 = vadd.f32 0.0, %v2664
    %2666 = vmatmul.bf16.gmra.mxu0 %v2651
    %v2667 = vpop.f32.mrf.mxu0
    %v2668 = vadd.f32 0.0, %v2667
    %v2669 = vpop.f32.mrf.mxu0
    %v2670 = vadd.f32 0.0, %v2669
    %2671 = vdwg.mxu0
    %v2672 = vpack.c.bf16 %v2665, %v2663
    %v2673 = vpack.c.bf16 %v2670, %v2668
    %s2674 = scalar_lea.vmem [#allocation8], 32
    %v2675 = vld [vmem:[%s2674] sm:$0xf]
    %v2676 = vld [vmem:[%s2674 + $0x4] sm:$0xf]
    %v2677 = vld [vmem:[%s2674 + $0x8] sm:$0xf]
    %v2678 = vld [vmem:[%s2674 + $0xc] sm:$0xf]
    %v2679 = vld [vmem:[%s2674 + $0x10] sm:$0xf]
    %v2680 = vld [vmem:[%s2674 + $0x14] sm:$0xf]
    %v2681 = vld [vmem:[%s2674 + $0x18] sm:$0xf]
    %v2682 = vld [vmem:[%s2674 + $0x1c] sm:$0xf]
    %v2691 = vunpack.c.l.b16 %v2675
    %v2692 = vunpack.c.l.b16 %v2676
    %v2693 = vunpack.c.l.b16 %v2677
    %v2694 = vunpack.c.l.b16 %v2678
    %v2695 = vunpack.c.l.b16 %v2679
    %v2696 = vunpack.c.l.b16 %v2680
    %v2697 = vunpack.c.l.b16 %v2681
    %v2698 = vunpack.c.l.b16 %v2682
    %v2699 = vpack.c.b16 %v2692, %v2691
    %v2700 = vpack.c.b16 %v2694, %v2693
    %v2701 = vpack.c.b16 %v2696, %v2695
    %v2702 = vpack.c.b16 %v2698, %v2697
    %v2708 = vsel %vm1440, %v2672, 0
    %v2711 = vsel %vm1440, %v2673, 0
    %2713 = vmatpush.bf16.msra.mxu0 0
    %2714 = vmatpush.bf16.msra.mxu0 0
    %2715 = vmatpush.bf16.msra.mxu0 0
    %2716 = vmatpush.bf16.msra.mxu0 0
    %2717 = vmatpush.bf16.msra.mxu0 %v2702
    %2718 = vmatpush.bf16.msra.mxu0 %v2701
    %2719 = vmatpush.bf16.msra.mxu0 %v2700
    %2720 = vmatpush.bf16.msra.mxu0 %v2699
    %2721 = vmatmul.bf16.gmra.mxu0 %v2708
    %v2722 = vpop.f32.mrf.mxu0
    %v2723 = vadd.f32 0.0, %v2722
    %v2724 = vpop.f32.mrf.mxu0
    %v2725 = vadd.f32 0.0, %v2724
    %2726 = vmatmul.bf16.gmra.mxu0 %v2711
    %v2727 = vpop.f32.mrf.mxu0
    %v2728 = vadd.f32 0.0, %v2727
    %v2729 = vpop.f32.mrf.mxu0
    %v2730 = vadd.f32 0.0, %v2729
    %2731 = vdwg.mxu0
    %v2740 = vunpack.c.l.b16 %v2624
    %v2741 = vunpack.c.l.b16 %v2625
    %v2742 = vunpack.c.l.b16 %v2626
    %v2743 = vunpack.c.l.b16 %v2627
    %v2744 = vunpack.c.l.b16 %v2628
    %v2745 = vunpack.c.l.b16 %v2629
    %v2746 = vunpack.c.l.b16 %v2630
    %v2747 = vunpack.c.l.b16 %v2631
    %v2748 = vpack.c.b16 %v2741, %v2740
    %v2749 = vpack.c.b16 %v2743, %v2742
    %v2750 = vpack.c.b16 %v2745, %v2744
    %v2751 = vpack.c.b16 %v2747, %v2746
    %v2757 = vsel %vm1440, %v2622, 0
    %v2760 = vsel %vm1440, %v2623, 0
    %2762 = vmatpush.bf16.msra.mxu0 0
    %2763 = vmatpush.bf16.msra.mxu0 0
    %2764 = vmatpush.bf16.msra.mxu0 0
    %2765 = vmatpush.bf16.msra.mxu0 0
    %2766 = vmatpush.bf16.msra.mxu0 %v2751
    %2767 = vmatpush.bf16.msra.mxu0 %v2750
    %2768 = vmatpush.bf16.msra.mxu0 %v2749
    %2769 = vmatpush.bf16.msra.mxu0 %v2748
    %2770 = vmatmul.bf16.gmra.mxu0 %v2757
    %v2771 = vpop.f32.mrf.mxu0
    %v2772 = vadd.f32 %v2723, %v2771
    %v2773 = vpop.f32.mrf.mxu0
    %v2774 = vadd.f32 %v2725, %v2773
    %2775 = vmatmul.bf16.gmra.mxu0 %v2760
    %v2776 = vpop.f32.mrf.mxu0
    %v2777 = vadd.f32 %v2728, %v2776
    %v2778 = vpop.f32.mrf.mxu0
    %v2779 = vadd.f32 %v2730, %v2778
    %2780 = vdwg.mxu0
    %s2781 = scalar_lea.vmem [#allocation5], 32
    %v2782 = vld [vmem:[%s2781] sm:$0xf]
    %v2783 = vld [vmem:[%s2781 + $0x4] sm:$0xf]
    %v2784 = vld [vmem:[%s2781 + $0x8] sm:$0xf]
    %v2785 = vld [vmem:[%s2781 + $0xc] sm:$0xf]
    %v2790 = vunpack.c.l.b16 %v2782
    %v2791 = vunpack.c.l.b16 %v2783
    %v2792 = vunpack.c.l.b16 %v2784
    %v2793 = vunpack.c.l.b16 %v2785
    %v2794 = vpack.c.b16 %v2791, %v2790
    %v2795 = vpack.c.b16 %v2793, %v2792
    %v2797 = vsel %vm428, %v2794, 0
    %v2800 = vsel %vm428, %v2795, 0
    %2802 = vmatpush.bf16.msra.mxu0 0
    %2803 = vmatpush.bf16.msra.mxu0 0
    %2804 = vmatpush.bf16.msra.mxu0 0
    %2805 = vmatpush.bf16.msra.mxu0 0
    %2806 = vmatpush.bf16.msra.mxu0 0
    %2807 = vmatpush.bf16.msra.mxu0 0
    %2808 = vmatpush.bf16.msra.mxu0 %v2582
    %2809 = vmatpush.bf16.msra.mxu0 %v2581
    %2810 = vmatmul.bf16.gmra.mxu0 %v2797
    %v2811 = vpop.f32.mrf.mxu0
    %v2812 = vadd.f32 0.0, %v2811
    %v2813 = vpop.f32.mrf.mxu0
    %v2814 = vadd.f32 0.0, %v2813
    %2815 = vmatmul.bf16.gmra.mxu0 %v2800
    %v2816 = vpop.f32.mrf.mxu0
    %v2817 = vadd.f32 0.0, %v2816
    %v2818 = vpop.f32.mrf.mxu0
    %v2819 = vadd.f32 0.0, %v2818
    %2820 = vdwg.mxu0
    %v2821 = vpack.c.bf16 %v2814, %v2812
    %v2822 = vpack.c.bf16 %v2819, %v2817
    %s2823 = scalar_lea.vmem [#allocation8], 64
    %v2824 = vld [vmem:[%s2823] sm:$0xf]
    %v2825 = vld [vmem:[%s2823 + $0x4] sm:$0xf]
    %v2826 = vld [vmem:[%s2823 + $0x8] sm:$0xf]
    %v2827 = vld [vmem:[%s2823 + $0xc] sm:$0xf]
    %v2828 = vld [vmem:[%s2823 + $0x10] sm:$0xf]
    %v2829 = vld [vmem:[%s2823 + $0x14] sm:$0xf]
    %v2830 = vld [vmem:[%s2823 + $0x18] sm:$0xf]
    %v2831 = vld [vmem:[%s2823 + $0x1c] sm:$0xf]
    %v2840 = vunpack.c.l.b16 %v2824
    %v2841 = vunpack.c.l.b16 %v2825
    %v2842 = vunpack.c.l.b16 %v2826
    %v2843 = vunpack.c.l.b16 %v2827
    %v2844 = vunpack.c.l.b16 %v2828
    %v2845 = vunpack.c.l.b16 %v2829
    %v2846 = vunpack.c.l.b16 %v2830
    %v2847 = vunpack.c.l.b16 %v2831
    %v2848 = vpack.c.b16 %v2841, %v2840
    %v2849 = vpack.c.b16 %v2843, %v2842
    %v2850 = vpack.c.b16 %v2845, %v2844
    %v2851 = vpack.c.b16 %v2847, %v2846
    %v2857 = vsel %vm1440, %v2821, 0
    %v2860 = vsel %vm1440, %v2822, 0
    %2862 = vmatpush.bf16.msra.mxu0 0
    %2863 = vmatpush.bf16.msra.mxu0 0
    %2864 = vmatpush.bf16.msra.mxu0 0
    %2865 = vmatpush.bf16.msra.mxu0 0
    %2866 = vmatpush.bf16.msra.mxu0 %v2851
    %2867 = vmatpush.bf16.msra.mxu0 %v2850
    %2868 = vmatpush.bf16.msra.mxu0 %v2849
    %2869 = vmatpush.bf16.msra.mxu0 %v2848
    %2870 = vmatmul.bf16.gmra.mxu0 %v2857
    %v2871 = vpop.f32.mrf.mxu0
    %v2872 = vadd.f32 0.0, %v2871
    %v2873 = vpop.f32.mrf.mxu0
    %v2874 = vadd.f32 0.0, %v2873
    %2875 = vmatmul.bf16.gmra.mxu0 %v2860
    %v2876 = vpop.f32.mrf.mxu0
    %v2877 = vadd.f32 0.0, %v2876
    %v2878 = vpop.f32.mrf.mxu0
    %v2879 = vadd.f32 0.0, %v2878
    %2880 = vdwg.mxu0
    %v2881 = vadd.f32 %v2772, %v2872
    %v2882 = vadd.f32 %v2774, %v2874
    %v2883 = vadd.f32 %v2777, %v2877
    %v2884 = vadd.f32 %v2779, %v2879
    %s2885 = scalar_lea.vmem [#allocation5], 48
    %v2886 = vld [vmem:[%s2885] sm:$0xf]
    %v2887 = vld [vmem:[%s2885 + $0x4] sm:$0xf]
    %v2888 = vld [vmem:[%s2885 + $0x8] sm:$0xf]
    %v2889 = vld [vmem:[%s2885 + $0xc] sm:$0xf]
    %v2894 = vunpack.c.l.b16 %v2886
    %v2895 = vunpack.c.l.b16 %v2887
    %v2896 = vunpack.c.l.b16 %v2888
    %v2897 = vunpack.c.l.b16 %v2889
    %v2898 = vpack.c.b16 %v2895, %v2894
    %v2899 = vpack.c.b16 %v2897, %v2896
    %v2901 = vsel %vm428, %v2898, 0
    %v2904 = vsel %vm428, %v2899, 0
    %2906 = vmatpush.bf16.msra.mxu0 0
    %2907 = vmatpush.bf16.msra.mxu0 0
    %2908 = vmatpush.bf16.msra.mxu0 0
    %2909 = vmatpush.bf16.msra.mxu0 0
    %2910 = vmatpush.bf16.msra.mxu0 0
    %2911 = vmatpush.bf16.msra.mxu0 0
    %2912 = vmatpush.bf16.msra.mxu0 %v2582
    %2913 = vmatpush.bf16.msra.mxu0 %v2581
    %2914 = vmatmul.bf16.gmra.mxu0 %v2901
    %v2915 = vpop.f32.mrf.mxu0
    %v2916 = vadd.f32 0.0, %v2915
    %v2917 = vpop.f32.mrf.mxu0
    %v2918 = vadd.f32 0.0, %v2917
    %2919 = vmatmul.bf16.gmra.mxu0 %v2904
    %v2920 = vpop.f32.mrf.mxu0
    %v2921 = vadd.f32 0.0, %v2920
    %v2922 = vpop.f32.mrf.mxu0
    %v2923 = vadd.f32 0.0, %v2922
    %2924 = vdwg.mxu0
    %v2925 = vpack.c.bf16 %v2918, %v2916
    %v2926 = vpack.c.bf16 %v2923, %v2921
    %s2927 = scalar_lea.vmem [#allocation8], 96
    %v2928 = vld [vmem:[%s2927] sm:$0xf]
    %v2929 = vld [vmem:[%s2927 + $0x4] sm:$0xf]
    %v2930 = vld [vmem:[%s2927 + $0x8] sm:$0xf]
    %v2931 = vld [vmem:[%s2927 + $0xc] sm:$0xf]
    %v2932 = vld [vmem:[%s2927 + $0x10] sm:$0xf]
    %v2933 = vld [vmem:[%s2927 + $0x14] sm:$0xf]
    %v2934 = vld [vmem:[%s2927 + $0x18] sm:$0xf]
    %v2935 = vld [vmem:[%s2927 + $0x1c] sm:$0xf]
    %v2944 = vunpack.c.l.b16 %v2928
    %v2945 = vunpack.c.l.b16 %v2929
    %v2946 = vunpack.c.l.b16 %v2930
    %v2947 = vunpack.c.l.b16 %v2931
    %v2948 = vunpack.c.l.b16 %v2932
    %v2949 = vunpack.c.l.b16 %v2933
    %v2950 = vunpack.c.l.b16 %v2934
    %v2951 = vunpack.c.l.b16 %v2935
    %v2952 = vpack.c.b16 %v2945, %v2944
    %v2953 = vpack.c.b16 %v2947, %v2946
    %v2954 = vpack.c.b16 %v2949, %v2948
    %v2955 = vpack.c.b16 %v2951, %v2950
    %v2961 = vsel %vm1440, %v2925, 0
    %v2964 = vsel %vm1440, %v2926, 0
    %2966 = vmatpush.bf16.msra.mxu0 0
    %2967 = vmatpush.bf16.msra.mxu0 0
    %2968 = vmatpush.bf16.msra.mxu0 0
    %2969 = vmatpush.bf16.msra.mxu0 0
    %2970 = vmatpush.bf16.msra.mxu0 %v2955
    %2971 = vmatpush.bf16.msra.mxu0 %v2954
    %2972 = vmatpush.bf16.msra.mxu0 %v2953
    %2973 = vmatpush.bf16.msra.mxu0 %v2952
    %2974 = vmatmul.bf16.gmra.mxu0 %v2961
    %v2975 = vpop.f32.mrf.mxu0
    %v2976 = vadd.f32 0.0, %v2975
    %v2977 = vpop.f32.mrf.mxu0
    %v2978 = vadd.f32 0.0, %v2977
    %2979 = vmatmul.bf16.gmra.mxu0 %v2964
    %v2980 = vpop.f32.mrf.mxu0
    %v2981 = vadd.f32 0.0, %v2980
    %v2982 = vpop.f32.mrf.mxu0
    %v2983 = vadd.f32 0.0, %v2982
    %2984 = vdwg.mxu0
    %v2985 = vadd.f32 %v2881, %v2976
    %v2986 = vadd.f32 %v2882, %v2978
    %v2987 = vadd.f32 %v2883, %v2981
    %v2988 = vadd.f32 %v2884, %v2983
    %s2989 = scalar_lea.vmem [#allocation5], 64
    %v2990 = vld [vmem:[%s2989] sm:$0xf]
    %v2991 = vld [vmem:[%s2989 + $0x4] sm:$0xf]
    %v2992 = vld [vmem:[%s2989 + $0x8] sm:$0xf]
    %v2993 = vld [vmem:[%s2989 + $0xc] sm:$0xf]
    %v2998 = vunpack.c.l.b16 %v2990
    %v2999 = vunpack.c.l.b16 %v2991
    %v3000 = vunpack.c.l.b16 %v2992
    %v3001 = vunpack.c.l.b16 %v2993
    %v3002 = vpack.c.b16 %v2999, %v2998
    %v3003 = vpack.c.b16 %v3001, %v3000
    %v3005 = vsel %vm428, %v3002, 0
    %v3008 = vsel %vm428, %v3003, 0
    %3010 = vmatpush.bf16.msra.mxu0 0
    %3011 = vmatpush.bf16.msra.mxu0 0
    %3012 = vmatpush.bf16.msra.mxu0 0
    %3013 = vmatpush.bf16.msra.mxu0 0
    %3014 = vmatpush.bf16.msra.mxu0 0
    %3015 = vmatpush.bf16.msra.mxu0 0
    %3016 = vmatpush.bf16.msra.mxu0 %v2582
    %3017 = vmatpush.bf16.msra.mxu0 %v2581
    %3018 = vmatmul.bf16.gmra.mxu0 %v3005
    %v3019 = vpop.f32.mrf.mxu0
    %v3020 = vadd.f32 0.0, %v3019
    %v3021 = vpop.f32.mrf.mxu0
    %v3022 = vadd.f32 0.0, %v3021
    %3023 = vmatmul.bf16.gmra.mxu0 %v3008
    %v3024 = vpop.f32.mrf.mxu0
    %v3025 = vadd.f32 0.0, %v3024
    %v3026 = vpop.f32.mrf.mxu0
    %v3027 = vadd.f32 0.0, %v3026
    %3028 = vdwg.mxu0
    %v3029 = vpack.c.bf16 %v3022, %v3020
    %v3030 = vpack.c.bf16 %v3027, %v3025
    %s3031 = scalar_lea.vmem [#allocation8], 128
    %v3032 = vld [vmem:[%s3031] sm:$0xf]
    %v3033 = vld [vmem:[%s3031 + $0x4] sm:$0xf]
    %v3034 = vld [vmem:[%s3031 + $0x8] sm:$0xf]
    %v3035 = vld [vmem:[%s3031 + $0xc] sm:$0xf]
    %v3036 = vld [vmem:[%s3031 + $0x10] sm:$0xf]
    %v3037 = vld [vmem:[%s3031 + $0x14] sm:$0xf]
    %v3038 = vld [vmem:[%s3031 + $0x18] sm:$0xf]
    %v3039 = vld [vmem:[%s3031 + $0x1c] sm:$0xf]
    %v3048 = vunpack.c.l.b16 %v3032
    %v3049 = vunpack.c.l.b16 %v3033
    %v3050 = vunpack.c.l.b16 %v3034
    %v3051 = vunpack.c.l.b16 %v3035
    %v3052 = vunpack.c.l.b16 %v3036
    %v3053 = vunpack.c.l.b16 %v3037
    %v3054 = vunpack.c.l.b16 %v3038
    %v3055 = vunpack.c.l.b16 %v3039
    %v3056 = vpack.c.b16 %v3049, %v3048
    %v3057 = vpack.c.b16 %v3051, %v3050
    %v3058 = vpack.c.b16 %v3053, %v3052
    %v3059 = vpack.c.b16 %v3055, %v3054
    %v3065 = vsel %vm1440, %v3029, 0
    %v3068 = vsel %vm1440, %v3030, 0
    %3070 = vmatpush.bf16.msra.mxu0 0
    %3071 = vmatpush.bf16.msra.mxu0 0
    %3072 = vmatpush.bf16.msra.mxu0 0
    %3073 = vmatpush.bf16.msra.mxu0 0
    %3074 = vmatpush.bf16.msra.mxu0 %v3059
    %3075 = vmatpush.bf16.msra.mxu0 %v3058
    %3076 = vmatpush.bf16.msra.mxu0 %v3057
    %3077 = vmatpush.bf16.msra.mxu0 %v3056
    %3078 = vmatmul.bf16.gmra.mxu0 %v3065
    %v3079 = vpop.f32.mrf.mxu0
    %v3080 = vadd.f32 0.0, %v3079
    %v3081 = vpop.f32.mrf.mxu0
    %v3082 = vadd.f32 0.0, %v3081
    %3083 = vmatmul.bf16.gmra.mxu0 %v3068
    %v3084 = vpop.f32.mrf.mxu0
    %v3085 = vadd.f32 0.0, %v3084
    %v3086 = vpop.f32.mrf.mxu0
    %v3087 = vadd.f32 0.0, %v3086
    %3088 = vdwg.mxu0
    %v3089 = vadd.f32 %v2985, %v3080
    %v3090 = vadd.f32 %v2986, %v3082
    %v3091 = vadd.f32 %v2987, %v3085
    %v3092 = vadd.f32 %v2988, %v3087
    %s3093 = scalar_lea.vmem [#allocation5], 80
    %v3094 = vld [vmem:[%s3093] sm:$0xf]
    %v3095 = vld [vmem:[%s3093 + $0x4] sm:$0xf]
    %v3096 = vld [vmem:[%s3093 + $0x8] sm:$0xf]
    %v3097 = vld [vmem:[%s3093 + $0xc] sm:$0xf]
    %v3102 = vunpack.c.l.b16 %v3094
    %v3103 = vunpack.c.l.b16 %v3095
    %v3104 = vunpack.c.l.b16 %v3096
    %v3105 = vunpack.c.l.b16 %v3097
    %v3106 = vpack.c.b16 %v3103, %v3102
    %v3107 = vpack.c.b16 %v3105, %v3104
    %v3109 = vsel %vm428, %v3106, 0
    %v3112 = vsel %vm428, %v3107, 0
    %3114 = vmatpush.bf16.msra.mxu0 0
    %3115 = vmatpush.bf16.msra.mxu0 0
    %3116 = vmatpush.bf16.msra.mxu0 0
    %3117 = vmatpush.bf16.msra.mxu0 0
    %3118 = vmatpush.bf16.msra.mxu0 0
    %3119 = vmatpush.bf16.msra.mxu0 0
    %3120 = vmatpush.bf16.msra.mxu0 %v2582
    %3121 = vmatpush.bf16.msra.mxu0 %v2581
    %3122 = vmatmul.bf16.gmra.mxu0 %v3109
    %v3123 = vpop.f32.mrf.mxu0
    %v3124 = vadd.f32 0.0, %v3123
    %v3125 = vpop.f32.mrf.mxu0
    %v3126 = vadd.f32 0.0, %v3125
    %3127 = vmatmul.bf16.gmra.mxu0 %v3112
    %v3128 = vpop.f32.mrf.mxu0
    %v3129 = vadd.f32 0.0, %v3128
    %v3130 = vpop.f32.mrf.mxu0
    %v3131 = vadd.f32 0.0, %v3130
    %3132 = vdwg.mxu0
    %v3133 = vpack.c.bf16 %v3126, %v3124
    %v3134 = vpack.c.bf16 %v3131, %v3129
    %s3135 = scalar_lea.vmem [#allocation8], 160
    %v3136 = vld [vmem:[%s3135] sm:$0xf]
    %v3137 = vld [vmem:[%s3135 + $0x4] sm:$0xf]
    %v3138 = vld [vmem:[%s3135 + $0x8] sm:$0xf]
    %v3139 = vld [vmem:[%s3135 + $0xc] sm:$0xf]
    %v3140 = vld [vmem:[%s3135 + $0x10] sm:$0xf]
    %v3141 = vld [vmem:[%s3135 + $0x14] sm:$0xf]
    %v3142 = vld [vmem:[%s3135 + $0x18] sm:$0xf]
    %v3143 = vld [vmem:[%s3135 + $0x1c] sm:$0xf]
    %v3152 = vunpack.c.l.b16 %v3136
    %v3153 = vunpack.c.l.b16 %v3137
    %v3154 = vunpack.c.l.b16 %v3138
    %v3155 = vunpack.c.l.b16 %v3139
    %v3156 = vunpack.c.l.b16 %v3140
    %v3157 = vunpack.c.l.b16 %v3141
    %v3158 = vunpack.c.l.b16 %v3142
    %v3159 = vunpack.c.l.b16 %v3143
    %v3160 = vpack.c.b16 %v3153, %v3152
    %v3161 = vpack.c.b16 %v3155, %v3154
    %v3162 = vpack.c.b16 %v3157, %v3156
    %v3163 = vpack.c.b16 %v3159, %v3158
    %v3169 = vsel %vm1440, %v3133, 0
    %v3172 = vsel %vm1440, %v3134, 0
    %3174 = vmatpush.bf16.msra.mxu0 0
    %3175 = vmatpush.bf16.msra.mxu0 0
    %3176 = vmatpush.bf16.msra.mxu0 0
    %3177 = vmatpush.bf16.msra.mxu0 0
    %3178 = vmatpush.bf16.msra.mxu0 %v3163
    %3179 = vmatpush.bf16.msra.mxu0 %v3162
    %3180 = vmatpush.bf16.msra.mxu0 %v3161
    %3181 = vmatpush.bf16.msra.mxu0 %v3160
    %3182 = vmatmul.bf16.gmra.mxu0 %v3169
    %v3183 = vpop.f32.mrf.mxu0
    %v3184 = vadd.f32 0.0, %v3183
    %v3185 = vpop.f32.mrf.mxu0
    %v3186 = vadd.f32 0.0, %v3185
    %3187 = vmatmul.bf16.gmra.mxu0 %v3172
    %v3188 = vpop.f32.mrf.mxu0
    %v3189 = vadd.f32 0.0, %v3188
    %v3190 = vpop.f32.mrf.mxu0
    %v3191 = vadd.f32 0.0, %v3190
    %3192 = vdwg.mxu0
    %v3193 = vadd.f32 %v3089, %v3184
    %v3194 = vadd.f32 %v3090, %v3186
    %v3195 = vadd.f32 %v3091, %v3189
    %v3196 = vadd.f32 %v3092, %v3191
    %s3197 = scalar_lea.vmem [#allocation5], 96
    %v3198 = vld [vmem:[%s3197] sm:$0xf]
    %v3199 = vld [vmem:[%s3197 + $0x4] sm:$0xf]
    %v3200 = vld [vmem:[%s3197 + $0x8] sm:$0xf]
    %v3201 = vld [vmem:[%s3197 + $0xc] sm:$0xf]
    %v3206 = vunpack.c.l.b16 %v3198
    %v3207 = vunpack.c.l.b16 %v3199
    %v3208 = vunpack.c.l.b16 %v3200
    %v3209 = vunpack.c.l.b16 %v3201
    %v3210 = vpack.c.b16 %v3207, %v3206
    %v3211 = vpack.c.b16 %v3209, %v3208
    %v3213 = vsel %vm428, %v3210, 0
    %v3216 = vsel %vm428, %v3211, 0
    %3218 = vmatpush.bf16.msra.mxu0 0
    %3219 = vmatpush.bf16.msra.mxu0 0
    %3220 = vmatpush.bf16.msra.mxu0 0
    %3221 = vmatpush.bf16.msra.mxu0 0
    %3222 = vmatpush.bf16.msra.mxu0 0
    %3223 = vmatpush.bf16.msra.mxu0 0
    %3224 = vmatpush.bf16.msra.mxu0 %v2582
    %3225 = vmatpush.bf16.msra.mxu0 %v2581
    %3226 = vmatmul.bf16.gmra.mxu0 %v3213
    %v3227 = vpop.f32.mrf.mxu0
    %v3228 = vadd.f32 0.0, %v3227
    %v3229 = vpop.f32.mrf.mxu0
    %v3230 = vadd.f32 0.0, %v3229
    %3231 = vmatmul.bf16.gmra.mxu0 %v3216
    %v3232 = vpop.f32.mrf.mxu0
    %v3233 = vadd.f32 0.0, %v3232
    %v3234 = vpop.f32.mrf.mxu0
    %v3235 = vadd.f32 0.0, %v3234
    %3236 = vdwg.mxu0
    %v3237 = vpack.c.bf16 %v3230, %v3228
    %v3238 = vpack.c.bf16 %v3235, %v3233
    %s3239 = scalar_lea.vmem [#allocation8], 192
    %v3240 = vld [vmem:[%s3239] sm:$0xf]
    %v3241 = vld [vmem:[%s3239 + $0x4] sm:$0xf]
    %v3242 = vld [vmem:[%s3239 + $0x8] sm:$0xf]
    %v3243 = vld [vmem:[%s3239 + $0xc] sm:$0xf]
    %v3244 = vld [vmem:[%s3239 + $0x10] sm:$0xf]
    %v3245 = vld [vmem:[%s3239 + $0x14] sm:$0xf]
    %v3246 = vld [vmem:[%s3239 + $0x18] sm:$0xf]
    %v3247 = vld [vmem:[%s3239 + $0x1c] sm:$0xf]
    %v3256 = vunpack.c.l.b16 %v3240
    %v3257 = vunpack.c.l.b16 %v3241
    %v3258 = vunpack.c.l.b16 %v3242
    %v3259 = vunpack.c.l.b16 %v3243
    %v3260 = vunpack.c.l.b16 %v3244
    %v3261 = vunpack.c.l.b16 %v3245
    %v3262 = vunpack.c.l.b16 %v3246
    %v3263 = vunpack.c.l.b16 %v3247
    %v3264 = vpack.c.b16 %v3257, %v3256
    %v3265 = vpack.c.b16 %v3259, %v3258
    %v3266 = vpack.c.b16 %v3261, %v3260
    %v3267 = vpack.c.b16 %v3263, %v3262
    %v3273 = vsel %vm1440, %v3237, 0
    %v3276 = vsel %vm1440, %v3238, 0
    %3278 = vmatpush.bf16.msra.mxu0 0
    %3279 = vmatpush.bf16.msra.mxu0 0
    %3280 = vmatpush.bf16.msra.mxu0 0
    %3281 = vmatpush.bf16.msra.mxu0 0
    %3282 = vmatpush.bf16.msra.mxu0 %v3267
    %3283 = vmatpush.bf16.msra.mxu0 %v3266
    %3284 = vmatpush.bf16.msra.mxu0 %v3265
    %3285 = vmatpush.bf16.msra.mxu0 %v3264
    %3286 = vmatmul.bf16.gmra.mxu0 %v3273
    %v3287 = vpop.f32.mrf.mxu0
    %v3288 = vadd.f32 0.0, %v3287
    %v3289 = vpop.f32.mrf.mxu0
    %v3290 = vadd.f32 0.0, %v3289
    %3291 = vmatmul.bf16.gmra.mxu0 %v3276
    %v3292 = vpop.f32.mrf.mxu0
    %v3293 = vadd.f32 0.0, %v3292
    %v3294 = vpop.f32.mrf.mxu0
    %v3295 = vadd.f32 0.0, %v3294
    %3296 = vdwg.mxu0
    %v3297 = vadd.f32 %v3193, %v3288
    %v3298 = vadd.f32 %v3194, %v3290
    %v3299 = vadd.f32 %v3195, %v3293
    %v3300 = vadd.f32 %v3196, %v3295
    %s3301 = scalar_lea.vmem [#allocation5], 112
    %v3302 = vld [vmem:[%s3301] sm:$0xf]
    %v3303 = vld [vmem:[%s3301 + $0x4] sm:$0xf]
    %v3304 = vld [vmem:[%s3301 + $0x8] sm:$0xf]
    %v3305 = vld [vmem:[%s3301 + $0xc] sm:$0xf]
    %v3310 = vunpack.c.l.b16 %v3302
    %v3311 = vunpack.c.l.b16 %v3303
    %v3312 = vunpack.c.l.b16 %v3304
    %v3313 = vunpack.c.l.b16 %v3305
    %v3314 = vpack.c.b16 %v3311, %v3310
    %v3315 = vpack.c.b16 %v3313, %v3312
    %v3317 = vsel %vm428, %v3314, 0
    %v3320 = vsel %vm428, %v3315, 0
    %3322 = vmatpush.bf16.msra.mxu0 0
    %3323 = vmatpush.bf16.msra.mxu0 0
    %3324 = vmatpush.bf16.msra.mxu0 0
    %3325 = vmatpush.bf16.msra.mxu0 0
    %3326 = vmatpush.bf16.msra.mxu0 0
    %3327 = vmatpush.bf16.msra.mxu0 0
    %3328 = vmatpush.bf16.msra.mxu0 %v2582
    %3329 = vmatpush.bf16.msra.mxu0 %v2581
    %3330 = vmatmul.bf16.gmra.mxu0 %v3317
    %v3331 = vpop.f32.mrf.mxu0
    %v3332 = vadd.f32 0.0, %v3331
    %v3333 = vpop.f32.mrf.mxu0
    %v3334 = vadd.f32 0.0, %v3333
    %3335 = vmatmul.bf16.gmra.mxu0 %v3320
    %v3336 = vpop.f32.mrf.mxu0
    %v3337 = vadd.f32 0.0, %v3336
    %v3338 = vpop.f32.mrf.mxu0
    %v3339 = vadd.f32 0.0, %v3338
    %3340 = vdwg.mxu0
    %v3341 = vpack.c.bf16 %v3334, %v3332
    %v3342 = vpack.c.bf16 %v3339, %v3337
    %s3343 = scalar_lea.vmem [#allocation8], 224
    %v3344 = vld [vmem:[%s3343] sm:$0xf]
    %v3345 = vld [vmem:[%s3343 + $0x4] sm:$0xf]
    %v3346 = vld [vmem:[%s3343 + $0x8] sm:$0xf]
    %v3347 = vld [vmem:[%s3343 + $0xc] sm:$0xf]
    %v3348 = vld [vmem:[%s3343 + $0x10] sm:$0xf]
    %v3349 = vld [vmem:[%s3343 + $0x14] sm:$0xf]
    %v3350 = vld [vmem:[%s3343 + $0x18] sm:$0xf]
    %v3351 = vld [vmem:[%s3343 + $0x1c] sm:$0xf]
    %v3360 = vunpack.c.l.b16 %v3344
    %v3361 = vunpack.c.l.b16 %v3345
    %v3362 = vunpack.c.l.b16 %v3346
    %v3363 = vunpack.c.l.b16 %v3347
    %v3364 = vunpack.c.l.b16 %v3348
    %v3365 = vunpack.c.l.b16 %v3349
    %v3366 = vunpack.c.l.b16 %v3350
    %v3367 = vunpack.c.l.b16 %v3351
    %v3368 = vpack.c.b16 %v3361, %v3360
    %v3369 = vpack.c.b16 %v3363, %v3362
    %v3370 = vpack.c.b16 %v3365, %v3364
    %v3371 = vpack.c.b16 %v3367, %v3366
    %v3377 = vsel %vm1440, %v3341, 0
    %v3380 = vsel %vm1440, %v3342, 0
    %3382 = vmatpush.bf16.msra.mxu0 0
    %3383 = vmatpush.bf16.msra.mxu0 0
    %3384 = vmatpush.bf16.msra.mxu0 0
    %3385 = vmatpush.bf16.msra.mxu0 0
    %3386 = vmatpush.bf16.msra.mxu0 %v3371
    %3387 = vmatpush.bf16.msra.mxu0 %v3370
    %3388 = vmatpush.bf16.msra.mxu0 %v3369
    %3389 = vmatpush.bf16.msra.mxu0 %v3368
    %3390 = vmatmul.bf16.gmra.mxu0 %v3377
    %v3391 = vpop.f32.mrf.mxu0
    %v3392 = vadd.f32 0.0, %v3391
    %v3393 = vpop.f32.mrf.mxu0
    %v3394 = vadd.f32 0.0, %v3393
    %3395 = vmatmul.bf16.gmra.mxu0 %v3380
    %v3396 = vpop.f32.mrf.mxu0
    %v3397 = vadd.f32 0.0, %v3396
    %v3398 = vpop.f32.mrf.mxu0
    %v3399 = vadd.f32 0.0, %v3398
    %3400 = vdwg.mxu0
    %v3401 = vadd.f32 %v3297, %v3392
    %v3402 = vadd.f32 %v3298, %v3394
    %v3403 = vadd.f32 %v3299, %v3397
    %v3404 = vadd.f32 %v3300, %v3399
    %s3405 = scalar_lea.vmem [#allocation5], 128
    %v3406 = vld [vmem:[%s3405] sm:$0xf]
    %v3407 = vld [vmem:[%s3405 + $0x4] sm:$0xf]
    %v3408 = vld [vmem:[%s3405 + $0x8] sm:$0xf]
    %v3409 = vld [vmem:[%s3405 + $0xc] sm:$0xf]
    %v3414 = vunpack.c.l.b16 %v3406
    %v3415 = vunpack.c.l.b16 %v3407
    %v3416 = vunpack.c.l.b16 %v3408
    %v3417 = vunpack.c.l.b16 %v3409
    %v3418 = vpack.c.b16 %v3415, %v3414
    %v3419 = vpack.c.b16 %v3417, %v3416
    %v3421 = vsel %vm428, %v3418, 0
    %v3424 = vsel %vm428, %v3419, 0
    %3426 = vmatpush.bf16.msra.mxu0 0
    %3427 = vmatpush.bf16.msra.mxu0 0
    %3428 = vmatpush.bf16.msra.mxu0 0
    %3429 = vmatpush.bf16.msra.mxu0 0
    %3430 = vmatpush.bf16.msra.mxu0 0
    %3431 = vmatpush.bf16.msra.mxu0 0
    %3432 = vmatpush.bf16.msra.mxu0 %v2582
    %3433 = vmatpush.bf16.msra.mxu0 %v2581
    %3434 = vmatmul.bf16.gmra.mxu0 %v3421
    %v3435 = vpop.f32.mrf.mxu0
    %v3436 = vadd.f32 0.0, %v3435
    %v3437 = vpop.f32.mrf.mxu0
    %v3438 = vadd.f32 0.0, %v3437
    %3439 = vmatmul.bf16.gmra.mxu0 %v3424
    %v3440 = vpop.f32.mrf.mxu0
    %v3441 = vadd.f32 0.0, %v3440
    %v3442 = vpop.f32.mrf.mxu0
    %v3443 = vadd.f32 0.0, %v3442
    %3444 = vdwg.mxu0
    %v3445 = vpack.c.bf16 %v3438, %v3436
    %v3446 = vpack.c.bf16 %v3443, %v3441
    %s3447 = scalar_lea.vmem [#allocation8], 256
    %v3448 = vld [vmem:[%s3447] sm:$0xf]
    %v3449 = vld [vmem:[%s3447 + $0x4] sm:$0xf]
    %v3450 = vld [vmem:[%s3447 + $0x8] sm:$0xf]
    %v3451 = vld [vmem:[%s3447 + $0xc] sm:$0xf]
    %v3452 = vld [vmem:[%s3447 + $0x10] sm:$0xf]
    %v3453 = vld [vmem:[%s3447 + $0x14] sm:$0xf]
    %v3454 = vld [vmem:[%s3447 + $0x18] sm:$0xf]
    %v3455 = vld [vmem:[%s3447 + $0x1c] sm:$0xf]
    %v3464 = vunpack.c.l.b16 %v3448
    %v3465 = vunpack.c.l.b16 %v3449
    %v3466 = vunpack.c.l.b16 %v3450
    %v3467 = vunpack.c.l.b16 %v3451
    %v3468 = vunpack.c.l.b16 %v3452
    %v3469 = vunpack.c.l.b16 %v3453
    %v3470 = vunpack.c.l.b16 %v3454
    %v3471 = vunpack.c.l.b16 %v3455
    %v3472 = vpack.c.b16 %v3465, %v3464
    %v3473 = vpack.c.b16 %v3467, %v3466
    %v3474 = vpack.c.b16 %v3469, %v3468
    %v3475 = vpack.c.b16 %v3471, %v3470
    %v3481 = vsel %vm1440, %v3445, 0
    %v3484 = vsel %vm1440, %v3446, 0
    %3486 = vmatpush.bf16.msra.mxu0 0
    %3487 = vmatpush.bf16.msra.mxu0 0
    %3488 = vmatpush.bf16.msra.mxu0 0
    %3489 = vmatpush.bf16.msra.mxu0 0
    %3490 = vmatpush.bf16.msra.mxu0 %v3475
    %3491 = vmatpush.bf16.msra.mxu0 %v3474
    %3492 = vmatpush.bf16.msra.mxu0 %v3473
    %3493 = vmatpush.bf16.msra.mxu0 %v3472
    %3494 = vmatmul.bf16.gmra.mxu0 %v3481
    %v3495 = vpop.f32.mrf.mxu0
    %v3496 = vadd.f32 0.0, %v3495
    %v3497 = vpop.f32.mrf.mxu0
    %v3498 = vadd.f32 0.0, %v3497
    %3499 = vmatmul.bf16.gmra.mxu0 %v3484
    %v3500 = vpop.f32.mrf.mxu0
    %v3501 = vadd.f32 0.0, %v3500
    %v3502 = vpop.f32.mrf.mxu0
    %v3503 = vadd.f32 0.0, %v3502
    %3504 = vdwg.mxu0
    %v3505 = vadd.f32 %v3401, %v3496
    %v3506 = vadd.f32 %v3402, %v3498
    %v3507 = vadd.f32 %v3403, %v3501
    %v3508 = vadd.f32 %v3404, %v3503
    %v3509 = vld [vmem:[%s27] sm:$0x1]
    %v3511 = vperm.slane %v3509, 0
    %v3513 = vadd.f32 %v3505, %v3511
    %v3514 = vadd.f32 %v3506, %v3511
    %v3515 = vadd.f32 %v3507, %v3511
    %v3516 = vadd.f32 %v3508, %v3511
    %v3517 = vld [vmem:[%s29] sm:$0x1]
    %v3518 = vld [vmem:[%s31] sm:$0x1]
    %v3519 = vsel %vm1440, %v3513, 0.0
    %v3520 = vsel %vm1440, %v3514, 0.0
    %v3521 = vadd.f32 %v3519, %v3520
    %v3522 = vsel %vm1440, %v3515, 0.0
    %v3523 = vadd.f32 %v3521, %v3522
    %v3524 = vsel %vm1440, %v3516, 0.0
    %v3525 = vadd.f32 %v3523, %v3524
    %v3526 = vrot.slane %v3525, 4
    %v3527 = vadd.f32 %v3525, %v3526
    %v3528 = vrot.slane %v3527, 2
    %v3529 = vadd.f32 %v3527, %v3528
    %v3530 = vrot.slane %v3529, 1
    %v3531 = vadd.f32 %v3529, %v3530
    %v3532 = vmul.f32 %v3531, %v2528
    %v3533 = vsub.f32 %v3513, %v3532
    %v3534 = vsub.f32 %v3514, %v3532
    %v3535 = vsub.f32 %v3515, %v3532
    %v3536 = vsub.f32 %v3516, %v3532
    %v3537 = vmul.f32 %v3533, %v3533
    %v3538 = vmul.f32 %v3534, %v3534
    %v3539 = vmul.f32 %v3535, %v3535
    %v3540 = vmul.f32 %v3536, %v3536
    %v3541 = vsel %vm1440, %v3537, 0.0
    %v3542 = vsel %vm1440, %v3538, 0.0
    %v3543 = vadd.f32 %v3541, %v3542
    %v3544 = vsel %vm1440, %v3539, 0.0
    %v3545 = vadd.f32 %v3543, %v3544
    %v3546 = vsel %vm1440, %v3540, 0.0
    %v3547 = vadd.f32 %v3545, %v3546
    %v3548 = vrot.slane %v3547, 4
    %v3549 = vadd.f32 %v3547, %v3548
    %v3550 = vrot.slane %v3549, 2
    %v3551 = vadd.f32 %v3549, %v3550
    %v3552 = vrot.slane %v3551, 1
    %v3553 = vadd.f32 %v3551, %v3552
    %v3554 = vmul.f32 %v3553, %v2528
    %v3555 = vadd.f32 %v3554, 1e-05
    %v3556 = vrsqrt.pop %v3555
    %v3557 = vmul.f32 %v3556, %v3555
    %v3558 = vmul.f32 %v3557, %v3556
    %v3559 = vmul.f32 0.5, %v3558
    %v3560 = vsub.f32 1.5, %v3559
    %v3561 = vmul.f32 %v3556, %v3560
    %vm3562 = vweird.f32 %v3555
    %vm3563 = vweird.f32 %v3556
    %vm3564 = vmor %vm3562, %vm3563
    %v3565 = vsel %vm3564, %v3556, %v3561
    %v3566 = vmul.f32 %v3533, %v3565
    %v3567 = vmul.f32 %v3534, %v3565
    %v3568 = vmul.f32 %v3535, %v3565
    %v3569 = vmul.f32 %v3536, %v3565
    %v3571 = vperm.slane %v3517, 0
    %v3573 = vmul.f32 %v3566, %v3571
    %v3574 = vmul.f32 %v3567, %v3571
    %v3575 = vmul.f32 %v3568, %v3571
    %v3576 = vmul.f32 %v3569, %v3571
    %v3578 = vperm.slane %v3518, 0
    %v3580 = vadd.f32 %v3573, %v3578
    %v3581 = vadd.f32 %v3574, %v3578
    %v3582 = vadd.f32 %v3575, %v3578
    %v3583 = vadd.f32 %v3576, %v3578
    %3588 = vrot.lane.b32.xlu0 %v2573, 64
    %v3589 = vpop.permute.xlu0 %3588
    %3590 = vrot.lane.b32.xlu0 %v2574, 64
    %v3591 = vpop.permute.xlu0 %3590
    %3592 = vrot.lane.b32.xlu0 %v2575, 64
    %v3593 = vpop.permute.xlu0 %3592
    %3594 = vrot.lane.b32.xlu0 %v2576, 64
    %v3595 = vpop.permute.xlu0 %3594
    %v3600 = vadd.f32 %v3580, %v3589
    %v3601 = vadd.f32 %v3581, %v3591
    %v3602 = vadd.f32 %v3582, %v3593
    %v3603 = vadd.f32 %v3583, %v3595
    %v3604 = vmax.f32 %v3600, 0.0
    %v3605 = vmax.f32 %v3601, 0.0
    %v3606 = vmax.f32 %v3602, 0.0
    %v3607 = vmax.f32 %v3603, 0.0
    %v3608 = vpack.c.bf16 %v3605, %v3604
    %v3609 = vpack.c.bf16 %v3607, %v3606
    %v3610 = vld [vmem:[%s33] sm:$0xf]
    %v3612 = vsel %vm428, %v3610, 0
    %3614 = vmatpush.bf16.msra.mxu0 0
    %3615 = vmatpush.bf16.msra.mxu0 0
    %3616 = vmatpush.bf16.msra.mxu0 0
    %3617 = vmatpush.bf16.msra.mxu0 0
    %3618 = vmatpush.bf16.msra.mxu0 0
    %3619 = vmatpush.bf16.msra.mxu0 0
    %3620 = vmatpush.bf16.msra.mxu0 %v3609
    %3621 = vmatpush.bf16.msra.mxu0 %v3608
    %3622 = vmatmul.bf16.gmra.mxu0 %v3612
    %v3623 = vpop.f32.mrf.mxu0
    %v3624 = vadd.f32 0.0, %v3623
    %v3625 = vpop.f32.mrf.mxu0
    %3626 = vdwg.mxu0
    %v3627 = vpack.c.bf16 %v3624, %v3624
    %v3628 = vld [vmem:[#allocation10] sm:$0xff]
    %v3629 = vld [vmem:[#allocation10 + $0x8] sm:$0xff]
    %v3630 = vld [vmem:[#allocation10 + $0x10] sm:$0xff]
    %v3631 = vld [vmem:[#allocation10 + $0x18] sm:$0xff]
    %v3632 = vld [vmem:[#allocation10 + $0x20] sm:$0xff]
    %v3633 = vld [vmem:[#allocation10 + $0x28] sm:$0xff]
    %v3634 = vld [vmem:[#allocation10 + $0x30] sm:$0xff]
    %v3635 = vld [vmem:[#allocation10 + $0x38] sm:$0xff]
    %s3636 = scalar_lea.vmem %s33, 4
    %v3637 = vld [vmem:[%s3636] sm:$0xf]
    %v3639 = vsel %vm428, %v3637, 0
    %3641 = vmatpush.bf16.msra.mxu0 0
    %3642 = vmatpush.bf16.msra.mxu0 0
    %3643 = vmatpush.bf16.msra.mxu0 0
    %3644 = vmatpush.bf16.msra.mxu0 0
    %3645 = vmatpush.bf16.msra.mxu0 0
    %3646 = vmatpush.bf16.msra.mxu0 0
    %3647 = vmatpush.bf16.msra.mxu0 %v3609
    %3648 = vmatpush.bf16.msra.mxu0 %v3608
    %3649 = vmatmul.bf16.gmra.mxu0 %v3639
    %v3650 = vpop.f32.mrf.mxu0
    %v3651 = vadd.f32 0.0, %v3650
    %v3652 = vpop.f32.mrf.mxu0
    %3653 = vdwg.mxu0
    %v3654 = vpack.c.bf16 %v3651, %v3651
    %s3655 = scalar_lea.vmem [#allocation10], 64
    %v3656 = vld [vmem:[%s3655] sm:$0xff]
    %v3657 = vld [vmem:[%s3655 + $0x8] sm:$0xff]
    %v3658 = vld [vmem:[%s3655 + $0x10] sm:$0xff]
    %v3659 = vld [vmem:[%s3655 + $0x18] sm:$0xff]
    %v3660 = vld [vmem:[%s3655 + $0x20] sm:$0xff]
    %v3661 = vld [vmem:[%s3655 + $0x28] sm:$0xff]
    %v3662 = vld [vmem:[%s3655 + $0x30] sm:$0xff]
    %v3663 = vld [vmem:[%s3655 + $0x38] sm:$0xff]
    %v3672 = vunpack.c.l.b16 %v3656
    %v3673 = vunpack.c.h.b16 %v3656
    %v3674 = vunpack.c.l.b16 %v3657
    %v3675 = vunpack.c.h.b16 %v3657
    %v3676 = vunpack.c.l.b16 %v3658
    %v3677 = vunpack.c.h.b16 %v3658
    %v3678 = vunpack.c.l.b16 %v3659
    %v3679 = vunpack.c.h.b16 %v3659
    %v3680 = vunpack.c.l.b16 %v3660
    %v3681 = vunpack.c.h.b16 %v3660
    %v3682 = vunpack.c.l.b16 %v3661
    %v3683 = vunpack.c.h.b16 %v3661
    %v3684 = vunpack.c.l.b16 %v3662
    %v3685 = vunpack.c.h.b16 %v3662
    %v3686 = vunpack.c.l.b16 %v3663
    %v3687 = vunpack.c.h.b16 %v3663
    %v3688 = vpack.c.b16 %v3674, %v3672
    %v3689 = vpack.c.b16 %v3675, %v3673
    %v3690 = vpack.c.b16 %v3678, %v3676
    %v3691 = vpack.c.b16 %v3679, %v3677
    %v3692 = vpack.c.b16 %v3682, %v3680
    %v3693 = vpack.c.b16 %v3683, %v3681
    %v3694 = vpack.c.b16 %v3686, %v3684
    %v3695 = vpack.c.b16 %v3687, %v3685
    %v3705 = vsel %vm1440, %v3654, 0
    %3707 = vmatpush.bf16.msra.mxu0 0
    %3708 = vmatpush.bf16.msra.mxu0 0
    %3709 = vmatpush.bf16.msra.mxu0 0
    %3710 = vmatpush.bf16.msra.mxu0 0
    %3711 = vmatpush.bf16.msra.mxu0 %v3694
    %3712 = vmatpush.bf16.msra.mxu0 %v3692
    %3713 = vmatpush.bf16.msra.mxu0 %v3690
    %3714 = vmatpush.bf16.msra.mxu0 %v3688
    %3715 = vmatmul.bf16.gmra.mxu0 %v3705
    %v3716 = vpop.f32.mrf.mxu0
    %v3717 = vadd.f32 0.0, %v3716
    %v3718 = vpop.f32.mrf.mxu0
    %3719 = vdwg.mxu0
    %3720 = vmatpush.bf16.msra.mxu0 0
    %3721 = vmatpush.bf16.msra.mxu0 0
    %3722 = vmatpush.bf16.msra.mxu0 0
    %3723 = vmatpush.bf16.msra.mxu0 0
    %3724 = vmatpush.bf16.msra.mxu0 %v3695
    %3725 = vmatpush.bf16.msra.mxu0 %v3693
    %3726 = vmatpush.bf16.msra.mxu0 %v3691
    %3727 = vmatpush.bf16.msra.mxu0 %v3689
    %3728 = vmatmul.bf16.gmra.mxu0 %v3705
    %v3729 = vpop.f32.mrf.mxu0
    %v3730 = vadd.f32 0.0, %v3729
    %v3731 = vpop.f32.mrf.mxu0
    %3732 = vdwg.mxu0
    %v3741 = vunpack.c.l.b16 %v3628
    %v3742 = vunpack.c.h.b16 %v3628
    %v3743 = vunpack.c.l.b16 %v3629
    %v3744 = vunpack.c.h.b16 %v3629
    %v3745 = vunpack.c.l.b16 %v3630
    %v3746 = vunpack.c.h.b16 %v3630
    %v3747 = vunpack.c.l.b16 %v3631
    %v3748 = vunpack.c.h.b16 %v3631
    %v3749 = vunpack.c.l.b16 %v3632
    %v3750 = vunpack.c.h.b16 %v3632
    %v3751 = vunpack.c.l.b16 %v3633
    %v3752 = vunpack.c.h.b16 %v3633
    %v3753 = vunpack.c.l.b16 %v3634
    %v3754 = vunpack.c.h.b16 %v3634
    %v3755 = vunpack.c.l.b16 %v3635
    %v3756 = vunpack.c.h.b16 %v3635
    %v3757 = vpack.c.b16 %v3743, %v3741
    %v3758 = vpack.c.b16 %v3744, %v3742
    %v3759 = vpack.c.b16 %v3747, %v3745
    %v3760 = vpack.c.b16 %v3748, %v3746
    %v3761 = vpack.c.b16 %v3751, %v3749
    %v3762 = vpack.c.b16 %v3752, %v3750
    %v3763 = vpack.c.b16 %v3755, %v3753
    %v3764 = vpack.c.b16 %v3756, %v3754
    %v3774 = vsel %vm1440, %v3627, 0
    %3776 = vmatpush.bf16.msra.mxu0 0
    %3777 = vmatpush.bf16.msra.mxu0 0
    %3778 = vmatpush.bf16.msra.mxu0 0
    %3779 = vmatpush.bf16.msra.mxu0 0
    %3780 = vmatpush.bf16.msra.mxu0 %v3763
    %3781 = vmatpush.bf16.msra.mxu0 %v3761
    %3782 = vmatpush.bf16.msra.mxu0 %v3759
    %3783 = vmatpush.bf16.msra.mxu0 %v3757
    %3784 = vmatmul.bf16.gmra.mxu0 %v3774
    %v3785 = vpop.f32.mrf.mxu0
    %v3786 = vadd.f32 %v3717, %v3785
    %v3787 = vpop.f32.mrf.mxu0
    %3788 = vdwg.mxu0
    %3789 = vmatpush.bf16.msra.mxu0 0
    %3790 = vmatpush.bf16.msra.mxu0 0
    %3791 = vmatpush.bf16.msra.mxu0 0
    %3792 = vmatpush.bf16.msra.mxu0 0
    %3793 = vmatpush.bf16.msra.mxu0 %v3764
    %3794 = vmatpush.bf16.msra.mxu0 %v3762
    %3795 = vmatpush.bf16.msra.mxu0 %v3760
    %3796 = vmatpush.bf16.msra.mxu0 %v3758
    %3797 = vmatmul.bf16.gmra.mxu0 %v3774
    %v3798 = vpop.f32.mrf.mxu0
    %v3799 = vadd.f32 %v3730, %v3798
    %v3800 = vpop.f32.mrf.mxu0
    %3801 = vdwg.mxu0
    %s3802 = scalar_lea.vmem %s33, 8
    %v3803 = vld [vmem:[%s3802] sm:$0xf]
    %v3805 = vsel %vm428, %v3803, 0
    %3807 = vmatpush.bf16.msra.mxu0 0
    %3808 = vmatpush.bf16.msra.mxu0 0
    %3809 = vmatpush.bf16.msra.mxu0 0
    %3810 = vmatpush.bf16.msra.mxu0 0
    %3811 = vmatpush.bf16.msra.mxu0 0
    %3812 = vmatpush.bf16.msra.mxu0 0
    %3813 = vmatpush.bf16.msra.mxu0 %v3609
    %3814 = vmatpush.bf16.msra.mxu0 %v3608
    %3815 = vmatmul.bf16.gmra.mxu0 %v3805
    %v3816 = vpop.f32.mrf.mxu0
    %v3817 = vadd.f32 0.0, %v3816
    %v3818 = vpop.f32.mrf.mxu0
    %3819 = vdwg.mxu0
    %v3820 = vpack.c.bf16 %v3817, %v3817
    %s3821 = scalar_lea.vmem [#allocation10], 128
    %v3822 = vld [vmem:[%s3821] sm:$0xff]
    %v3823 = vld [vmem:[%s3821 + $0x8] sm:$0xff]
    %v3824 = vld [vmem:[%s3821 + $0x10] sm:$0xff]
    %v3825 = vld [vmem:[%s3821 + $0x18] sm:$0xff]
    %v3826 = vld [vmem:[%s3821 + $0x20] sm:$0xff]
    %v3827 = vld [vmem:[%s3821 + $0x28] sm:$0xff]
    %v3828 = vld [vmem:[%s3821 + $0x30] sm:$0xff]
    %v3829 = vld [vmem:[%s3821 + $0x38] sm:$0xff]
    %v3838 = vunpack.c.l.b16 %v3822
    %v3839 = vunpack.c.h.b16 %v3822
    %v3840 = vunpack.c.l.b16 %v3823
    %v3841 = vunpack.c.h.b16 %v3823
    %v3842 = vunpack.c.l.b16 %v3824
    %v3843 = vunpack.c.h.b16 %v3824
    %v3844 = vunpack.c.l.b16 %v3825
    %v3845 = vunpack.c.h.b16 %v3825
    %v3846 = vunpack.c.l.b16 %v3826
    %v3847 = vunpack.c.h.b16 %v3826
    %v3848 = vunpack.c.l.b16 %v3827
    %v3849 = vunpack.c.h.b16 %v3827
    %v3850 = vunpack.c.l.b16 %v3828
    %v3851 = vunpack.c.h.b16 %v3828
    %v3852 = vunpack.c.l.b16 %v3829
    %v3853 = vunpack.c.h.b16 %v3829
    %v3854 = vpack.c.b16 %v3840, %v3838
    %v3855 = vpack.c.b16 %v3841, %v3839
    %v3856 = vpack.c.b16 %v3844, %v3842
    %v3857 = vpack.c.b16 %v3845, %v3843
    %v3858 = vpack.c.b16 %v3848, %v3846
    %v3859 = vpack.c.b16 %v3849, %v3847
    %v3860 = vpack.c.b16 %v3852, %v3850
    %v3861 = vpack.c.b16 %v3853, %v3851
    %v3871 = vsel %vm1440, %v3820, 0
    %3873 = vmatpush.bf16.msra.mxu0 0
    %3874 = vmatpush.bf16.msra.mxu0 0
    %3875 = vmatpush.bf16.msra.mxu0 0
    %3876 = vmatpush.bf16.msra.mxu0 0
    %3877 = vmatpush.bf16.msra.mxu0 %v3860
    %3878 = vmatpush.bf16.msra.mxu0 %v3858
    %3879 = vmatpush.bf16.msra.mxu0 %v3856
    %3880 = vmatpush.bf16.msra.mxu0 %v3854
    %3881 = vmatmul.bf16.gmra.mxu0 %v3871
    %v3882 = vpop.f32.mrf.mxu0
    %v3883 = vadd.f32 0.0, %v3882
    %v3884 = vpop.f32.mrf.mxu0
    %3885 = vdwg.mxu0
    %3886 = vmatpush.bf16.msra.mxu0 0
    %3887 = vmatpush.bf16.msra.mxu0 0
    %3888 = vmatpush.bf16.msra.mxu0 0
    %3889 = vmatpush.bf16.msra.mxu0 0
    %3890 = vmatpush.bf16.msra.mxu0 %v3861
    %3891 = vmatpush.bf16.msra.mxu0 %v3859
    %3892 = vmatpush.bf16.msra.mxu0 %v3857
    %3893 = vmatpush.bf16.msra.mxu0 %v3855
    %3894 = vmatmul.bf16.gmra.mxu0 %v3871
    %v3895 = vpop.f32.mrf.mxu0
    %v3896 = vadd.f32 0.0, %v3895
    %v3897 = vpop.f32.mrf.mxu0
    %3898 = vdwg.mxu0
    %v3899 = vadd.f32 %v3786, %v3883
    %v3900 = vadd.f32 %v3799, %v3896
    %s3901 = scalar_lea.vmem %s33, 12
    %v3902 = vld [vmem:[%s3901] sm:$0xf]
    %v3904 = vsel %vm428, %v3902, 0
    %3906 = vmatpush.bf16.msra.mxu0 0
    %3907 = vmatpush.bf16.msra.mxu0 0
    %3908 = vmatpush.bf16.msra.mxu0 0
    %3909 = vmatpush.bf16.msra.mxu0 0
    %3910 = vmatpush.bf16.msra.mxu0 0
    %3911 = vmatpush.bf16.msra.mxu0 0
    %3912 = vmatpush.bf16.msra.mxu0 %v3609
    %3913 = vmatpush.bf16.msra.mxu0 %v3608
    %3914 = vmatmul.bf16.gmra.mxu0 %v3904
    %v3915 = vpop.f32.mrf.mxu0
    %v3916 = vadd.f32 0.0, %v3915
    %v3917 = vpop.f32.mrf.mxu0
    %3918 = vdwg.mxu0
    %v3919 = vpack.c.bf16 %v3916, %v3916
    %s3920 = scalar_lea.vmem [#allocation10], 192
    %v3921 = vld [vmem:[%s3920] sm:$0xff]
    %v3922 = vld [vmem:[%s3920 + $0x8] sm:$0xff]
    %v3923 = vld [vmem:[%s3920 + $0x10] sm:$0xff]
    %v3924 = vld [vmem:[%s3920 + $0x18] sm:$0xff]
    %v3925 = vld [vmem:[%s3920 + $0x20] sm:$0xff]
    %v3926 = vld [vmem:[%s3920 + $0x28] sm:$0xff]
    %v3927 = vld [vmem:[%s3920 + $0x30] sm:$0xff]
    %v3928 = vld [vmem:[%s3920 + $0x38] sm:$0xff]
    %v3937 = vunpack.c.l.b16 %v3921
    %v3938 = vunpack.c.h.b16 %v3921
    %v3939 = vunpack.c.l.b16 %v3922
    %v3940 = vunpack.c.h.b16 %v3922
    %v3941 = vunpack.c.l.b16 %v3923
    %v3942 = vunpack.c.h.b16 %v3923
    %v3943 = vunpack.c.l.b16 %v3924
    %v3944 = vunpack.c.h.b16 %v3924
    %v3945 = vunpack.c.l.b16 %v3925
    %v3946 = vunpack.c.h.b16 %v3925
    %v3947 = vunpack.c.l.b16 %v3926
    %v3948 = vunpack.c.h.b16 %v3926
    %v3949 = vunpack.c.l.b16 %v3927
    %v3950 = vunpack.c.h.b16 %v3927
    %v3951 = vunpack.c.l.b16 %v3928
    %v3952 = vunpack.c.h.b16 %v3928
    %v3953 = vpack.c.b16 %v3939, %v3937
    %v3954 = vpack.c.b16 %v3940, %v3938
    %v3955 = vpack.c.b16 %v3943, %v3941
    %v3956 = vpack.c.b16 %v3944, %v3942
    %v3957 = vpack.c.b16 %v3947, %v3945
    %v3958 = vpack.c.b16 %v3948, %v3946
    %v3959 = vpack.c.b16 %v3951, %v3949
    %v3960 = vpack.c.b16 %v3952, %v3950
    %v3970 = vsel %vm1440, %v3919, 0
    %3972 = vmatpush.bf16.msra.mxu0 0
    %3973 = vmatpush.bf16.msra.mxu0 0
    %3974 = vmatpush.bf16.msra.mxu0 0
    %3975 = vmatpush.bf16.msra.mxu0 0
    %3976 = vmatpush.bf16.msra.mxu0 %v3959
    %3977 = vmatpush.bf16.msra.mxu0 %v3957
    %3978 = vmatpush.bf16.msra.mxu0 %v3955
    %3979 = vmatpush.bf16.msra.mxu0 %v3953
    %3980 = vmatmul.bf16.gmra.mxu0 %v3970
    %v3981 = vpop.f32.mrf.mxu0
    %v3982 = vadd.f32 0.0, %v3981
    %v3983 = vpop.f32.mrf.mxu0
    %3984 = vdwg.mxu0
    %3985 = vmatpush.bf16.msra.mxu0 0
    %3986 = vmatpush.bf16.msra.mxu0 0
    %3987 = vmatpush.bf16.msra.mxu0 0
    %3988 = vmatpush.bf16.msra.mxu0 0
    %3989 = vmatpush.bf16.msra.mxu0 %v3960
    %3990 = vmatpush.bf16.msra.mxu0 %v3958
    %3991 = vmatpush.bf16.msra.mxu0 %v3956
    %3992 = vmatpush.bf16.msra.mxu0 %v3954
    %3993 = vmatmul.bf16.gmra.mxu0 %v3970
    %v3994 = vpop.f32.mrf.mxu0
    %v3995 = vadd.f32 0.0, %v3994
    %v3996 = vpop.f32.mrf.mxu0
    %3997 = vdwg.mxu0
    %v3998 = vadd.f32 %v3899, %v3982
    %v3999 = vadd.f32 %v3900, %v3995
    %s4000 = scalar_lea.vmem %s33, 16
    %v4001 = vld [vmem:[%s4000] sm:$0xf]
    %v4003 = vsel %vm428, %v4001, 0
    %4005 = vmatpush.bf16.msra.mxu0 0
    %4006 = vmatpush.bf16.msra.mxu0 0
    %4007 = vmatpush.bf16.msra.mxu0 0
    %4008 = vmatpush.bf16.msra.mxu0 0
    %4009 = vmatpush.bf16.msra.mxu0 0
    %4010 = vmatpush.bf16.msra.mxu0 0
    %4011 = vmatpush.bf16.msra.mxu0 %v3609
    %4012 = vmatpush.bf16.msra.mxu0 %v3608
    %4013 = vmatmul.bf16.gmra.mxu0 %v4003
    %v4014 = vpop.f32.mrf.mxu0
    %v4015 = vadd.f32 0.0, %v4014
    %v4016 = vpop.f32.mrf.mxu0
    %4017 = vdwg.mxu0
    %v4018 = vpack.c.bf16 %v4015, %v4015
    %s4019 = scalar_lea.vmem [#allocation10], 256
    %v4020 = vld [vmem:[%s4019] sm:$0xff]
    %v4021 = vld [vmem:[%s4019 + $0x8] sm:$0xff]
    %v4022 = vld [vmem:[%s4019 + $0x10] sm:$0xff]
    %v4023 = vld [vmem:[%s4019 + $0x18] sm:$0xff]
    %v4024 = vld [vmem:[%s4019 + $0x20] sm:$0xff]
    %v4025 = vld [vmem:[%s4019 + $0x28] sm:$0xff]
    %v4026 = vld [vmem:[%s4019 + $0x30] sm:$0xff]
    %v4027 = vld [vmem:[%s4019 + $0x38] sm:$0xff]
    %v4036 = vunpack.c.l.b16 %v4020
    %v4037 = vunpack.c.h.b16 %v4020
    %v4038 = vunpack.c.l.b16 %v4021
    %v4039 = vunpack.c.h.b16 %v4021
    %v4040 = vunpack.c.l.b16 %v4022
    %v4041 = vunpack.c.h.b16 %v4022
    %v4042 = vunpack.c.l.b16 %v4023
    %v4043 = vunpack.c.h.b16 %v4023
    %v4044 = vunpack.c.l.b16 %v4024
    %v4045 = vunpack.c.h.b16 %v4024
    %v4046 = vunpack.c.l.b16 %v4025
    %v4047 = vunpack.c.h.b16 %v4025
    %v4048 = vunpack.c.l.b16 %v4026
    %v4049 = vunpack.c.h.b16 %v4026
    %v4050 = vunpack.c.l.b16 %v4027
    %v4051 = vunpack.c.h.b16 %v4027
    %v4052 = vpack.c.b16 %v4038, %v4036
    %v4053 = vpack.c.b16 %v4039, %v4037
    %v4054 = vpack.c.b16 %v4042, %v4040
    %v4055 = vpack.c.b16 %v4043, %v4041
    %v4056 = vpack.c.b16 %v4046, %v4044
    %v4057 = vpack.c.b16 %v4047, %v4045
    %v4058 = vpack.c.b16 %v4050, %v4048
    %v4059 = vpack.c.b16 %v4051, %v4049
    %v4069 = vsel %vm1440, %v4018, 0
    %4071 = vmatpush.bf16.msra.mxu0 0
    %4072 = vmatpush.bf16.msra.mxu0 0
    %4073 = vmatpush.bf16.msra.mxu0 0
    %4074 = vmatpush.bf16.msra.mxu0 0
    %4075 = vmatpush.bf16.msra.mxu0 %v4058
    %4076 = vmatpush.bf16.msra.mxu0 %v4056
    %4077 = vmatpush.bf16.msra.mxu0 %v4054
    %4078 = vmatpush.bf16.msra.mxu0 %v4052
    %4079 = vmatmul.bf16.gmra.mxu0 %v4069
    %v4080 = vpop.f32.mrf.mxu0
    %v4081 = vadd.f32 0.0, %v4080
    %v4082 = vpop.f32.mrf.mxu0
    %4083 = vdwg.mxu0
    %4084 = vmatpush.bf16.msra.mxu0 0
    %4085 = vmatpush.bf16.msra.mxu0 0
    %4086 = vmatpush.bf16.msra.mxu0 0
    %4087 = vmatpush.bf16.msra.mxu0 0
    %4088 = vmatpush.bf16.msra.mxu0 %v4059
    %4089 = vmatpush.bf16.msra.mxu0 %v4057
    %4090 = vmatpush.bf16.msra.mxu0 %v4055
    %4091 = vmatpush.bf16.msra.mxu0 %v4053
    %4092 = vmatmul.bf16.gmra.mxu0 %v4069
    %v4093 = vpop.f32.mrf.mxu0
    %v4094 = vadd.f32 0.0, %v4093
    %v4095 = vpop.f32.mrf.mxu0
    %4096 = vdwg.mxu0
    %v4097 = vadd.f32 %v3998, %v4081
    %v4098 = vadd.f32 %v3999, %v4094
    %s4099 = scalar_lea.vmem %s33, 20
    %v4100 = vld [vmem:[%s4099] sm:$0xf]
    %v4102 = vsel %vm428, %v4100, 0
    %4104 = vmatpush.bf16.msra.mxu0 0
    %4105 = vmatpush.bf16.msra.mxu0 0
    %4106 = vmatpush.bf16.msra.mxu0 0
    %4107 = vmatpush.bf16.msra.mxu0 0
    %4108 = vmatpush.bf16.msra.mxu0 0
    %4109 = vmatpush.bf16.msra.mxu0 0
    %4110 = vmatpush.bf16.msra.mxu0 %v3609
    %4111 = vmatpush.bf16.msra.mxu0 %v3608
    %4112 = vmatmul.bf16.gmra.mxu0 %v4102
    %v4113 = vpop.f32.mrf.mxu0
    %v4114 = vadd.f32 0.0, %v4113
    %v4115 = vpop.f32.mrf.mxu0
    %4116 = vdwg.mxu0
    %v4117 = vpack.c.bf16 %v4114, %v4114
    %s4118 = scalar_lea.vmem [#allocation10], 320
    %v4119 = vld [vmem:[%s4118] sm:$0xff]
    %v4120 = vld [vmem:[%s4118 + $0x8] sm:$0xff]
    %v4121 = vld [vmem:[%s4118 + $0x10] sm:$0xff]
    %v4122 = vld [vmem:[%s4118 + $0x18] sm:$0xff]
    %v4123 = vld [vmem:[%s4118 + $0x20] sm:$0xff]
    %v4124 = vld [vmem:[%s4118 + $0x28] sm:$0xff]
    %v4125 = vld [vmem:[%s4118 + $0x30] sm:$0xff]
    %v4126 = vld [vmem:[%s4118 + $0x38] sm:$0xff]
    %v4135 = vunpack.c.l.b16 %v4119
    %v4136 = vunpack.c.h.b16 %v4119
    %v4137 = vunpack.c.l.b16 %v4120
    %v4138 = vunpack.c.h.b16 %v4120
    %v4139 = vunpack.c.l.b16 %v4121
    %v4140 = vunpack.c.h.b16 %v4121
    %v4141 = vunpack.c.l.b16 %v4122
    %v4142 = vunpack.c.h.b16 %v4122
    %v4143 = vunpack.c.l.b16 %v4123
    %v4144 = vunpack.c.h.b16 %v4123
    %v4145 = vunpack.c.l.b16 %v4124
    %v4146 = vunpack.c.h.b16 %v4124
    %v4147 = vunpack.c.l.b16 %v4125
    %v4148 = vunpack.c.h.b16 %v4125
    %v4149 = vunpack.c.l.b16 %v4126
    %v4150 = vunpack.c.h.b16 %v4126
    %v4151 = vpack.c.b16 %v4137, %v4135
    %v4152 = vpack.c.b16 %v4138, %v4136
    %v4153 = vpack.c.b16 %v4141, %v4139
    %v4154 = vpack.c.b16 %v4142, %v4140
    %v4155 = vpack.c.b16 %v4145, %v4143
    %v4156 = vpack.c.b16 %v4146, %v4144
    %v4157 = vpack.c.b16 %v4149, %v4147
    %v4158 = vpack.c.b16 %v4150, %v4148
    %v4168 = vsel %vm1440, %v4117, 0
    %4170 = vmatpush.bf16.msra.mxu0 0
    %4171 = vmatpush.bf16.msra.mxu0 0
    %4172 = vmatpush.bf16.msra.mxu0 0
    %4173 = vmatpush.bf16.msra.mxu0 0
    %4174 = vmatpush.bf16.msra.mxu0 %v4157
    %4175 = vmatpush.bf16.msra.mxu0 %v4155
    %4176 = vmatpush.bf16.msra.mxu0 %v4153
    %4177 = vmatpush.bf16.msra.mxu0 %v4151
    %4178 = vmatmul.bf16.gmra.mxu0 %v4168
    %v4179 = vpop.f32.mrf.mxu0
    %v4180 = vadd.f32 0.0, %v4179
    %v4181 = vpop.f32.mrf.mxu0
    %4182 = vdwg.mxu0
    %4183 = vmatpush.bf16.msra.mxu0 0
    %4184 = vmatpush.bf16.msra.mxu0 0
    %4185 = vmatpush.bf16.msra.mxu0 0
    %4186 = vmatpush.bf16.msra.mxu0 0
    %4187 = vmatpush.bf16.msra.mxu0 %v4158
    %4188 = vmatpush.bf16.msra.mxu0 %v4156
    %4189 = vmatpush.bf16.msra.mxu0 %v4154
    %4190 = vmatpush.bf16.msra.mxu0 %v4152
    %4191 = vmatmul.bf16.gmra.mxu0 %v4168
    %v4192 = vpop.f32.mrf.mxu0
    %v4193 = vadd.f32 0.0, %v4192
    %v4194 = vpop.f32.mrf.mxu0
    %4195 = vdwg.mxu0
    %v4196 = vadd.f32 %v4097, %v4180
    %v4197 = vadd.f32 %v4098, %v4193
    %s4198 = scalar_lea.vmem %s33, 24
    %v4199 = vld [vmem:[%s4198] sm:$0xf]
    %v4201 = vsel %vm428, %v4199, 0
    %4203 = vmatpush.bf16.msra.mxu0 0
    %4204 = vmatpush.bf16.msra.mxu0 0
    %4205 = vmatpush.bf16.msra.mxu0 0
    %4206 = vmatpush.bf16.msra.mxu0 0
    %4207 = vmatpush.bf16.msra.mxu0 0
    %4208 = vmatpush.bf16.msra.mxu0 0
    %4209 = vmatpush.bf16.msra.mxu0 %v3609
    %4210 = vmatpush.bf16.msra.mxu0 %v3608
    %4211 = vmatmul.bf16.gmra.mxu0 %v4201
    %v4212 = vpop.f32.mrf.mxu0
    %v4213 = vadd.f32 0.0, %v4212
    %v4214 = vpop.f32.mrf.mxu0
    %4215 = vdwg.mxu0
    %v4216 = vpack.c.bf16 %v4213, %v4213
    %s4217 = scalar_lea.vmem [#allocation10], 384
    %v4218 = vld [vmem:[%s4217] sm:$0xff]
    %v4219 = vld [vmem:[%s4217 + $0x8] sm:$0xff]
    %v4220 = vld [vmem:[%s4217 + $0x10] sm:$0xff]
    %v4221 = vld [vmem:[%s4217 + $0x18] sm:$0xff]
    %v4222 = vld [vmem:[%s4217 + $0x20] sm:$0xff]
    %v4223 = vld [vmem:[%s4217 + $0x28] sm:$0xff]
    %v4224 = vld [vmem:[%s4217 + $0x30] sm:$0xff]
    %v4225 = vld [vmem:[%s4217 + $0x38] sm:$0xff]
    %v4234 = vunpack.c.l.b16 %v4218
    %v4235 = vunpack.c.h.b16 %v4218
    %v4236 = vunpack.c.l.b16 %v4219
    %v4237 = vunpack.c.h.b16 %v4219
    %v4238 = vunpack.c.l.b16 %v4220
    %v4239 = vunpack.c.h.b16 %v4220
    %v4240 = vunpack.c.l.b16 %v4221
    %v4241 = vunpack.c.h.b16 %v4221
    %v4242 = vunpack.c.l.b16 %v4222
    %v4243 = vunpack.c.h.b16 %v4222
    %v4244 = vunpack.c.l.b16 %v4223
    %v4245 = vunpack.c.h.b16 %v4223
    %v4246 = vunpack.c.l.b16 %v4224
    %v4247 = vunpack.c.h.b16 %v4224
    %v4248 = vunpack.c.l.b16 %v4225
    %v4249 = vunpack.c.h.b16 %v4225
    %v4250 = vpack.c.b16 %v4236, %v4234
    %v4251 = vpack.c.b16 %v4237, %v4235
    %v4252 = vpack.c.b16 %v4240, %v4238
    %v4253 = vpack.c.b16 %v4241, %v4239
    %v4254 = vpack.c.b16 %v4244, %v4242
    %v4255 = vpack.c.b16 %v4245, %v4243
    %v4256 = vpack.c.b16 %v4248, %v4246
    %v4257 = vpack.c.b16 %v4249, %v4247
    %v4267 = vsel %vm1440, %v4216, 0
    %4269 = vmatpush.bf16.msra.mxu0 0
    %4270 = vmatpush.bf16.msra.mxu0 0
    %4271 = vmatpush.bf16.msra.mxu0 0
    %4272 = vmatpush.bf16.msra.mxu0 0
    %4273 = vmatpush.bf16.msra.mxu0 %v4256
    %4274 = vmatpush.bf16.msra.mxu0 %v4254
    %4275 = vmatpush.bf16.msra.mxu0 %v4252
    %4276 = vmatpush.bf16.msra.mxu0 %v4250
    %4277 = vmatmul.bf16.gmra.mxu0 %v4267
    %v4278 = vpop.f32.mrf.mxu0
    %v4279 = vadd.f32 0.0, %v4278
    %v4280 = vpop.f32.mrf.mxu0
    %4281 = vdwg.mxu0
    %4282 = vmatpush.bf16.msra.mxu0 0
    %4283 = vmatpush.bf16.msra.mxu0 0
    %4284 = vmatpush.bf16.msra.mxu0 0
    %4285 = vmatpush.bf16.msra.mxu0 0
    %4286 = vmatpush.bf16.msra.mxu0 %v4257
    %4287 = vmatpush.bf16.msra.mxu0 %v4255
    %4288 = vmatpush.bf16.msra.mxu0 %v4253
    %4289 = vmatpush.bf16.msra.mxu0 %v4251
    %4290 = vmatmul.bf16.gmra.mxu0 %v4267
    %v4291 = vpop.f32.mrf.mxu0
    %v4292 = vadd.f32 0.0, %v4291
    %v4293 = vpop.f32.mrf.mxu0
    %4294 = vdwg.mxu0
    %v4295 = vadd.f32 %v4196, %v4279
    %v4296 = vadd.f32 %v4197, %v4292
    %s4297 = scalar_lea.vmem %s33, 28
    %v4298 = vld [vmem:[%s4297] sm:$0xf]
    %v4300 = vsel %vm428, %v4298, 0
    %4302 = vmatpush.bf16.msra.mxu0 0
    %4303 = vmatpush.bf16.msra.mxu0 0
    %4304 = vmatpush.bf16.msra.mxu0 0
    %4305 = vmatpush.bf16.msra.mxu0 0
    %4306 = vmatpush.bf16.msra.mxu0 0
    %4307 = vmatpush.bf16.msra.mxu0 0
    %4308 = vmatpush.bf16.msra.mxu0 %v3609
    %4309 = vmatpush.bf16.msra.mxu0 %v3608
    %4310 = vmatmul.bf16.gmra.mxu0 %v4300
    %v4311 = vpop.f32.mrf.mxu0
    %v4312 = vadd.f32 0.0, %v4311
    %v4313 = vpop.f32.mrf.mxu0
    %4314 = vdwg.mxu0
    %v4315 = vpack.c.bf16 %v4312, %v4312
    %s4316 = scalar_lea.vmem [#allocation10], 448
    %v4317 = vld [vmem:[%s4316] sm:$0xff]
    %v4318 = vld [vmem:[%s4316 + $0x8] sm:$0xff]
    %v4319 = vld [vmem:[%s4316 + $0x10] sm:$0xff]
    %v4320 = vld [vmem:[%s4316 + $0x18] sm:$0xff]
    %v4321 = vld [vmem:[%s4316 + $0x20] sm:$0xff]
    %v4322 = vld [vmem:[%s4316 + $0x28] sm:$0xff]
    %v4323 = vld [vmem:[%s4316 + $0x30] sm:$0xff]
    %v4324 = vld [vmem:[%s4316 + $0x38] sm:$0xff]
    %v4333 = vunpack.c.l.b16 %v4317
    %v4334 = vunpack.c.h.b16 %v4317
    %v4335 = vunpack.c.l.b16 %v4318
    %v4336 = vunpack.c.h.b16 %v4318
    %v4337 = vunpack.c.l.b16 %v4319
    %v4338 = vunpack.c.h.b16 %v4319
    %v4339 = vunpack.c.l.b16 %v4320
    %v4340 = vunpack.c.h.b16 %v4320
    %v4341 = vunpack.c.l.b16 %v4321
    %v4342 = vunpack.c.h.b16 %v4321
    %v4343 = vunpack.c.l.b16 %v4322
    %v4344 = vunpack.c.h.b16 %v4322
    %v4345 = vunpack.c.l.b16 %v4323
    %v4346 = vunpack.c.h.b16 %v4323
    %v4347 = vunpack.c.l.b16 %v4324
    %v4348 = vunpack.c.h.b16 %v4324
    %v4349 = vpack.c.b16 %v4335, %v4333
    %v4350 = vpack.c.b16 %v4336, %v4334
    %v4351 = vpack.c.b16 %v4339, %v4337
    %v4352 = vpack.c.b16 %v4340, %v4338
    %v4353 = vpack.c.b16 %v4343, %v4341
    %v4354 = vpack.c.b16 %v4344, %v4342
    %v4355 = vpack.c.b16 %v4347, %v4345
    %v4356 = vpack.c.b16 %v4348, %v4346
    %v4366 = vsel %vm1440, %v4315, 0
    %4368 = vmatpush.bf16.msra.mxu0 0
    %4369 = vmatpush.bf16.msra.mxu0 0
    %4370 = vmatpush.bf16.msra.mxu0 0
    %4371 = vmatpush.bf16.msra.mxu0 0
    %4372 = vmatpush.bf16.msra.mxu0 %v4355
    %4373 = vmatpush.bf16.msra.mxu0 %v4353
    %4374 = vmatpush.bf16.msra.mxu0 %v4351
    %4375 = vmatpush.bf16.msra.mxu0 %v4349
    %4376 = vmatmul.bf16.gmra.mxu0 %v4366
    %v4377 = vpop.f32.mrf.mxu0
    %v4378 = vadd.f32 0.0, %v4377
    %v4379 = vpop.f32.mrf.mxu0
    %4380 = vdwg.mxu0
    %4381 = vmatpush.bf16.msra.mxu0 0
    %4382 = vmatpush.bf16.msra.mxu0 0
    %4383 = vmatpush.bf16.msra.mxu0 0
    %4384 = vmatpush.bf16.msra.mxu0 0
    %4385 = vmatpush.bf16.msra.mxu0 %v4356
    %4386 = vmatpush.bf16.msra.mxu0 %v4354
    %4387 = vmatpush.bf16.msra.mxu0 %v4352
    %4388 = vmatpush.bf16.msra.mxu0 %v4350
    %4389 = vmatmul.bf16.gmra.mxu0 %v4366
    %v4390 = vpop.f32.mrf.mxu0
    %v4391 = vadd.f32 0.0, %v4390
    %v4392 = vpop.f32.mrf.mxu0
    %4393 = vdwg.mxu0
    %v4394 = vadd.f32 %v4295, %v4378
    %v4395 = vadd.f32 %v4296, %v4391
    %s4396 = scalar_lea.vmem %s33, 32
    %v4397 = vld [vmem:[%s4396] sm:$0xf]
    %v4399 = vsel %vm428, %v4397, 0
    %4401 = vmatpush.bf16.msra.mxu0 0
    %4402 = vmatpush.bf16.msra.mxu0 0
    %4403 = vmatpush.bf16.msra.mxu0 0
    %4404 = vmatpush.bf16.msra.mxu0 0
    %4405 = vmatpush.bf16.msra.mxu0 0
    %4406 = vmatpush.bf16.msra.mxu0 0
    %4407 = vmatpush.bf16.msra.mxu0 %v3609
    %4408 = vmatpush.bf16.msra.mxu0 %v3608
    %4409 = vmatmul.bf16.gmra.mxu0 %v4399
    %v4410 = vpop.f32.mrf.mxu0
    %v4411 = vadd.f32 0.0, %v4410
    %v4412 = vpop.f32.mrf.mxu0
    %4413 = vdwg.mxu0
    %v4414 = vpack.c.bf16 %v4411, %v4411
    %s4415 = scalar_lea.vmem [#allocation10], 512
    %v4416 = vld [vmem:[%s4415] sm:$0xff]
    %v4417 = vld [vmem:[%s4415 + $0x8] sm:$0xff]
    %v4418 = vld [vmem:[%s4415 + $0x10] sm:$0xff]
    %v4419 = vld [vmem:[%s4415 + $0x18] sm:$0xff]
    %v4420 = vld [vmem:[%s4415 + $0x20] sm:$0xff]
    %v4421 = vld [vmem:[%s4415 + $0x28] sm:$0xff]
    %v4422 = vld [vmem:[%s4415 + $0x30] sm:$0xff]
    %v4423 = vld [vmem:[%s4415 + $0x38] sm:$0xff]
    %v4432 = vunpack.c.l.b16 %v4416
    %v4433 = vunpack.c.h.b16 %v4416
    %v4434 = vunpack.c.l.b16 %v4417
    %v4435 = vunpack.c.h.b16 %v4417
    %v4436 = vunpack.c.l.b16 %v4418
    %v4437 = vunpack.c.h.b16 %v4418
    %v4438 = vunpack.c.l.b16 %v4419
    %v4439 = vunpack.c.h.b16 %v4419
    %v4440 = vunpack.c.l.b16 %v4420
    %v4441 = vunpack.c.h.b16 %v4420
    %v4442 = vunpack.c.l.b16 %v4421
    %v4443 = vunpack.c.h.b16 %v4421
    %v4444 = vunpack.c.l.b16 %v4422
    %v4445 = vunpack.c.h.b16 %v4422
    %v4446 = vunpack.c.l.b16 %v4423
    %v4447 = vunpack.c.h.b16 %v4423
    %v4448 = vpack.c.b16 %v4434, %v4432
    %v4449 = vpack.c.b16 %v4435, %v4433
    %v4450 = vpack.c.b16 %v4438, %v4436
    %v4451 = vpack.c.b16 %v4439, %v4437
    %v4452 = vpack.c.b16 %v4442, %v4440
    %v4453 = vpack.c.b16 %v4443, %v4441
    %v4454 = vpack.c.b16 %v4446, %v4444
    %v4455 = vpack.c.b16 %v4447, %v4445
    %v4465 = vsel %vm1440, %v4414, 0
    %4467 = vmatpush.bf16.msra.mxu0 0
    %4468 = vmatpush.bf16.msra.mxu0 0
    %4469 = vmatpush.bf16.msra.mxu0 0
    %4470 = vmatpush.bf16.msra.mxu0 0
    %4471 = vmatpush.bf16.msra.mxu0 %v4454
    %4472 = vmatpush.bf16.msra.mxu0 %v4452
    %4473 = vmatpush.bf16.msra.mxu0 %v4450
    %4474 = vmatpush.bf16.msra.mxu0 %v4448
    %4475 = vmatmul.bf16.gmra.mxu0 %v4465
    %v4476 = vpop.f32.mrf.mxu0
    %v4477 = vadd.f32 0.0, %v4476
    %v4478 = vpop.f32.mrf.mxu0
    %4479 = vdwg.mxu0
    %4480 = vmatpush.bf16.msra.mxu0 0
    %4481 = vmatpush.bf16.msra.mxu0 0
    %4482 = vmatpush.bf16.msra.mxu0 0
    %4483 = vmatpush.bf16.msra.mxu0 0
    %4484 = vmatpush.bf16.msra.mxu0 %v4455
    %4485 = vmatpush.bf16.msra.mxu0 %v4453
    %4486 = vmatpush.bf16.msra.mxu0 %v4451
    %4487 = vmatpush.bf16.msra.mxu0 %v4449
    %4488 = vmatmul.bf16.gmra.mxu0 %v4465
    %v4489 = vpop.f32.mrf.mxu0
    %v4490 = vadd.f32 0.0, %v4489
    %v4491 = vpop.f32.mrf.mxu0
    %4492 = vdwg.mxu0
    %v4493 = vadd.f32 %v4394, %v4477
    %v4494 = vadd.f32 %v4395, %v4490
    %v4495 = vld [vmem:[%s39] sm:$0x3]
    %v4497 = vperm.slane %v4495, 0
    %v4498 = vperm.slane %v4495, 1
    %v4501 = vadd.f32 %v4493, %v4497
    %v4502 = vadd.f32 %v4494, %v4498
    %v4503 = vld [vmem:[%s41] sm:$0x3]
    %v4504 = vld [vmem:[%s43] sm:$0x3]
    %v4505 = vrot.slane %v4501, 4
    %v4506 = vadd.f32 %v4501, %v4505
    %v4507 = vrot.slane %v4506, 2
    %v4508 = vadd.f32 %v4506, %v4507
    %v4509 = vrot.slane %v4508, 1
    %v4510 = vadd.f32 %v4508, %v4509
    %v4511 = vrot.slane %v4502, 4
    %v4512 = vadd.f32 %v4502, %v4511
    %v4513 = vrot.slane %v4512, 2
    %v4514 = vadd.f32 %v4512, %v4513
    %v4515 = vrot.slane %v4514, 1
    %v4516 = vadd.f32 %v4514, %v4515
    %v4517 = vrcp.pop 8.0
    %v4518 = vmul.f32 8.0, %v4517
    %v4519 = vsub.f32 1.0, %v4518
    %v4520 = vmul.f32 %v4517, %v4519
    %v4521 = vadd.f32 %v4517, %v4520
    %vm4522 = vweird.f32 %v4517
    %v4523 = vsel %vm4522, %v4517, %v4521
    %v4524 = vmul.f32 %v4510, %v4523
    %v4525 = vmul.f32 %v4516, %v4523
    %v4526 = vsub.f32 %v4501, %v4524
    %v4527 = vsub.f32 %v4502, %v4525
    %v4528 = vmul.f32 %v4526, %v4526
    %v4529 = vmul.f32 %v4527, %v4527
    %v4530 = vrot.slane %v4528, 4
    %v4531 = vadd.f32 %v4528, %v4530
    %v4532 = vrot.slane %v4531, 2
    %v4533 = vadd.f32 %v4531, %v4532
    %v4534 = vrot.slane %v4533, 1
    %v4535 = vadd.f32 %v4533, %v4534
    %v4536 = vrot.slane %v4529, 4
    %v4537 = vadd.f32 %v4529, %v4536
    %v4538 = vrot.slane %v4537, 2
    %v4539 = vadd.f32 %v4537, %v4538
    %v4540 = vrot.slane %v4539, 1
    %v4541 = vadd.f32 %v4539, %v4540
    %v4542 = vmul.f32 %v4535, %v4523
    %v4543 = vmul.f32 %v4541, %v4523
    %v4544 = vadd.f32 %v4542, 1e-05
    %v4545 = vadd.f32 %v4543, 1e-05
    %v4546 = vrsqrt.pop %v4544
    %v4547 = vmul.f32 %v4546, %v4544
    %v4548 = vmul.f32 %v4547, %v4546
    %v4549 = vmul.f32 0.5, %v4548
    %v4550 = vsub.f32 1.5, %v4549
    %v4551 = vmul.f32 %v4546, %v4550
    %vm4552 = vweird.f32 %v4544
    %vm4553 = vweird.f32 %v4546
    %vm4554 = vmor %vm4552, %vm4553
    %v4555 = vsel %vm4554, %v4546, %v4551
    %v4556 = vrsqrt.pop %v4545
    %v4557 = vmul.f32 %v4556, %v4545
    %v4558 = vmul.f32 %v4557, %v4556
    %v4559 = vmul.f32 0.5, %v4558
    %v4560 = vsub.f32 1.5, %v4559
    %v4561 = vmul.f32 %v4556, %v4560
    %vm4562 = vweird.f32 %v4545
    %vm4563 = vweird.f32 %v4556
    %vm4564 = vmor %vm4562, %vm4563
    %v4565 = vsel %vm4564, %v4556, %v4561
    %v4566 = vmul.f32 %v4526, %v4555
    %v4567 = vmul.f32 %v4527, %v4565
    %v4569 = vperm.slane %v4503, 0
    %v4570 = vperm.slane %v4503, 1
    %v4573 = vmul.f32 %v4566, %v4569
    %v4574 = vmul.f32 %v4567, %v4570
    %v4576 = vperm.slane %v4504, 0
    %v4577 = vperm.slane %v4504, 1
    %v4580 = vadd.f32 %v4573, %v4576
    %v4581 = vadd.f32 %v4574, %v4577
    %v4582 = vmax.f32 %v4580, 0.0
    %v4583 = vpack.c.bf16 %v4582, %v4582
    %v4584 = vld [vmem:[%s35] sm:$0xf]
    %vm4585 = vcmask 64512
    %v4587 = vsel %vm4585, %v4584, 0
    %v4590 = vsel %vm1593, %v4583, 0
    %4592 = vmatpush.bf16.msra.mxu0 0
    %4593 = vmatpush.bf16.msra.mxu0 0
    %4594 = vmatpush.bf16.msra.mxu0 0
    %4595 = vmatpush.bf16.msra.mxu0 0
    %4596 = vmatpush.bf16.msra.mxu0 0
    %4597 = vmatpush.bf16.msra.mxu0 0
    %4598 = vmatpush.bf16.msra.mxu0 0
    %4599 = vmatpush.bf16.msra.mxu0 %v4590
    %4600 = vmatmul.bf16.gmra.mxu0 %v4587
    %v4601 = vpop.f32.mrf.mxu0
    %v4602 = vadd.f32 0.0, %v4601
    %v4603 = vpop.f32.mrf.mxu0
    %4604 = vdwg.mxu0
    %v4605 = vpack.c.bf16 %v4602, %v4602
    %v4606 = vld [vmem:[#allocation11] sm:$0xf]
    %v4607 = vld [vmem:[#allocation11 + $0x4] sm:$0xf]
    %v4608 = vld [vmem:[#allocation11 + $0x8] sm:$0xf]
    %v4609 = vld [vmem:[#allocation11 + $0xc] sm:$0xf]
    %v4610 = vld [vmem:[#allocation11 + $0x10] sm:$0xf]
    %v4611 = vld [vmem:[#allocation11 + $0x14] sm:$0xf]
    %v4612 = vld [vmem:[#allocation11 + $0x18] sm:$0xf]
    %v4613 = vld [vmem:[#allocation11 + $0x1c] sm:$0xf]
    %v4614 = vld [vmem:[#allocation11 + $0x20] sm:$0xf]
    %v4615 = vld [vmem:[#allocation11 + $0x24] sm:$0xf]
    %v4616 = vld [vmem:[#allocation11 + $0x28] sm:$0xf]
    %v4617 = vld [vmem:[#allocation11 + $0x2c] sm:$0xf]
    %v4618 = vld [vmem:[#allocation11 + $0x30] sm:$0xf]
    %v4619 = vld [vmem:[#allocation11 + $0x34] sm:$0xf]
    %v4620 = vld [vmem:[#allocation11 + $0x38] sm:$0xf]
    %v4621 = vld [vmem:[#allocation11 + $0x3c] sm:$0xf]
    %s4622 = scalar_lea.vmem %s35, 4
    %v4623 = vld [vmem:[%s4622] sm:$0xf]
    %v4625 = vsel %vm4585, %v4623, 0
    %4627 = vmatpush.bf16.msra.mxu0 0
    %4628 = vmatpush.bf16.msra.mxu0 0
    %4629 = vmatpush.bf16.msra.mxu0 0
    %4630 = vmatpush.bf16.msra.mxu0 0
    %4631 = vmatpush.bf16.msra.mxu0 0
    %4632 = vmatpush.bf16.msra.mxu0 0
    %4633 = vmatpush.bf16.msra.mxu0 0
    %4634 = vmatpush.bf16.msra.mxu0 %v4590
    %4635 = vmatmul.bf16.gmra.mxu0 %v4625
    %v4636 = vpop.f32.mrf.mxu0
    %v4637 = vadd.f32 0.0, %v4636
    %v4638 = vpop.f32.mrf.mxu0
    %4639 = vdwg.mxu0
    %v4640 = vpack.c.bf16 %v4637, %v4637
    %s4641 = scalar_lea.vmem [#allocation11], 64
    %v4642 = vld [vmem:[%s4641] sm:$0xf]
    %v4643 = vld [vmem:[%s4641 + $0x4] sm:$0xf]
    %v4644 = vld [vmem:[%s4641 + $0x8] sm:$0xf]
    %v4645 = vld [vmem:[%s4641 + $0xc] sm:$0xf]
    %v4646 = vld [vmem:[%s4641 + $0x10] sm:$0xf]
    %v4647 = vld [vmem:[%s4641 + $0x14] sm:$0xf]
    %v4648 = vld [vmem:[%s4641 + $0x18] sm:$0xf]
    %v4649 = vld [vmem:[%s4641 + $0x1c] sm:$0xf]
    %v4650 = vld [vmem:[%s4641 + $0x20] sm:$0xf]
    %v4651 = vld [vmem:[%s4641 + $0x24] sm:$0xf]
    %v4652 = vld [vmem:[%s4641 + $0x28] sm:$0xf]
    %v4653 = vld [vmem:[%s4641 + $0x2c] sm:$0xf]
    %v4654 = vld [vmem:[%s4641 + $0x30] sm:$0xf]
    %v4655 = vld [vmem:[%s4641 + $0x34] sm:$0xf]
    %v4656 = vld [vmem:[%s4641 + $0x38] sm:$0xf]
    %v4657 = vld [vmem:[%s4641 + $0x3c] sm:$0xf]
    %v4674 = vunpack.c.l.b16 %v4642
    %v4675 = vunpack.c.l.b16 %v4643
    %v4676 = vunpack.c.l.b16 %v4644
    %v4677 = vunpack.c.l.b16 %v4645
    %v4678 = vunpack.c.l.b16 %v4646
    %v4679 = vunpack.c.l.b16 %v4647
    %v4680 = vunpack.c.l.b16 %v4648
    %v4681 = vunpack.c.l.b16 %v4649
    %v4682 = vunpack.c.l.b16 %v4650
    %v4683 = vunpack.c.l.b16 %v4651
    %v4684 = vunpack.c.l.b16 %v4652
    %v4685 = vunpack.c.l.b16 %v4653
    %v4686 = vunpack.c.l.b16 %v4654
    %v4687 = vunpack.c.l.b16 %v4655
    %v4688 = vunpack.c.l.b16 %v4656
    %v4689 = vunpack.c.l.b16 %v4657
    %v4690 = vpack.c.b16 %v4675, %v4674
    %v4691 = vpack.c.b16 %v4677, %v4676
    %v4692 = vpack.c.b16 %v4679, %v4678
    %v4693 = vpack.c.b16 %v4681, %v4680
    %v4694 = vpack.c.b16 %v4683, %v4682
    %v4695 = vpack.c.b16 %v4685, %v4684
    %v4696 = vpack.c.b16 %v4687, %v4686
    %v4697 = vpack.c.b16 %v4689, %v4688
    %4706 = vmatpush.bf16.msra.mxu0 %v4697
    %4707 = vmatpush.bf16.msra.mxu0 %v4696
    %4708 = vmatpush.bf16.msra.mxu0 %v4695
    %4709 = vmatpush.bf16.msra.mxu0 %v4694
    %4710 = vmatpush.bf16.msra.mxu0 %v4693
    %4711 = vmatpush.bf16.msra.mxu0 %v4692
    %4712 = vmatpush.bf16.msra.mxu0 %v4691
    %4713 = vmatpush.bf16.msra.mxu0 %v4690
    %4714 = vmatmul.bf16.gmra.mxu0 %v4640
    %v4715 = vpop.f32.mrf.mxu0
    %v4716 = vadd.f32 0.0, %v4715
    %v4717 = vpop.f32.mrf.mxu0
    %4718 = vdwg.mxu0
    %v4735 = vunpack.c.l.b16 %v4606
    %v4736 = vunpack.c.l.b16 %v4607
    %v4737 = vunpack.c.l.b16 %v4608
    %v4738 = vunpack.c.l.b16 %v4609
    %v4739 = vunpack.c.l.b16 %v4610
    %v4740 = vunpack.c.l.b16 %v4611
    %v4741 = vunpack.c.l.b16 %v4612
    %v4742 = vunpack.c.l.b16 %v4613
    %v4743 = vunpack.c.l.b16 %v4614
    %v4744 = vunpack.c.l.b16 %v4615
    %v4745 = vunpack.c.l.b16 %v4616
    %v4746 = vunpack.c.l.b16 %v4617
    %v4747 = vunpack.c.l.b16 %v4618
    %v4748 = vunpack.c.l.b16 %v4619
    %v4749 = vunpack.c.l.b16 %v4620
    %v4750 = vunpack.c.l.b16 %v4621
    %v4751 = vpack.c.b16 %v4736, %v4735
    %v4752 = vpack.c.b16 %v4738, %v4737
    %v4753 = vpack.c.b16 %v4740, %v4739
    %v4754 = vpack.c.b16 %v4742, %v4741
    %v4755 = vpack.c.b16 %v4744, %v4743
    %v4756 = vpack.c.b16 %v4746, %v4745
    %v4757 = vpack.c.b16 %v4748, %v4747
    %v4758 = vpack.c.b16 %v4750, %v4749
    %4767 = vmatpush.bf16.msra.mxu0 %v4758
    %4768 = vmatpush.bf16.msra.mxu0 %v4757
    %4769 = vmatpush.bf16.msra.mxu0 %v4756
    %4770 = vmatpush.bf16.msra.mxu0 %v4755
    %4771 = vmatpush.bf16.msra.mxu0 %v4754
    %4772 = vmatpush.bf16.msra.mxu0 %v4753
    %4773 = vmatpush.bf16.msra.mxu0 %v4752
    %4774 = vmatpush.bf16.msra.mxu0 %v4751
    %4775 = vmatmul.bf16.gmra.mxu0 %v4605
    %v4776 = vpop.f32.mrf.mxu0
    %v4777 = vadd.f32 %v4716, %v4776
    %v4778 = vpop.f32.mrf.mxu0
    %4779 = vdwg.mxu0
    %s4780 = scalar_lea.vmem %s35, 8
    %v4781 = vld [vmem:[%s4780] sm:$0xf]
    %v4783 = vsel %vm4585, %v4781, 0
    %4785 = vmatpush.bf16.msra.mxu0 0
    %4786 = vmatpush.bf16.msra.mxu0 0
    %4787 = vmatpush.bf16.msra.mxu0 0
    %4788 = vmatpush.bf16.msra.mxu0 0
    %4789 = vmatpush.bf16.msra.mxu0 0
    %4790 = vmatpush.bf16.msra.mxu0 0
    %4791 = vmatpush.bf16.msra.mxu0 0
    %4792 = vmatpush.bf16.msra.mxu0 %v4590
    %4793 = vmatmul.bf16.gmra.mxu0 %v4783
    %v4794 = vpop.f32.mrf.mxu0
    %v4795 = vadd.f32 0.0, %v4794
    %v4796 = vpop.f32.mrf.mxu0
    %4797 = vdwg.mxu0
    %v4798 = vpack.c.bf16 %v4795, %v4795
    %s4799 = scalar_lea.vmem [#allocation11], 128
    %v4800 = vld [vmem:[%s4799] sm:$0xf]
    %v4801 = vld [vmem:[%s4799 + $0x4] sm:$0xf]
    %v4802 = vld [vmem:[%s4799 + $0x8] sm:$0xf]
    %v4803 = vld [vmem:[%s4799 + $0xc] sm:$0xf]
    %v4804 = vld [vmem:[%s4799 + $0x10] sm:$0xf]
    %v4805 = vld [vmem:[%s4799 + $0x14] sm:$0xf]
    %v4806 = vld [vmem:[%s4799 + $0x18] sm:$0xf]
    %v4807 = vld [vmem:[%s4799 + $0x1c] sm:$0xf]
    %v4808 = vld [vmem:[%s4799 + $0x20] sm:$0xf]
    %v4809 = vld [vmem:[%s4799 + $0x24] sm:$0xf]
    %v4810 = vld [vmem:[%s4799 + $0x28] sm:$0xf]
    %v4811 = vld [vmem:[%s4799 + $0x2c] sm:$0xf]
    %v4812 = vld [vmem:[%s4799 + $0x30] sm:$0xf]
    %v4813 = vld [vmem:[%s4799 + $0x34] sm:$0xf]
    %v4814 = vld [vmem:[%s4799 + $0x38] sm:$0xf]
    %v4815 = vld [vmem:[%s4799 + $0x3c] sm:$0xf]
    %v4832 = vunpack.c.l.b16 %v4800
    %v4833 = vunpack.c.l.b16 %v4801
    %v4834 = vunpack.c.l.b16 %v4802
    %v4835 = vunpack.c.l.b16 %v4803
    %v4836 = vunpack.c.l.b16 %v4804
    %v4837 = vunpack.c.l.b16 %v4805
    %v4838 = vunpack.c.l.b16 %v4806
    %v4839 = vunpack.c.l.b16 %v4807
    %v4840 = vunpack.c.l.b16 %v4808
    %v4841 = vunpack.c.l.b16 %v4809
    %v4842 = vunpack.c.l.b16 %v4810
    %v4843 = vunpack.c.l.b16 %v4811
    %v4844 = vunpack.c.l.b16 %v4812
    %v4845 = vunpack.c.l.b16 %v4813
    %v4846 = vunpack.c.l.b16 %v4814
    %v4847 = vunpack.c.l.b16 %v4815
    %v4848 = vpack.c.b16 %v4833, %v4832
    %v4849 = vpack.c.b16 %v4835, %v4834
    %v4850 = vpack.c.b16 %v4837, %v4836
    %v4851 = vpack.c.b16 %v4839, %v4838
    %v4852 = vpack.c.b16 %v4841, %v4840
    %v4853 = vpack.c.b16 %v4843, %v4842
    %v4854 = vpack.c.b16 %v4845, %v4844
    %v4855 = vpack.c.b16 %v4847, %v4846
    %4864 = vmatpush.bf16.msra.mxu0 %v4855
    %4865 = vmatpush.bf16.msra.mxu0 %v4854
    %4866 = vmatpush.bf16.msra.mxu0 %v4853
    %4867 = vmatpush.bf16.msra.mxu0 %v4852
    %4868 = vmatpush.bf16.msra.mxu0 %v4851
    %4869 = vmatpush.bf16.msra.mxu0 %v4850
    %4870 = vmatpush.bf16.msra.mxu0 %v4849
    %4871 = vmatpush.bf16.msra.mxu0 %v4848
    %4872 = vmatmul.bf16.gmra.mxu0 %v4798
    %v4873 = vpop.f32.mrf.mxu0
    %v4874 = vadd.f32 0.0, %v4873
    %v4875 = vpop.f32.mrf.mxu0
    %4876 = vdwg.mxu0
    %v4877 = vadd.f32 %v4777, %v4874
    %s4878 = scalar_lea.vmem %s35, 12
    %v4879 = vld [vmem:[%s4878] sm:$0xf]
    %v4881 = vsel %vm4585, %v4879, 0
    %4883 = vmatpush.bf16.msra.mxu0 0
    %4884 = vmatpush.bf16.msra.mxu0 0
    %4885 = vmatpush.bf16.msra.mxu0 0
    %4886 = vmatpush.bf16.msra.mxu0 0
    %4887 = vmatpush.bf16.msra.mxu0 0
    %4888 = vmatpush.bf16.msra.mxu0 0
    %4889 = vmatpush.bf16.msra.mxu0 0
    %4890 = vmatpush.bf16.msra.mxu0 %v4590
    %4891 = vmatmul.bf16.gmra.mxu0 %v4881
    %v4892 = vpop.f32.mrf.mxu0
    %v4893 = vadd.f32 0.0, %v4892
    %v4894 = vpop.f32.mrf.mxu0
    %4895 = vdwg.mxu0
    %v4896 = vpack.c.bf16 %v4893, %v4893
    %s4897 = scalar_lea.vmem [#allocation11], 192
    %v4898 = vld [vmem:[%s4897] sm:$0xf]
    %v4899 = vld [vmem:[%s4897 + $0x4] sm:$0xf]
    %v4900 = vld [vmem:[%s4897 + $0x8] sm:$0xf]
    %v4901 = vld [vmem:[%s4897 + $0xc] sm:$0xf]
    %v4902 = vld [vmem:[%s4897 + $0x10] sm:$0xf]
    %v4903 = vld [vmem:[%s4897 + $0x14] sm:$0xf]
    %v4904 = vld [vmem:[%s4897 + $0x18] sm:$0xf]
    %v4905 = vld [vmem:[%s4897 + $0x1c] sm:$0xf]
    %v4906 = vld [vmem:[%s4897 + $0x20] sm:$0xf]
    %v4907 = vld [vmem:[%s4897 + $0x24] sm:$0xf]
    %v4908 = vld [vmem:[%s4897 + $0x28] sm:$0xf]
    %v4909 = vld [vmem:[%s4897 + $0x2c] sm:$0xf]
    %v4910 = vld [vmem:[%s4897 + $0x30] sm:$0xf]
    %v4911 = vld [vmem:[%s4897 + $0x34] sm:$0xf]
    %v4912 = vld [vmem:[%s4897 + $0x38] sm:$0xf]
    %v4913 = vld [vmem:[%s4897 + $0x3c] sm:$0xf]
    %v4930 = vunpack.c.l.b16 %v4898
    %v4931 = vunpack.c.l.b16 %v4899
    %v4932 = vunpack.c.l.b16 %v4900
    %v4933 = vunpack.c.l.b16 %v4901
    %v4934 = vunpack.c.l.b16 %v4902
    %v4935 = vunpack.c.l.b16 %v4903
    %v4936 = vunpack.c.l.b16 %v4904
    %v4937 = vunpack.c.l.b16 %v4905
    %v4938 = vunpack.c.l.b16 %v4906
    %v4939 = vunpack.c.l.b16 %v4907
    %v4940 = vunpack.c.l.b16 %v4908
    %v4941 = vunpack.c.l.b16 %v4909
    %v4942 = vunpack.c.l.b16 %v4910
    %v4943 = vunpack.c.l.b16 %v4911
    %v4944 = vunpack.c.l.b16 %v4912
    %v4945 = vunpack.c.l.b16 %v4913
    %v4946 = vpack.c.b16 %v4931, %v4930
    %v4947 = vpack.c.b16 %v4933, %v4932
    %v4948 = vpack.c.b16 %v4935, %v4934
    %v4949 = vpack.c.b16 %v4937, %v4936
    %v4950 = vpack.c.b16 %v4939, %v4938
    %v4951 = vpack.c.b16 %v4941, %v4940
    %v4952 = vpack.c.b16 %v4943, %v4942
    %v4953 = vpack.c.b16 %v4945, %v4944
    %4962 = vmatpush.bf16.msra.mxu0 %v4953
    %4963 = vmatpush.bf16.msra.mxu0 %v4952
    %4964 = vmatpush.bf16.msra.mxu0 %v4951
    %4965 = vmatpush.bf16.msra.mxu0 %v4950
    %4966 = vmatpush.bf16.msra.mxu0 %v4949
    %4967 = vmatpush.bf16.msra.mxu0 %v4948
    %4968 = vmatpush.bf16.msra.mxu0 %v4947
    %4969 = vmatpush.bf16.msra.mxu0 %v4946
    %4970 = vmatmul.bf16.gmra.mxu0 %v4896
    %v4971 = vpop.f32.mrf.mxu0
    %v4972 = vadd.f32 0.0, %v4971
    %v4973 = vpop.f32.mrf.mxu0
    %4974 = vdwg.mxu0
    %v4975 = vadd.f32 %v4877, %v4972
    %s4976 = scalar_lea.vmem %s35, 16
    %v4977 = vld [vmem:[%s4976] sm:$0xf]
    %v4979 = vsel %vm4585, %v4977, 0
    %4981 = vmatpush.bf16.msra.mxu0 0
    %4982 = vmatpush.bf16.msra.mxu0 0
    %4983 = vmatpush.bf16.msra.mxu0 0
    %4984 = vmatpush.bf16.msra.mxu0 0
    %4985 = vmatpush.bf16.msra.mxu0 0
    %4986 = vmatpush.bf16.msra.mxu0 0
    %4987 = vmatpush.bf16.msra.mxu0 0
    %4988 = vmatpush.bf16.msra.mxu0 %v4590
    %4989 = vmatmul.bf16.gmra.mxu0 %v4979
    %v4990 = vpop.f32.mrf.mxu0
    %v4991 = vadd.f32 0.0, %v4990
    %v4992 = vpop.f32.mrf.mxu0
    %4993 = vdwg.mxu0
    %v4994 = vpack.c.bf16 %v4991, %v4991
    %s4995 = scalar_lea.vmem [#allocation11], 256
    %v4996 = vld [vmem:[%s4995] sm:$0xf]
    %v4997 = vld [vmem:[%s4995 + $0x4] sm:$0xf]
    %v4998 = vld [vmem:[%s4995 + $0x8] sm:$0xf]
    %v4999 = vld [vmem:[%s4995 + $0xc] sm:$0xf]
    %v5000 = vld [vmem:[%s4995 + $0x10] sm:$0xf]
    %v5001 = vld [vmem:[%s4995 + $0x14] sm:$0xf]
    %v5002 = vld [vmem:[%s4995 + $0x18] sm:$0xf]
    %v5003 = vld [vmem:[%s4995 + $0x1c] sm:$0xf]
    %v5004 = vld [vmem:[%s4995 + $0x20] sm:$0xf]
    %v5005 = vld [vmem:[%s4995 + $0x24] sm:$0xf]
    %v5006 = vld [vmem:[%s4995 + $0x28] sm:$0xf]
    %v5007 = vld [vmem:[%s4995 + $0x2c] sm:$0xf]
    %v5008 = vld [vmem:[%s4995 + $0x30] sm:$0xf]
    %v5009 = vld [vmem:[%s4995 + $0x34] sm:$0xf]
    %v5010 = vld [vmem:[%s4995 + $0x38] sm:$0xf]
    %v5011 = vld [vmem:[%s4995 + $0x3c] sm:$0xf]
    %v5028 = vunpack.c.l.b16 %v4996
    %v5029 = vunpack.c.l.b16 %v4997
    %v5030 = vunpack.c.l.b16 %v4998
    %v5031 = vunpack.c.l.b16 %v4999
    %v5032 = vunpack.c.l.b16 %v5000
    %v5033 = vunpack.c.l.b16 %v5001
    %v5034 = vunpack.c.l.b16 %v5002
    %v5035 = vunpack.c.l.b16 %v5003
    %v5036 = vunpack.c.l.b16 %v5004
    %v5037 = vunpack.c.l.b16 %v5005
    %v5038 = vunpack.c.l.b16 %v5006
    %v5039 = vunpack.c.l.b16 %v5007
    %v5040 = vunpack.c.l.b16 %v5008
    %v5041 = vunpack.c.l.b16 %v5009
    %v5042 = vunpack.c.l.b16 %v5010
    %v5043 = vunpack.c.l.b16 %v5011
    %v5044 = vpack.c.b16 %v5029, %v5028
    %v5045 = vpack.c.b16 %v5031, %v5030
    %v5046 = vpack.c.b16 %v5033, %v5032
    %v5047 = vpack.c.b16 %v5035, %v5034
    %v5048 = vpack.c.b16 %v5037, %v5036
    %v5049 = vpack.c.b16 %v5039, %v5038
    %v5050 = vpack.c.b16 %v5041, %v5040
    %v5051 = vpack.c.b16 %v5043, %v5042
    %5060 = vmatpush.bf16.msra.mxu0 %v5051
    %5061 = vmatpush.bf16.msra.mxu0 %v5050
    %5062 = vmatpush.bf16.msra.mxu0 %v5049
    %5063 = vmatpush.bf16.msra.mxu0 %v5048
    %5064 = vmatpush.bf16.msra.mxu0 %v5047
    %5065 = vmatpush.bf16.msra.mxu0 %v5046
    %5066 = vmatpush.bf16.msra.mxu0 %v5045
    %5067 = vmatpush.bf16.msra.mxu0 %v5044
    %5068 = vmatmul.bf16.gmra.mxu0 %v4994
    %v5069 = vpop.f32.mrf.mxu0
    %v5070 = vadd.f32 0.0, %v5069
    %v5071 = vpop.f32.mrf.mxu0
    %5072 = vdwg.mxu0
    %v5073 = vadd.f32 %v4975, %v5070
    %s5074 = scalar_lea.vmem %s35, 20
    %v5075 = vld [vmem:[%s5074] sm:$0xf]
    %v5077 = vsel %vm4585, %v5075, 0
    %5079 = vmatpush.bf16.msra.mxu0 0
    %5080 = vmatpush.bf16.msra.mxu0 0
    %5081 = vmatpush.bf16.msra.mxu0 0
    %5082 = vmatpush.bf16.msra.mxu0 0
    %5083 = vmatpush.bf16.msra.mxu0 0
    %5084 = vmatpush.bf16.msra.mxu0 0
    %5085 = vmatpush.bf16.msra.mxu0 0
    %5086 = vmatpush.bf16.msra.mxu0 %v4590
    %5087 = vmatmul.bf16.gmra.mxu0 %v5077
    %v5088 = vpop.f32.mrf.mxu0
    %v5089 = vadd.f32 0.0, %v5088
    %v5090 = vpop.f32.mrf.mxu0
    %5091 = vdwg.mxu0
    %v5092 = vpack.c.bf16 %v5089, %v5089
    %s5093 = scalar_lea.vmem [#allocation11], 320
    %v5094 = vld [vmem:[%s5093] sm:$0xf]
    %v5095 = vld [vmem:[%s5093 + $0x4] sm:$0xf]
    %v5096 = vld [vmem:[%s5093 + $0x8] sm:$0xf]
    %v5097 = vld [vmem:[%s5093 + $0xc] sm:$0xf]
    %v5098 = vld [vmem:[%s5093 + $0x10] sm:$0xf]
    %v5099 = vld [vmem:[%s5093 + $0x14] sm:$0xf]
    %v5100 = vld [vmem:[%s5093 + $0x18] sm:$0xf]
    %v5101 = vld [vmem:[%s5093 + $0x1c] sm:$0xf]
    %v5102 = vld [vmem:[%s5093 + $0x20] sm:$0xf]
    %v5103 = vld [vmem:[%s5093 + $0x24] sm:$0xf]
    %v5104 = vld [vmem:[%s5093 + $0x28] sm:$0xf]
    %v5105 = vld [vmem:[%s5093 + $0x2c] sm:$0xf]
    %v5106 = vld [vmem:[%s5093 + $0x30] sm:$0xf]
    %v5107 = vld [vmem:[%s5093 + $0x34] sm:$0xf]
    %v5108 = vld [vmem:[%s5093 + $0x38] sm:$0xf]
    %v5109 = vld [vmem:[%s5093 + $0x3c] sm:$0xf]
    %v5126 = vunpack.c.l.b16 %v5094
    %v5127 = vunpack.c.l.b16 %v5095
    %v5128 = vunpack.c.l.b16 %v5096
    %v5129 = vunpack.c.l.b16 %v5097
    %v5130 = vunpack.c.l.b16 %v5098
    %v5131 = vunpack.c.l.b16 %v5099
    %v5132 = vunpack.c.l.b16 %v5100
    %v5133 = vunpack.c.l.b16 %v5101
    %v5134 = vunpack.c.l.b16 %v5102
    %v5135 = vunpack.c.l.b16 %v5103
    %v5136 = vunpack.c.l.b16 %v5104
    %v5137 = vunpack.c.l.b16 %v5105
    %v5138 = vunpack.c.l.b16 %v5106
    %v5139 = vunpack.c.l.b16 %v5107
    %v5140 = vunpack.c.l.b16 %v5108
    %v5141 = vunpack.c.l.b16 %v5109
    %v5142 = vpack.c.b16 %v5127, %v5126
    %v5143 = vpack.c.b16 %v5129, %v5128
    %v5144 = vpack.c.b16 %v5131, %v5130
    %v5145 = vpack.c.b16 %v5133, %v5132
    %v5146 = vpack.c.b16 %v5135, %v5134
    %v5147 = vpack.c.b16 %v5137, %v5136
    %v5148 = vpack.c.b16 %v5139, %v5138
    %v5149 = vpack.c.b16 %v5141, %v5140
    %5158 = vmatpush.bf16.msra.mxu0 %v5149
    %5159 = vmatpush.bf16.msra.mxu0 %v5148
    %5160 = vmatpush.bf16.msra.mxu0 %v5147
    %5161 = vmatpush.bf16.msra.mxu0 %v5146
    %5162 = vmatpush.bf16.msra.mxu0 %v5145
    %5163 = vmatpush.bf16.msra.mxu0 %v5144
    %5164 = vmatpush.bf16.msra.mxu0 %v5143
    %5165 = vmatpush.bf16.msra.mxu0 %v5142
    %5166 = vmatmul.bf16.gmra.mxu0 %v5092
    %v5167 = vpop.f32.mrf.mxu0
    %v5168 = vadd.f32 0.0, %v5167
    %v5169 = vpop.f32.mrf.mxu0
    %5170 = vdwg.mxu0
    %v5171 = vadd.f32 %v5073, %v5168
    %s5172 = scalar_lea.vmem %s35, 24
    %v5173 = vld [vmem:[%s5172] sm:$0xf]
    %v5175 = vsel %vm4585, %v5173, 0
    %5177 = vmatpush.bf16.msra.mxu0 0
    %5178 = vmatpush.bf16.msra.mxu0 0
    %5179 = vmatpush.bf16.msra.mxu0 0
    %5180 = vmatpush.bf16.msra.mxu0 0
    %5181 = vmatpush.bf16.msra.mxu0 0
    %5182 = vmatpush.bf16.msra.mxu0 0
    %5183 = vmatpush.bf16.msra.mxu0 0
    %5184 = vmatpush.bf16.msra.mxu0 %v4590
    %5185 = vmatmul.bf16.gmra.mxu0 %v5175
    %v5186 = vpop.f32.mrf.mxu0
    %v5187 = vadd.f32 0.0, %v5186
    %v5188 = vpop.f32.mrf.mxu0
    %5189 = vdwg.mxu0
    %v5190 = vpack.c.bf16 %v5187, %v5187
    %s5191 = scalar_lea.vmem [#allocation11], 384
    %v5192 = vld [vmem:[%s5191] sm:$0xf]
    %v5193 = vld [vmem:[%s5191 + $0x4] sm:$0xf]
    %v5194 = vld [vmem:[%s5191 + $0x8] sm:$0xf]
    %v5195 = vld [vmem:[%s5191 + $0xc] sm:$0xf]
    %v5196 = vld [vmem:[%s5191 + $0x10] sm:$0xf]
    %v5197 = vld [vmem:[%s5191 + $0x14] sm:$0xf]
    %v5198 = vld [vmem:[%s5191 + $0x18] sm:$0xf]
    %v5199 = vld [vmem:[%s5191 + $0x1c] sm:$0xf]
    %v5200 = vld [vmem:[%s5191 + $0x20] sm:$0xf]
    %v5201 = vld [vmem:[%s5191 + $0x24] sm:$0xf]
    %v5202 = vld [vmem:[%s5191 + $0x28] sm:$0xf]
    %v5203 = vld [vmem:[%s5191 + $0x2c] sm:$0xf]
    %v5204 = vld [vmem:[%s5191 + $0x30] sm:$0xf]
    %v5205 = vld [vmem:[%s5191 + $0x34] sm:$0xf]
    %v5206 = vld [vmem:[%s5191 + $0x38] sm:$0xf]
    %v5207 = vld [vmem:[%s5191 + $0x3c] sm:$0xf]
    %v5224 = vunpack.c.l.b16 %v5192
    %v5225 = vunpack.c.l.b16 %v5193
    %v5226 = vunpack.c.l.b16 %v5194
    %v5227 = vunpack.c.l.b16 %v5195
    %v5228 = vunpack.c.l.b16 %v5196
    %v5229 = vunpack.c.l.b16 %v5197
    %v5230 = vunpack.c.l.b16 %v5198
    %v5231 = vunpack.c.l.b16 %v5199
    %v5232 = vunpack.c.l.b16 %v5200
    %v5233 = vunpack.c.l.b16 %v5201
    %v5234 = vunpack.c.l.b16 %v5202
    %v5235 = vunpack.c.l.b16 %v5203
    %v5236 = vunpack.c.l.b16 %v5204
    %v5237 = vunpack.c.l.b16 %v5205
    %v5238 = vunpack.c.l.b16 %v5206
    %v5239 = vunpack.c.l.b16 %v5207
    %v5240 = vpack.c.b16 %v5225, %v5224
    %v5241 = vpack.c.b16 %v5227, %v5226
    %v5242 = vpack.c.b16 %v5229, %v5228
    %v5243 = vpack.c.b16 %v5231, %v5230
    %v5244 = vpack.c.b16 %v5233, %v5232
    %v5245 = vpack.c.b16 %v5235, %v5234
    %v5246 = vpack.c.b16 %v5237, %v5236
    %v5247 = vpack.c.b16 %v5239, %v5238
    %5256 = vmatpush.bf16.msra.mxu0 %v5247
    %5257 = vmatpush.bf16.msra.mxu0 %v5246
    %5258 = vmatpush.bf16.msra.mxu0 %v5245
    %5259 = vmatpush.bf16.msra.mxu0 %v5244
    %5260 = vmatpush.bf16.msra.mxu0 %v5243
    %5261 = vmatpush.bf16.msra.mxu0 %v5242
    %5262 = vmatpush.bf16.msra.mxu0 %v5241
    %5263 = vmatpush.bf16.msra.mxu0 %v5240
    %5264 = vmatmul.bf16.gmra.mxu0 %v5190
    %v5265 = vpop.f32.mrf.mxu0
    %v5266 = vadd.f32 0.0, %v5265
    %v5267 = vpop.f32.mrf.mxu0
    %5268 = vdwg.mxu0
    %v5269 = vadd.f32 %v5171, %v5266
    %s5270 = scalar_lea.vmem %s35, 28
    %v5271 = vld [vmem:[%s5270] sm:$0xf]
    %v5273 = vsel %vm4585, %v5271, 0
    %5275 = vmatpush.bf16.msra.mxu0 0
    %5276 = vmatpush.bf16.msra.mxu0 0
    %5277 = vmatpush.bf16.msra.mxu0 0
    %5278 = vmatpush.bf16.msra.mxu0 0
    %5279 = vmatpush.bf16.msra.mxu0 0
    %5280 = vmatpush.bf16.msra.mxu0 0
    %5281 = vmatpush.bf16.msra.mxu0 0
    %5282 = vmatpush.bf16.msra.mxu0 %v4590
    %5283 = vmatmul.bf16.gmra.mxu0 %v5273
    %v5284 = vpop.f32.mrf.mxu0
    %v5285 = vadd.f32 0.0, %v5284
    %v5286 = vpop.f32.mrf.mxu0
    %5287 = vdwg.mxu0
    %v5288 = vpack.c.bf16 %v5285, %v5285
    %s5289 = scalar_lea.vmem [#allocation11], 448
    %v5290 = vld [vmem:[%s5289] sm:$0xf]
    %v5291 = vld [vmem:[%s5289 + $0x4] sm:$0xf]
    %v5292 = vld [vmem:[%s5289 + $0x8] sm:$0xf]
    %v5293 = vld [vmem:[%s5289 + $0xc] sm:$0xf]
    %v5294 = vld [vmem:[%s5289 + $0x10] sm:$0xf]
    %v5295 = vld [vmem:[%s5289 + $0x14] sm:$0xf]
    %v5296 = vld [vmem:[%s5289 + $0x18] sm:$0xf]
    %v5297 = vld [vmem:[%s5289 + $0x1c] sm:$0xf]
    %v5298 = vld [vmem:[%s5289 + $0x20] sm:$0xf]
    %v5299 = vld [vmem:[%s5289 + $0x24] sm:$0xf]
    %v5300 = vld [vmem:[%s5289 + $0x28] sm:$0xf]
    %v5301 = vld [vmem:[%s5289 + $0x2c] sm:$0xf]
    %v5302 = vld [vmem:[%s5289 + $0x30] sm:$0xf]
    %v5303 = vld [vmem:[%s5289 + $0x34] sm:$0xf]
    %v5304 = vld [vmem:[%s5289 + $0x38] sm:$0xf]
    %v5305 = vld [vmem:[%s5289 + $0x3c] sm:$0xf]
    %v5322 = vunpack.c.l.b16 %v5290
    %v5323 = vunpack.c.l.b16 %v5291
    %v5324 = vunpack.c.l.b16 %v5292
    %v5325 = vunpack.c.l.b16 %v5293
    %v5326 = vunpack.c.l.b16 %v5294
    %v5327 = vunpack.c.l.b16 %v5295
    %v5328 = vunpack.c.l.b16 %v5296
    %v5329 = vunpack.c.l.b16 %v5297
    %v5330 = vunpack.c.l.b16 %v5298
    %v5331 = vunpack.c.l.b16 %v5299
    %v5332 = vunpack.c.l.b16 %v5300
    %v5333 = vunpack.c.l.b16 %v5301
    %v5334 = vunpack.c.l.b16 %v5302
    %v5335 = vunpack.c.l.b16 %v5303
    %v5336 = vunpack.c.l.b16 %v5304
    %v5337 = vunpack.c.l.b16 %v5305
    %v5338 = vpack.c.b16 %v5323, %v5322
    %v5339 = vpack.c.b16 %v5325, %v5324
    %v5340 = vpack.c.b16 %v5327, %v5326
    %v5341 = vpack.c.b16 %v5329, %v5328
    %v5342 = vpack.c.b16 %v5331, %v5330
    %v5343 = vpack.c.b16 %v5333, %v5332
    %v5344 = vpack.c.b16 %v5335, %v5334
    %v5345 = vpack.c.b16 %v5337, %v5336
    %5354 = vmatpush.bf16.msra.mxu0 %v5345
    %5355 = vmatpush.bf16.msra.mxu0 %v5344
    %5356 = vmatpush.bf16.msra.mxu0 %v5343
    %5357 = vmatpush.bf16.msra.mxu0 %v5342
    %5358 = vmatpush.bf16.msra.mxu0 %v5341
    %5359 = vmatpush.bf16.msra.mxu0 %v5340
    %5360 = vmatpush.bf16.msra.mxu0 %v5339
    %5361 = vmatpush.bf16.msra.mxu0 %v5338
    %5362 = vmatmul.bf16.gmra.mxu0 %v5288
    %v5363 = vpop.f32.mrf.mxu0
    %v5364 = vadd.f32 0.0, %v5363
    %v5365 = vpop.f32.mrf.mxu0
    %5366 = vdwg.mxu0
    %v5367 = vadd.f32 %v5269, %v5364
    %s5368 = scalar_lea.vmem %s35, 32
    %v5369 = vld [vmem:[%s5368] sm:$0xf]
    %v5371 = vsel %vm4585, %v5369, 0
    %5373 = vmatpush.bf16.msra.mxu0 0
    %5374 = vmatpush.bf16.msra.mxu0 0
    %5375 = vmatpush.bf16.msra.mxu0 0
    %5376 = vmatpush.bf16.msra.mxu0 0
    %5377 = vmatpush.bf16.msra.mxu0 0
    %5378 = vmatpush.bf16.msra.mxu0 0
    %5379 = vmatpush.bf16.msra.mxu0 0
    %5380 = vmatpush.bf16.msra.mxu0 %v4590
    %5381 = vmatmul.bf16.gmra.mxu0 %v5371
    %v5382 = vpop.f32.mrf.mxu0
    %v5383 = vadd.f32 0.0, %v5382
    %v5384 = vpop.f32.mrf.mxu0
    %5385 = vdwg.mxu0
    %v5386 = vpack.c.bf16 %v5383, %v5383
    %s5387 = scalar_lea.vmem [#allocation11], 512
    %v5388 = vld [vmem:[%s5387] sm:$0xf]
    %v5389 = vld [vmem:[%s5387 + $0x4] sm:$0xf]
    %v5390 = vld [vmem:[%s5387 + $0x8] sm:$0xf]
    %v5391 = vld [vmem:[%s5387 + $0xc] sm:$0xf]
    %v5392 = vld [vmem:[%s5387 + $0x10] sm:$0xf]
    %v5393 = vld [vmem:[%s5387 + $0x14] sm:$0xf]
    %v5394 = vld [vmem:[%s5387 + $0x18] sm:$0xf]
    %v5395 = vld [vmem:[%s5387 + $0x1c] sm:$0xf]
    %v5396 = vld [vmem:[%s5387 + $0x20] sm:$0xf]
    %v5397 = vld [vmem:[%s5387 + $0x24] sm:$0xf]
    %v5398 = vld [vmem:[%s5387 + $0x28] sm:$0xf]
    %v5399 = vld [vmem:[%s5387 + $0x2c] sm:$0xf]
    %v5400 = vld [vmem:[%s5387 + $0x30] sm:$0xf]
    %v5401 = vld [vmem:[%s5387 + $0x34] sm:$0xf]
    %v5402 = vld [vmem:[%s5387 + $0x38] sm:$0xf]
    %v5403 = vld [vmem:[%s5387 + $0x3c] sm:$0xf]
    %v5420 = vunpack.c.l.b16 %v5388
    %v5421 = vunpack.c.l.b16 %v5389
    %v5422 = vunpack.c.l.b16 %v5390
    %v5423 = vunpack.c.l.b16 %v5391
    %v5424 = vunpack.c.l.b16 %v5392
    %v5425 = vunpack.c.l.b16 %v5393
    %v5426 = vunpack.c.l.b16 %v5394
    %v5427 = vunpack.c.l.b16 %v5395
    %v5428 = vunpack.c.l.b16 %v5396
    %v5429 = vunpack.c.l.b16 %v5397
    %v5430 = vunpack.c.l.b16 %v5398
    %v5431 = vunpack.c.l.b16 %v5399
    %v5432 = vunpack.c.l.b16 %v5400
    %v5433 = vunpack.c.l.b16 %v5401
    %v5434 = vunpack.c.l.b16 %v5402
    %v5435 = vunpack.c.l.b16 %v5403
    %v5436 = vpack.c.b16 %v5421, %v5420
    %v5437 = vpack.c.b16 %v5423, %v5422
    %v5438 = vpack.c.b16 %v5425, %v5424
    %v5439 = vpack.c.b16 %v5427, %v5426
    %v5440 = vpack.c.b16 %v5429, %v5428
    %v5441 = vpack.c.b16 %v5431, %v5430
    %v5442 = vpack.c.b16 %v5433, %v5432
    %v5443 = vpack.c.b16 %v5435, %v5434
    %5452 = vmatpush.bf16.msra.mxu0 %v5443
    %5453 = vmatpush.bf16.msra.mxu0 %v5442
    %5454 = vmatpush.bf16.msra.mxu0 %v5441
    %5455 = vmatpush.bf16.msra.mxu0 %v5440
    %5456 = vmatpush.bf16.msra.mxu0 %v5439
    %5457 = vmatpush.bf16.msra.mxu0 %v5438
    %5458 = vmatpush.bf16.msra.mxu0 %v5437
    %5459 = vmatpush.bf16.msra.mxu0 %v5436
    %5460 = vmatmul.bf16.gmra.mxu0 %v5386
    %v5461 = vpop.f32.mrf.mxu0
    %v5462 = vadd.f32 0.0, %v5461
    %v5463 = vpop.f32.mrf.mxu0
    %5464 = vdwg.mxu0
    %v5465 = vadd.f32 %v5367, %v5462
    %v5466 = vld [vmem:[%s47] sm:$0x1]
    %v5468 = vperm.slane %v5466, 0
    %v5470 = vadd.f32 %v5465, %v5468
    %v5471 = vld [vmem:[%s49] sm:$0x1]
    %v5472 = vld [vmem:[%s51] sm:$0x1]
    %v5473 = vrot.slane %v5470, 4
    %v5474 = vadd.f32 %v5470, %v5473
    %v5475 = vrot.slane %v5474, 2
    %v5476 = vadd.f32 %v5474, %v5475
    %v5477 = vrot.slane %v5476, 1
    %v5478 = vadd.f32 %v5476, %v5477
    %v5479 = vmul.f32 %v5478, %v4523
    %v5480 = vsub.f32 %v5470, %v5479
    %v5481 = vmul.f32 %v5480, %v5480
    %v5482 = vrot.slane %v5481, 4
    %v5483 = vadd.f32 %v5481, %v5482
    %v5484 = vrot.slane %v5483, 2
    %v5485 = vadd.f32 %v5483, %v5484
    %v5486 = vrot.slane %v5485, 1
    %v5487 = vadd.f32 %v5485, %v5486
    %v5488 = vmul.f32 %v5487, %v4523
    %v5489 = vadd.f32 %v5488, 1e-05
    %v5490 = vrsqrt.pop %v5489
    %v5491 = vmul.f32 %v5490, %v5489
    %v5492 = vmul.f32 %v5491, %v5490
    %v5493 = vmul.f32 0.5, %v5492
    %v5494 = vsub.f32 1.5, %v5493
    %v5495 = vmul.f32 %v5490, %v5494
    %vm5496 = vweird.f32 %v5489
    %vm5497 = vweird.f32 %v5490
    %vm5498 = vmor %vm5496, %vm5497
    %v5499 = vsel %vm5498, %v5490, %v5495
    %v5500 = vmul.f32 %v5480, %v5499
    %v5502 = vperm.slane %v5471, 0
    %v5504 = vmul.f32 %v5500, %v5502
    %v5506 = vperm.slane %v5472, 0
    %v5508 = vadd.f32 %v5504, %v5506
    %v5509 = vadd.f32 %v5508, %v4581
    %v5510 = vmax.f32 %v5509, 0.0
    %v5511 = vpack.c.bf16 %v5510, %v5510
    %v5512 = vld [vmem:[%s53] sm:$0x1]
    %v5514 = vsel %vm4585, %v5512, 0
    %v5517 = vsel %vm1593, %v5511, 0
    %5519 = vmatpush.bf16.msra.mxu0 0
    %5520 = vmatpush.bf16.msra.mxu0 0
    %5521 = vmatpush.bf16.msra.mxu0 0
    %5522 = vmatpush.bf16.msra.mxu0 0
    %5523 = vmatpush.bf16.msra.mxu0 0
    %5524 = vmatpush.bf16.msra.mxu0 0
    %5525 = vmatpush.bf16.msra.mxu0 0
    %5526 = vmatpush.bf16.msra.mxu0 %v5517
    %5527 = vmatmul.bf16.gmra.mxu0 %v5514
    %v5528 = vpop.f32.mrf.mxu0
    %v5529 = vadd.f32 0.0, %v5528
    %v5530 = vpop.f32.mrf.mxu0
    %5531 = vdwg.mxu0
    %v5532 = vpack.c.bf16 %v5529, %v5529
    %v5533 = vld [vmem:[#allocation13] sm:$0xff]
    %v5534 = vld [vmem:[#allocation13 + $0x8] sm:$0xff]
    %v5535 = vld [vmem:[#allocation13 + $0x10] sm:$0xff]
    %v5536 = vld [vmem:[#allocation13 + $0x18] sm:$0xff]
    %v5537 = vld [vmem:[#allocation13 + $0x20] sm:$0xff]
    %v5538 = vld [vmem:[#allocation13 + $0x28] sm:$0xff]
    %v5539 = vld [vmem:[#allocation13 + $0x30] sm:$0xff]
    %v5540 = vld [vmem:[#allocation13 + $0x38] sm:$0xff]
    %v5541 = vld [vmem:[#allocation13 + $0x40] sm:$0xff]
    %v5542 = vld [vmem:[#allocation13 + $0x48] sm:$0xff]
    %v5543 = vld [vmem:[#allocation13 + $0x50] sm:$0xff]
    %v5544 = vld [vmem:[#allocation13 + $0x58] sm:$0xff]
    %v5545 = vld [vmem:[#allocation13 + $0x60] sm:$0xff]
    %v5546 = vld [vmem:[#allocation13 + $0x68] sm:$0xff]
    %v5547 = vld [vmem:[#allocation13 + $0x70] sm:$0xff]
    %v5548 = vld [vmem:[#allocation13 + $0x78] sm:$0xff]
    %s5549 = scalar_lea.vmem %s53, 1
    %v5550 = vld [vmem:[%s5549] sm:$0x1]
    %v5552 = vsel %vm4585, %v5550, 0
    %5554 = vmatpush.bf16.msra.mxu0 0
    %5555 = vmatpush.bf16.msra.mxu0 0
    %5556 = vmatpush.bf16.msra.mxu0 0
    %5557 = vmatpush.bf16.msra.mxu0 0
    %5558 = vmatpush.bf16.msra.mxu0 0
    %5559 = vmatpush.bf16.msra.mxu0 0
    %5560 = vmatpush.bf16.msra.mxu0 0
    %5561 = vmatpush.bf16.msra.mxu0 %v5517
    %5562 = vmatmul.bf16.gmra.mxu0 %v5552
    %v5563 = vpop.f32.mrf.mxu0
    %v5564 = vadd.f32 0.0, %v5563
    %v5565 = vpop.f32.mrf.mxu0
    %5566 = vdwg.mxu0
    %v5567 = vpack.c.bf16 %v5564, %v5564
    %s5568 = scalar_lea.vmem [#allocation13], 128
    %v5569 = vld [vmem:[%s5568] sm:$0xff]
    %v5570 = vld [vmem:[%s5568 + $0x8] sm:$0xff]
    %v5571 = vld [vmem:[%s5568 + $0x10] sm:$0xff]
    %v5572 = vld [vmem:[%s5568 + $0x18] sm:$0xff]
    %v5573 = vld [vmem:[%s5568 + $0x20] sm:$0xff]
    %v5574 = vld [vmem:[%s5568 + $0x28] sm:$0xff]
    %v5575 = vld [vmem:[%s5568 + $0x30] sm:$0xff]
    %v5576 = vld [vmem:[%s5568 + $0x38] sm:$0xff]
    %v5577 = vld [vmem:[%s5568 + $0x40] sm:$0xff]
    %v5578 = vld [vmem:[%s5568 + $0x48] sm:$0xff]
    %v5579 = vld [vmem:[%s5568 + $0x50] sm:$0xff]
    %v5580 = vld [vmem:[%s5568 + $0x58] sm:$0xff]
    %v5581 = vld [vmem:[%s5568 + $0x60] sm:$0xff]
    %v5582 = vld [vmem:[%s5568 + $0x68] sm:$0xff]
    %v5583 = vld [vmem:[%s5568 + $0x70] sm:$0xff]
    %v5584 = vld [vmem:[%s5568 + $0x78] sm:$0xff]
    %v5601 = vunpack.c.l.b16 %v5569
    %v5602 = vunpack.c.h.b16 %v5569
    %v5603 = vunpack.c.l.b16 %v5570
    %v5604 = vunpack.c.h.b16 %v5570
    %v5605 = vunpack.c.l.b16 %v5571
    %v5606 = vunpack.c.h.b16 %v5571
    %v5607 = vunpack.c.l.b16 %v5572
    %v5608 = vunpack.c.h.b16 %v5572
    %v5609 = vunpack.c.l.b16 %v5573
    %v5610 = vunpack.c.h.b16 %v5573
    %v5611 = vunpack.c.l.b16 %v5574
    %v5612 = vunpack.c.h.b16 %v5574
    %v5613 = vunpack.c.l.b16 %v5575
    %v5614 = vunpack.c.h.b16 %v5575
    %v5615 = vunpack.c.l.b16 %v5576
    %v5616 = vunpack.c.h.b16 %v5576
    %v5617 = vunpack.c.l.b16 %v5577
    %v5618 = vunpack.c.h.b16 %v5577
    %v5619 = vunpack.c.l.b16 %v5578
    %v5620 = vunpack.c.h.b16 %v5578
    %v5621 = vunpack.c.l.b16 %v5579
    %v5622 = vunpack.c.h.b16 %v5579
    %v5623 = vunpack.c.l.b16 %v5580
    %v5624 = vunpack.c.h.b16 %v5580
    %v5625 = vunpack.c.l.b16 %v5581
    %v5626 = vunpack.c.h.b16 %v5581
    %v5627 = vunpack.c.l.b16 %v5582
    %v5628 = vunpack.c.h.b16 %v5582
    %v5629 = vunpack.c.l.b16 %v5583
    %v5630 = vunpack.c.h.b16 %v5583
    %v5631 = vunpack.c.l.b16 %v5584
    %v5632 = vunpack.c.h.b16 %v5584
    %v5633 = vpack.c.b16 %v5603, %v5601
    %v5634 = vpack.c.b16 %v5604, %v5602
    %v5635 = vpack.c.b16 %v5607, %v5605
    %v5636 = vpack.c.b16 %v5608, %v5606
    %v5637 = vpack.c.b16 %v5611, %v5609
    %v5638 = vpack.c.b16 %v5612, %v5610
    %v5639 = vpack.c.b16 %v5615, %v5613
    %v5640 = vpack.c.b16 %v5616, %v5614
    %v5641 = vpack.c.b16 %v5619, %v5617
    %v5642 = vpack.c.b16 %v5620, %v5618
    %v5643 = vpack.c.b16 %v5623, %v5621
    %v5644 = vpack.c.b16 %v5624, %v5622
    %v5645 = vpack.c.b16 %v5627, %v5625
    %v5646 = vpack.c.b16 %v5628, %v5626
    %v5647 = vpack.c.b16 %v5631, %v5629
    %v5648 = vpack.c.b16 %v5632, %v5630
    %5665 = vmatpush.bf16.msra.mxu0 %v5647
    %5666 = vmatpush.bf16.msra.mxu0 %v5645
    %5667 = vmatpush.bf16.msra.mxu0 %v5643
    %5668 = vmatpush.bf16.msra.mxu0 %v5641
    %5669 = vmatpush.bf16.msra.mxu0 %v5639
    %5670 = vmatpush.bf16.msra.mxu0 %v5637
    %5671 = vmatpush.bf16.msra.mxu0 %v5635
    %5672 = vmatpush.bf16.msra.mxu0 %v5633
    %5673 = vmatmul.bf16.gmra.mxu0 %v5567
    %v5674 = vpop.f32.mrf.mxu0
    %v5675 = vadd.f32 0.0, %v5674
    %v5676 = vpop.f32.mrf.mxu0
    %5677 = vdwg.mxu0
    %5678 = vmatpush.bf16.msra.mxu0 %v5648
    %5679 = vmatpush.bf16.msra.mxu0 %v5646
    %5680 = vmatpush.bf16.msra.mxu0 %v5644
    %5681 = vmatpush.bf16.msra.mxu0 %v5642
    %5682 = vmatpush.bf16.msra.mxu0 %v5640
    %5683 = vmatpush.bf16.msra.mxu0 %v5638
    %5684 = vmatpush.bf16.msra.mxu0 %v5636
    %5685 = vmatpush.bf16.msra.mxu0 %v5634
    %5686 = vmatmul.bf16.gmra.mxu0 %v5567
    %v5687 = vpop.f32.mrf.mxu0
    %v5688 = vadd.f32 0.0, %v5687
    %v5689 = vpop.f32.mrf.mxu0
    %5690 = vdwg.mxu0
    %v5707 = vunpack.c.l.b16 %v5533
    %v5708 = vunpack.c.h.b16 %v5533
    %v5709 = vunpack.c.l.b16 %v5534
    %v5710 = vunpack.c.h.b16 %v5534
    %v5711 = vunpack.c.l.b16 %v5535
    %v5712 = vunpack.c.h.b16 %v5535
    %v5713 = vunpack.c.l.b16 %v5536
    %v5714 = vunpack.c.h.b16 %v5536
    %v5715 = vunpack.c.l.b16 %v5537
    %v5716 = vunpack.c.h.b16 %v5537
    %v5717 = vunpack.c.l.b16 %v5538
    %v5718 = vunpack.c.h.b16 %v5538
    %v5719 = vunpack.c.l.b16 %v5539
    %v5720 = vunpack.c.h.b16 %v5539
    %v5721 = vunpack.c.l.b16 %v5540
    %v5722 = vunpack.c.h.b16 %v5540
    %v5723 = vunpack.c.l.b16 %v5541
    %v5724 = vunpack.c.h.b16 %v5541
    %v5725 = vunpack.c.l.b16 %v5542
    %v5726 = vunpack.c.h.b16 %v5542
    %v5727 = vunpack.c.l.b16 %v5543
    %v5728 = vunpack.c.h.b16 %v5543
    %v5729 = vunpack.c.l.b16 %v5544
    %v5730 = vunpack.c.h.b16 %v5544
    %v5731 = vunpack.c.l.b16 %v5545
    %v5732 = vunpack.c.h.b16 %v5545
    %v5733 = vunpack.c.l.b16 %v5546
    %v5734 = vunpack.c.h.b16 %v5546
    %v5735 = vunpack.c.l.b16 %v5547
    %v5736 = vunpack.c.h.b16 %v5547
    %v5737 = vunpack.c.l.b16 %v5548
    %v5738 = vunpack.c.h.b16 %v5548
    %v5739 = vpack.c.b16 %v5709, %v5707
    %v5740 = vpack.c.b16 %v5710, %v5708
    %v5741 = vpack.c.b16 %v5713, %v5711
    %v5742 = vpack.c.b16 %v5714, %v5712
    %v5743 = vpack.c.b16 %v5717, %v5715
    %v5744 = vpack.c.b16 %v5718, %v5716
    %v5745 = vpack.c.b16 %v5721, %v5719
    %v5746 = vpack.c.b16 %v5722, %v5720
    %v5747 = vpack.c.b16 %v5725, %v5723
    %v5748 = vpack.c.b16 %v5726, %v5724
    %v5749 = vpack.c.b16 %v5729, %v5727
    %v5750 = vpack.c.b16 %v5730, %v5728
    %v5751 = vpack.c.b16 %v5733, %v5731
    %v5752 = vpack.c.b16 %v5734, %v5732
    %v5753 = vpack.c.b16 %v5737, %v5735
    %v5754 = vpack.c.b16 %v5738, %v5736
    %5771 = vmatpush.bf16.msra.mxu0 %v5753
    %5772 = vmatpush.bf16.msra.mxu0 %v5751
    %5773 = vmatpush.bf16.msra.mxu0 %v5749
    %5774 = vmatpush.bf16.msra.mxu0 %v5747
    %5775 = vmatpush.bf16.msra.mxu0 %v5745
    %5776 = vmatpush.bf16.msra.mxu0 %v5743
    %5777 = vmatpush.bf16.msra.mxu0 %v5741
    %5778 = vmatpush.bf16.msra.mxu0 %v5739
    %5779 = vmatmul.bf16.gmra.mxu0 %v5532
    %v5780 = vpop.f32.mrf.mxu0
    %v5781 = vadd.f32 %v5675, %v5780
    %v5782 = vpop.f32.mrf.mxu0
    %5783 = vdwg.mxu0
    %5784 = vmatpush.bf16.msra.mxu0 %v5754
    %5785 = vmatpush.bf16.msra.mxu0 %v5752
    %5786 = vmatpush.bf16.msra.mxu0 %v5750
    %5787 = vmatpush.bf16.msra.mxu0 %v5748
    %5788 = vmatpush.bf16.msra.mxu0 %v5746
    %5789 = vmatpush.bf16.msra.mxu0 %v5744
    %5790 = vmatpush.bf16.msra.mxu0 %v5742
    %5791 = vmatpush.bf16.msra.mxu0 %v5740
    %5792 = vmatmul.bf16.gmra.mxu0 %v5532
    %v5793 = vpop.f32.mrf.mxu0
    %v5794 = vadd.f32 %v5688, %v5793
    %v5795 = vpop.f32.mrf.mxu0
    %5796 = vdwg.mxu0
    %s5797 = scalar_lea.vmem %s53, 2
    %v5798 = vld [vmem:[%s5797] sm:$0x1]
    %v5800 = vsel %vm4585, %v5798, 0
    %5802 = vmatpush.bf16.msra.mxu0 0
    %5803 = vmatpush.bf16.msra.mxu0 0
    %5804 = vmatpush.bf16.msra.mxu0 0
    %5805 = vmatpush.bf16.msra.mxu0 0
    %5806 = vmatpush.bf16.msra.mxu0 0
    %5807 = vmatpush.bf16.msra.mxu0 0
    %5808 = vmatpush.bf16.msra.mxu0 0
    %5809 = vmatpush.bf16.msra.mxu0 %v5517
    %5810 = vmatmul.bf16.gmra.mxu0 %v5800
    %v5811 = vpop.f32.mrf.mxu0
    %v5812 = vadd.f32 0.0, %v5811
    %v5813 = vpop.f32.mrf.mxu0
    %5814 = vdwg.mxu0
    %v5815 = vpack.c.bf16 %v5812, %v5812
    %s5816 = scalar_lea.vmem [#allocation13], 256
    %v5817 = vld [vmem:[%s5816] sm:$0xff]
    %v5818 = vld [vmem:[%s5816 + $0x8] sm:$0xff]
    %v5819 = vld [vmem:[%s5816 + $0x10] sm:$0xff]
    %v5820 = vld [vmem:[%s5816 + $0x18] sm:$0xff]
    %v5821 = vld [vmem:[%s5816 + $0x20] sm:$0xff]
    %v5822 = vld [vmem:[%s5816 + $0x28] sm:$0xff]
    %v5823 = vld [vmem:[%s5816 + $0x30] sm:$0xff]
    %v5824 = vld [vmem:[%s5816 + $0x38] sm:$0xff]
    %v5825 = vld [vmem:[%s5816 + $0x40] sm:$0xff]
    %v5826 = vld [vmem:[%s5816 + $0x48] sm:$0xff]
    %v5827 = vld [vmem:[%s5816 + $0x50] sm:$0xff]
    %v5828 = vld [vmem:[%s5816 + $0x58] sm:$0xff]
    %v5829 = vld [vmem:[%s5816 + $0x60] sm:$0xff]
    %v5830 = vld [vmem:[%s5816 + $0x68] sm:$0xff]
    %v5831 = vld [vmem:[%s5816 + $0x70] sm:$0xff]
    %v5832 = vld [vmem:[%s5816 + $0x78] sm:$0xff]
    %v5849 = vunpack.c.l.b16 %v5817
    %v5850 = vunpack.c.h.b16 %v5817
    %v5851 = vunpack.c.l.b16 %v5818
    %v5852 = vunpack.c.h.b16 %v5818
    %v5853 = vunpack.c.l.b16 %v5819
    %v5854 = vunpack.c.h.b16 %v5819
    %v5855 = vunpack.c.l.b16 %v5820
    %v5856 = vunpack.c.h.b16 %v5820
    %v5857 = vunpack.c.l.b16 %v5821
    %v5858 = vunpack.c.h.b16 %v5821
    %v5859 = vunpack.c.l.b16 %v5822
    %v5860 = vunpack.c.h.b16 %v5822
    %v5861 = vunpack.c.l.b16 %v5823
    %v5862 = vunpack.c.h.b16 %v5823
    %v5863 = vunpack.c.l.b16 %v5824
    %v5864 = vunpack.c.h.b16 %v5824
    %v5865 = vunpack.c.l.b16 %v5825
    %v5866 = vunpack.c.h.b16 %v5825
    %v5867 = vunpack.c.l.b16 %v5826
    %v5868 = vunpack.c.h.b16 %v5826
    %v5869 = vunpack.c.l.b16 %v5827
    %v5870 = vunpack.c.h.b16 %v5827
    %v5871 = vunpack.c.l.b16 %v5828
    %v5872 = vunpack.c.h.b16 %v5828
    %v5873 = vunpack.c.l.b16 %v5829
    %v5874 = vunpack.c.h.b16 %v5829
    %v5875 = vunpack.c.l.b16 %v5830
    %v5876 = vunpack.c.h.b16 %v5830
    %v5877 = vunpack.c.l.b16 %v5831
    %v5878 = vunpack.c.h.b16 %v5831
    %v5879 = vunpack.c.l.b16 %v5832
    %v5880 = vunpack.c.h.b16 %v5832
    %v5881 = vpack.c.b16 %v5851, %v5849
    %v5882 = vpack.c.b16 %v5852, %v5850
    %v5883 = vpack.c.b16 %v5855, %v5853
    %v5884 = vpack.c.b16 %v5856, %v5854
    %v5885 = vpack.c.b16 %v5859, %v5857
    %v5886 = vpack.c.b16 %v5860, %v5858
    %v5887 = vpack.c.b16 %v5863, %v5861
    %v5888 = vpack.c.b16 %v5864, %v5862
    %v5889 = vpack.c.b16 %v5867, %v5865
    %v5890 = vpack.c.b16 %v5868, %v5866
    %v5891 = vpack.c.b16 %v5871, %v5869
    %v5892 = vpack.c.b16 %v5872, %v5870
    %v5893 = vpack.c.b16 %v5875, %v5873
    %v5894 = vpack.c.b16 %v5876, %v5874
    %v5895 = vpack.c.b16 %v5879, %v5877
    %v5896 = vpack.c.b16 %v5880, %v5878
    %5913 = vmatpush.bf16.msra.mxu0 %v5895
    %5914 = vmatpush.bf16.msra.mxu0 %v5893
    %5915 = vmatpush.bf16.msra.mxu0 %v5891
    %5916 = vmatpush.bf16.msra.mxu0 %v5889
    %5917 = vmatpush.bf16.msra.mxu0 %v5887
    %5918 = vmatpush.bf16.msra.mxu0 %v5885
    %5919 = vmatpush.bf16.msra.mxu0 %v5883
    %5920 = vmatpush.bf16.msra.mxu0 %v5881
    %5921 = vmatmul.bf16.gmra.mxu0 %v5815
    %v5922 = vpop.f32.mrf.mxu0
    %v5923 = vadd.f32 0.0, %v5922
    %v5924 = vpop.f32.mrf.mxu0
    %5925 = vdwg.mxu0
    %5926 = vmatpush.bf16.msra.mxu0 %v5896
    %5927 = vmatpush.bf16.msra.mxu0 %v5894
    %5928 = vmatpush.bf16.msra.mxu0 %v5892
    %5929 = vmatpush.bf16.msra.mxu0 %v5890
    %5930 = vmatpush.bf16.msra.mxu0 %v5888
    %5931 = vmatpush.bf16.msra.mxu0 %v5886
    %5932 = vmatpush.bf16.msra.mxu0 %v5884
    %5933 = vmatpush.bf16.msra.mxu0 %v5882
    %5934 = vmatmul.bf16.gmra.mxu0 %v5815
    %v5935 = vpop.f32.mrf.mxu0
    %v5936 = vadd.f32 0.0, %v5935
    %v5937 = vpop.f32.mrf.mxu0
    %5938 = vdwg.mxu0
    %v5939 = vadd.f32 %v5781, %v5923
    %v5940 = vadd.f32 %v5794, %v5936
    %s5941 = scalar_lea.vmem %s53, 3
    %v5942 = vld [vmem:[%s5941] sm:$0x1]
    %v5944 = vsel %vm4585, %v5942, 0
    %5946 = vmatpush.bf16.msra.mxu0 0
    %5947 = vmatpush.bf16.msra.mxu0 0
    %5948 = vmatpush.bf16.msra.mxu0 0
    %5949 = vmatpush.bf16.msra.mxu0 0
    %5950 = vmatpush.bf16.msra.mxu0 0
    %5951 = vmatpush.bf16.msra.mxu0 0
    %5952 = vmatpush.bf16.msra.mxu0 0
    %5953 = vmatpush.bf16.msra.mxu0 %v5517
    %5954 = vmatmul.bf16.gmra.mxu0 %v5944
    %v5955 = vpop.f32.mrf.mxu0
    %v5956 = vadd.f32 0.0, %v5955
    %v5957 = vpop.f32.mrf.mxu0
    %5958 = vdwg.mxu0
    %v5959 = vpack.c.bf16 %v5956, %v5956
    %s5960 = scalar_lea.vmem [#allocation13], 384
    %v5961 = vld [vmem:[%s5960] sm:$0xff]
    %v5962 = vld [vmem:[%s5960 + $0x8] sm:$0xff]
    %v5963 = vld [vmem:[%s5960 + $0x10] sm:$0xff]
    %v5964 = vld [vmem:[%s5960 + $0x18] sm:$0xff]
    %v5965 = vld [vmem:[%s5960 + $0x20] sm:$0xff]
    %v5966 = vld [vmem:[%s5960 + $0x28] sm:$0xff]
    %v5967 = vld [vmem:[%s5960 + $0x30] sm:$0xff]
    %v5968 = vld [vmem:[%s5960 + $0x38] sm:$0xff]
    %v5969 = vld [vmem:[%s5960 + $0x40] sm:$0xff]
    %v5970 = vld [vmem:[%s5960 + $0x48] sm:$0xff]
    %v5971 = vld [vmem:[%s5960 + $0x50] sm:$0xff]
    %v5972 = vld [vmem:[%s5960 + $0x58] sm:$0xff]
    %v5973 = vld [vmem:[%s5960 + $0x60] sm:$0xff]
    %v5974 = vld [vmem:[%s5960 + $0x68] sm:$0xff]
    %v5975 = vld [vmem:[%s5960 + $0x70] sm:$0xff]
    %v5976 = vld [vmem:[%s5960 + $0x78] sm:$0xff]
    %v5993 = vunpack.c.l.b16 %v5961
    %v5994 = vunpack.c.h.b16 %v5961
    %v5995 = vunpack.c.l.b16 %v5962
    %v5996 = vunpack.c.h.b16 %v5962
    %v5997 = vunpack.c.l.b16 %v5963
    %v5998 = vunpack.c.h.b16 %v5963
    %v5999 = vunpack.c.l.b16 %v5964
    %v6000 = vunpack.c.h.b16 %v5964
    %v6001 = vunpack.c.l.b16 %v5965
    %v6002 = vunpack.c.h.b16 %v5965
    %v6003 = vunpack.c.l.b16 %v5966
    %v6004 = vunpack.c.h.b16 %v5966
    %v6005 = vunpack.c.l.b16 %v5967
    %v6006 = vunpack.c.h.b16 %v5967
    %v6007 = vunpack.c.l.b16 %v5968
    %v6008 = vunpack.c.h.b16 %v5968
    %v6009 = vunpack.c.l.b16 %v5969
    %v6010 = vunpack.c.h.b16 %v5969
    %v6011 = vunpack.c.l.b16 %v5970
    %v6012 = vunpack.c.h.b16 %v5970
    %v6013 = vunpack.c.l.b16 %v5971
    %v6014 = vunpack.c.h.b16 %v5971
    %v6015 = vunpack.c.l.b16 %v5972
    %v6016 = vunpack.c.h.b16 %v5972
    %v6017 = vunpack.c.l.b16 %v5973
    %v6018 = vunpack.c.h.b16 %v5973
    %v6019 = vunpack.c.l.b16 %v5974
    %v6020 = vunpack.c.h.b16 %v5974
    %v6021 = vunpack.c.l.b16 %v5975
    %v6022 = vunpack.c.h.b16 %v5975
    %v6023 = vunpack.c.l.b16 %v5976
    %v6024 = vunpack.c.h.b16 %v5976
    %v6025 = vpack.c.b16 %v5995, %v5993
    %v6026 = vpack.c.b16 %v5996, %v5994
    %v6027 = vpack.c.b16 %v5999, %v5997
    %v6028 = vpack.c.b16 %v6000, %v5998
    %v6029 = vpack.c.b16 %v6003, %v6001
    %v6030 = vpack.c.b16 %v6004, %v6002
    %v6031 = vpack.c.b16 %v6007, %v6005
    %v6032 = vpack.c.b16 %v6008, %v6006
    %v6033 = vpack.c.b16 %v6011, %v6009
    %v6034 = vpack.c.b16 %v6012, %v6010
    %v6035 = vpack.c.b16 %v6015, %v6013
    %v6036 = vpack.c.b16 %v6016, %v6014
    %v6037 = vpack.c.b16 %v6019, %v6017
    %v6038 = vpack.c.b16 %v6020, %v6018
    %v6039 = vpack.c.b16 %v6023, %v6021
    %v6040 = vpack.c.b16 %v6024, %v6022
    %6057 = vmatpush.bf16.msra.mxu0 %v6039
    %6058 = vmatpush.bf16.msra.mxu0 %v6037
    %6059 = vmatpush.bf16.msra.mxu0 %v6035
    %6060 = vmatpush.bf16.msra.mxu0 %v6033
    %6061 = vmatpush.bf16.msra.mxu0 %v6031
    %6062 = vmatpush.bf16.msra.mxu0 %v6029
    %6063 = vmatpush.bf16.msra.mxu0 %v6027
    %6064 = vmatpush.bf16.msra.mxu0 %v6025
    %6065 = vmatmul.bf16.gmra.mxu0 %v5959
    %v6066 = vpop.f32.mrf.mxu0
    %v6067 = vadd.f32 0.0, %v6066
    %v6068 = vpop.f32.mrf.mxu0
    %6069 = vdwg.mxu0
    %6070 = vmatpush.bf16.msra.mxu0 %v6040
    %6071 = vmatpush.bf16.msra.mxu0 %v6038
    %6072 = vmatpush.bf16.msra.mxu0 %v6036
    %6073 = vmatpush.bf16.msra.mxu0 %v6034
    %6074 = vmatpush.bf16.msra.mxu0 %v6032
    %6075 = vmatpush.bf16.msra.mxu0 %v6030
    %6076 = vmatpush.bf16.msra.mxu0 %v6028
    %6077 = vmatpush.bf16.msra.mxu0 %v6026
    %6078 = vmatmul.bf16.gmra.mxu0 %v5959
    %v6079 = vpop.f32.mrf.mxu0
    %v6080 = vadd.f32 0.0, %v6079
    %v6081 = vpop.f32.mrf.mxu0
    %6082 = vdwg.mxu0
    %v6083 = vadd.f32 %v5939, %v6067
    %v6084 = vadd.f32 %v5940, %v6080
    %v6085 = vld [vmem:[%s57] sm:$0x3]
    %v6087 = vperm.slane %v6085, 0
    %v6088 = vperm.slane %v6085, 1
    %v6091 = vadd.f32 %v6083, %v6087
    %v6092 = vadd.f32 %v6084, %v6088
    %v6093 = vld [vmem:[%s59] sm:$0x3]
    %v6094 = vld [vmem:[%s61] sm:$0x3]
    %vm6095 = vcmask 1041408
    %v6096 = vsel %vm6095, %v6091, 0.0
    %v6097 = vrot.slane %v6096, 4
    %v6098 = vadd.f32 %v6096, %v6097
    %v6099 = vrot.slane %v6098, 2
    %v6100 = vadd.f32 %v6098, %v6099
    %v6101 = vrot.slane %v6100, 1
    %v6102 = vadd.f32 %v6100, %v6101
    %v6103 = vsel %vm6095, %v6092, 0.0
    %v6104 = vrot.slane %v6103, 4
    %v6105 = vadd.f32 %v6103, %v6104
    %v6106 = vrot.slane %v6105, 2
    %v6107 = vadd.f32 %v6105, %v6106
    %v6108 = vrot.slane %v6107, 1
    %v6109 = vadd.f32 %v6107, %v6108
    %v6110 = vrcp.pop 2.0
    %v6111 = vmul.f32 2.0, %v6110
    %v6112 = vsub.f32 1.0, %v6111
    %v6113 = vmul.f32 %v6110, %v6112
    %v6114 = vadd.f32 %v6110, %v6113
    %vm6115 = vweird.f32 %v6110
    %v6116 = vsel %vm6115, %v6110, %v6114
    %v6117 = vmul.f32 %v6102, %v6116
    %v6118 = vmul.f32 %v6109, %v6116
    %v6119 = vsub.f32 %v6091, %v6117
    %v6120 = vsub.f32 %v6092, %v6118
    %v6121 = vmul.f32 %v6119, %v6119
    %v6122 = vmul.f32 %v6120, %v6120
    %v6123 = vsel %vm6095, %v6121, 0.0
    %v6124 = vrot.slane %v6123, 4
    %v6125 = vadd.f32 %v6123, %v6124
    %v6126 = vrot.slane %v6125, 2
    %v6127 = vadd.f32 %v6125, %v6126
    %v6128 = vrot.slane %v6127, 1
    %v6129 = vadd.f32 %v6127, %v6128
    %v6130 = vsel %vm6095, %v6122, 0.0
    %v6131 = vrot.slane %v6130, 4
    %v6132 = vadd.f32 %v6130, %v6131
    %v6133 = vrot.slane %v6132, 2
    %v6134 = vadd.f32 %v6132, %v6133
    %v6135 = vrot.slane %v6134, 1
    %v6136 = vadd.f32 %v6134, %v6135
    %v6137 = vmul.f32 %v6129, %v6116
    %v6138 = vmul.f32 %v6136, %v6116
    %v6139 = vadd.f32 %v6137, 1e-05
    %v6140 = vadd.f32 %v6138, 1e-05
    %v6141 = vrsqrt.pop %v6139
    %v6142 = vmul.f32 %v6141, %v6139
    %v6143 = vmul.f32 %v6142, %v6141
    %v6144 = vmul.f32 0.5, %v6143
    %v6145 = vsub.f32 1.5, %v6144
    %v6146 = vmul.f32 %v6141, %v6145
    %vm6147 = vweird.f32 %v6139
    %vm6148 = vweird.f32 %v6141
    %vm6149 = vmor %vm6147, %vm6148
    %v6150 = vsel %vm6149, %v6141, %v6146
    %v6151 = vrsqrt.pop %v6140
    %v6152 = vmul.f32 %v6151, %v6140
    %v6153 = vmul.f32 %v6152, %v6151
    %v6154 = vmul.f32 0.5, %v6153
    %v6155 = vsub.f32 1.5, %v6154
    %v6156 = vmul.f32 %v6151, %v6155
    %vm6157 = vweird.f32 %v6140
    %vm6158 = vweird.f32 %v6151
    %vm6159 = vmor %vm6157, %vm6158
    %v6160 = vsel %vm6159, %v6151, %v6156
    %v6161 = vmul.f32 %v6119, %v6150
    %v6162 = vmul.f32 %v6120, %v6160
    %v6164 = vperm.slane %v6093, 0
    %v6165 = vperm.slane %v6093, 1
    %v6168 = vmul.f32 %v6161, %v6164
    %v6169 = vmul.f32 %v6162, %v6165
    %v6171 = vperm.slane %v6094, 0
    %v6172 = vperm.slane %v6094, 1
    %v6175 = vadd.f32 %v6168, %v6171
    %v6176 = vadd.f32 %v6169, %v6172
    %v6177 = vmax.f32 %v6175, 0.0
    %v6178 = vmax.f32 %v6176, 0.0
    %v6179 = vpack.c.bf16 %v6177, %v6177
    %v6180 = vpack.c.bf16 %v6178, %v6178
    %v6181 = vld [vmem:[#allocation14] sm:$0xf]
    %v6182 = vld [vmem:[#allocation14 + $0x4] sm:$0xf]
    %v6183 = vld [vmem:[#allocation14 + $0x8] sm:$0xf]
    %v6184 = vld [vmem:[#allocation14 + $0xc] sm:$0xf]
    %v6185 = vld [vmem:[#allocation14 + $0x10] sm:$0xf]
    %v6186 = vld [vmem:[#allocation14 + $0x14] sm:$0xf]
    %v6187 = vld [vmem:[#allocation14 + $0x18] sm:$0xf]
    %v6188 = vld [vmem:[#allocation14 + $0x1c] sm:$0xf]
    %v6189 = vld [vmem:[#allocation14 + $0x20] sm:$0xf]
    %v6190 = vld [vmem:[#allocation14 + $0x24] sm:$0xf]
    %v6191 = vld [vmem:[#allocation14 + $0x28] sm:$0xf]
    %v6192 = vld [vmem:[#allocation14 + $0x2c] sm:$0xf]
    %v6193 = vld [vmem:[#allocation14 + $0x30] sm:$0xf]
    %v6194 = vld [vmem:[#allocation14 + $0x34] sm:$0xf]
    %v6195 = vld [vmem:[#allocation14 + $0x38] sm:$0xf]
    %v6196 = vld [vmem:[#allocation14 + $0x3c] sm:$0xf]
    %v6197 = vld [vmem:[#allocation14 + $0x40] sm:$0xf]
    %v6198 = vld [vmem:[#allocation14 + $0x44] sm:$0xf]
    %v6199 = vld [vmem:[#allocation14 + $0x48] sm:$0xf]
    %v6200 = vld [vmem:[#allocation14 + $0x4c] sm:$0xf]
    %v6201 = vld [vmem:[#allocation14 + $0x50] sm:$0xf]
    %v6202 = vld [vmem:[#allocation14 + $0x54] sm:$0xf]
    %v6203 = vld [vmem:[#allocation14 + $0x58] sm:$0xf]
    %v6204 = vld [vmem:[#allocation14 + $0x5c] sm:$0xf]
    %v6205 = vld [vmem:[#allocation14 + $0x60] sm:$0xf]
    %v6206 = vld [vmem:[#allocation14 + $0x64] sm:$0xf]
    %v6207 = vld [vmem:[#allocation14 + $0x68] sm:$0xf]
    %v6208 = vld [vmem:[#allocation14 + $0x6c] sm:$0xf]
    %v6209 = vld [vmem:[#allocation14 + $0x70] sm:$0xf]
    %v6210 = vld [vmem:[#allocation14 + $0x74] sm:$0xf]
    %v6211 = vld [vmem:[#allocation14 + $0x78] sm:$0xf]
    %v6212 = vld [vmem:[#allocation14 + $0x7c] sm:$0xf]
    %v6213 = vld [vmem:[%s65] sm:$0x1]
    %v6215 = vperm.slane %v6213, 0
    %v6249 = vunpack.c.l.b16 %v6181
    %v6250 = vunpack.c.l.b16 %v6182
    %v6251 = vunpack.c.l.b16 %v6183
    %v6252 = vunpack.c.l.b16 %v6184
    %v6253 = vunpack.c.l.b16 %v6185
    %v6254 = vunpack.c.l.b16 %v6186
    %v6255 = vunpack.c.l.b16 %v6187
    %v6256 = vunpack.c.l.b16 %v6188
    %v6257 = vunpack.c.l.b16 %v6189
    %v6258 = vunpack.c.l.b16 %v6190
    %v6259 = vunpack.c.l.b16 %v6191
    %v6260 = vunpack.c.l.b16 %v6192
    %v6261 = vunpack.c.l.b16 %v6193
    %v6262 = vunpack.c.l.b16 %v6194
    %v6263 = vunpack.c.l.b16 %v6195
    %v6264 = vunpack.c.l.b16 %v6196
    %v6265 = vunpack.c.l.b16 %v6197
    %v6266 = vunpack.c.l.b16 %v6198
    %v6267 = vunpack.c.l.b16 %v6199
    %v6268 = vunpack.c.l.b16 %v6200
    %v6269 = vunpack.c.l.b16 %v6201
    %v6270 = vunpack.c.l.b16 %v6202
    %v6271 = vunpack.c.l.b16 %v6203
    %v6272 = vunpack.c.l.b16 %v6204
    %v6273 = vunpack.c.l.b16 %v6205
    %v6274 = vunpack.c.l.b16 %v6206
    %v6275 = vunpack.c.l.b16 %v6207
    %v6276 = vunpack.c.l.b16 %v6208
    %v6277 = vunpack.c.l.b16 %v6209
    %v6278 = vunpack.c.l.b16 %v6210
    %v6279 = vunpack.c.l.b16 %v6211
    %v6280 = vunpack.c.l.b16 %v6212
    %v6281 = vpack.c.b16 %v6250, %v6249
    %v6282 = vpack.c.b16 %v6252, %v6251
    %v6283 = vpack.c.b16 %v6254, %v6253
    %v6284 = vpack.c.b16 %v6256, %v6255
    %v6285 = vpack.c.b16 %v6258, %v6257
    %v6286 = vpack.c.b16 %v6260, %v6259
    %v6287 = vpack.c.b16 %v6262, %v6261
    %v6288 = vpack.c.b16 %v6264, %v6263
    %v6289 = vpack.c.b16 %v6266, %v6265
    %v6290 = vpack.c.b16 %v6268, %v6267
    %v6291 = vpack.c.b16 %v6270, %v6269
    %v6292 = vpack.c.b16 %v6272, %v6271
    %v6293 = vpack.c.b16 %v6274, %v6273
    %v6294 = vpack.c.b16 %v6276, %v6275
    %v6295 = vpack.c.b16 %v6278, %v6277
    %v6296 = vpack.c.b16 %v6280, %v6279
    %6313 = vmatpush.bf16.msra.mxu0 %v6288
    %6314 = vmatpush.bf16.msra.mxu0 %v6287
    %6315 = vmatpush.bf16.msra.mxu0 %v6286
    %6316 = vmatpush.bf16.msra.mxu0 %v6285
    %6317 = vmatpush.bf16.msra.mxu0 %v6284
    %6318 = vmatpush.bf16.msra.mxu0 %v6283
    %6319 = vmatpush.bf16.msra.mxu0 %v6282
    %6320 = vmatpush.bf16.msra.mxu0 %v6281
    %6321 = vmatmul.bf16.gmra.mxu0 %v6179
    %v6322 = vpop.f32.mrf.mxu0
    %v6323 = vadd.f32 %v6215, %v6322
    %v6324 = vpop.f32.mrf.mxu0
    %6325 = vdwg.mxu0
    %6326 = vmatpush.bf16.msra.mxu0 %v6296
    %6327 = vmatpush.bf16.msra.mxu0 %v6295
    %6328 = vmatpush.bf16.msra.mxu0 %v6294
    %6329 = vmatpush.bf16.msra.mxu0 %v6293
    %6330 = vmatpush.bf16.msra.mxu0 %v6292
    %6331 = vmatpush.bf16.msra.mxu0 %v6291
    %6332 = vmatpush.bf16.msra.mxu0 %v6290
    %6333 = vmatpush.bf16.msra.mxu0 %v6289
    %6334 = vmatmul.bf16.gmra.mxu0 %v6180
    %v6335 = vpop.f32.mrf.mxu0
    %v6336 = vadd.f32 %v6323, %v6335
    %v6337 = vpop.f32.mrf.mxu0
    %6338 = vdwg.mxu0
    %v6339 = vmax.f32 %v6336, 0.0
    %v6340 = vpack.c.bf16 %v6339, %v6339
    %v6341 = vld [vmem:[%s67] sm:$0xf]
    %v6342 = vld [vmem:[%s67 + $0x4] sm:$0xf]
    %v6343 = vld [vmem:[%s67 + $0x8] sm:$0xf]
    %v6344 = vld [vmem:[%s67 + $0xc] sm:$0xf]
    %v6345 = vld [vmem:[%s67 + $0x10] sm:$0xf]
    %v6346 = vld [vmem:[%s67 + $0x14] sm:$0xf]
    %v6347 = vld [vmem:[%s67 + $0x18] sm:$0xf]
    %v6348 = vld [vmem:[%s67 + $0x1c] sm:$0xf]
    %v6349 = vld [vmem:[%s67 + $0x20] sm:$0xf]
    %v6350 = vld [vmem:[%s67 + $0x24] sm:$0xf]
    %v6351 = vld [vmem:[%s67 + $0x28] sm:$0xf]
    %v6352 = vld [vmem:[%s67 + $0x2c] sm:$0xf]
    %v6353 = vld [vmem:[%s67 + $0x30] sm:$0xf]
    %v6354 = vld [vmem:[%s67 + $0x34] sm:$0xf]
    %v6355 = vld [vmem:[%s67 + $0x38] sm:$0xf]
    %v6356 = vld [vmem:[%s67 + $0x3c] sm:$0xf]
    %v6357 = vld [vmem:[%s69] sm:$0x1]
    %v6359 = vperm.slane %v6357, 0
    %v6377 = vunpack.c.l.b16 %v6341
    %v6378 = vunpack.c.l.b16 %v6342
    %v6379 = vunpack.c.l.b16 %v6343
    %v6380 = vunpack.c.l.b16 %v6344
    %v6381 = vunpack.c.l.b16 %v6345
    %v6382 = vunpack.c.l.b16 %v6346
    %v6383 = vunpack.c.l.b16 %v6347
    %v6384 = vunpack.c.l.b16 %v6348
    %v6385 = vunpack.c.l.b16 %v6349
    %v6386 = vunpack.c.l.b16 %v6350
    %v6387 = vunpack.c.l.b16 %v6351
    %v6388 = vunpack.c.l.b16 %v6352
    %v6389 = vunpack.c.l.b16 %v6353
    %v6390 = vunpack.c.l.b16 %v6354
    %v6391 = vunpack.c.l.b16 %v6355
    %v6392 = vunpack.c.l.b16 %v6356
    %v6393 = vpack.c.b16 %v6378, %v6377
    %v6394 = vpack.c.b16 %v6380, %v6379
    %v6395 = vpack.c.b16 %v6382, %v6381
    %v6396 = vpack.c.b16 %v6384, %v6383
    %v6397 = vpack.c.b16 %v6386, %v6385
    %v6398 = vpack.c.b16 %v6388, %v6387
    %v6399 = vpack.c.b16 %v6390, %v6389
    %v6400 = vpack.c.b16 %v6392, %v6391
    %6409 = vmatpush.bf16.msra.mxu0 %v6400
    %6410 = vmatpush.bf16.msra.mxu0 %v6399
    %6411 = vmatpush.bf16.msra.mxu0 %v6398
    %6412 = vmatpush.bf16.msra.mxu0 %v6397
    %6413 = vmatpush.bf16.msra.mxu0 %v6396
    %6414 = vmatpush.bf16.msra.mxu0 %v6395
    %6415 = vmatpush.bf16.msra.mxu0 %v6394
    %6416 = vmatpush.bf16.msra.mxu0 %v6393
    %6417 = vmatmul.bf16.gmra.mxu0 %v6340
    %v6418 = vpop.f32.mrf.mxu0
    %v6419 = vadd.f32 %v6359, %v6418
    %v6420 = vpop.f32.mrf.mxu0
    %6421 = vdwg.mxu0
    %v6422 = vmax.f32 %v6419, 0.0
    %v6423 = vpack.c.bf16 %v6422, %v6422
    %v6424 = vld [vmem:[%s71] sm:$0xf]
    %v6425 = vld [vmem:[%s71 + $0x4] sm:$0xf]
    %v6426 = vld [vmem:[%s71 + $0x8] sm:$0xf]
    %v6427 = vld [vmem:[%s71 + $0xc] sm:$0xf]
    %v6428 = vld [vmem:[%s71 + $0x10] sm:$0xf]
    %v6429 = vld [vmem:[%s71 + $0x14] sm:$0xf]
    %v6430 = vld [vmem:[%s71 + $0x18] sm:$0xf]
    %v6431 = vld [vmem:[%s71 + $0x1c] sm:$0xf]
    %v6432 = vld [vmem:[#allocation2] sm:$0x1]
    %v6434 = vperm.slane %v6432, 0
    %v6444 = vunpack.c.l.b16 %v6424
    %v6445 = vunpack.c.l.b16 %v6425
    %v6446 = vunpack.c.l.b16 %v6426
    %v6447 = vunpack.c.l.b16 %v6427
    %v6448 = vunpack.c.l.b16 %v6428
    %v6449 = vunpack.c.l.b16 %v6429
    %v6450 = vunpack.c.l.b16 %v6430
    %v6451 = vunpack.c.l.b16 %v6431
    %v6452 = vpack.c.b16 %v6445, %v6444
    %v6453 = vpack.c.b16 %v6447, %v6446
    %v6454 = vpack.c.b16 %v6449, %v6448
    %v6455 = vpack.c.b16 %v6451, %v6450
    %v6461 = vsel %vm1440, %v6423, 0
    %6463 = vmatpush.bf16.msra.mxu0 0
    %6464 = vmatpush.bf16.msra.mxu0 0
    %6465 = vmatpush.bf16.msra.mxu0 0
    %6466 = vmatpush.bf16.msra.mxu0 0
    %6467 = vmatpush.bf16.msra.mxu0 %v6455
    %6468 = vmatpush.bf16.msra.mxu0 %v6454
    %6469 = vmatpush.bf16.msra.mxu0 %v6453
    %6470 = vmatpush.bf16.msra.mxu0 %v6452
    %6471 = vmatmul.bf16.gmra.mxu0 %v6461
    %v6472 = vpop.f32.mrf.mxu0
    %v6473 = vadd.f32 %v6434, %v6472
    %v6474 = vpop.f32.mrf.mxu0
    %6475 = vdwg.mxu0
    %v6476 = vmul.f32 %v6473, 0.5
    %v6477 = vtanh.pop %v6476
    %v6478 = vadd.f32 %v6477, 1.0
    %v6479 = vmul.f32 %v6478, 0.5
    %vm6480 = vcmask 1024
    %6481 = vst.msk [vmem:[%s75] sm:$0x3] %vm6480, %v6479
    // Predicated region
    $region182: #{tpu_custom_call.1} parent=1 // pred_check
      _
    $region183: #{tpu_custom_call.1} parent=1 // pred_check_branch
      %6483 = sbr.rel (0) target = $region185
    $region184: #{tpu_custom_call.1} parent=1 // pred_region
      _
    $region185: #{tpu_custom_call.1} parent=1 // pred_fallthru
      _
    // Predicated region
    $region186: #{tpu_custom_call.1} parent=1 // pred_check
      _
    $region187: #{tpu_custom_call.1} parent=1 // pred_check_branch
      %6485 = sbr.rel (0) target = $region189
    $region188: #{tpu_custom_call.1} parent=1 // pred_region
      _
    $region189: #{tpu_custom_call.1} parent=1 // pred_fallthru
      _
    %6486 = vsyncpa [#allocation4], 1
    %6487 = vsyncpa [#allocation6], 1
    %6488 = vsyncpa [#allocation9], 1
    %6489 = vsyncpa [#allocation12], 1
    %6490 = vsyncpa [#allocation15], 1

</llo_original>
